<compile_context>
chip_gen: v7x
topology: tpu7x:2x2x1
jax: 0.10.0
libtpu: 0.0.40
codegen_flags: <defaults>
</compile_context>

<pallas_src>
import jax
import jax.numpy as jnp
from jax.experimental import pallas as pl
from jax.experimental.pallas import tpu as pltpu

# ----------------------------- configuration ------------------------------ #
B = 2            # batch size (pairs of views)
Z_DIM = 64       # latent dim (scaled down from 512)
C_DIM = 25       # camera params dim (as in the module)
W_DIM = 64       # mapping-network output dim
IMG_CH = 32      # synthesis-network output channels
RES = 16         # synthesis / image resolution
C3D = 4          # scene channels
D3D = 16         # scene depth
MID3D = 8        # 3D resblock hidden channels
C2D = 32         # 2D feature channels after projection
MID2D = 64       # 2D resblock hidden channels
IMG_OUT_CH = 3   # rendered image channels (img_shape[0])
OUT_PAD = 128    # lane-dense padded width of the final conv / image store

HW = RES * RES   # pixels per image
CD = C3D * D3D   # scene slab width (channels x depth) = 64


def get_swapped_indices(length):
    """[1, 0, 3, 2, 5, 4, ...] — every index pair swapped."""
    return [i + 1 if i % 2 == 0 else i - 1 for i in range(length)]


SWAP = get_swapped_indices(B)


# ------------------------------ kernel helpers ------------------------------ #
def _lrelu(x):
    return jnp.where(x >= 0, x, 0.2 * x)


def _bdot(a, w):
    """bf16 MXU matmul with f32 accumulation (weights `w` are stored bf16)."""
    return jnp.dot(a.astype(jnp.bfloat16), w, preferred_element_type=jnp.float32)


# ------------------------------- fused kernel ------------------------------- #
def _fused_renderer_kernel(
        # inputs
        z_ref, c_ref,
        we_ref, be_ref, w0z_ref, w0y_ref, b0_ref, w1_ref, b1_ref,
        wsty_ref, bsty_ref, cmap_ref, wcv_ref, bcv_ref,
        wip_ref, bip_ref, wia_ref, bia_ref, wib_ref, bib_ref, mask_ref,
        wfa_ref, bfa_ref, wfb_ref, bfb_ref,
        wp_ref, bp_ref, w2a_ref, b2a_ref, w2b_ref, b2b_ref,
        wfin_ref, bfin_ref,
        # outputs
        scene_ref, rot_ref, img_ref):
    """Whole NeuralRenderer channel pipeline, fully VMEM resident.

    Activations are channels-last (B*HW pixels, channels) slabs end-to-end; the
    1x1x1 3D convs were Kronecker-expanded (W ⊗ I_D) at init so every matmul is
    a lane-dense (32/64/128) MXU op over 512 rows.
    """
    # ---- MappingNetwork (B rows) ----
    z = z_ref[...]
    z_n = z * jax.lax.rsqrt(jnp.mean(z * z, axis=-1, keepdims=True) + 1e-8)
    y = _bdot(c_ref[...], we_ref[...]) + be_ref[...]
    y_n = y * jax.lax.rsqrt(jnp.mean(y * y, axis=-1, keepdims=True) + 1e-8)
    h = _lrelu(_bdot(z_n, w0z_ref[...]) + _bdot(y_n, w0y_ref[...]) + b0_ref[...])
    w_lat = _lrelu(_bdot(h, w1_ref[...]) + b1_ref[...])               # (B, W_DIM)

    # ---- SynthesisNetwork stand-in: style-modulated constant map + 1x1 conv ----
    # TODO(synk): StyleGAN2 modulated-conv synthesis not reproduced (definition unavailable)
    style = _bdot(w_lat, wsty_ref[...]) + bsty_ref[...]                # (B, IMG_CH)
    const = cmap_ref[...].astype(jnp.float32)                          # (HW, IMG_CH)
    mod = jnp.concatenate([const * style[b:b + 1, :] for b in range(B)], axis=0)
    feat = _lrelu(_bdot(mod, wcv_ref[...]) + bcv_ref[...])             # (B*HW, IMG_CH)

    # ---- InverseProjection -> inverse ResNet3d -> SphericalMask ----
    y0 = _lrelu(_bdot(feat, wip_ref[...]) + bip_ref[...])              # (B*HW, CD)
    h1 = _lrelu(_bdot(y0, wia_ref[...]) + bia_ref[...])                # (B*HW, MID3D*D3D)
    scn = _lrelu(_bdot(h1, wib_ref[...]) + bib_ref[...] + y0)          # (B*HW, CD)
    mask = mask_ref[...].astype(jnp.float32)                           # (HW, CD)
    scn = scn * jnp.concatenate([mask] * B, axis=0)
    scene_ref[...] = scn                                               # scenes output

    # ---- rotate source -> target: the module's azimuth/elevation are the same
    #      constants for every sample, so R_t @ R_s^T == I and the trilinear
    #      resample is exactly the batch swap (static slices, rows resident).
    sw = jnp.concatenate([scn[j * HW:(j + 1) * HW, :] for j in SWAP], axis=0)
    rot_ref[...] = sw                                                  # scenes_rotated output

    # ---- forward ResNet3d -> Projection -> ResNet2d -> final conv + sigmoid ----
    h2 = _lrelu(_bdot(sw, wfa_ref[...]) + bfa_ref[...])                # (B*HW, 128)
    y2 = _lrelu(_bdot(h2, wfb_ref[...]) + bfb_ref[...] + sw)           # (B*HW, 64)
    p = _lrelu(_bdot(y2, wp_ref[...]) + bp_ref[...])                   # (B*HW, 32)
    h3 = _lrelu(_bdot(p, w2a_ref[...]) + b2a_ref[...])                 # (B*HW, 64)
    q = _lrelu(_bdot(h3, w2b_ref[...]) + b2b_ref[...] + p)             # (B*HW, 32)
    logits = _bdot(q, wfin_ref[...]) + bfin_ref[...]                   # (B*HW, 128) lane-dense
    img_ref[...] = 1.0 / (1.0 + jnp.exp(-logits))                      # sigmoid, f32


def fused_forward(fp, z, c):
    """(B, Z_DIM), (B, C_DIM) -> (scene_slab, rotated_scene_slab, padded image)."""
    assert z.shape[0] == B, "kernel is specialized for the module batch size"
    return pl.pallas_call(
        _fused_renderer_kernel,
        out_shape=(
            jax.ShapeDtypeStruct((B * HW, CD), jnp.float32),       # scenes slab
            jax.ShapeDtypeStruct((B * HW, CD), jnp.float32),       # swapped scenes slab
            jax.ShapeDtypeStruct((B * HW, OUT_PAD), jnp.float32),  # image, lane-padded
        ),
        cost_estimate=pl.CostEstimate(
            flops=50_000_000, transcendentals=70_000, bytes_accessed=700_000),
    )(z, c,
      fp["map_embed_w"], fp["map_embed_b"],
      fp["map_fc0_wz"], fp["map_fc0_wy"], fp["map_fc0_b"],
      fp["map_fc1_w"], fp["map_fc1_b"],
      fp["syn_style_w"], fp["syn_style_b"], fp["syn_const"],
      fp["syn_conv_w"], fp["syn_conv_b"],
      fp["invproj_w"], fp["invproj_b"],
      fp["inv3d_a_wk"], fp["inv3d_a_bk"], fp["inv3d_b_wk"], fp["inv3d_b_bk"],
      fp["mask_slab"],
      fp["fwd3d_a_wk"], fp["fwd3d_a_bk"], fp["fwd3d_b_wk"], fp["fwd3d_b_bk"],
      fp["proj_w"], fp["proj_b"],
      fp["fwd2d_a_w"], fp["fwd2d_a_b"], fp["fwd2d_b_w"], fp["fwd2d_b_b"],
      fp["final2d_w"], fp["final2d_b"])


# --------------------------- parameter creation ---------------------------- #
def _init_linear(key, fan_in, fan_out):
    w = jax.random.normal(key, (fan_in, fan_out), jnp.float32) / jnp.sqrt(
        jnp.asarray(fan_in, jnp.float32))
    b = jnp.zeros((1, fan_out), jnp.float32)
    return w, b


def init_params(key):
    ks = jax.random.split(key, 15)
    p = {}
    # MappingNetwork (simplified: c-embed + 2 FC layers)  TODO(synk): full StyleGAN mapping
    p["map_embed"] = _init_linear(ks[0], C_DIM, W_DIM)
    p["map_fc0"] = _init_linear(ks[1], Z_DIM + W_DIM, W_DIM)
    p["map_fc1"] = _init_linear(ks[2], W_DIM, W_DIM)
    # SynthesisNetwork stand-in: learned constant map + style modulation + 1x1 conv
    p["syn_const"] = jax.random.normal(ks[3], (HW, IMG_CH), jnp.float32)
    sw_, sb_ = _init_linear(ks[4], W_DIM, IMG_CH)
    p["syn_style"] = (sw_, sb_ + 1.0)           # modulation bias ~1 (StyleGAN-like)
    p["syn_conv"] = _init_linear(ks[5], IMG_CH, IMG_CH)
    # InverseProjection: 1x1 conv 2D->3D channels (output cols ordered (c3d, d3d))
    p["invproj"] = _init_linear(ks[6], IMG_CH, CD)
    # inverse / forward ResNet3d blocks (1x1x1 channel mixes)
    p["inv3d_a"] = _init_linear(ks[7], C3D, MID3D)
    p["inv3d_b"] = _init_linear(ks[8], MID3D, C3D)
    p["fwd3d_a"] = _init_linear(ks[9], C3D, MID3D)
    p["fwd3d_b"] = _init_linear(ks[10], MID3D, C3D)
    # Projection unit: collapse depth into channels, 1x1 conv
    p["proj"] = _init_linear(ks[11], CD, C2D)
    # forward ResNet2d block + final conv
    p["fwd2d_a"] = _init_linear(ks[12], C2D, MID2D)
    p["fwd2d_b"] = _init_linear(ks[13], MID2D, C2D)
    p["final2d"] = _init_linear(ks[14], C2D, IMG_OUT_CH)
    return p


def make_spherical_mask(d, h, w):
    zs = jnp.linspace(-1.0, 1.0, d)
    ys = jnp.linspace(-1.0, 1.0, h)
    xs = jnp.linspace(-1.0, 1.0, w)
    zz, yy, xx = jnp.meshgrid(zs, ys, xs, indexing="ij")
    return (zz * zz + yy * yy + xx * xx <= 1.0).astype(jnp.float32)


def prepare_fused_params(p, mask3d):
    """Module-init-time precompute for the fused kernel.

    * 1x1x1 3D convs (channel mix shared over depth) are Kronecker-expanded to
      block-diagonal W ⊗ I_D so the kernel only issues lane-dense matmuls on
      the (pixels, channels*depth) slab layout.
    * Matmul weights are stored bf16 (f32 accumulation in-kernel), biases stay
      f32 (epilogues run in f32).
    * The final conv is padded to 128 output lanes (lane-dense image store).
    * The spherical mask is baked into a (HW, CD) bf16 slab.
    """
    bf16 = jnp.bfloat16
    eye_d = jnp.eye(D3D, dtype=jnp.float32)
    ones_d = jnp.ones((1, D3D), jnp.float32)

    def kron_w(w):   # (Cin, Cout) -> (Cin*D, Cout*D), bf16
        return jnp.kron(w, eye_d).astype(bf16)

    def kron_b(b):   # (1, Cout) -> (1, Cout*D), f32
        return jnp.kron(b, ones_d)

    w0 = p["map_fc0"][0]                     # (Z_DIM + W_DIM, W_DIM)
    # Spherical mask as a (HW, CD) slab: cols ordered (c3d major, d3d minor).
    mask_slab = jnp.tile(
        jnp.transpose(mask3d, (1, 2, 0)).reshape(HW, D3D), (1, C3D)).astype(bf16)

    wf = jnp.zeros((C2D, OUT_PAD), jnp.float32).at[:, :IMG_OUT_CH].set(p["final2d"][0])
    bf = jnp.zeros((1, OUT_PAD), jnp.float32).at[:, :IMG_OUT_CH].set(p["final2d"][1])

    return {
        "map_embed_w": p["map_embed"][0].astype(bf16), "map_embed_b": p["map_embed"][1],
        "map_fc0_wz": w0[:Z_DIM].astype(bf16), "map_fc0_wy": w0[Z_DIM:].astype(bf16),
        "map_fc0_b": p["map_fc0"][1],
        "map_fc1_w": p["map_fc1"][0].astype(bf16), "map_fc1_b": p["map_fc1"][1],
        "syn_style_w": p["syn_style"][0].astype(bf16), "syn_style_b": p["syn_style"][1],
        "syn_const": p["syn_const"].astype(bf16),
        "syn_conv_w": p["syn_conv"][0].astype(bf16), "syn_conv_b": p["syn_conv"][1],
        "invproj_w": p["invproj"][0].astype(bf16), "invproj_b": p["invproj"][1],
        "inv3d_a_wk": kron_w(p["inv3d_a"][0]), "inv3d_a_bk": kron_b(p["inv3d_a"][1]),
        "inv3d_b_wk": kron_w(p["inv3d_b"][0]), "inv3d_b_bk": kron_b(p["inv3d_b"][1]),
        "fwd3d_a_wk": kron_w(p["fwd3d_a"][0]), "fwd3d_a_bk": kron_b(p["fwd3d_a"][1]),
        "fwd3d_b_wk": kron_w(p["fwd3d_b"][0]), "fwd3d_b_bk": kron_b(p["fwd3d_b"][1]),
        "proj_w": p["proj"][0].astype(bf16), "proj_b": p["proj"][1],
        "fwd2d_a_w": p["fwd2d_a"][0].astype(bf16), "fwd2d_a_b": p["fwd2d_a"][1],
        "fwd2d_b_w": p["fwd2d_b"][0].astype(bf16), "fwd2d_b_b": p["fwd2d_b"][1],
        "final2d_w": wf.astype(bf16), "final2d_b": bf,
        "mask_slab": mask_slab,
    }


# ------------------ general rotation path (plain-JAX fallback) -------------- #
# Kept wired-in for per-sample cameras; unused in this forward pass because the
# module's azimuth/elevation are identical constants for source and target, so
# the relative rotation is exactly the identity.
def _az_el_to_rotation(az_deg, el_deg):
    az = jnp.deg2rad(az_deg)
    el = jnp.deg2rad(el_deg)
    ca, sa = jnp.cos(az), jnp.sin(az)
    ce, se = jnp.cos(el), jnp.sin(el)
    z = jnp.zeros_like(az)
    o = jnp.ones_like(az)
    ry = jnp.stack([jnp.stack([ca, z, sa], -1),
                    jnp.stack([z, o, z], -1),
                    jnp.stack([-sa, z, ca], -1)], -2)
    rx = jnp.stack([jnp.stack([o, z, z], -1),
                    jnp.stack([z, ce, -se], -1),
                    jnp.stack([z, se, ce], -1)], -2)
    return jnp.einsum("bij,bjk->bik", rx, ry)


def rotation_source_to_target(az_s, el_s, az_t, el_t):
    rs = _az_el_to_rotation(az_s, el_s)
    rt = _az_el_to_rotation(az_t, el_t)
    return jnp.einsum("bij,bkj->bik", rt, rs)  # R_t @ R_s^T


def _trilinear_sample_one(scene_b, fx, fy, fz):
    c, d, h, w = scene_b.shape
    x0 = jnp.floor(fx).astype(jnp.int32); x1 = x0 + 1
    y0 = jnp.floor(fy).astype(jnp.int32); y1 = y0 + 1
    z0 = jnp.floor(fz).astype(jnp.int32); z1 = z0 + 1
    wx = fx - x0.astype(fx.dtype)
    wy = fy - y0.astype(fy.dtype)
    wz = fz - z0.astype(fz.dtype)
    flat = scene_b.reshape(c, -1)

    def corner(zi, yi, xi):
        inb = ((zi >= 0) & (zi < d) & (yi >= 0) & (yi < h) &
               (xi >= 0) & (xi < w))
        zc = jnp.clip(zi, 0, d - 1)
        yc = jnp.clip(yi, 0, h - 1)
        xc = jnp.clip(xi, 0, w - 1)
        idx = ((zc * h + yc) * w + xc).reshape(-1)
        vals = flat[:, idx].reshape(c, d, h, w)
        return vals * inb[None].astype(scene_b.dtype)

    return (corner(z0, y0, x0) * ((1 - wz) * (1 - wy) * (1 - wx))[None]
            + corner(z0, y0, x1) * ((1 - wz) * (1 - wy) * wx)[None]
            + corner(z0, y1, x0) * ((1 - wz) * wy * (1 - wx))[None]
            + corner(z0, y1, x1) * ((1 - wz) * wy * wx)[None]
            + corner(z1, y0, x0) * (wz * (1 - wy) * (1 - wx))[None]
            + corner(z1, y0, x1) * (wz * (1 - wy) * wx)[None]
            + corner(z1, y1, x0) * (wz * wy * (1 - wx))[None]
            + corner(z1, y1, x1) * (wz * wy * wx)[None])


def rotate_scene(scene, rot):
    """General Rotate3d (trilinear resample); not used for identity rotation.
    TODO(synk): Pallas depth-plane resample kernel for non-identity rotations."""
    b, c, d, h, w = scene.shape
    zs = jnp.linspace(-1.0, 1.0, d)
    ys = jnp.linspace(-1.0, 1.0, h)
    xs = jnp.linspace(-1.0, 1.0, w)
    zz, yy, xx = jnp.meshgrid(zs, ys, xs, indexing="ij")
    coords = jnp.stack([xx, yy, zz], -1)
    rc = jnp.einsum("bij,dhwj->bdhwi", rot, coords)

    def unnorm(v, n):
        return (v + 1.0) * (n - 1) / 2.0

    fx = unnorm(rc[..., 0], w)
    fy = unnorm(rc[..., 1], h)
    fz = unnorm(rc[..., 2], d)
    return jax.vmap(_trilinear_sample_one)(scene, fx, fy, fz)


# --------------------------- model forward pass ----------------------------- #
def neural_renderer_forward(fp, batch, z_key):
    imgs = batch["img"]
    c = batch["render_params"]
    n = c.shape[0]
    # _extrinsics_intrinsics_to_azimuth_elevation: both are batch-constant, so
    # azimuth[swapped] == azimuth and elevation[swapped] == elevation — the
    # relative rotation is exactly the identity and the resample is skipped.
    # (rotate_scene / rotation_source_to_target keep the general path wired in.)
    z = jax.random.normal(z_key, (n, Z_DIM), jnp.float32)

    # One fused Pallas kernel: inverse render -> mask -> swap -> forward render.
    scene_slab, rot_slab, img_pad = fused_forward(fp, z, c)

    # NCDHW / NCHW only at the module boundary (return values).
    scenes = jnp.transpose(
        scene_slab.reshape(n, RES, RES, C3D, D3D), (0, 3, 4, 1, 2))
    scenes_rotated = jnp.transpose(
        rot_slab.reshape(n, RES, RES, C3D, D3D), (0, 3, 4, 1, 2))
    enr_rendered = jnp.transpose(
        img_pad[:, :IMG_OUT_CH].reshape(n, RES, RES, IMG_OUT_CH), (0, 3, 1, 2))

    eg3d_rendered = None  # TODO(synk): EG3D teacher renderer unavailable (weights/definition not provided)
    return imgs, enr_rendered, eg3d_rendered, scenes, scenes_rotated


# ---------------------------------- main ----------------------------------- #
if __name__ == "__main__":
    key = jax.random.PRNGKey(0)
    k_params, k_img, k_c, k_z = jax.random.split(key, 4)
    params = init_params(k_params)
    mask3d = make_spherical_mask(D3D, RES, RES)
    fused_params = prepare_fused_params(params, mask3d)   # module-init precompute
    batch = {
        "img": jax.random.uniform(k_img, (B, IMG_OUT_CH, RES, RES), jnp.float32),
        "render_params": jax.random.normal(k_c, (B, C_DIM), jnp.float32),
    }

    fwd = jax.jit(neural_renderer_forward)
    imgs, enr_rendered, eg3d_rendered, scenes, scenes_rotated = fwd(
        fused_params, batch, k_z)
    jax.block_until_ready([imgs, enr_rendered, scenes, scenes_rotated])

    assert enr_rendered.shape == (B, IMG_OUT_CH, RES, RES)
    assert scenes.shape == (B, C3D, D3D, RES, RES)
    assert scenes_rotated.shape == (B, C3D, D3D, RES, RES)
    assert bool(jnp.all(jnp.isfinite(enr_rendered)))
    # scenes_rotated must be exactly the batch-swapped (masked) scenes
    assert bool(jnp.allclose(scenes_rotated, scenes[jnp.asarray(SWAP)]))
    print("KERNEL_OK")
</pallas_src>

<mosaic_0001>
module attributes {stable_mosaic.version = 11 : i64} {
  func.func @_fused_renderer_kernel(%arg0: memref<2x64xf32, #tpu.memory_space<vmem>>, %arg1: memref<2x25xf32, #tpu.memory_space<vmem>>, %arg2: memref<25x64xbf16, #tpu.memory_space<vmem>>, %arg3: memref<1x64xf32, #tpu.memory_space<vmem>>, %arg4: memref<64x64xbf16, #tpu.memory_space<vmem>>, %arg5: memref<64x64xbf16, #tpu.memory_space<vmem>>, %arg6: memref<1x64xf32, #tpu.memory_space<vmem>>, %arg7: memref<64x64xbf16, #tpu.memory_space<vmem>>, %arg8: memref<1x64xf32, #tpu.memory_space<vmem>>, %arg9: memref<64x32xbf16, #tpu.memory_space<vmem>>, %arg10: memref<1x32xf32, #tpu.memory_space<vmem>>, %arg11: memref<256x32xbf16, #tpu.memory_space<vmem>>, %arg12: memref<32x32xbf16, #tpu.memory_space<vmem>>, %arg13: memref<1x32xf32, #tpu.memory_space<vmem>>, %arg14: memref<32x64xbf16, #tpu.memory_space<vmem>>, %arg15: memref<1x64xf32, #tpu.memory_space<vmem>>, %arg16: memref<64x128xbf16, #tpu.memory_space<vmem>>, %arg17: memref<1x128xf32, #tpu.memory_space<vmem>>, %arg18: memref<128x64xbf16, #tpu.memory_space<vmem>>, %arg19: memref<1x64xf32, #tpu.memory_space<vmem>>, %arg20: memref<256x64xbf16, #tpu.memory_space<vmem>>, %arg21: memref<64x128xbf16, #tpu.memory_space<vmem>>, %arg22: memref<1x128xf32, #tpu.memory_space<vmem>>, %arg23: memref<128x64xbf16, #tpu.memory_space<vmem>>, %arg24: memref<1x64xf32, #tpu.memory_space<vmem>>, %arg25: memref<64x32xbf16, #tpu.memory_space<vmem>>, %arg26: memref<1x32xf32, #tpu.memory_space<vmem>>, %arg27: memref<32x64xbf16, #tpu.memory_space<vmem>>, %arg28: memref<1x64xf32, #tpu.memory_space<vmem>>, %arg29: memref<64x32xbf16, #tpu.memory_space<vmem>>, %arg30: memref<1x32xf32, #tpu.memory_space<vmem>>, %arg31: memref<32x128xbf16, #tpu.memory_space<vmem>>, %arg32: memref<1x128xf32, #tpu.memory_space<vmem>>, %arg33: memref<512x64xf32, #tpu.memory_space<vmem>>, %arg34: memref<512x64xf32, #tpu.memory_space<vmem>>, %arg35: memref<512x128xf32, #tpu.memory_space<vmem>>) attributes {dimension_semantics = [], scalar_prefetch = 0 : i64, scratch_operands = 0 : i64, tpu.core_type = #tpu.core_type<tc>} {
    %c0 = arith.constant 0 : index
    %c0_0 = arith.constant 0 : index
    %0 = vector.load %arg0[%c0, %c0_0] : memref<2x64xf32, #tpu.memory_space<vmem>>, vector<2x64xf32>
    %1 = arith.mulf %0, %0 : vector<2x64xf32>
    %cst = arith.constant dense<0.000000e+00> : vector<2xf32>
    %2 = vector.multi_reduction <add>, %1, %cst [1] : vector<2x64xf32> to vector<2xf32>
    %3 = vector.shape_cast %2 : vector<2xf32> to vector<2x1xf32>
    %cst_1 = arith.constant 6.400000e+01 : f32
    %4 = vector.broadcast %cst_1 : f32 to vector<2x1xf32>
    %5 = arith.divf %3, %4 : vector<2x1xf32>
    %cst_2 = arith.constant 9.99999993E-9 : f32
    %6 = vector.broadcast %cst_2 : f32 to vector<2x1xf32>
    %7 = arith.addf %5, %6 : vector<2x1xf32>
    %8 = math.rsqrt %7 : vector<2x1xf32>
    %9 = vector.broadcast %8 : vector<2x1xf32> to vector<2x64xf32>
    %10 = arith.mulf %0, %9 : vector<2x64xf32>
    %c0_3 = arith.constant 0 : index
    %c0_4 = arith.constant 0 : index
    %11 = vector.load %arg1[%c0_3, %c0_4] : memref<2x25xf32, #tpu.memory_space<vmem>>, vector<2x25xf32>
    %c0_5 = arith.constant 0 : index
    %c0_6 = arith.constant 0 : index
    %12 = vector.load %arg2[%c0_5, %c0_6] : memref<25x64xbf16, #tpu.memory_space<vmem>>, vector<25x64xbf16>
    %13 = arith.truncf %11 : vector<2x25xf32> to vector<2x25xbf16>
    %cst_7 = arith.constant dense<0.000000e+00> : vector<2x64xf32>
    %14 = tpu.matmul %13, %12, %cst_7 {dimension_numbers = #tpu.dot_dimension_numbers<[1], [0], [0], [1], [0, 0, 1, 1], [], []>} : vector<2x25xbf16>, vector<25x64xbf16>, vector<2x64xf32> -> vector<2x64xf32>
    %c0_8 = arith.constant 0 : index
    %c0_9 = arith.constant 0 : index
    %15 = vector.load %arg3[%c0_8, %c0_9] : memref<1x64xf32, #tpu.memory_space<vmem>>, vector<1x64xf32>
    %16 = vector.broadcast %15 : vector<1x64xf32> to vector<2x64xf32>
    %17 = arith.addf %14, %16 : vector<2x64xf32>
    %18 = arith.mulf %17, %17 : vector<2x64xf32>
    %cst_10 = arith.constant dense<0.000000e+00> : vector<2xf32>
    %19 = vector.multi_reduction <add>, %18, %cst_10 [1] : vector<2x64xf32> to vector<2xf32>
    %20 = vector.shape_cast %19 : vector<2xf32> to vector<2x1xf32>
    %cst_11 = arith.constant 6.400000e+01 : f32
    %21 = vector.broadcast %cst_11 : f32 to vector<2x1xf32>
    %22 = arith.divf %20, %21 : vector<2x1xf32>
    %cst_12 = arith.constant 9.99999993E-9 : f32
    %23 = vector.broadcast %cst_12 : f32 to vector<2x1xf32>
    %24 = arith.addf %22, %23 : vector<2x1xf32>
    %25 = math.rsqrt %24 : vector<2x1xf32>
    %26 = vector.broadcast %25 : vector<2x1xf32> to vector<2x64xf32>
    %27 = arith.mulf %17, %26 : vector<2x64xf32>
    %c0_13 = arith.constant 0 : index
    %c0_14 = arith.constant 0 : index
    %28 = vector.load %arg4[%c0_13, %c0_14] : memref<64x64xbf16, #tpu.memory_space<vmem>>, vector<64x64xbf16>
    %29 = arith.truncf %10 : vector<2x64xf32> to vector<2x64xbf16>
    %cst_15 = arith.constant dense<0.000000e+00> : vector<2x64xf32>
    %30 = tpu.matmul %29, %28, %cst_15 {dimension_numbers = #tpu.dot_dimension_numbers<[1], [0], [0], [1], [0, 0, 1, 1], [], []>} : vector<2x64xbf16>, vector<64x64xbf16>, vector<2x64xf32> -> vector<2x64xf32>
    %c0_16 = arith.constant 0 : index
    %c0_17 = arith.constant 0 : index
    %31 = vector.load %arg5[%c0_16, %c0_17] : memref<64x64xbf16, #tpu.memory_space<vmem>>, vector<64x64xbf16>
    %32 = arith.truncf %27 : vector<2x64xf32> to vector<2x64xbf16>
    %cst_18 = arith.constant dense<0.000000e+00> : vector<2x64xf32>
    %33 = tpu.matmul %32, %31, %cst_18 {dimension_numbers = #tpu.dot_dimension_numbers<[1], [0], [0], [1], [0, 0, 1, 1], [], []>} : vector<2x64xbf16>, vector<64x64xbf16>, vector<2x64xf32> -> vector<2x64xf32>
    %34 = arith.addf %30, %33 : vector<2x64xf32>
    %c0_19 = arith.constant 0 : index
    %c0_20 = arith.constant 0 : index
    %35 = vector.load %arg6[%c0_19, %c0_20] : memref<1x64xf32, #tpu.memory_space<vmem>>, vector<1x64xf32>
    %36 = vector.broadcast %35 : vector<1x64xf32> to vector<2x64xf32>
    %37 = arith.addf %34, %36 : vector<2x64xf32>
    %cst_21 = arith.constant 0.000000e+00 : f32
    %38 = vector.broadcast %cst_21 : f32 to vector<2x64xf32>
    %39 = arith.cmpf oge, %37, %38 : vector<2x64xf32>
    %cst_22 = arith.constant 2.000000e-01 : f32
    %40 = vector.broadcast %cst_22 : f32 to vector<2x64xf32>
    %41 = arith.mulf %40, %37 : vector<2x64xf32>
    %42 = arith.select %39, %37, %41 : vector<2x64xi1>, vector<2x64xf32>
    %c0_23 = arith.constant 0 : index
    %c0_24 = arith.constant 0 : index
    %43 = vector.load %arg7[%c0_23, %c0_24] : memref<64x64xbf16, #tpu.memory_space<vmem>>, vector<64x64xbf16>
    %44 = arith.truncf %42 : vector<2x64xf32> to vector<2x64xbf16>
    %cst_25 = arith.constant dense<0.000000e+00> : vector<2x64xf32>
    %45 = tpu.matmul %44, %43, %cst_25 {dimension_numbers = #tpu.dot_dimension_numbers<[1], [0], [0], [1], [0, 0, 1, 1], [], []>} : vector<2x64xbf16>, vector<64x64xbf16>, vector<2x64xf32> -> vector<2x64xf32>
    %c0_26 = arith.constant 0 : index
    %c0_27 = arith.constant 0 : index
    %46 = vector.load %arg8[%c0_26, %c0_27] : memref<1x64xf32, #tpu.memory_space<vmem>>, vector<1x64xf32>
    %47 = vector.broadcast %46 : vector<1x64xf32> to vector<2x64xf32>
    %48 = arith.addf %45, %47 : vector<2x64xf32>
    %cst_28 = arith.constant 0.000000e+00 : f32
    %49 = vector.broadcast %cst_28 : f32 to vector<2x64xf32>
    %50 = arith.cmpf oge, %48, %49 : vector<2x64xf32>
    %cst_29 = arith.constant 2.000000e-01 : f32
    %51 = vector.broadcast %cst_29 : f32 to vector<2x64xf32>
    %52 = arith.mulf %51, %48 : vector<2x64xf32>
    %53 = arith.select %50, %48, %52 : vector<2x64xi1>, vector<2x64xf32>
    %c0_30 = arith.constant 0 : index
    %c0_31 = arith.constant 0 : index
    %54 = vector.load %arg9[%c0_30, %c0_31] : memref<64x32xbf16, #tpu.memory_space<vmem>>, vector<64x32xbf16>
    %55 = arith.truncf %53 : vector<2x64xf32> to vector<2x64xbf16>
    %cst_32 = arith.constant dense<0.000000e+00> : vector<2x32xf32>
    %56 = tpu.matmul %55, %54, %cst_32 {dimension_numbers = #tpu.dot_dimension_numbers<[1], [0], [0], [1], [0, 0, 1, 1], [], []>} : vector<2x64xbf16>, vector<64x32xbf16>, vector<2x32xf32> -> vector<2x32xf32>
    %c0_33 = arith.constant 0 : index
    %c0_34 = arith.constant 0 : index
    %57 = vector.load %arg10[%c0_33, %c0_34] : memref<1x32xf32, #tpu.memory_space<vmem>>, vector<1x32xf32>
    %58 = vector.broadcast %57 : vector<1x32xf32> to vector<2x32xf32>
    %59 = arith.addf %56, %58 : vector<2x32xf32>
    %c0_35 = arith.constant 0 : index
    %c0_36 = arith.constant 0 : index
    %60 = vector.load %arg11[%c0_35, %c0_36] : memref<256x32xbf16, #tpu.memory_space<vmem>>, vector<256x32xbf16>
    %61 = arith.extf %60 : vector<256x32xbf16> to vector<256x32xf32>
    %62 = vector.extract_strided_slice %59 {offsets = [0, 0], sizes = [1, 32], strides = [1, 1]} : vector<2x32xf32> to vector<1x32xf32>
    %63 = vector.broadcast %62 : vector<1x32xf32> to vector<256x32xf32>
    %64 = arith.mulf %61, %63 : vector<256x32xf32>
    %65 = vector.extract_strided_slice %59 {offsets = [1, 0], sizes = [1, 32], strides = [1, 1]} : vector<2x32xf32> to vector<1x32xf32>
    %66 = vector.broadcast %65 : vector<1x32xf32> to vector<256x32xf32>
    %67 = arith.mulf %61, %66 : vector<256x32xf32>
    %68 = tpu.concatenate %64, %67 in 0 : vector<256x32xf32>, vector<256x32xf32> -> vector<512x32xf32>
    %c0_37 = arith.constant 0 : index
    %c0_38 = arith.constant 0 : index
    %69 = vector.load %arg12[%c0_37, %c0_38] : memref<32x32xbf16, #tpu.memory_space<vmem>>, vector<32x32xbf16>
    %70 = arith.truncf %68 : vector<512x32xf32> to vector<512x32xbf16>
    %cst_39 = arith.constant dense<0.000000e+00> : vector<512x32xf32>
    %71 = tpu.matmul %70, %69, %cst_39 {dimension_numbers = #tpu.dot_dimension_numbers<[1], [0], [0], [1], [0, 0, 1, 1], [], []>} : vector<512x32xbf16>, vector<32x32xbf16>, vector<512x32xf32> -> vector<512x32xf32>
    %c0_40 = arith.constant 0 : index
    %c0_41 = arith.constant 0 : index
    %72 = vector.load %arg13[%c0_40, %c0_41] : memref<1x32xf32, #tpu.memory_space<vmem>>, vector<1x32xf32>
    %73 = vector.broadcast %72 : vector<1x32xf32> to vector<512x32xf32>
    %74 = arith.addf %71, %73 : vector<512x32xf32>
    %cst_42 = arith.constant 0.000000e+00 : f32
    %75 = vector.broadcast %cst_42 : f32 to vector<512x32xf32>
    %76 = arith.cmpf oge, %74, %75 : vector<512x32xf32>
    %cst_43 = arith.constant 2.000000e-01 : f32
    %77 = vector.broadcast %cst_43 : f32 to vector<512x32xf32>
    %78 = arith.mulf %77, %74 : vector<512x32xf32>
    %79 = arith.select %76, %74, %78 : vector<512x32xi1>, vector<512x32xf32>
    %c0_44 = arith.constant 0 : index
    %c0_45 = arith.constant 0 : index
    %80 = vector.load %arg14[%c0_44, %c0_45] : memref<32x64xbf16, #tpu.memory_space<vmem>>, vector<32x64xbf16>
    %81 = arith.truncf %79 : vector<512x32xf32> to vector<512x32xbf16>
    %cst_46 = arith.constant dense<0.000000e+00> : vector<512x64xf32>
    %82 = tpu.matmul %81, %80, %cst_46 {dimension_numbers = #tpu.dot_dimension_numbers<[1], [0], [0], [1], [0, 0, 1, 1], [], []>} : vector<512x32xbf16>, vector<32x64xbf16>, vector<512x64xf32> -> vector<512x64xf32>
    %c0_47 = arith.constant 0 : index
    %c0_48 = arith.constant 0 : index
    %83 = vector.load %arg15[%c0_47, %c0_48] : memref<1x64xf32, #tpu.memory_space<vmem>>, vector<1x64xf32>
    %84 = vector.broadcast %83 : vector<1x64xf32> to vector<512x64xf32>
    %85 = arith.addf %82, %84 : vector<512x64xf32>
    %cst_49 = arith.constant 0.000000e+00 : f32
    %86 = vector.broadcast %cst_49 : f32 to vector<512x64xf32>
    %87 = arith.cmpf oge, %85, %86 : vector<512x64xf32>
    %cst_50 = arith.constant 2.000000e-01 : f32
    %88 = vector.broadcast %cst_50 : f32 to vector<512x64xf32>
    %89 = arith.mulf %88, %85 : vector<512x64xf32>
    %90 = arith.select %87, %85, %89 : vector<512x64xi1>, vector<512x64xf32>
    %c0_51 = arith.constant 0 : index
    %c0_52 = arith.constant 0 : index
    %91 = vector.load %arg16[%c0_51, %c0_52] : memref<64x128xbf16, #tpu.memory_space<vmem>>, vector<64x128xbf16>
    %92 = arith.truncf %90 : vector<512x64xf32> to vector<512x64xbf16>
    %cst_53 = arith.constant dense<0.000000e+00> : vector<512x128xf32>
    %93 = tpu.matmul %92, %91, %cst_53 {dimension_numbers = #tpu.dot_dimension_numbers<[1], [0], [0], [1], [0, 0, 1, 1], [], []>} : vector<512x64xbf16>, vector<64x128xbf16>, vector<512x128xf32> -> vector<512x128xf32>
    %c0_54 = arith.constant 0 : index
    %c0_55 = arith.constant 0 : index
    %94 = vector.load %arg17[%c0_54, %c0_55] : memref<1x128xf32, #tpu.memory_space<vmem>>, vector<1x128xf32>
    %95 = vector.broadcast %94 : vector<1x128xf32> to vector<512x128xf32>
    %96 = arith.addf %93, %95 : vector<512x128xf32>
    %cst_56 = arith.constant 0.000000e+00 : f32
    %97 = vector.broadcast %cst_56 : f32 to vector<512x128xf32>
    %98 = arith.cmpf oge, %96, %97 : vector<512x128xf32>
    %cst_57 = arith.constant 2.000000e-01 : f32
    %99 = vector.broadcast %cst_57 : f32 to vector<512x128xf32>
    %100 = arith.mulf %99, %96 : vector<512x128xf32>
    %101 = arith.select %98, %96, %100 : vector<512x128xi1>, vector<512x128xf32>
    %c0_58 = arith.constant 0 : index
    %c0_59 = arith.constant 0 : index
    %102 = vector.load %arg18[%c0_58, %c0_59] : memref<128x64xbf16, #tpu.memory_space<vmem>>, vector<128x64xbf16>
    %103 = arith.truncf %101 : vector<512x128xf32> to vector<512x128xbf16>
    %cst_60 = arith.constant dense<0.000000e+00> : vector<512x64xf32>
    %104 = tpu.matmul %103, %102, %cst_60 {dimension_numbers = #tpu.dot_dimension_numbers<[1], [0], [0], [1], [0, 0, 1, 1], [], []>} : vector<512x128xbf16>, vector<128x64xbf16>, vector<512x64xf32> -> vector<512x64xf32>
    %c0_61 = arith.constant 0 : index
    %c0_62 = arith.constant 0 : index
    %105 = vector.load %arg19[%c0_61, %c0_62] : memref<1x64xf32, #tpu.memory_space<vmem>>, vector<1x64xf32>
    %106 = vector.broadcast %105 : vector<1x64xf32> to vector<512x64xf32>
    %107 = arith.addf %104, %106 : vector<512x64xf32>
    %108 = arith.addf %107, %90 : vector<512x64xf32>
    %cst_63 = arith.constant 0.000000e+00 : f32
    %109 = vector.broadcast %cst_63 : f32 to vector<512x64xf32>
    %110 = arith.cmpf oge, %108, %109 : vector<512x64xf32>
    %cst_64 = arith.constant 2.000000e-01 : f32
    %111 = vector.broadcast %cst_64 : f32 to vector<512x64xf32>
    %112 = arith.mulf %111, %108 : vector<512x64xf32>
    %113 = arith.select %110, %108, %112 : vector<512x64xi1>, vector<512x64xf32>
    %c0_65 = arith.constant 0 : index
    %c0_66 = arith.constant 0 : index
    %114 = vector.load %arg20[%c0_65, %c0_66] : memref<256x64xbf16, #tpu.memory_space<vmem>>, vector<256x64xbf16>
    %115 = arith.extf %114 : vector<256x64xbf16> to vector<256x64xf32>
    %116 = tpu.concatenate %115, %115 in 0 : vector<256x64xf32>, vector<256x64xf32> -> vector<512x64xf32>
    %117 = arith.mulf %113, %116 : vector<512x64xf32>
    %c0_67 = arith.constant 0 : index
    %c0_68 = arith.constant 0 : index
    %118 = vector.load %arg33[%c0_67, %c0_68] : memref<512x64xf32, #tpu.memory_space<vmem>>, vector<512x64xf32>
    tpu.vector_store %arg33[%c0_67, %c0_68], %117 {strides = array<i32>} : memref<512x64xf32, #tpu.memory_space<vmem>>, vector<512x64xf32>,
    %119 = vector.extract_strided_slice %117 {offsets = [256, 0], sizes = [256, 64], strides = [1, 1]} : vector<512x64xf32> to vector<256x64xf32>
    %120 = vector.extract_strided_slice %117 {offsets = [0, 0], sizes = [256, 64], strides = [1, 1]} : vector<512x64xf32> to vector<256x64xf32>
    %121 = tpu.concatenate %119, %120 in 0 : vector<256x64xf32>, vector<256x64xf32> -> vector<512x64xf32>
    %c0_69 = arith.constant 0 : index
    %c0_70 = arith.constant 0 : index
    %122 = vector.load %arg34[%c0_69, %c0_70] : memref<512x64xf32, #tpu.memory_space<vmem>>, vector<512x64xf32>
    tpu.vector_store %arg34[%c0_69, %c0_70], %121 {strides = array<i32>} : memref<512x64xf32, #tpu.memory_space<vmem>>, vector<512x64xf32>,
    %c0_71 = arith.constant 0 : index
    %c0_72 = arith.constant 0 : index
    %123 = vector.load %arg21[%c0_71, %c0_72] : memref<64x128xbf16, #tpu.memory_space<vmem>>, vector<64x128xbf16>
    %124 = arith.truncf %121 : vector<512x64xf32> to vector<512x64xbf16>
    %cst_73 = arith.constant dense<0.000000e+00> : vector<512x128xf32>
    %125 = tpu.matmul %124, %123, %cst_73 {dimension_numbers = #tpu.dot_dimension_numbers<[1], [0], [0], [1], [0, 0, 1, 1], [], []>} : vector<512x64xbf16>, vector<64x128xbf16>, vector<512x128xf32> -> vector<512x128xf32>
    %c0_74 = arith.constant 0 : index
    %c0_75 = arith.constant 0 : index
    %126 = vector.load %arg22[%c0_74, %c0_75] : memref<1x128xf32, #tpu.memory_space<vmem>>, vector<1x128xf32>
    %127 = vector.broadcast %126 : vector<1x128xf32> to vector<512x128xf32>
    %128 = arith.addf %125, %127 : vector<512x128xf32>
    %cst_76 = arith.constant 0.000000e+00 : f32
    %129 = vector.broadcast %cst_76 : f32 to vector<512x128xf32>
    %130 = arith.cmpf oge, %128, %129 : vector<512x128xf32>
    %cst_77 = arith.constant 2.000000e-01 : f32
    %131 = vector.broadcast %cst_77 : f32 to vector<512x128xf32>
    %132 = arith.mulf %131, %128 : vector<512x128xf32>
    %133 = arith.select %130, %128, %132 : vector<512x128xi1>, vector<512x128xf32>
    %c0_78 = arith.constant 0 : index
    %c0_79 = arith.constant 0 : index
    %134 = vector.load %arg23[%c0_78, %c0_79] : memref<128x64xbf16, #tpu.memory_space<vmem>>, vector<128x64xbf16>
    %135 = arith.truncf %133 : vector<512x128xf32> to vector<512x128xbf16>
    %cst_80 = arith.constant dense<0.000000e+00> : vector<512x64xf32>
    %136 = tpu.matmul %135, %134, %cst_80 {dimension_numbers = #tpu.dot_dimension_numbers<[1], [0], [0], [1], [0, 0, 1, 1], [], []>} : vector<512x128xbf16>, vector<128x64xbf16>, vector<512x64xf32> -> vector<512x64xf32>
    %c0_81 = arith.constant 0 : index
    %c0_82 = arith.constant 0 : index
    %137 = vector.load %arg24[%c0_81, %c0_82] : memref<1x64xf32, #tpu.memory_space<vmem>>, vector<1x64xf32>
    %138 = vector.broadcast %137 : vector<1x64xf32> to vector<512x64xf32>
    %139 = arith.addf %136, %138 : vector<512x64xf32>
    %140 = arith.addf %139, %121 : vector<512x64xf32>
    %cst_83 = arith.constant 0.000000e+00 : f32
    %141 = vector.broadcast %cst_83 : f32 to vector<512x64xf32>
    %142 = arith.cmpf oge, %140, %141 : vector<512x64xf32>
    %cst_84 = arith.constant 2.000000e-01 : f32
    %143 = vector.broadcast %cst_84 : f32 to vector<512x64xf32>
    %144 = arith.mulf %143, %140 : vector<512x64xf32>
    %145 = arith.select %142, %140, %144 : vector<512x64xi1>, vector<512x64xf32>
    %c0_85 = arith.constant 0 : index
    %c0_86 = arith.constant 0 : index
    %146 = vector.load %arg25[%c0_85, %c0_86] : memref<64x32xbf16, #tpu.memory_space<vmem>>, vector<64x32xbf16>
    %147 = arith.truncf %145 : vector<512x64xf32> to vector<512x64xbf16>
    %cst_87 = arith.constant dense<0.000000e+00> : vector<512x32xf32>
    %148 = tpu.matmul %147, %146, %cst_87 {dimension_numbers = #tpu.dot_dimension_numbers<[1], [0], [0], [1], [0, 0, 1, 1], [], []>} : vector<512x64xbf16>, vector<64x32xbf16>, vector<512x32xf32> -> vector<512x32xf32>
    %c0_88 = arith.constant 0 : index
    %c0_89 = arith.constant 0 : index
    %149 = vector.load %arg26[%c0_88, %c0_89] : memref<1x32xf32, #tpu.memory_space<vmem>>, vector<1x32xf32>
    %150 = vector.broadcast %149 : vector<1x32xf32> to vector<512x32xf32>
    %151 = arith.addf %148, %150 : vector<512x32xf32>
    %cst_90 = arith.constant 0.000000e+00 : f32
    %152 = vector.broadcast %cst_90 : f32 to vector<512x32xf32>
    %153 = arith.cmpf oge, %151, %152 : vector<512x32xf32>
    %cst_91 = arith.constant 2.000000e-01 : f32
    %154 = vector.broadcast %cst_91 : f32 to vector<512x32xf32>
    %155 = arith.mulf %154, %151 : vector<512x32xf32>
    %156 = arith.select %153, %151, %155 : vector<512x32xi1>, vector<512x32xf32>
    %c0_92 = arith.constant 0 : index
    %c0_93 = arith.constant 0 : index
    %157 = vector.load %arg27[%c0_92, %c0_93] : memref<32x64xbf16, #tpu.memory_space<vmem>>, vector<32x64xbf16>
    %158 = arith.truncf %156 : vector<512x32xf32> to vector<512x32xbf16>
    %cst_94 = arith.constant dense<0.000000e+00> : vector<512x64xf32>
    %159 = tpu.matmul %158, %157, %cst_94 {dimension_numbers = #tpu.dot_dimension_numbers<[1], [0], [0], [1], [0, 0, 1, 1], [], []>} : vector<512x32xbf16>, vector<32x64xbf16>, vector<512x64xf32> -> vector<512x64xf32>
    %c0_95 = arith.constant 0 : index
    %c0_96 = arith.constant 0 : index
    %160 = vector.load %arg28[%c0_95, %c0_96] : memref<1x64xf32, #tpu.memory_space<vmem>>, vector<1x64xf32>
    %161 = vector.broadcast %160 : vector<1x64xf32> to vector<512x64xf32>
    %162 = arith.addf %159, %161 : vector<512x64xf32>
    %cst_97 = arith.constant 0.000000e+00 : f32
    %163 = vector.broadcast %cst_97 : f32 to vector<512x64xf32>
    %164 = arith.cmpf oge, %162, %163 : vector<512x64xf32>
    %cst_98 = arith.constant 2.000000e-01 : f32
    %165 = vector.broadcast %cst_98 : f32 to vector<512x64xf32>
    %166 = arith.mulf %165, %162 : vector<512x64xf32>
    %167 = arith.select %164, %162, %166 : vector<512x64xi1>, vector<512x64xf32>
    %c0_99 = arith.constant 0 : index
    %c0_100 = arith.constant 0 : index
    %168 = vector.load %arg29[%c0_99, %c0_100] : memref<64x32xbf16, #tpu.memory_space<vmem>>, vector<64x32xbf16>
    %169 = arith.truncf %167 : vector<512x64xf32> to vector<512x64xbf16>
    %cst_101 = arith.constant dense<0.000000e+00> : vector<512x32xf32>
    %170 = tpu.matmul %169, %168, %cst_101 {dimension_numbers = #tpu.dot_dimension_numbers<[1], [0], [0], [1], [0, 0, 1, 1], [], []>} : vector<512x64xbf16>, vector<64x32xbf16>, vector<512x32xf32> -> vector<512x32xf32>
    %c0_102 = arith.constant 0 : index
    %c0_103 = arith.constant 0 : index
    %171 = vector.load %arg30[%c0_102, %c0_103] : memref<1x32xf32, #tpu.memory_space<vmem>>, vector<1x32xf32>
    %172 = vector.broadcast %171 : vector<1x32xf32> to vector<512x32xf32>
    %173 = arith.addf %170, %172 : vector<512x32xf32>
    %174 = arith.addf %173, %156 : vector<512x32xf32>
    %cst_104 = arith.constant 0.000000e+00 : f32
    %175 = vector.broadcast %cst_104 : f32 to vector<512x32xf32>
    %176 = arith.cmpf oge, %174, %175 : vector<512x32xf32>
    %cst_105 = arith.constant 2.000000e-01 : f32
    %177 = vector.broadcast %cst_105 : f32 to vector<512x32xf32>
    %178 = arith.mulf %177, %174 : vector<512x32xf32>
    %179 = arith.select %176, %174, %178 : vector<512x32xi1>, vector<512x32xf32>
    %c0_106 = arith.constant 0 : index
    %c0_107 = arith.constant 0 : index
    %180 = vector.load %arg31[%c0_106, %c0_107] : memref<32x128xbf16, #tpu.memory_space<vmem>>, vector<32x128xbf16>
    %181 = arith.truncf %179 : vector<512x32xf32> to vector<512x32xbf16>
    %cst_108 = arith.constant dense<0.000000e+00> : vector<512x128xf32>
    %182 = tpu.matmul %181, %180, %cst_108 {dimension_numbers = #tpu.dot_dimension_numbers<[1], [0], [0], [1], [0, 0, 1, 1], [], []>} : vector<512x32xbf16>, vector<32x128xbf16>, vector<512x128xf32> -> vector<512x128xf32>
    %c0_109 = arith.constant 0 : index
    %c0_110 = arith.constant 0 : index
    %183 = vector.load %arg32[%c0_109, %c0_110] : memref<1x128xf32, #tpu.memory_space<vmem>>, vector<1x128xf32>
    %184 = vector.broadcast %183 : vector<1x128xf32> to vector<512x128xf32>
    %185 = arith.addf %182, %184 : vector<512x128xf32>
    %cst_111 = arith.constant 0.000000e+00 : f32
    %186 = vector.broadcast %cst_111 : f32 to vector<512x128xf32>
    %187 = arith.subf %186, %185 : vector<512x128xf32>
    %188 = math.exp %187 : vector<512x128xf32>
    %cst_112 = arith.constant 1.000000e+00 : f32
    %189 = vector.broadcast %cst_112 : f32 to vector<512x128xf32>
    %190 = arith.addf %189, %188 : vector<512x128xf32>
    %cst_113 = arith.constant 1.000000e+00 : f32
    %191 = vector.broadcast %cst_113 : f32 to vector<512x128xf32>
    %192 = arith.divf %191, %190 : vector<512x128xf32>
    %c0_114 = arith.constant 0 : index
    %c0_115 = arith.constant 0 : index
    %193 = vector.load %arg35[%c0_114, %c0_115] : memref<512x128xf32, #tpu.memory_space<vmem>>, vector<512x128xf32>
    tpu.vector_store %arg35[%c0_114, %c0_115], %192 {strides = array<i32>} : memref<512x128xf32, #tpu.memory_space<vmem>>, vector<512x128xf32>,
    return
  }
}

</mosaic_0001>

<llo_original>
// kernel: neural_renderer_forward.1
$region0: #{neural_renderer_forward.1}
  #allocation0 [shape = 'u32[]', space=smem, size = 0x4, offset = 0x4, fixed_abs, tag = 'smem constant byte address 0x4 - core index']
  #allocation1 [shape = 'u32[144,128]{1,0:T(1,128)}', space=vmem, size = 0x12000, scoped, tag = 'internal scratch']
  %s0 = inlined_call_operand.smem [shape: u32[36], index: -1, kind: input, shape index: {}]
  %s1 = sld [smem:[%s0]]
  %s2 = scalar_lea.smem %s0, 1
  %s3 = sld [smem:[%s2]]
  %s4 = scalar_lea.smem %s0, 2
  %s5 = sld [smem:[%s4]]
  %s6 = scalar_lea.smem %s0, 3
  %s7 = sld [smem:[%s6]]
  %s8 = scalar_lea.smem %s0, 4
  %s9 = sld [smem:[%s8]]
  %s10 = scalar_lea.smem %s0, 5
  %s11 = sld [smem:[%s10]]
  %s12 = scalar_lea.smem %s0, 6
  %s13 = sld [smem:[%s12]]
  %s14 = scalar_lea.smem %s0, 7
  %s15 = sld [smem:[%s14]]
  %s16 = scalar_lea.smem %s0, 8
  %s17 = sld [smem:[%s16]]
  %s18 = scalar_lea.smem %s0, 9
  %s19 = sld [smem:[%s18]]
  %s20 = scalar_lea.smem %s0, 10
  %s21 = sld [smem:[%s20]]
  %s22 = scalar_lea.smem %s0, 11
  %s23 = sld [smem:[%s22]]
  %s24 = scalar_lea.smem %s0, 12
  %s25 = sld [smem:[%s24]]
  %s26 = scalar_lea.smem %s0, 13
  %s27 = sld [smem:[%s26]]
  %s28 = scalar_lea.smem %s0, 14
  %s29 = sld [smem:[%s28]]
  %s30 = scalar_lea.smem %s0, 15
  %s31 = sld [smem:[%s30]]
  %s32 = scalar_lea.smem %s0, 16
  %s33 = sld [smem:[%s32]]
  %s34 = scalar_lea.smem %s0, 17
  %s35 = sld [smem:[%s34]]
  %s36 = scalar_lea.smem %s0, 18
  %s37 = sld [smem:[%s36]]
  %s38 = scalar_lea.smem %s0, 19
  %s39 = sld [smem:[%s38]]
  %s40 = scalar_lea.smem %s0, 20
  %s41 = sld [smem:[%s40]]
  %s42 = scalar_lea.smem %s0, 21
  %s43 = sld [smem:[%s42]]
  %s44 = scalar_lea.smem %s0, 22
  %s45 = sld [smem:[%s44]]
  %s46 = scalar_lea.smem %s0, 23
  %s47 = sld [smem:[%s46]]
  %s48 = scalar_lea.smem %s0, 24
  %s49 = sld [smem:[%s48]]
  %s50 = scalar_lea.smem %s0, 25
  %s51 = sld [smem:[%s50]]
  %s52 = scalar_lea.smem %s0, 26
  %s53 = sld [smem:[%s52]]
  %s54 = scalar_lea.smem %s0, 27
  %s55 = sld [smem:[%s54]]
  %s56 = scalar_lea.smem %s0, 28
  %s57 = sld [smem:[%s56]]
  %s58 = scalar_lea.smem %s0, 29
  %s59 = sld [smem:[%s58]]
  %s60 = scalar_lea.smem %s0, 30
  %s61 = sld [smem:[%s60]]
  %s62 = scalar_lea.smem %s0, 31
  %s63 = sld [smem:[%s62]]
  %s64 = scalar_lea.smem %s0, 32
  %s65 = sld [smem:[%s64]]
  %s66 = scalar_lea.smem %s0, 33
  %s67 = sld [smem:[%s66]]
  %s68 = scalar_lea.smem %s0, 34
  %s69 = sld [smem:[%s68]]
  %s70 = scalar_lea.smem %s0, 35
  %s71 = sld [smem:[%s70]]
  %72 = xla_tuple %s67, %s69, %s71
  %s73 = sld [smem:[#allocation0]]
  $region158: #{neural_renderer_forward.1} parent=0
    _
  %s75 = ssub.s32 1, %s73
  %s76 = scalar_select 0, %s75, %s73
  // Predicated region
  $region2: #{neural_renderer_forward.1} parent=0 // pred_check
    _
  $region3: #{neural_renderer_forward.1} parent=0 // pred_check_branch
    %78 = sbr.rel (0) target = $region5
  $region4: #{neural_renderer_forward.1} parent=0 // pred_region
    _
  $region5: #{neural_renderer_forward.1} parent=0 // pred_fallthru
    _
  // Predicated region
  $region6: #{neural_renderer_forward.1} parent=0 // pred_check
    _
  $region7: #{neural_renderer_forward.1} parent=0 // pred_check_branch
    %80 = sbr.rel (0) target = $region9
  $region8: #{neural_renderer_forward.1} parent=0 // pred_region
    _
  $region9: #{neural_renderer_forward.1} parent=0 // pred_fallthru
    _
  // Predicated region
  $region10: #{neural_renderer_forward.1} parent=0 // pred_check
    _
  $region11: #{neural_renderer_forward.1} parent=0 // pred_check_branch
    %82 = sbr.rel (0) target = $region13
  $region12: #{neural_renderer_forward.1} parent=0 // pred_region
    _
  $region13: #{neural_renderer_forward.1} parent=0 // pred_fallthru
    _
  // Predicated region
  $region14: #{neural_renderer_forward.1} parent=0 // pred_check
    _
  $region15: #{neural_renderer_forward.1} parent=0 // pred_check_branch
    %84 = sbr.rel (0) target = $region17
  $region16: #{neural_renderer_forward.1} parent=0 // pred_region
    _
  $region17: #{neural_renderer_forward.1} parent=0 // pred_fallthru
    _
  // Predicated region
  $region18: #{neural_renderer_forward.1} parent=0 // pred_check
    _
  $region19: #{neural_renderer_forward.1} parent=0 // pred_check_branch
    %86 = sbr.rel (0) target = $region21
  $region20: #{neural_renderer_forward.1} parent=0 // pred_region
    _
  $region21: #{neural_renderer_forward.1} parent=0 // pred_fallthru
    _
  // Predicated region
  $region22: #{neural_renderer_forward.1} parent=0 // pred_check
    _
  $region23: #{neural_renderer_forward.1} parent=0 // pred_check_branch
    %88 = sbr.rel (0) target = $region25
  $region24: #{neural_renderer_forward.1} parent=0 // pred_region
    _
  $region25: #{neural_renderer_forward.1} parent=0 // pred_fallthru
    _
  // Predicated region
  $region26: #{neural_renderer_forward.1} parent=0 // pred_check
    _
  $region27: #{neural_renderer_forward.1} parent=0 // pred_check_branch
    %90 = sbr.rel (0) target = $region29
  $region28: #{neural_renderer_forward.1} parent=0 // pred_region
    _
  $region29: #{neural_renderer_forward.1} parent=0 // pred_fallthru
    _
  // Predicated region
  $region30: #{neural_renderer_forward.1} parent=0 // pred_check
    _
  $region31: #{neural_renderer_forward.1} parent=0 // pred_check_branch
    %92 = sbr.rel (0) target = $region33
  $region32: #{neural_renderer_forward.1} parent=0 // pred_region
    _
  $region33: #{neural_renderer_forward.1} parent=0 // pred_fallthru
    _
  // Predicated region
  $region34: #{neural_renderer_forward.1} parent=0 // pred_check
    _
  $region35: #{neural_renderer_forward.1} parent=0 // pred_check_branch
    %94 = sbr.rel (0) target = $region37
  $region36: #{neural_renderer_forward.1} parent=0 // pred_region
    _
  $region37: #{neural_renderer_forward.1} parent=0 // pred_fallthru
    _
  // Predicated region
  $region38: #{neural_renderer_forward.1} parent=0 // pred_check
    _
  $region39: #{neural_renderer_forward.1} parent=0 // pred_check_branch
    %96 = sbr.rel (0) target = $region41
  $region40: #{neural_renderer_forward.1} parent=0 // pred_region
    _
  $region41: #{neural_renderer_forward.1} parent=0 // pred_fallthru
    _
  // Predicated region
  $region42: #{neural_renderer_forward.1} parent=0 // pred_check
    _
  $region43: #{neural_renderer_forward.1} parent=0 // pred_check_branch
    %98 = sbr.rel (0) target = $region45
  $region44: #{neural_renderer_forward.1} parent=0 // pred_region
    _
  $region45: #{neural_renderer_forward.1} parent=0 // pred_fallthru
    _
  // Predicated region
  $region46: #{neural_renderer_forward.1} parent=0 // pred_check
    _
  $region47: #{neural_renderer_forward.1} parent=0 // pred_check_branch
    %100 = sbr.rel (0) target = $region49
  $region48: #{neural_renderer_forward.1} parent=0 // pred_region
    _
  $region49: #{neural_renderer_forward.1} parent=0 // pred_fallthru
    _
  // Predicated region
  $region50: #{neural_renderer_forward.1} parent=0 // pred_check
    _
  $region51: #{neural_renderer_forward.1} parent=0 // pred_check_branch
    %102 = sbr.rel (0) target = $region53
  $region52: #{neural_renderer_forward.1} parent=0 // pred_region
    _
  $region53: #{neural_renderer_forward.1} parent=0 // pred_fallthru
    _
  // Predicated region
  $region54: #{neural_renderer_forward.1} parent=0 // pred_check
    _
  $region55: #{neural_renderer_forward.1} parent=0 // pred_check_branch
    %104 = sbr.rel (0) target = $region57
  $region56: #{neural_renderer_forward.1} parent=0 // pred_region
    _
  $region57: #{neural_renderer_forward.1} parent=0 // pred_fallthru
    _
  // Predicated region
  $region58: #{neural_renderer_forward.1} parent=0 // pred_check
    _
  $region59: #{neural_renderer_forward.1} parent=0 // pred_check_branch
    %106 = sbr.rel (0) target = $region61
  $region60: #{neural_renderer_forward.1} parent=0 // pred_region
    _
  $region61: #{neural_renderer_forward.1} parent=0 // pred_fallthru
    _
  // Predicated region
  $region62: #{neural_renderer_forward.1} parent=0 // pred_check
    _
  $region63: #{neural_renderer_forward.1} parent=0 // pred_check_branch
    %108 = sbr.rel (0) target = $region65
  $region64: #{neural_renderer_forward.1} parent=0 // pred_region
    _
  $region65: #{neural_renderer_forward.1} parent=0 // pred_fallthru
    _
  // Predicated region
  $region66: #{neural_renderer_forward.1} parent=0 // pred_check
    _
  $region67: #{neural_renderer_forward.1} parent=0 // pred_check_branch
    %110 = sbr.rel (0) target = $region69
  $region68: #{neural_renderer_forward.1} parent=0 // pred_region
    _
  $region69: #{neural_renderer_forward.1} parent=0 // pred_fallthru
    _
  // Predicated region
  $region70: #{neural_renderer_forward.1} parent=0 // pred_check
    _
  $region71: #{neural_renderer_forward.1} parent=0 // pred_check_branch
    %112 = sbr.rel (0) target = $region73
  $region72: #{neural_renderer_forward.1} parent=0 // pred_region
    _
  $region73: #{neural_renderer_forward.1} parent=0 // pred_fallthru
    _
  // Predicated region
  $region74: #{neural_renderer_forward.1} parent=0 // pred_check
    _
  $region75: #{neural_renderer_forward.1} parent=0 // pred_check_branch
    %114 = sbr.rel (0) target = $region77
  $region76: #{neural_renderer_forward.1} parent=0 // pred_region
    _
  $region77: #{neural_renderer_forward.1} parent=0 // pred_fallthru
    _
  // Predicated region
  $region78: #{neural_renderer_forward.1} parent=0 // pred_check
    _
  $region79: #{neural_renderer_forward.1} parent=0 // pred_check_branch
    %116 = sbr.rel (0) target = $region81
  $region80: #{neural_renderer_forward.1} parent=0 // pred_region
    _
  $region81: #{neural_renderer_forward.1} parent=0 // pred_fallthru
    _
  // Predicated region
  $region82: #{neural_renderer_forward.1} parent=0 // pred_check
    _
  $region83: #{neural_renderer_forward.1} parent=0 // pred_check_branch
    %118 = sbr.rel (0) target = $region85
  $region84: #{neural_renderer_forward.1} parent=0 // pred_region
    _
  $region85: #{neural_renderer_forward.1} parent=0 // pred_fallthru
    _
  // Predicated region
  $region86: #{neural_renderer_forward.1} parent=0 // pred_check
    _
  $region87: #{neural_renderer_forward.1} parent=0 // pred_check_branch
    %120 = sbr.rel (0) target = $region89
  $region88: #{neural_renderer_forward.1} parent=0 // pred_region
    _
  $region89: #{neural_renderer_forward.1} parent=0 // pred_fallthru
    _
  // Predicated region
  $region90: #{neural_renderer_forward.1} parent=0 // pred_check
    _
  $region91: #{neural_renderer_forward.1} parent=0 // pred_check_branch
    %122 = sbr.rel (0) target = $region93
  $region92: #{neural_renderer_forward.1} parent=0 // pred_region
    _
  $region93: #{neural_renderer_forward.1} parent=0 // pred_fallthru
    _
  // Predicated region
  $region94: #{neural_renderer_forward.1} parent=0 // pred_check
    _
  $region95: #{neural_renderer_forward.1} parent=0 // pred_check_branch
    %124 = sbr.rel (0) target = $region97
  $region96: #{neural_renderer_forward.1} parent=0 // pred_region
    _
  $region97: #{neural_renderer_forward.1} parent=0 // pred_fallthru
    _
  // Predicated region
  $region98: #{neural_renderer_forward.1} parent=0 // pred_check
    _
  $region99: #{neural_renderer_forward.1} parent=0 // pred_check_branch
    %126 = sbr.rel (0) target = $region101
  $region100: #{neural_renderer_forward.1} parent=0 // pred_region
    _
  $region101: #{neural_renderer_forward.1} parent=0 // pred_fallthru
    _
  // Predicated region
  $region102: #{neural_renderer_forward.1} parent=0 // pred_check
    _
  $region103: #{neural_renderer_forward.1} parent=0 // pred_check_branch
    %128 = sbr.rel (0) target = $region105
  $region104: #{neural_renderer_forward.1} parent=0 // pred_region
    _
  $region105: #{neural_renderer_forward.1} parent=0 // pred_fallthru
    _
  // Predicated region
  $region106: #{neural_renderer_forward.1} parent=0 // pred_check
    _
  $region107: #{neural_renderer_forward.1} parent=0 // pred_check_branch
    %130 = sbr.rel (0) target = $region109
  $region108: #{neural_renderer_forward.1} parent=0 // pred_region
    _
  $region109: #{neural_renderer_forward.1} parent=0 // pred_fallthru
    _
  // Predicated region
  $region110: #{neural_renderer_forward.1} parent=0 // pred_check
    _
  $region111: #{neural_renderer_forward.1} parent=0 // pred_check_branch
    %132 = sbr.rel (0) target = $region113
  $region112: #{neural_renderer_forward.1} parent=0 // pred_region
    _
  $region113: #{neural_renderer_forward.1} parent=0 // pred_fallthru
    _
  // Predicated region
  $region114: #{neural_renderer_forward.1} parent=0 // pred_check
    _
  $region115: #{neural_renderer_forward.1} parent=0 // pred_check_branch
    %134 = sbr.rel (0) target = $region117
  $region116: #{neural_renderer_forward.1} parent=0 // pred_region
    _
  $region117: #{neural_renderer_forward.1} parent=0 // pred_fallthru
    _
  // Predicated region
  $region118: #{neural_renderer_forward.1} parent=0 // pred_check
    _
  $region119: #{neural_renderer_forward.1} parent=0 // pred_check_branch
    %136 = sbr.rel (0) target = $region121
  $region120: #{neural_renderer_forward.1} parent=0 // pred_region
    _
  $region121: #{neural_renderer_forward.1} parent=0 // pred_fallthru
    _
  // Predicated region
  $region122: #{neural_renderer_forward.1} parent=0 // pred_check
    _
  $region123: #{neural_renderer_forward.1} parent=0 // pred_check_branch
    %138 = sbr.rel (0) target = $region125
  $region124: #{neural_renderer_forward.1} parent=0 // pred_region
    _
  $region125: #{neural_renderer_forward.1} parent=0 // pred_fallthru
    _
  // Predicated region
  $region126: #{neural_renderer_forward.1} parent=0 // pred_check
    _
  $region127: #{neural_renderer_forward.1} parent=0 // pred_check_branch
    %140 = sbr.rel (0) target = $region129
  $region128: #{neural_renderer_forward.1} parent=0 // pred_region
    _
  $region129: #{neural_renderer_forward.1} parent=0 // pred_fallthru
    _
  // Predicated region
  $region130: #{neural_renderer_forward.1} parent=0 // pred_check
    _
  $region131: #{neural_renderer_forward.1} parent=0 // pred_check_branch
    %142 = sbr.rel (0) target = $region133
  $region132: #{neural_renderer_forward.1} parent=0 // pred_region
    _
  $region133: #{neural_renderer_forward.1} parent=0 // pred_fallthru
    _
  %v144 = vld [vmem:[%s1] sm:$0x3]
  %v145 = vmul.f32 %v144, %v144
  %vm146 = vcmask 517120
  %v147 = vsel %vm146, %v145, 0.0
  %148 = vadd.xlane.f32.xlu0 %v147
  %v149 = vpop.xlane.xlu0 %148
  %v150 = vrcp.pop 64.0
  %v151 = vmul.f32 %v149, %v150
  %v152 = vadd.f32 %v151, 1e-08
  %v153 = vrsqrt.pop %v152
  %v154 = vmul.f32 %v144, %v153
  %v155 = vld [vmem:[%s3] sm:$0x3]
  %v156 = vld [vmem:[%s5] sm:$0xf]
  %v157 = vld [vmem:[%s5 + $0x4] sm:$0xf]
  %v158 = vld [vmem:[%s5 + $0x8] sm:$0xf]
  %v159 = vld [vmem:[%s5 + $0xc] sm:$0x1]
  %v160 = vpack.c.bf16 %v155, %v155
  %v161 = vld [vmem:[%s7] sm:$0x1]
  %v163 = vlaneseq
  %v164 = vshrl.u32 %v163, 7
  %v165 = vsub.s32 0, %v164
  %v166 = vrot.slane %v161, %v165
  %v172 = vunpack.c.l.b16 %v156
  %v173 = vunpack.c.l.b16 %v157
  %v174 = vunpack.c.l.b16 %v158
  %v175 = vunpack.c.l.b16 %v159
  %v176 = vpack.c.b16 %v173, %v172
  %v177 = vpack.c.b16 %v175, %v174
  %vm179 = vcmask 203776
  %v181 = vsel %vm179, %v160, 0
  %vm183 = vcmask 1043456
  %vm184 = vcmask 1044480
  %v185 = vsel %vm183, 4294967295, 65535
  %v186 = vsel %vm184, %v185, 0
  %v188 = vand.u32 %v177, %v186
  %190 = vmatprep.subr.bf16.mxu0 0
  %191 = vmatpush1.bf16.msra.mxu0 %v176
  %192 = vmatprep.subr.bf16.mxu0 0
  %193 = vmatpush1.bf16.msra.mxu0 %v188
  %194 = vmatprep.subr.bf16.mxu0 0
  %195 = vmatpush1.bf16.msra.mxu0 0
  %196 = vmatprep.subr.bf16.mxu0 0
  %197 = vmatpush1.bf16.msra.mxu0 0
  %198 = vmatprep.subr.bf16.mxu0 0
  %199 = vmatpush1.bf16.msra.mxu0 0
  %200 = vmatprep.subr.bf16.mxu0 0
  %201 = vmatpush1.bf16.msra.mxu0 0
  %202 = vmatprep.subr.bf16.mxu0 0
  %203 = vmatpush1.bf16.msra.mxu0 0
  %204 = vmatprep.subr.bf16.mxu0 0
  %205 = vmatpush1.bf16.msra.mxu0 0
  %206 = vmatprep.subr.bf16.mxu0 0
  %207 = vmatpush1.bf16.msra.mxu0 0
  %208 = vmatprep.subr.bf16.mxu0 0
  %209 = vmatpush1.bf16.msra.mxu0 0
  %210 = vmatprep.subr.bf16.mxu0 0
  %211 = vmatpush1.bf16.msra.mxu0 0
  %212 = vmatprep.subr.bf16.mxu0 0
  %213 = vmatpush1.bf16.msra.mxu0 0
  %214 = vmatprep.subr.bf16.mxu0 0
  %215 = vmatpush1.bf16.msra.mxu0 0
  %216 = vmatprep.subr.bf16.mxu0 0
  %217 = vmatpush1.bf16.msra.mxu0 0
  %218 = vmatprep.subr.bf16.mxu0 0
  %219 = vmatpush1.bf16.msra.mxu0 0
  %220 = vmatprep.subr.bf16.mxu0 0
  %221 = vmatpush1.bf16.msra.mxu0 0
  %222 = vmatprep.mubr.bf16.mxu0 0
  %223 = vmatmul.mubr.bf16.gmra.mrb[0].mxu0 %v181
  %v224 = vpop.f32.mrb[0].mxu0
  %v225 = vadd.f32 %v166, %v224
  %v226 = vpop.f32.mrb[0].mxu0
  %v227 = vpop.f32.mrb[0].mxu0
  %v228 = vpop.f32.mrb[0].mxu0
  %229 = vdwg.mxu0
  %v230 = vmul.f32 %v225, %v225
  %v231 = vsel %vm146, %v230, 0.0
  %232 = vadd.xlane.f32.xlu0 %v231
  %v233 = vpop.xlane.xlu0 %232
  %v234 = vmul.f32 %v233, %v150
  %v235 = vadd.f32 %v234, 1e-08
  %v236 = vrsqrt.pop %v235
  %v237 = vmul.f32 %v225, %v236
  %v238 = vld [vmem:[%s9] sm:$0xf]
  %v239 = vld [vmem:[%s9 + $0x4] sm:$0xf]
  %v240 = vld [vmem:[%s9 + $0x8] sm:$0xf]
  %v241 = vld [vmem:[%s9 + $0xc] sm:$0xf]
  %v242 = vld [vmem:[%s9 + $0x10] sm:$0xf]
  %v243 = vld [vmem:[%s9 + $0x14] sm:$0xf]
  %v244 = vld [vmem:[%s9 + $0x18] sm:$0xf]
  %v245 = vld [vmem:[%s9 + $0x1c] sm:$0xf]
  %v246 = vpack.c.bf16 %v154, %v154
  %v247 = vld [vmem:[%s11] sm:$0xf]
  %v248 = vld [vmem:[%s11 + $0x4] sm:$0xf]
  %v249 = vld [vmem:[%s11 + $0x8] sm:$0xf]
  %v250 = vld [vmem:[%s11 + $0xc] sm:$0xf]
  %v251 = vld [vmem:[%s11 + $0x10] sm:$0xf]
  %v252 = vld [vmem:[%s11 + $0x14] sm:$0xf]
  %v253 = vld [vmem:[%s11 + $0x18] sm:$0xf]
  %v254 = vld [vmem:[%s11 + $0x1c] sm:$0xf]
  %v255 = vpack.c.bf16 %v237, %v237
  %v264 = vunpack.c.l.b16 %v247
  %v265 = vunpack.c.l.b16 %v248
  %v266 = vunpack.c.l.b16 %v249
  %v267 = vunpack.c.l.b16 %v250
  %v268 = vunpack.c.l.b16 %v251
  %v269 = vunpack.c.l.b16 %v252
  %v270 = vunpack.c.l.b16 %v253
  %v271 = vunpack.c.l.b16 %v254
  %v272 = vpack.c.b16 %v265, %v264
  %v273 = vpack.c.b16 %v267, %v266
  %v274 = vpack.c.b16 %v269, %v268
  %v275 = vpack.c.b16 %v271, %v270
  %vm280 = vcmask 523264
  %v282 = vsel %vm280, %v255, 0
  %284 = vmatprep.subr.bf16.mxu0 0
  %285 = vmatpush1.bf16.msra.mxu0 %v272
  %286 = vmatprep.subr.bf16.mxu0 0
  %287 = vmatpush1.bf16.msra.mxu0 %v273
  %288 = vmatprep.subr.bf16.mxu0 0
  %289 = vmatpush1.bf16.msra.mxu0 %v274
  %290 = vmatprep.subr.bf16.mxu0 0
  %291 = vmatpush1.bf16.msra.mxu0 %v275
  %292 = vmatprep.subr.bf16.mxu0 0
  %293 = vmatpush1.bf16.msra.mxu0 0
  %294 = vmatprep.subr.bf16.mxu0 0
  %295 = vmatpush1.bf16.msra.mxu0 0
  %296 = vmatprep.subr.bf16.mxu0 0
  %297 = vmatpush1.bf16.msra.mxu0 0
  %298 = vmatprep.subr.bf16.mxu0 0
  %299 = vmatpush1.bf16.msra.mxu0 0
  %300 = vmatprep.subr.bf16.mxu0 0
  %301 = vmatpush1.bf16.msra.mxu0 0
  %302 = vmatprep.subr.bf16.mxu0 0
  %303 = vmatpush1.bf16.msra.mxu0 0
  %304 = vmatprep.subr.bf16.mxu0 0
  %305 = vmatpush1.bf16.msra.mxu0 0
  %306 = vmatprep.subr.bf16.mxu0 0
  %307 = vmatpush1.bf16.msra.mxu0 0
  %308 = vmatprep.subr.bf16.mxu0 0
  %309 = vmatpush1.bf16.msra.mxu0 0
  %310 = vmatprep.subr.bf16.mxu0 0
  %311 = vmatpush1.bf16.msra.mxu0 0
  %312 = vmatprep.subr.bf16.mxu0 0
  %313 = vmatpush1.bf16.msra.mxu0 0
  %314 = vmatprep.subr.bf16.mxu0 0
  %315 = vmatpush1.bf16.msra.mxu0 0
  %316 = vmatprep.mubr.bf16.mxu0 0
  %317 = vmatmul.mubr.bf16.gmra.mrb[0].mxu0 %v282
  %v318 = vpop.f32.mrb[0].mxu0
  %v319 = vadd.f32 0.0, %v318
  %v320 = vpop.f32.mrb[0].mxu0
  %v321 = vpop.f32.mrb[0].mxu0
  %v322 = vpop.f32.mrb[0].mxu0
  %323 = vdwg.mxu0
  %v332 = vunpack.c.l.b16 %v238
  %v333 = vunpack.c.l.b16 %v239
  %v334 = vunpack.c.l.b16 %v240
  %v335 = vunpack.c.l.b16 %v241
  %v336 = vunpack.c.l.b16 %v242
  %v337 = vunpack.c.l.b16 %v243
  %v338 = vunpack.c.l.b16 %v244
  %v339 = vunpack.c.l.b16 %v245
  %v340 = vpack.c.b16 %v333, %v332
  %v341 = vpack.c.b16 %v335, %v334
  %v342 = vpack.c.b16 %v337, %v336
  %v343 = vpack.c.b16 %v339, %v338
  %v349 = vsel %vm280, %v246, 0
  %351 = vmatprep.subr.bf16.mxu0 0
  %352 = vmatpush1.bf16.msra.mxu0 %v340
  %353 = vmatprep.subr.bf16.mxu0 0
  %354 = vmatpush1.bf16.msra.mxu0 %v341
  %355 = vmatprep.subr.bf16.mxu0 0
  %356 = vmatpush1.bf16.msra.mxu0 %v342
  %357 = vmatprep.subr.bf16.mxu0 0
  %358 = vmatpush1.bf16.msra.mxu0 %v343
  %359 = vmatprep.subr.bf16.mxu0 0
  %360 = vmatpush1.bf16.msra.mxu0 0
  %361 = vmatprep.subr.bf16.mxu0 0
  %362 = vmatpush1.bf16.msra.mxu0 0
  %363 = vmatprep.subr.bf16.mxu0 0
  %364 = vmatpush1.bf16.msra.mxu0 0
  %365 = vmatprep.subr.bf16.mxu0 0
  %366 = vmatpush1.bf16.msra.mxu0 0
  %367 = vmatprep.subr.bf16.mxu0 0
  %368 = vmatpush1.bf16.msra.mxu0 0
  %369 = vmatprep.subr.bf16.mxu0 0
  %370 = vmatpush1.bf16.msra.mxu0 0
  %371 = vmatprep.subr.bf16.mxu0 0
  %372 = vmatpush1.bf16.msra.mxu0 0
  %373 = vmatprep.subr.bf16.mxu0 0
  %374 = vmatpush1.bf16.msra.mxu0 0
  %375 = vmatprep.subr.bf16.mxu0 0
  %376 = vmatpush1.bf16.msra.mxu0 0
  %377 = vmatprep.subr.bf16.mxu0 0
  %378 = vmatpush1.bf16.msra.mxu0 0
  %379 = vmatprep.subr.bf16.mxu0 0
  %380 = vmatpush1.bf16.msra.mxu0 0
  %381 = vmatprep.subr.bf16.mxu0 0
  %382 = vmatpush1.bf16.msra.mxu0 0
  %383 = vmatprep.mubr.bf16.mxu0 0
  %384 = vmatmul.mubr.bf16.gmra.mrb[0].mxu0 %v349
  %v385 = vpop.f32.mrb[0].mxu0
  %v386 = vadd.f32 %v319, %v385
  %v387 = vpop.f32.mrb[0].mxu0
  %v388 = vpop.f32.mrb[0].mxu0
  %v389 = vpop.f32.mrb[0].mxu0
  %390 = vdwg.mxu0
  %v391 = vld [vmem:[%s13] sm:$0x1]
  %v393 = vlaneseq
  %v394 = vshrl.u32 %v393, 7
  %v395 = vsub.s32 0, %v394
  %v396 = vrot.slane %v391, %v395
  %v398 = vadd.f32 %v386, %v396
  %vm399 = vcmp.ge.f32.partialorder %v398, 0.0
  %v400 = vmul.f32 %v398, 0.2
  %v401 = vsel %vm399, %v398, %v400
  %v402 = vld [vmem:[%s15] sm:$0xf]
  %v403 = vld [vmem:[%s15 + $0x4] sm:$0xf]
  %v404 = vld [vmem:[%s15 + $0x8] sm:$0xf]
  %v405 = vld [vmem:[%s15 + $0xc] sm:$0xf]
  %v406 = vld [vmem:[%s15 + $0x10] sm:$0xf]
  %v407 = vld [vmem:[%s15 + $0x14] sm:$0xf]
  %v408 = vld [vmem:[%s15 + $0x18] sm:$0xf]
  %v409 = vld [vmem:[%s15 + $0x1c] sm:$0xf]
  %v410 = vpack.c.bf16 %v401, %v401
  %v411 = vld [vmem:[%s17] sm:$0x1]
  %v413 = vlaneseq
  %v414 = vshrl.u32 %v413, 7
  %v415 = vsub.s32 0, %v414
  %v416 = vrot.slane %v411, %v415
  %v426 = vunpack.c.l.b16 %v402
  %v427 = vunpack.c.l.b16 %v403
  %v428 = vunpack.c.l.b16 %v404
  %v429 = vunpack.c.l.b16 %v405
  %v430 = vunpack.c.l.b16 %v406
  %v431 = vunpack.c.l.b16 %v407
  %v432 = vunpack.c.l.b16 %v408
  %v433 = vunpack.c.l.b16 %v409
  %v434 = vpack.c.b16 %v427, %v426
  %v435 = vpack.c.b16 %v429, %v428
  %v436 = vpack.c.b16 %v431, %v430
  %v437 = vpack.c.b16 %v433, %v432
  %v443 = vsel %vm280, %v410, 0
  %445 = vmatprep.subr.bf16.mxu0 0
  %446 = vmatpush1.bf16.msra.mxu0 %v434
  %447 = vmatprep.subr.bf16.mxu0 0
  %448 = vmatpush1.bf16.msra.mxu0 %v435
  %449 = vmatprep.subr.bf16.mxu0 0
  %450 = vmatpush1.bf16.msra.mxu0 %v436
  %451 = vmatprep.subr.bf16.mxu0 0
  %452 = vmatpush1.bf16.msra.mxu0 %v437
  %453 = vmatprep.subr.bf16.mxu0 0
  %454 = vmatpush1.bf16.msra.mxu0 0
  %455 = vmatprep.subr.bf16.mxu0 0
  %456 = vmatpush1.bf16.msra.mxu0 0
  %457 = vmatprep.subr.bf16.mxu0 0
  %458 = vmatpush1.bf16.msra.mxu0 0
  %459 = vmatprep.subr.bf16.mxu0 0
  %460 = vmatpush1.bf16.msra.mxu0 0
  %461 = vmatprep.subr.bf16.mxu0 0
  %462 = vmatpush1.bf16.msra.mxu0 0
  %463 = vmatprep.subr.bf16.mxu0 0
  %464 = vmatpush1.bf16.msra.mxu0 0
  %465 = vmatprep.subr.bf16.mxu0 0
  %466 = vmatpush1.bf16.msra.mxu0 0
  %467 = vmatprep.subr.bf16.mxu0 0
  %468 = vmatpush1.bf16.msra.mxu0 0
  %469 = vmatprep.subr.bf16.mxu0 0
  %470 = vmatpush1.bf16.msra.mxu0 0
  %471 = vmatprep.subr.bf16.mxu0 0
  %472 = vmatpush1.bf16.msra.mxu0 0
  %473 = vmatprep.subr.bf16.mxu0 0
  %474 = vmatpush1.bf16.msra.mxu0 0
  %475 = vmatprep.subr.bf16.mxu0 0
  %476 = vmatpush1.bf16.msra.mxu0 0
  %477 = vmatprep.mubr.bf16.mxu0 0
  %478 = vmatmul.mubr.bf16.gmra.mrb[0].mxu0 %v443
  %v479 = vpop.f32.mrb[0].mxu0
  %v480 = vadd.f32 %v416, %v479
  %v481 = vpop.f32.mrb[0].mxu0
  %v482 = vpop.f32.mrb[0].mxu0
  %v483 = vpop.f32.mrb[0].mxu0
  %484 = vdwg.mxu0
  %vm485 = vcmp.ge.f32.partialorder %v480, 0.0
  %v486 = vmul.f32 %v480, 0.2
  %v487 = vsel %vm485, %v480, %v486
  %v488 = vld [vmem:[%s19] sm:$0xf]
  %v489 = vld [vmem:[%s19 + $0x4] sm:$0xf]
  %v490 = vld [vmem:[%s19 + $0x8] sm:$0xf]
  %v491 = vld [vmem:[%s19 + $0xc] sm:$0xf]
  %v492 = vld [vmem:[%s19 + $0x10] sm:$0xf]
  %v493 = vld [vmem:[%s19 + $0x14] sm:$0xf]
  %v494 = vld [vmem:[%s19 + $0x18] sm:$0xf]
  %v495 = vld [vmem:[%s19 + $0x1c] sm:$0xf]
  %v496 = vpack.c.bf16 %v487, %v487
  %v497 = vld [vmem:[%s21] sm:$0x1]
  %v499 = vlaneseq
  %v500 = vshrl.u32 %v499, 7
  %v501 = vsub.s32 0, %v500
  %v502 = vrot.slane %v497, %v501
  %v512 = vunpack.c.l.b16 %v488
  %v513 = vunpack.c.l.b16 %v489
  %v514 = vunpack.c.l.b16 %v490
  %v515 = vunpack.c.l.b16 %v491
  %v516 = vunpack.c.l.b16 %v492
  %v517 = vunpack.c.l.b16 %v493
  %v518 = vunpack.c.l.b16 %v494
  %v519 = vunpack.c.l.b16 %v495
  %v520 = vpack.c.b16 %v513, %v512
  %v521 = vpack.c.b16 %v515, %v514
  %v522 = vpack.c.b16 %v517, %v516
  %v523 = vpack.c.b16 %v519, %v518
  %v529 = vsel %vm280, %v496, 0
  %531 = vmatprep.subr.bf16.mxu0 0
  %532 = vmatpush1.bf16.msra.mxu0 %v520
  %533 = vmatprep.subr.bf16.mxu0 0
  %534 = vmatpush1.bf16.msra.mxu0 %v521
  %535 = vmatprep.subr.bf16.mxu0 0
  %536 = vmatpush1.bf16.msra.mxu0 %v522
  %537 = vmatprep.subr.bf16.mxu0 0
  %538 = vmatpush1.bf16.msra.mxu0 %v523
  %539 = vmatprep.subr.bf16.mxu0 0
  %540 = vmatpush1.bf16.msra.mxu0 0
  %541 = vmatprep.subr.bf16.mxu0 0
  %542 = vmatpush1.bf16.msra.mxu0 0
  %543 = vmatprep.subr.bf16.mxu0 0
  %544 = vmatpush1.bf16.msra.mxu0 0
  %545 = vmatprep.subr.bf16.mxu0 0
  %546 = vmatpush1.bf16.msra.mxu0 0
  %547 = vmatprep.subr.bf16.mxu0 0
  %548 = vmatpush1.bf16.msra.mxu0 0
  %549 = vmatprep.subr.bf16.mxu0 0
  %550 = vmatpush1.bf16.msra.mxu0 0
  %551 = vmatprep.subr.bf16.mxu0 0
  %552 = vmatpush1.bf16.msra.mxu0 0
  %553 = vmatprep.subr.bf16.mxu0 0
  %554 = vmatpush1.bf16.msra.mxu0 0
  %555 = vmatprep.subr.bf16.mxu0 0
  %556 = vmatpush1.bf16.msra.mxu0 0
  %557 = vmatprep.subr.bf16.mxu0 0
  %558 = vmatpush1.bf16.msra.mxu0 0
  %559 = vmatprep.subr.bf16.mxu0 0
  %560 = vmatpush1.bf16.msra.mxu0 0
  %561 = vmatprep.subr.bf16.mxu0 0
  %562 = vmatpush1.bf16.msra.mxu0 0
  %563 = vmatprep.mubr.bf16.mxu0 0
  %564 = vmatmul.mubr.bf16.gmra.mrb[0].mxu0 %v529
  %v565 = vpop.f32.mrb[0].mxu0
  %v566 = vadd.f32 %v502, %v565
  %v567 = vpop.f32.mrb[0].mxu0
  %v568 = vpop.f32.mrb[0].mxu0
  %v569 = vpop.f32.mrb[0].mxu0
  %570 = vdwg.mxu0
  %v571 = vld [vmem:[%s23] sm:$0xf]
  %v572 = vld [vmem:[%s23 + $0x4] sm:$0xf]
  %v573 = vld [vmem:[%s23 + $0x8] sm:$0xf]
  %v574 = vld [vmem:[%s23 + $0xc] sm:$0xf]
  %v575 = vld [vmem:[%s23 + $0x10] sm:$0xf]
  %v576 = vld [vmem:[%s23 + $0x14] sm:$0xf]
  %v577 = vld [vmem:[%s23 + $0x18] sm:$0xf]
  %v578 = vld [vmem:[%s23 + $0x1c] sm:$0xf]
  %v579 = vld [vmem:[%s23 + $0x20] sm:$0xf]
  %v580 = vld [vmem:[%s23 + $0x24] sm:$0xf]
  %v581 = vld [vmem:[%s23 + $0x28] sm:$0xf]
  %v582 = vld [vmem:[%s23 + $0x2c] sm:$0xf]
  %v583 = vld [vmem:[%s23 + $0x30] sm:$0xf]
  %v584 = vld [vmem:[%s23 + $0x34] sm:$0xf]
  %v585 = vld [vmem:[%s23 + $0x38] sm:$0xf]
  %v586 = vld [vmem:[%s23 + $0x3c] sm:$0xf]
  %v587 = vld [vmem:[%s23 + $0x40] sm:$0xf]
  %v588 = vld [vmem:[%s23 + $0x44] sm:$0xf]
  %v589 = vld [vmem:[%s23 + $0x48] sm:$0xf]
  %v590 = vld [vmem:[%s23 + $0x4c] sm:$0xf]
  %v591 = vld [vmem:[%s23 + $0x50] sm:$0xf]
  %v592 = vld [vmem:[%s23 + $0x54] sm:$0xf]
  %v593 = vld [vmem:[%s23 + $0x58] sm:$0xf]
  %v594 = vld [vmem:[%s23 + $0x5c] sm:$0xf]
  %v595 = vld [vmem:[%s23 + $0x60] sm:$0xf]
  %v596 = vld [vmem:[%s23 + $0x64] sm:$0xf]
  %v597 = vld [vmem:[%s23 + $0x68] sm:$0xf]
  %v598 = vld [vmem:[%s23 + $0x6c] sm:$0xf]
  %v599 = vld [vmem:[%s23 + $0x70] sm:$0xf]
  %v600 = vld [vmem:[%s23 + $0x74] sm:$0xf]
  %v601 = vld [vmem:[%s23 + $0x78] sm:$0xf]
  %v602 = vld [vmem:[%s23 + $0x7c] sm:$0xf]
  %v603 = vunpack.c.l.bf16 %v571
  %v604 = vunpack.c.l.bf16 %v572
  %v605 = vunpack.c.l.bf16 %v573
  %v606 = vunpack.c.l.bf16 %v574
  %v607 = vunpack.c.l.bf16 %v575
  %v608 = vunpack.c.l.bf16 %v576
  %v609 = vunpack.c.l.bf16 %v577
  %v610 = vunpack.c.l.bf16 %v578
  %v611 = vunpack.c.l.bf16 %v579
  %v612 = vunpack.c.l.bf16 %v580
  %v613 = vunpack.c.l.bf16 %v581
  %v614 = vunpack.c.l.bf16 %v582
  %v615 = vunpack.c.l.bf16 %v583
  %v616 = vunpack.c.l.bf16 %v584
  %v617 = vunpack.c.l.bf16 %v585
  %v618 = vunpack.c.l.bf16 %v586
  %v619 = vunpack.c.l.bf16 %v587
  %v620 = vunpack.c.l.bf16 %v588
  %v621 = vunpack.c.l.bf16 %v589
  %v622 = vunpack.c.l.bf16 %v590
  %v623 = vunpack.c.l.bf16 %v591
  %v624 = vunpack.c.l.bf16 %v592
  %v625 = vunpack.c.l.bf16 %v593
  %v626 = vunpack.c.l.bf16 %v594
  %v627 = vunpack.c.l.bf16 %v595
  %v628 = vunpack.c.l.bf16 %v596
  %v629 = vunpack.c.l.bf16 %v597
  %v630 = vunpack.c.l.bf16 %v598
  %v631 = vunpack.c.l.bf16 %v599
  %v632 = vunpack.c.l.bf16 %v600
  %v633 = vunpack.c.l.bf16 %v601
  %v634 = vunpack.c.l.bf16 %v602
  %v635 = vlaneseq
  %v636 = vshrl.u32 %v635, 7
  %v637 = vsub.s32 0, %v636
  %v638 = vrot.slane %v566, %v637
  %v639 = vmul.f32 %v603, %v638
  %v640 = vmul.f32 %v604, %v638
  %v641 = vmul.f32 %v605, %v638
  %v642 = vmul.f32 %v606, %v638
  %v643 = vmul.f32 %v607, %v638
  %v644 = vmul.f32 %v608, %v638
  %v645 = vmul.f32 %v609, %v638
  %v646 = vmul.f32 %v610, %v638
  %v647 = vmul.f32 %v611, %v638
  %v648 = vmul.f32 %v612, %v638
  %v649 = vmul.f32 %v613, %v638
  %v650 = vmul.f32 %v614, %v638
  %v651 = vmul.f32 %v615, %v638
  %v652 = vmul.f32 %v616, %v638
  %v653 = vmul.f32 %v617, %v638
  %v654 = vmul.f32 %v618, %v638
  %v655 = vmul.f32 %v619, %v638
  %v656 = vmul.f32 %v620, %v638
  %v657 = vmul.f32 %v621, %v638
  %v658 = vmul.f32 %v622, %v638
  %v659 = vmul.f32 %v623, %v638
  %v660 = vmul.f32 %v624, %v638
  %v661 = vmul.f32 %v625, %v638
  %v662 = vmul.f32 %v626, %v638
  %v663 = vmul.f32 %v627, %v638
  %v664 = vmul.f32 %v628, %v638
  %v665 = vmul.f32 %v629, %v638
  %v666 = vmul.f32 %v630, %v638
  %v667 = vmul.f32 %v631, %v638
  %v668 = vmul.f32 %v632, %v638
  %v669 = vmul.f32 %v633, %v638
  %v670 = vmul.f32 %v634, %v638
  %v671 = vlaneseq
  %v672 = vshrl.u32 %v671, 7
  %v673 = vsub.s32 1, %v672
  %v674 = vrot.slane %v566, %v673
  %v675 = vmul.f32 %v603, %v674
  %v676 = vmul.f32 %v604, %v674
  %v677 = vmul.f32 %v605, %v674
  %v678 = vmul.f32 %v606, %v674
  %v679 = vmul.f32 %v607, %v674
  %v680 = vmul.f32 %v608, %v674
  %v681 = vmul.f32 %v609, %v674
  %v682 = vmul.f32 %v610, %v674
  %v683 = vmul.f32 %v611, %v674
  %v684 = vmul.f32 %v612, %v674
  %v685 = vmul.f32 %v613, %v674
  %v686 = vmul.f32 %v614, %v674
  %v687 = vmul.f32 %v615, %v674
  %v688 = vmul.f32 %v616, %v674
  %v689 = vmul.f32 %v617, %v674
  %v690 = vmul.f32 %v618, %v674
  %v691 = vmul.f32 %v619, %v674
  %v692 = vmul.f32 %v620, %v674
  %v693 = vmul.f32 %v621, %v674
  %v694 = vmul.f32 %v622, %v674
  %v695 = vmul.f32 %v623, %v674
  %v696 = vmul.f32 %v624, %v674
  %v697 = vmul.f32 %v625, %v674
  %v698 = vmul.f32 %v626, %v674
  %v699 = vmul.f32 %v627, %v674
  %v700 = vmul.f32 %v628, %v674
  %v701 = vmul.f32 %v629, %v674
  %v702 = vmul.f32 %v630, %v674
  %v703 = vmul.f32 %v631, %v674
  %v704 = vmul.f32 %v632, %v674
  %v705 = vmul.f32 %v633, %v674
  %v706 = vmul.f32 %v634, %v674
  %v707 = vld [vmem:[%s25] sm:$0xf]
  %v708 = vld [vmem:[%s25 + $0x4] sm:$0xf]
  %v709 = vld [vmem:[%s25 + $0x8] sm:$0xf]
  %v710 = vld [vmem:[%s25 + $0xc] sm:$0xf]
  %v711 = vpack.c.bf16 %v640, %v639
  %v712 = vpack.c.bf16 %v642, %v641
  %v713 = vpack.c.bf16 %v644, %v643
  %v714 = vpack.c.bf16 %v646, %v645
  %v715 = vpack.c.bf16 %v648, %v647
  %v716 = vpack.c.bf16 %v650, %v649
  %v717 = vpack.c.bf16 %v652, %v651
  %v718 = vpack.c.bf16 %v654, %v653
  %v719 = vpack.c.bf16 %v656, %v655
  %v720 = vpack.c.bf16 %v658, %v657
  %v721 = vpack.c.bf16 %v660, %v659
  %v722 = vpack.c.bf16 %v662, %v661
  %v723 = vpack.c.bf16 %v664, %v663
  %v724 = vpack.c.bf16 %v666, %v665
  %v725 = vpack.c.bf16 %v668, %v667
  %v726 = vpack.c.bf16 %v670, %v669
  %v727 = vpack.c.bf16 %v676, %v675
  %v728 = vpack.c.bf16 %v678, %v677
  %v729 = vpack.c.bf16 %v680, %v679
  %v730 = vpack.c.bf16 %v682, %v681
  %v731 = vpack.c.bf16 %v684, %v683
  %v732 = vpack.c.bf16 %v686, %v685
  %v733 = vpack.c.bf16 %v688, %v687
  %v734 = vpack.c.bf16 %v690, %v689
  %v735 = vpack.c.bf16 %v692, %v691
  %v736 = vpack.c.bf16 %v694, %v693
  %v737 = vpack.c.bf16 %v696, %v695
  %v738 = vpack.c.bf16 %v698, %v697
  %v739 = vpack.c.bf16 %v700, %v699
  %v740 = vpack.c.bf16 %v702, %v701
  %v741 = vpack.c.bf16 %v704, %v703
  %v742 = vpack.c.bf16 %v706, %v705
  %v743 = vld [vmem:[%s27] sm:$0x1]
  %v745 = vlaneseq
  %v746 = vshrl.u32 %v745, 7
  %v747 = vsub.s32 0, %v746
  %v748 = vrot.slane %v743, %v747
  %v754 = vunpack.c.l.b16 %v707
  %v755 = vunpack.c.l.b16 %v708
  %v756 = vunpack.c.l.b16 %v709
  %v757 = vunpack.c.l.b16 %v710
  %v758 = vpack.c.b16 %v755, %v754
  %v759 = vpack.c.b16 %v757, %v756
  %vm762 = vcmask 261120
  %v764 = vsel %vm762, %v711, 0
  %v767 = vsel %vm762, %v712, 0
  %v770 = vsel %vm762, %v713, 0
  %v773 = vsel %vm762, %v714, 0
  %v776 = vsel %vm762, %v715, 0
  %v779 = vsel %vm762, %v716, 0
  %v782 = vsel %vm762, %v717, 0
  %v785 = vsel %vm762, %v718, 0
  %v788 = vsel %vm762, %v719, 0
  %v791 = vsel %vm762, %v720, 0
  %v794 = vsel %vm762, %v721, 0
  %v797 = vsel %vm762, %v722, 0
  %v800 = vsel %vm762, %v723, 0
  %v803 = vsel %vm762, %v724, 0
  %v806 = vsel %vm762, %v725, 0
  %v809 = vsel %vm762, %v726, 0
  %v812 = vsel %vm762, %v727, 0
  %v815 = vsel %vm762, %v728, 0
  %v818 = vsel %vm762, %v729, 0
  %v821 = vsel %vm762, %v730, 0
  %v824 = vsel %vm762, %v731, 0
  %v827 = vsel %vm762, %v732, 0
  %v830 = vsel %vm762, %v733, 0
  %v833 = vsel %vm762, %v734, 0
  %v836 = vsel %vm762, %v735, 0
  %v839 = vsel %vm762, %v736, 0
  %v842 = vsel %vm762, %v737, 0
  %v845 = vsel %vm762, %v738, 0
  %v848 = vsel %vm762, %v739, 0
  %v851 = vsel %vm762, %v740, 0
  %v854 = vsel %vm762, %v741, 0
  %v857 = vsel %vm762, %v742, 0
  %859 = vmatprep.subr.bf16.mxu0 0
  %860 = vmatpush1.bf16.msra.mxu0 %v758
  %861 = vmatprep.subr.bf16.mxu0 0
  %862 = vmatpush1.bf16.msra.mxu0 %v759
  %863 = vmatprep.subr.bf16.mxu0 0
  %864 = vmatpush1.bf16.msra.mxu0 0
  %865 = vmatprep.subr.bf16.mxu0 0
  %866 = vmatpush1.bf16.msra.mxu0 0
  %867 = vmatprep.subr.bf16.mxu0 0
  %868 = vmatpush1.bf16.msra.mxu0 0
  %869 = vmatprep.subr.bf16.mxu0 0
  %870 = vmatpush1.bf16.msra.mxu0 0
  %871 = vmatprep.subr.bf16.mxu0 0
  %872 = vmatpush1.bf16.msra.mxu0 0
  %873 = vmatprep.subr.bf16.mxu0 0
  %874 = vmatpush1.bf16.msra.mxu0 0
  %875 = vmatprep.subr.bf16.mxu0 0
  %876 = vmatpush1.bf16.msra.mxu0 0
  %877 = vmatprep.subr.bf16.mxu0 0
  %878 = vmatpush1.bf16.msra.mxu0 0
  %879 = vmatprep.subr.bf16.mxu0 0
  %880 = vmatpush1.bf16.msra.mxu0 0
  %881 = vmatprep.subr.bf16.mxu0 0
  %882 = vmatpush1.bf16.msra.mxu0 0
  %883 = vmatprep.subr.bf16.mxu0 0
  %884 = vmatpush1.bf16.msra.mxu0 0
  %885 = vmatprep.subr.bf16.mxu0 0
  %886 = vmatpush1.bf16.msra.mxu0 0
  %887 = vmatprep.subr.bf16.mxu0 0
  %888 = vmatpush1.bf16.msra.mxu0 0
  %889 = vmatprep.subr.bf16.mxu0 0
  %890 = vmatpush1.bf16.msra.mxu0 0
  %891 = vmatprep.mubr.bf16.mxu0 0
  %892 = vmatmul.mubr.bf16.gmra.mrb[0].mxu0 %v764
  %v893 = vpop.f32.mrb[0].mxu0
  %v894 = vadd.f32 %v748, %v893
  %v895 = vpop.f32.mrb[0].mxu0
  %v896 = vpop.f32.mrb[0].mxu0
  %v897 = vadd.f32 %v748, %v896
  %v898 = vpop.f32.mrb[0].mxu0
  %899 = vmatprep.mubr.bf16.mxu0 0
  %900 = vmatmul.mubr.bf16.gmra.mrb[0].mxu0 %v767
  %v901 = vpop.f32.mrb[0].mxu0
  %v902 = vadd.f32 %v748, %v901
  %v903 = vpop.f32.mrb[0].mxu0
  %v904 = vpop.f32.mrb[0].mxu0
  %v905 = vadd.f32 %v748, %v904
  %v906 = vpop.f32.mrb[0].mxu0
  %907 = vmatprep.mubr.bf16.mxu0 0
  %908 = vmatmul.mubr.bf16.gmra.mrb[0].mxu0 %v770
  %v909 = vpop.f32.mrb[0].mxu0
  %v910 = vadd.f32 %v748, %v909
  %v911 = vpop.f32.mrb[0].mxu0
  %v912 = vpop.f32.mrb[0].mxu0
  %v913 = vadd.f32 %v748, %v912
  %v914 = vpop.f32.mrb[0].mxu0
  %915 = vmatprep.mubr.bf16.mxu0 0
  %916 = vmatmul.mubr.bf16.gmra.mrb[0].mxu0 %v773
  %v917 = vpop.f32.mrb[0].mxu0
  %v918 = vadd.f32 %v748, %v917
  %v919 = vpop.f32.mrb[0].mxu0
  %v920 = vpop.f32.mrb[0].mxu0
  %v921 = vadd.f32 %v748, %v920
  %v922 = vpop.f32.mrb[0].mxu0
  %923 = vmatprep.mubr.bf16.mxu0 0
  %924 = vmatmul.mubr.bf16.gmra.mrb[0].mxu0 %v776
  %v925 = vpop.f32.mrb[0].mxu0
  %v926 = vadd.f32 %v748, %v925
  %v927 = vpop.f32.mrb[0].mxu0
  %v928 = vpop.f32.mrb[0].mxu0
  %v929 = vadd.f32 %v748, %v928
  %v930 = vpop.f32.mrb[0].mxu0
  %931 = vmatprep.mubr.bf16.mxu0 0
  %932 = vmatmul.mubr.bf16.gmra.mrb[0].mxu0 %v779
  %v933 = vpop.f32.mrb[0].mxu0
  %v934 = vadd.f32 %v748, %v933
  %v935 = vpop.f32.mrb[0].mxu0
  %v936 = vpop.f32.mrb[0].mxu0
  %v937 = vadd.f32 %v748, %v936
  %v938 = vpop.f32.mrb[0].mxu0
  %939 = vmatprep.mubr.bf16.mxu0 0
  %940 = vmatmul.mubr.bf16.gmra.mrb[0].mxu0 %v782
  %v941 = vpop.f32.mrb[0].mxu0
  %v942 = vadd.f32 %v748, %v941
  %v943 = vpop.f32.mrb[0].mxu0
  %v944 = vpop.f32.mrb[0].mxu0
  %v945 = vadd.f32 %v748, %v944
  %v946 = vpop.f32.mrb[0].mxu0
  %947 = vmatprep.mubr.bf16.mxu0 0
  %948 = vmatmul.mubr.bf16.gmra.mrb[0].mxu0 %v785
  %v949 = vpop.f32.mrb[0].mxu0
  %v950 = vadd.f32 %v748, %v949
  %v951 = vpop.f32.mrb[0].mxu0
  %v952 = vpop.f32.mrb[0].mxu0
  %v953 = vadd.f32 %v748, %v952
  %v954 = vpop.f32.mrb[0].mxu0
  %955 = vmatprep.mubr.bf16.mxu0 0
  %956 = vmatmul.mubr.bf16.gmra.mrb[0].mxu0 %v788
  %v957 = vpop.f32.mrb[0].mxu0
  %v958 = vadd.f32 %v748, %v957
  %v959 = vpop.f32.mrb[0].mxu0
  %v960 = vpop.f32.mrb[0].mxu0
  %v961 = vadd.f32 %v748, %v960
  %v962 = vpop.f32.mrb[0].mxu0
  %963 = vmatprep.mubr.bf16.mxu0 0
  %964 = vmatmul.mubr.bf16.gmra.mrb[0].mxu0 %v791
  %v965 = vpop.f32.mrb[0].mxu0
  %v966 = vadd.f32 %v748, %v965
  %v967 = vpop.f32.mrb[0].mxu0
  %v968 = vpop.f32.mrb[0].mxu0
  %v969 = vadd.f32 %v748, %v968
  %v970 = vpop.f32.mrb[0].mxu0
  %971 = vmatprep.mubr.bf16.mxu0 0
  %972 = vmatmul.mubr.bf16.gmra.mrb[0].mxu0 %v794
  %v973 = vpop.f32.mrb[0].mxu0
  %v974 = vadd.f32 %v748, %v973
  %v975 = vpop.f32.mrb[0].mxu0
  %v976 = vpop.f32.mrb[0].mxu0
  %v977 = vadd.f32 %v748, %v976
  %v978 = vpop.f32.mrb[0].mxu0
  %979 = vmatprep.mubr.bf16.mxu0 0
  %980 = vmatmul.mubr.bf16.gmra.mrb[0].mxu0 %v797
  %v981 = vpop.f32.mrb[0].mxu0
  %v982 = vadd.f32 %v748, %v981
  %v983 = vpop.f32.mrb[0].mxu0
  %v984 = vpop.f32.mrb[0].mxu0
  %v985 = vadd.f32 %v748, %v984
  %v986 = vpop.f32.mrb[0].mxu0
  %987 = vmatprep.mubr.bf16.mxu0 0
  %988 = vmatmul.mubr.bf16.gmra.mrb[0].mxu0 %v800
  %v989 = vpop.f32.mrb[0].mxu0
  %v990 = vadd.f32 %v748, %v989
  %v991 = vpop.f32.mrb[0].mxu0
  %v992 = vpop.f32.mrb[0].mxu0
  %v993 = vadd.f32 %v748, %v992
  %v994 = vpop.f32.mrb[0].mxu0
  %995 = vmatprep.mubr.bf16.mxu0 0
  %996 = vmatmul.mubr.bf16.gmra.mrb[0].mxu0 %v803
  %v997 = vpop.f32.mrb[0].mxu0
  %v998 = vadd.f32 %v748, %v997
  %v999 = vpop.f32.mrb[0].mxu0
  %v1000 = vpop.f32.mrb[0].mxu0
  %v1001 = vadd.f32 %v748, %v1000
  %v1002 = vpop.f32.mrb[0].mxu0
  %1003 = vmatprep.mubr.bf16.mxu0 0
  %1004 = vmatmul.mubr.bf16.gmra.mrb[0].mxu0 %v806
  %v1005 = vpop.f32.mrb[0].mxu0
  %v1006 = vadd.f32 %v748, %v1005
  %v1007 = vpop.f32.mrb[0].mxu0
  %v1008 = vpop.f32.mrb[0].mxu0
  %v1009 = vadd.f32 %v748, %v1008
  %v1010 = vpop.f32.mrb[0].mxu0
  %1011 = vmatprep.mubr.bf16.mxu0 0
  %1012 = vmatmul.mubr.bf16.gmra.mrb[0].mxu0 %v809
  %v1013 = vpop.f32.mrb[0].mxu0
  %v1014 = vadd.f32 %v748, %v1013
  %v1015 = vpop.f32.mrb[0].mxu0
  %v1016 = vpop.f32.mrb[0].mxu0
  %v1017 = vadd.f32 %v748, %v1016
  %v1018 = vpop.f32.mrb[0].mxu0
  %1019 = vmatprep.mubr.bf16.mxu0 0
  %1020 = vmatmul.mubr.bf16.gmra.mrb[0].mxu0 %v812
  %v1021 = vpop.f32.mrb[0].mxu0
  %v1022 = vadd.f32 %v748, %v1021
  %v1023 = vpop.f32.mrb[0].mxu0
  %v1024 = vpop.f32.mrb[0].mxu0
  %v1025 = vadd.f32 %v748, %v1024
  %v1026 = vpop.f32.mrb[0].mxu0
  %1027 = vmatprep.mubr.bf16.mxu0 0
  %1028 = vmatmul.mubr.bf16.gmra.mrb[0].mxu0 %v815
  %v1029 = vpop.f32.mrb[0].mxu0
  %v1030 = vadd.f32 %v748, %v1029
  %v1031 = vpop.f32.mrb[0].mxu0
  %v1032 = vpop.f32.mrb[0].mxu0
  %v1033 = vadd.f32 %v748, %v1032
  %v1034 = vpop.f32.mrb[0].mxu0
  %1035 = vmatprep.mubr.bf16.mxu0 0
  %1036 = vmatmul.mubr.bf16.gmra.mrb[0].mxu0 %v818
  %v1037 = vpop.f32.mrb[0].mxu0
  %v1038 = vadd.f32 %v748, %v1037
  %v1039 = vpop.f32.mrb[0].mxu0
  %v1040 = vpop.f32.mrb[0].mxu0
  %v1041 = vadd.f32 %v748, %v1040
  %v1042 = vpop.f32.mrb[0].mxu0
  %1043 = vmatprep.mubr.bf16.mxu0 0
  %1044 = vmatmul.mubr.bf16.gmra.mrb[0].mxu0 %v821
  %v1045 = vpop.f32.mrb[0].mxu0
  %v1046 = vadd.f32 %v748, %v1045
  %v1047 = vpop.f32.mrb[0].mxu0
  %v1048 = vpop.f32.mrb[0].mxu0
  %v1049 = vadd.f32 %v748, %v1048
  %v1050 = vpop.f32.mrb[0].mxu0
  %1051 = vmatprep.mubr.bf16.mxu0 0
  %1052 = vmatmul.mubr.bf16.gmra.mrb[0].mxu0 %v824
  %v1053 = vpop.f32.mrb[0].mxu0
  %v1054 = vadd.f32 %v748, %v1053
  %v1055 = vpop.f32.mrb[0].mxu0
  %v1056 = vpop.f32.mrb[0].mxu0
  %v1057 = vadd.f32 %v748, %v1056
  %v1058 = vpop.f32.mrb[0].mxu0
  %1059 = vmatprep.mubr.bf16.mxu0 0
  %1060 = vmatmul.mubr.bf16.gmra.mrb[0].mxu0 %v827
  %v1061 = vpop.f32.mrb[0].mxu0
  %v1062 = vadd.f32 %v748, %v1061
  %v1063 = vpop.f32.mrb[0].mxu0
  %v1064 = vpop.f32.mrb[0].mxu0
  %v1065 = vadd.f32 %v748, %v1064
  %v1066 = vpop.f32.mrb[0].mxu0
  %1067 = vmatprep.mubr.bf16.mxu0 0
  %1068 = vmatmul.mubr.bf16.gmra.mrb[0].mxu0 %v830
  %v1069 = vpop.f32.mrb[0].mxu0
  %v1070 = vadd.f32 %v748, %v1069
  %v1071 = vpop.f32.mrb[0].mxu0
  %v1072 = vpop.f32.mrb[0].mxu0
  %v1073 = vadd.f32 %v748, %v1072
  %v1074 = vpop.f32.mrb[0].mxu0
  %1075 = vmatprep.mubr.bf16.mxu0 0
  %1076 = vmatmul.mubr.bf16.gmra.mrb[0].mxu0 %v833
  %v1077 = vpop.f32.mrb[0].mxu0
  %v1078 = vadd.f32 %v748, %v1077
  %v1079 = vpop.f32.mrb[0].mxu0
  %v1080 = vpop.f32.mrb[0].mxu0
  %v1081 = vadd.f32 %v748, %v1080
  %v1082 = vpop.f32.mrb[0].mxu0
  %1083 = vmatprep.mubr.bf16.mxu0 0
  %1084 = vmatmul.mubr.bf16.gmra.mrb[0].mxu0 %v836
  %v1085 = vpop.f32.mrb[0].mxu0
  %v1086 = vadd.f32 %v748, %v1085
  %v1087 = vpop.f32.mrb[0].mxu0
  %v1088 = vpop.f32.mrb[0].mxu0
  %v1089 = vadd.f32 %v748, %v1088
  %v1090 = vpop.f32.mrb[0].mxu0
  %1091 = vmatprep.mubr.bf16.mxu0 0
  %1092 = vmatmul.mubr.bf16.gmra.mrb[0].mxu0 %v839
  %v1093 = vpop.f32.mrb[0].mxu0
  %v1094 = vadd.f32 %v748, %v1093
  %v1095 = vpop.f32.mrb[0].mxu0
  %v1096 = vpop.f32.mrb[0].mxu0
  %v1097 = vadd.f32 %v748, %v1096
  %v1098 = vpop.f32.mrb[0].mxu0
  %1099 = vmatprep.mubr.bf16.mxu0 0
  %1100 = vmatmul.mubr.bf16.gmra.mrb[0].mxu0 %v842
  %v1101 = vpop.f32.mrb[0].mxu0
  %v1102 = vadd.f32 %v748, %v1101
  %v1103 = vpop.f32.mrb[0].mxu0
  %v1104 = vpop.f32.mrb[0].mxu0
  %v1105 = vadd.f32 %v748, %v1104
  %v1106 = vpop.f32.mrb[0].mxu0
  %1107 = vmatprep.mubr.bf16.mxu0 0
  %1108 = vmatmul.mubr.bf16.gmra.mrb[0].mxu0 %v845
  %v1109 = vpop.f32.mrb[0].mxu0
  %v1110 = vadd.f32 %v748, %v1109
  %v1111 = vpop.f32.mrb[0].mxu0
  %v1112 = vpop.f32.mrb[0].mxu0
  %v1113 = vadd.f32 %v748, %v1112
  %v1114 = vpop.f32.mrb[0].mxu0
  %1115 = vmatprep.mubr.bf16.mxu0 0
  %1116 = vmatmul.mubr.bf16.gmra.mrb[0].mxu0 %v848
  %v1117 = vpop.f32.mrb[0].mxu0
  %v1118 = vadd.f32 %v748, %v1117
  %v1119 = vpop.f32.mrb[0].mxu0
  %v1120 = vpop.f32.mrb[0].mxu0
  %v1121 = vadd.f32 %v748, %v1120
  %v1122 = vpop.f32.mrb[0].mxu0
  %1123 = vmatprep.mubr.bf16.mxu0 0
  %1124 = vmatmul.mubr.bf16.gmra.mrb[0].mxu0 %v851
  %v1125 = vpop.f32.mrb[0].mxu0
  %v1126 = vadd.f32 %v748, %v1125
  %v1127 = vpop.f32.mrb[0].mxu0
  %v1128 = vpop.f32.mrb[0].mxu0
  %v1129 = vadd.f32 %v748, %v1128
  %v1130 = vpop.f32.mrb[0].mxu0
  %1131 = vmatprep.mubr.bf16.mxu0 0
  %1132 = vmatmul.mubr.bf16.gmra.mrb[0].mxu0 %v854
  %v1133 = vpop.f32.mrb[0].mxu0
  %v1134 = vadd.f32 %v748, %v1133
  %v1135 = vpop.f32.mrb[0].mxu0
  %v1136 = vpop.f32.mrb[0].mxu0
  %v1137 = vadd.f32 %v748, %v1136
  %v1138 = vpop.f32.mrb[0].mxu0
  %1139 = vmatprep.mubr.bf16.mxu0 0
  %1140 = vmatmul.mubr.bf16.gmra.mrb[0].mxu0 %v857
  %v1141 = vpop.f32.mrb[0].mxu0
  %v1142 = vadd.f32 %v748, %v1141
  %v1143 = vpop.f32.mrb[0].mxu0
  %v1144 = vpop.f32.mrb[0].mxu0
  %v1145 = vadd.f32 %v748, %v1144
  %v1146 = vpop.f32.mrb[0].mxu0
  %1147 = vdwg.mxu0
  %vm1148 = vcmp.ge.f32.partialorder %v894, 0.0
  %vm1149 = vcmp.ge.f32.partialorder %v897, 0.0
  %vm1150 = vcmp.ge.f32.partialorder %v902, 0.0
  %vm1151 = vcmp.ge.f32.partialorder %v905, 0.0
  %vm1152 = vcmp.ge.f32.partialorder %v910, 0.0
  %vm1153 = vcmp.ge.f32.partialorder %v913, 0.0
  %vm1154 = vcmp.ge.f32.partialorder %v918, 0.0
  %vm1155 = vcmp.ge.f32.partialorder %v921, 0.0
  %vm1156 = vcmp.ge.f32.partialorder %v926, 0.0
  %vm1157 = vcmp.ge.f32.partialorder %v929, 0.0
  %vm1158 = vcmp.ge.f32.partialorder %v934, 0.0
  %vm1159 = vcmp.ge.f32.partialorder %v937, 0.0
  %vm1160 = vcmp.ge.f32.partialorder %v942, 0.0
  %vm1161 = vcmp.ge.f32.partialorder %v945, 0.0
  %vm1162 = vcmp.ge.f32.partialorder %v950, 0.0
  %vm1163 = vcmp.ge.f32.partialorder %v953, 0.0
  %vm1164 = vcmp.ge.f32.partialorder %v958, 0.0
  %vm1165 = vcmp.ge.f32.partialorder %v961, 0.0
  %vm1166 = vcmp.ge.f32.partialorder %v966, 0.0
  %vm1167 = vcmp.ge.f32.partialorder %v969, 0.0
  %vm1168 = vcmp.ge.f32.partialorder %v974, 0.0
  %vm1169 = vcmp.ge.f32.partialorder %v977, 0.0
  %vm1170 = vcmp.ge.f32.partialorder %v982, 0.0
  %vm1171 = vcmp.ge.f32.partialorder %v985, 0.0
  %vm1172 = vcmp.ge.f32.partialorder %v990, 0.0
  %vm1173 = vcmp.ge.f32.partialorder %v993, 0.0
  %vm1174 = vcmp.ge.f32.partialorder %v998, 0.0
  %vm1175 = vcmp.ge.f32.partialorder %v1001, 0.0
  %vm1176 = vcmp.ge.f32.partialorder %v1006, 0.0
  %vm1177 = vcmp.ge.f32.partialorder %v1009, 0.0
  %vm1178 = vcmp.ge.f32.partialorder %v1014, 0.0
  %vm1179 = vcmp.ge.f32.partialorder %v1017, 0.0
  %vm1180 = vcmp.ge.f32.partialorder %v1022, 0.0
  %vm1181 = vcmp.ge.f32.partialorder %v1025, 0.0
  %vm1182 = vcmp.ge.f32.partialorder %v1030, 0.0
  %vm1183 = vcmp.ge.f32.partialorder %v1033, 0.0
  %vm1184 = vcmp.ge.f32.partialorder %v1038, 0.0
  %vm1185 = vcmp.ge.f32.partialorder %v1041, 0.0
  %vm1186 = vcmp.ge.f32.partialorder %v1046, 0.0
  %vm1187 = vcmp.ge.f32.partialorder %v1049, 0.0
  %vm1188 = vcmp.ge.f32.partialorder %v1054, 0.0
  %vm1189 = vcmp.ge.f32.partialorder %v1057, 0.0
  %vm1190 = vcmp.ge.f32.partialorder %v1062, 0.0
  %vm1191 = vcmp.ge.f32.partialorder %v1065, 0.0
  %vm1192 = vcmp.ge.f32.partialorder %v1070, 0.0
  %vm1193 = vcmp.ge.f32.partialorder %v1073, 0.0
  %vm1194 = vcmp.ge.f32.partialorder %v1078, 0.0
  %vm1195 = vcmp.ge.f32.partialorder %v1081, 0.0
  %vm1196 = vcmp.ge.f32.partialorder %v1086, 0.0
  %vm1197 = vcmp.ge.f32.partialorder %v1089, 0.0
  %vm1198 = vcmp.ge.f32.partialorder %v1094, 0.0
  %vm1199 = vcmp.ge.f32.partialorder %v1097, 0.0
  %vm1200 = vcmp.ge.f32.partialorder %v1102, 0.0
  %vm1201 = vcmp.ge.f32.partialorder %v1105, 0.0
  %vm1202 = vcmp.ge.f32.partialorder %v1110, 0.0
  %vm1203 = vcmp.ge.f32.partialorder %v1113, 0.0
  %vm1204 = vcmp.ge.f32.partialorder %v1118, 0.0
  %vm1205 = vcmp.ge.f32.partialorder %v1121, 0.0
  %vm1206 = vcmp.ge.f32.partialorder %v1126, 0.0
  %vm1207 = vcmp.ge.f32.partialorder %v1129, 0.0
  %vm1208 = vcmp.ge.f32.partialorder %v1134, 0.0
  %vm1209 = vcmp.ge.f32.partialorder %v1137, 0.0
  %vm1210 = vcmp.ge.f32.partialorder %v1142, 0.0
  %vm1211 = vcmp.ge.f32.partialorder %v1145, 0.0
  %v1212 = vmul.f32 %v894, 0.2
  %v1213 = vmul.f32 %v897, 0.2
  %v1214 = vmul.f32 %v902, 0.2
  %v1215 = vmul.f32 %v905, 0.2
  %v1216 = vmul.f32 %v910, 0.2
  %v1217 = vmul.f32 %v913, 0.2
  %v1218 = vmul.f32 %v918, 0.2
  %v1219 = vmul.f32 %v921, 0.2
  %v1220 = vmul.f32 %v926, 0.2
  %v1221 = vmul.f32 %v929, 0.2
  %v1222 = vmul.f32 %v934, 0.2
  %v1223 = vmul.f32 %v937, 0.2
  %v1224 = vmul.f32 %v942, 0.2
  %v1225 = vmul.f32 %v945, 0.2
  %v1226 = vmul.f32 %v950, 0.2
  %v1227 = vmul.f32 %v953, 0.2
  %v1228 = vmul.f32 %v958, 0.2
  %v1229 = vmul.f32 %v961, 0.2
  %v1230 = vmul.f32 %v966, 0.2
  %v1231 = vmul.f32 %v969, 0.2
  %v1232 = vmul.f32 %v974, 0.2
  %v1233 = vmul.f32 %v977, 0.2
  %v1234 = vmul.f32 %v982, 0.2
  %v1235 = vmul.f32 %v985, 0.2
  %v1236 = vmul.f32 %v990, 0.2
  %v1237 = vmul.f32 %v993, 0.2
  %v1238 = vmul.f32 %v998, 0.2
  %v1239 = vmul.f32 %v1001, 0.2
  %v1240 = vmul.f32 %v1006, 0.2
  %v1241 = vmul.f32 %v1009, 0.2
  %v1242 = vmul.f32 %v1014, 0.2
  %v1243 = vmul.f32 %v1017, 0.2
  %v1244 = vmul.f32 %v1022, 0.2
  %v1245 = vmul.f32 %v1025, 0.2
  %v1246 = vmul.f32 %v1030, 0.2
  %v1247 = vmul.f32 %v1033, 0.2
  %v1248 = vmul.f32 %v1038, 0.2
  %v1249 = vmul.f32 %v1041, 0.2
  %v1250 = vmul.f32 %v1046, 0.2
  %v1251 = vmul.f32 %v1049, 0.2
  %v1252 = vmul.f32 %v1054, 0.2
  %v1253 = vmul.f32 %v1057, 0.2
  %v1254 = vmul.f32 %v1062, 0.2
  %v1255 = vmul.f32 %v1065, 0.2
  %v1256 = vmul.f32 %v1070, 0.2
  %v1257 = vmul.f32 %v1073, 0.2
  %v1258 = vmul.f32 %v1078, 0.2
  %v1259 = vmul.f32 %v1081, 0.2
  %v1260 = vmul.f32 %v1086, 0.2
  %v1261 = vmul.f32 %v1089, 0.2
  %v1262 = vmul.f32 %v1094, 0.2
  %v1263 = vmul.f32 %v1097, 0.2
  %v1264 = vmul.f32 %v1102, 0.2
  %v1265 = vmul.f32 %v1105, 0.2
  %v1266 = vmul.f32 %v1110, 0.2
  %v1267 = vmul.f32 %v1113, 0.2
  %v1268 = vmul.f32 %v1118, 0.2
  %v1269 = vmul.f32 %v1121, 0.2
  %v1270 = vmul.f32 %v1126, 0.2
  %v1271 = vmul.f32 %v1129, 0.2
  %v1272 = vmul.f32 %v1134, 0.2
  %v1273 = vmul.f32 %v1137, 0.2
  %v1274 = vmul.f32 %v1142, 0.2
  %v1275 = vmul.f32 %v1145, 0.2
  %v1276 = vsel %vm1148, %v894, %v1212
  %v1277 = vsel %vm1149, %v897, %v1213
  %v1278 = vsel %vm1150, %v902, %v1214
  %v1279 = vsel %vm1151, %v905, %v1215
  %v1280 = vsel %vm1152, %v910, %v1216
  %v1281 = vsel %vm1153, %v913, %v1217
  %v1282 = vsel %vm1154, %v918, %v1218
  %v1283 = vsel %vm1155, %v921, %v1219
  %v1284 = vsel %vm1156, %v926, %v1220
  %v1285 = vsel %vm1157, %v929, %v1221
  %v1286 = vsel %vm1158, %v934, %v1222
  %v1287 = vsel %vm1159, %v937, %v1223
  %v1288 = vsel %vm1160, %v942, %v1224
  %v1289 = vsel %vm1161, %v945, %v1225
  %v1290 = vsel %vm1162, %v950, %v1226
  %v1291 = vsel %vm1163, %v953, %v1227
  %v1292 = vsel %vm1164, %v958, %v1228
  %v1293 = vsel %vm1165, %v961, %v1229
  %v1294 = vsel %vm1166, %v966, %v1230
  %v1295 = vsel %vm1167, %v969, %v1231
  %v1296 = vsel %vm1168, %v974, %v1232
  %v1297 = vsel %vm1169, %v977, %v1233
  %v1298 = vsel %vm1170, %v982, %v1234
  %v1299 = vsel %vm1171, %v985, %v1235
  %v1300 = vsel %vm1172, %v990, %v1236
  %v1301 = vsel %vm1173, %v993, %v1237
  %v1302 = vsel %vm1174, %v998, %v1238
  %v1303 = vsel %vm1175, %v1001, %v1239
  %v1304 = vsel %vm1176, %v1006, %v1240
  %v1305 = vsel %vm1177, %v1009, %v1241
  %v1306 = vsel %vm1178, %v1014, %v1242
  %v1307 = vsel %vm1179, %v1017, %v1243
  %v1308 = vsel %vm1180, %v1022, %v1244
  %v1309 = vsel %vm1181, %v1025, %v1245
  %v1310 = vsel %vm1182, %v1030, %v1246
  %v1311 = vsel %vm1183, %v1033, %v1247
  %v1312 = vsel %vm1184, %v1038, %v1248
  %v1313 = vsel %vm1185, %v1041, %v1249
  %v1314 = vsel %vm1186, %v1046, %v1250
  %v1315 = vsel %vm1187, %v1049, %v1251
  %v1316 = vsel %vm1188, %v1054, %v1252
  %v1317 = vsel %vm1189, %v1057, %v1253
  %v1318 = vsel %vm1190, %v1062, %v1254
  %v1319 = vsel %vm1191, %v1065, %v1255
  %v1320 = vsel %vm1192, %v1070, %v1256
  %v1321 = vsel %vm1193, %v1073, %v1257
  %v1322 = vsel %vm1194, %v1078, %v1258
  %v1323 = vsel %vm1195, %v1081, %v1259
  %v1324 = vsel %vm1196, %v1086, %v1260
  %v1325 = vsel %vm1197, %v1089, %v1261
  %v1326 = vsel %vm1198, %v1094, %v1262
  %v1327 = vsel %vm1199, %v1097, %v1263
  %v1328 = vsel %vm1200, %v1102, %v1264
  %v1329 = vsel %vm1201, %v1105, %v1265
  %v1330 = vsel %vm1202, %v1110, %v1266
  %v1331 = vsel %vm1203, %v1113, %v1267
  %v1332 = vsel %vm1204, %v1118, %v1268
  %v1333 = vsel %vm1205, %v1121, %v1269
  %v1334 = vsel %vm1206, %v1126, %v1270
  %v1335 = vsel %vm1207, %v1129, %v1271
  %v1336 = vsel %vm1208, %v1134, %v1272
  %v1337 = vsel %vm1209, %v1137, %v1273
  %v1338 = vsel %vm1210, %v1142, %v1274
  %v1339 = vsel %vm1211, %v1145, %v1275
  %v1340 = vld [vmem:[%s29] sm:$0xf]
  %v1341 = vld [vmem:[%s29 + $0x4] sm:$0xf]
  %v1342 = vld [vmem:[%s29 + $0x8] sm:$0xf]
  %v1343 = vld [vmem:[%s29 + $0xc] sm:$0xf]
  %v1344 = vpack.c.bf16 %v1277, %v1276
  %v1345 = vpack.c.bf16 %v1279, %v1278
  %v1346 = vpack.c.bf16 %v1281, %v1280
  %v1347 = vpack.c.bf16 %v1283, %v1282
  %v1348 = vpack.c.bf16 %v1285, %v1284
  %v1349 = vpack.c.bf16 %v1287, %v1286
  %v1350 = vpack.c.bf16 %v1289, %v1288
  %v1351 = vpack.c.bf16 %v1291, %v1290
  %v1352 = vpack.c.bf16 %v1293, %v1292
  %v1353 = vpack.c.bf16 %v1295, %v1294
  %v1354 = vpack.c.bf16 %v1297, %v1296
  %v1355 = vpack.c.bf16 %v1299, %v1298
  %v1356 = vpack.c.bf16 %v1301, %v1300
  %v1357 = vpack.c.bf16 %v1303, %v1302
  %v1358 = vpack.c.bf16 %v1305, %v1304
  %v1359 = vpack.c.bf16 %v1307, %v1306
  %v1360 = vpack.c.bf16 %v1309, %v1308
  %v1361 = vpack.c.bf16 %v1311, %v1310
  %v1362 = vpack.c.bf16 %v1313, %v1312
  %v1363 = vpack.c.bf16 %v1315, %v1314
  %v1364 = vpack.c.bf16 %v1317, %v1316
  %v1365 = vpack.c.bf16 %v1319, %v1318
  %v1366 = vpack.c.bf16 %v1321, %v1320
  %v1367 = vpack.c.bf16 %v1323, %v1322
  %v1368 = vpack.c.bf16 %v1325, %v1324
  %v1369 = vpack.c.bf16 %v1327, %v1326
  %v1370 = vpack.c.bf16 %v1329, %v1328
  %v1371 = vpack.c.bf16 %v1331, %v1330
  %v1372 = vpack.c.bf16 %v1333, %v1332
  %v1373 = vpack.c.bf16 %v1335, %v1334
  %v1374 = vpack.c.bf16 %v1337, %v1336
  %v1375 = vpack.c.bf16 %v1339, %v1338
  %v1376 = vld [vmem:[%s31] sm:$0x1]
  %v1378 = vlaneseq
  %v1379 = vshrl.u32 %v1378, 7
  %v1380 = vsub.s32 0, %v1379
  %v1381 = vrot.slane %v1376, %v1380
  %v1387 = vunpack.c.l.b16 %v1340
  %v1388 = vunpack.c.l.b16 %v1341
  %v1389 = vunpack.c.l.b16 %v1342
  %v1390 = vunpack.c.l.b16 %v1343
  %v1391 = vpack.c.b16 %v1388, %v1387
  %v1392 = vpack.c.b16 %v1390, %v1389
  %v1396 = vsel %vm762, %v1344, 0
  %v1399 = vsel %vm762, %v1345, 0
  %v1402 = vsel %vm762, %v1346, 0
  %v1405 = vsel %vm762, %v1347, 0
  %v1408 = vsel %vm762, %v1348, 0
  %v1411 = vsel %vm762, %v1349, 0
  %v1414 = vsel %vm762, %v1350, 0
  %v1417 = vsel %vm762, %v1351, 0
  %v1420 = vsel %vm762, %v1352, 0
  %v1423 = vsel %vm762, %v1353, 0
  %v1426 = vsel %vm762, %v1354, 0
  %v1429 = vsel %vm762, %v1355, 0
  %v1432 = vsel %vm762, %v1356, 0
  %v1435 = vsel %vm762, %v1357, 0
  %v1438 = vsel %vm762, %v1358, 0
  %v1441 = vsel %vm762, %v1359, 0
  %v1444 = vsel %vm762, %v1360, 0
  %v1447 = vsel %vm762, %v1361, 0
  %v1450 = vsel %vm762, %v1362, 0
  %v1453 = vsel %vm762, %v1363, 0
  %v1456 = vsel %vm762, %v1364, 0
  %v1459 = vsel %vm762, %v1365, 0
  %v1462 = vsel %vm762, %v1366, 0
  %v1465 = vsel %vm762, %v1367, 0
  %v1468 = vsel %vm762, %v1368, 0
  %v1471 = vsel %vm762, %v1369, 0
  %v1474 = vsel %vm762, %v1370, 0
  %v1477 = vsel %vm762, %v1371, 0
  %v1480 = vsel %vm762, %v1372, 0
  %v1483 = vsel %vm762, %v1373, 0
  %v1486 = vsel %vm762, %v1374, 0
  %v1489 = vsel %vm762, %v1375, 0
  %1491 = vmatprep.subr.bf16.mxu0 0
  %1492 = vmatpush1.bf16.msra.mxu0 %v1391
  %1493 = vmatprep.subr.bf16.mxu0 0
  %1494 = vmatpush1.bf16.msra.mxu0 %v1392
  %1495 = vmatprep.subr.bf16.mxu0 0
  %1496 = vmatpush1.bf16.msra.mxu0 0
  %1497 = vmatprep.subr.bf16.mxu0 0
  %1498 = vmatpush1.bf16.msra.mxu0 0
  %1499 = vmatprep.subr.bf16.mxu0 0
  %1500 = vmatpush1.bf16.msra.mxu0 0
  %1501 = vmatprep.subr.bf16.mxu0 0
  %1502 = vmatpush1.bf16.msra.mxu0 0
  %1503 = vmatprep.subr.bf16.mxu0 0
  %1504 = vmatpush1.bf16.msra.mxu0 0
  %1505 = vmatprep.subr.bf16.mxu0 0
  %1506 = vmatpush1.bf16.msra.mxu0 0
  %1507 = vmatprep.subr.bf16.mxu0 0
  %1508 = vmatpush1.bf16.msra.mxu0 0
  %1509 = vmatprep.subr.bf16.mxu0 0
  %1510 = vmatpush1.bf16.msra.mxu0 0
  %1511 = vmatprep.subr.bf16.mxu0 0
  %1512 = vmatpush1.bf16.msra.mxu0 0
  %1513 = vmatprep.subr.bf16.mxu0 0
  %1514 = vmatpush1.bf16.msra.mxu0 0
  %1515 = vmatprep.subr.bf16.mxu0 0
  %1516 = vmatpush1.bf16.msra.mxu0 0
  %1517 = vmatprep.subr.bf16.mxu0 0
  %1518 = vmatpush1.bf16.msra.mxu0 0
  %1519 = vmatprep.subr.bf16.mxu0 0
  %1520 = vmatpush1.bf16.msra.mxu0 0
  %1521 = vmatprep.subr.bf16.mxu0 0
  %1522 = vmatpush1.bf16.msra.mxu0 0
  %1523 = vmatprep.mubr.bf16.mxu0 0
  %1524 = vmatmul.mubr.bf16.gmra.mrb[0].mxu0 %v1396
  %v1525 = vpop.f32.mrb[0].mxu0
  %v1526 = vadd.f32 %v1381, %v1525
  %v1527 = vpop.f32.mrb[0].mxu0
  %v1528 = vpop.f32.mrb[0].mxu0
  %v1529 = vadd.f32 %v1381, %v1528
  %v1530 = vpop.f32.mrb[0].mxu0
  %1531 = vmatprep.mubr.bf16.mxu0 0
  %1532 = vmatmul.mubr.bf16.gmra.mrb[0].mxu0 %v1399
  %v1533 = vpop.f32.mrb[0].mxu0
  %v1534 = vadd.f32 %v1381, %v1533
  %v1535 = vpop.f32.mrb[0].mxu0
  %v1536 = vpop.f32.mrb[0].mxu0
  %v1537 = vadd.f32 %v1381, %v1536
  %v1538 = vpop.f32.mrb[0].mxu0
  %1539 = vmatprep.mubr.bf16.mxu0 0
  %1540 = vmatmul.mubr.bf16.gmra.mrb[0].mxu0 %v1402
  %v1541 = vpop.f32.mrb[0].mxu0
  %v1542 = vadd.f32 %v1381, %v1541
  %v1543 = vpop.f32.mrb[0].mxu0
  %v1544 = vpop.f32.mrb[0].mxu0
  %v1545 = vadd.f32 %v1381, %v1544
  %v1546 = vpop.f32.mrb[0].mxu0
  %1547 = vmatprep.mubr.bf16.mxu0 0
  %1548 = vmatmul.mubr.bf16.gmra.mrb[0].mxu0 %v1405
  %v1549 = vpop.f32.mrb[0].mxu0
  %v1550 = vadd.f32 %v1381, %v1549
  %v1551 = vpop.f32.mrb[0].mxu0
  %v1552 = vpop.f32.mrb[0].mxu0
  %v1553 = vadd.f32 %v1381, %v1552
  %v1554 = vpop.f32.mrb[0].mxu0
  %1555 = vmatprep.mubr.bf16.mxu0 0
  %1556 = vmatmul.mubr.bf16.gmra.mrb[0].mxu0 %v1408
  %v1557 = vpop.f32.mrb[0].mxu0
  %v1558 = vadd.f32 %v1381, %v1557
  %v1559 = vpop.f32.mrb[0].mxu0
  %v1560 = vpop.f32.mrb[0].mxu0
  %v1561 = vadd.f32 %v1381, %v1560
  %v1562 = vpop.f32.mrb[0].mxu0
  %1563 = vmatprep.mubr.bf16.mxu0 0
  %1564 = vmatmul.mubr.bf16.gmra.mrb[0].mxu0 %v1411
  %v1565 = vpop.f32.mrb[0].mxu0
  %v1566 = vadd.f32 %v1381, %v1565
  %v1567 = vpop.f32.mrb[0].mxu0
  %v1568 = vpop.f32.mrb[0].mxu0
  %v1569 = vadd.f32 %v1381, %v1568
  %v1570 = vpop.f32.mrb[0].mxu0
  %1571 = vmatprep.mubr.bf16.mxu0 0
  %1572 = vmatmul.mubr.bf16.gmra.mrb[0].mxu0 %v1414
  %v1573 = vpop.f32.mrb[0].mxu0
  %v1574 = vadd.f32 %v1381, %v1573
  %v1575 = vpop.f32.mrb[0].mxu0
  %v1576 = vpop.f32.mrb[0].mxu0
  %v1577 = vadd.f32 %v1381, %v1576
  %v1578 = vpop.f32.mrb[0].mxu0
  %1579 = vmatprep.mubr.bf16.mxu0 0
  %1580 = vmatmul.mubr.bf16.gmra.mrb[0].mxu0 %v1417
  %v1581 = vpop.f32.mrb[0].mxu0
  %v1582 = vadd.f32 %v1381, %v1581
  %v1583 = vpop.f32.mrb[0].mxu0
  %v1584 = vpop.f32.mrb[0].mxu0
  %v1585 = vadd.f32 %v1381, %v1584
  %v1586 = vpop.f32.mrb[0].mxu0
  %1587 = vmatprep.mubr.bf16.mxu0 0
  %1588 = vmatmul.mubr.bf16.gmra.mrb[0].mxu0 %v1420
  %v1589 = vpop.f32.mrb[0].mxu0
  %v1590 = vadd.f32 %v1381, %v1589
  %v1591 = vpop.f32.mrb[0].mxu0
  %v1592 = vpop.f32.mrb[0].mxu0
  %v1593 = vadd.f32 %v1381, %v1592
  %v1594 = vpop.f32.mrb[0].mxu0
  %1595 = vmatprep.mubr.bf16.mxu0 0
  %1596 = vmatmul.mubr.bf16.gmra.mrb[0].mxu0 %v1423
  %v1597 = vpop.f32.mrb[0].mxu0
  %v1598 = vadd.f32 %v1381, %v1597
  %v1599 = vpop.f32.mrb[0].mxu0
  %v1600 = vpop.f32.mrb[0].mxu0
  %v1601 = vadd.f32 %v1381, %v1600
  %v1602 = vpop.f32.mrb[0].mxu0
  %1603 = vmatprep.mubr.bf16.mxu0 0
  %1604 = vmatmul.mubr.bf16.gmra.mrb[0].mxu0 %v1426
  %v1605 = vpop.f32.mrb[0].mxu0
  %v1606 = vadd.f32 %v1381, %v1605
  %v1607 = vpop.f32.mrb[0].mxu0
  %v1608 = vpop.f32.mrb[0].mxu0
  %v1609 = vadd.f32 %v1381, %v1608
  %v1610 = vpop.f32.mrb[0].mxu0
  %1611 = vmatprep.mubr.bf16.mxu0 0
  %1612 = vmatmul.mubr.bf16.gmra.mrb[0].mxu0 %v1429
  %v1613 = vpop.f32.mrb[0].mxu0
  %v1614 = vadd.f32 %v1381, %v1613
  %v1615 = vpop.f32.mrb[0].mxu0
  %v1616 = vpop.f32.mrb[0].mxu0
  %v1617 = vadd.f32 %v1381, %v1616
  %v1618 = vpop.f32.mrb[0].mxu0
  %1619 = vmatprep.mubr.bf16.mxu0 0
  %1620 = vmatmul.mubr.bf16.gmra.mrb[0].mxu0 %v1432
  %v1621 = vpop.f32.mrb[0].mxu0
  %v1622 = vadd.f32 %v1381, %v1621
  %v1623 = vpop.f32.mrb[0].mxu0
  %v1624 = vpop.f32.mrb[0].mxu0
  %v1625 = vadd.f32 %v1381, %v1624
  %v1626 = vpop.f32.mrb[0].mxu0
  %1627 = vmatprep.mubr.bf16.mxu0 0
  %1628 = vmatmul.mubr.bf16.gmra.mrb[0].mxu0 %v1435
  %v1629 = vpop.f32.mrb[0].mxu0
  %v1630 = vadd.f32 %v1381, %v1629
  %v1631 = vpop.f32.mrb[0].mxu0
  %v1632 = vpop.f32.mrb[0].mxu0
  %v1633 = vadd.f32 %v1381, %v1632
  %v1634 = vpop.f32.mrb[0].mxu0
  %1635 = vmatprep.mubr.bf16.mxu0 0
  %1636 = vmatmul.mubr.bf16.gmra.mrb[0].mxu0 %v1438
  %v1637 = vpop.f32.mrb[0].mxu0
  %v1638 = vadd.f32 %v1381, %v1637
  %v1639 = vpop.f32.mrb[0].mxu0
  %v1640 = vpop.f32.mrb[0].mxu0
  %v1641 = vadd.f32 %v1381, %v1640
  %v1642 = vpop.f32.mrb[0].mxu0
  %1643 = vmatprep.mubr.bf16.mxu0 0
  %1644 = vmatmul.mubr.bf16.gmra.mrb[0].mxu0 %v1441
  %v1645 = vpop.f32.mrb[0].mxu0
  %v1646 = vadd.f32 %v1381, %v1645
  %v1647 = vpop.f32.mrb[0].mxu0
  %v1648 = vpop.f32.mrb[0].mxu0
  %v1649 = vadd.f32 %v1381, %v1648
  %v1650 = vpop.f32.mrb[0].mxu0
  %1651 = vmatprep.mubr.bf16.mxu0 0
  %1652 = vmatmul.mubr.bf16.gmra.mrb[0].mxu0 %v1444
  %v1653 = vpop.f32.mrb[0].mxu0
  %v1654 = vadd.f32 %v1381, %v1653
  %v1655 = vpop.f32.mrb[0].mxu0
  %v1656 = vpop.f32.mrb[0].mxu0
  %v1657 = vadd.f32 %v1381, %v1656
  %v1658 = vpop.f32.mrb[0].mxu0
  %1659 = vmatprep.mubr.bf16.mxu0 0
  %1660 = vmatmul.mubr.bf16.gmra.mrb[0].mxu0 %v1447
  %v1661 = vpop.f32.mrb[0].mxu0
  %v1662 = vadd.f32 %v1381, %v1661
  %v1663 = vpop.f32.mrb[0].mxu0
  %v1664 = vpop.f32.mrb[0].mxu0
  %v1665 = vadd.f32 %v1381, %v1664
  %v1666 = vpop.f32.mrb[0].mxu0
  %1667 = vmatprep.mubr.bf16.mxu0 0
  %1668 = vmatmul.mubr.bf16.gmra.mrb[0].mxu0 %v1450
  %v1669 = vpop.f32.mrb[0].mxu0
  %v1670 = vadd.f32 %v1381, %v1669
  %v1671 = vpop.f32.mrb[0].mxu0
  %v1672 = vpop.f32.mrb[0].mxu0
  %v1673 = vadd.f32 %v1381, %v1672
  %v1674 = vpop.f32.mrb[0].mxu0
  %1675 = vmatprep.mubr.bf16.mxu0 0
  %1676 = vmatmul.mubr.bf16.gmra.mrb[0].mxu0 %v1453
  %v1677 = vpop.f32.mrb[0].mxu0
  %v1678 = vadd.f32 %v1381, %v1677
  %v1679 = vpop.f32.mrb[0].mxu0
  %v1680 = vpop.f32.mrb[0].mxu0
  %v1681 = vadd.f32 %v1381, %v1680
  %v1682 = vpop.f32.mrb[0].mxu0
  %1683 = vmatprep.mubr.bf16.mxu0 0
  %1684 = vmatmul.mubr.bf16.gmra.mrb[0].mxu0 %v1456
  %v1685 = vpop.f32.mrb[0].mxu0
  %v1686 = vadd.f32 %v1381, %v1685
  %v1687 = vpop.f32.mrb[0].mxu0
  %v1688 = vpop.f32.mrb[0].mxu0
  %v1689 = vadd.f32 %v1381, %v1688
  %v1690 = vpop.f32.mrb[0].mxu0
  %1691 = vmatprep.mubr.bf16.mxu0 0
  %1692 = vmatmul.mubr.bf16.gmra.mrb[0].mxu0 %v1459
  %v1693 = vpop.f32.mrb[0].mxu0
  %v1694 = vadd.f32 %v1381, %v1693
  %v1695 = vpop.f32.mrb[0].mxu0
  %v1696 = vpop.f32.mrb[0].mxu0
  %v1697 = vadd.f32 %v1381, %v1696
  %v1698 = vpop.f32.mrb[0].mxu0
  %1699 = vmatprep.mubr.bf16.mxu0 0
  %1700 = vmatmul.mubr.bf16.gmra.mrb[0].mxu0 %v1462
  %v1701 = vpop.f32.mrb[0].mxu0
  %v1702 = vadd.f32 %v1381, %v1701
  %v1703 = vpop.f32.mrb[0].mxu0
  %v1704 = vpop.f32.mrb[0].mxu0
  %v1705 = vadd.f32 %v1381, %v1704
  %v1706 = vpop.f32.mrb[0].mxu0
  %1707 = vmatprep.mubr.bf16.mxu0 0
  %1708 = vmatmul.mubr.bf16.gmra.mrb[0].mxu0 %v1465
  %v1709 = vpop.f32.mrb[0].mxu0
  %v1710 = vadd.f32 %v1381, %v1709
  %v1711 = vpop.f32.mrb[0].mxu0
  %v1712 = vpop.f32.mrb[0].mxu0
  %v1713 = vadd.f32 %v1381, %v1712
  %v1714 = vpop.f32.mrb[0].mxu0
  %1715 = vmatprep.mubr.bf16.mxu0 0
  %1716 = vmatmul.mubr.bf16.gmra.mrb[0].mxu0 %v1468
  %v1717 = vpop.f32.mrb[0].mxu0
  %v1718 = vadd.f32 %v1381, %v1717
  %v1719 = vpop.f32.mrb[0].mxu0
  %v1720 = vpop.f32.mrb[0].mxu0
  %v1721 = vadd.f32 %v1381, %v1720
  %v1722 = vpop.f32.mrb[0].mxu0
  %1723 = vmatprep.mubr.bf16.mxu0 0
  %1724 = vmatmul.mubr.bf16.gmra.mrb[0].mxu0 %v1471
  %v1725 = vpop.f32.mrb[0].mxu0
  %v1726 = vadd.f32 %v1381, %v1725
  %v1727 = vpop.f32.mrb[0].mxu0
  %v1728 = vpop.f32.mrb[0].mxu0
  %v1729 = vadd.f32 %v1381, %v1728
  %v1730 = vpop.f32.mrb[0].mxu0
  %1731 = vmatprep.mubr.bf16.mxu0 0
  %1732 = vmatmul.mubr.bf16.gmra.mrb[0].mxu0 %v1474
  %v1733 = vpop.f32.mrb[0].mxu0
  %v1734 = vadd.f32 %v1381, %v1733
  %v1735 = vpop.f32.mrb[0].mxu0
  %v1736 = vpop.f32.mrb[0].mxu0
  %v1737 = vadd.f32 %v1381, %v1736
  %v1738 = vpop.f32.mrb[0].mxu0
  %1739 = vmatprep.mubr.bf16.mxu0 0
  %1740 = vmatmul.mubr.bf16.gmra.mrb[0].mxu0 %v1477
  %v1741 = vpop.f32.mrb[0].mxu0
  %v1742 = vadd.f32 %v1381, %v1741
  %v1743 = vpop.f32.mrb[0].mxu0
  %v1744 = vpop.f32.mrb[0].mxu0
  %v1745 = vadd.f32 %v1381, %v1744
  %v1746 = vpop.f32.mrb[0].mxu0
  %1747 = vmatprep.mubr.bf16.mxu0 0
  %1748 = vmatmul.mubr.bf16.gmra.mrb[0].mxu0 %v1480
  %v1749 = vpop.f32.mrb[0].mxu0
  %v1750 = vadd.f32 %v1381, %v1749
  %v1751 = vpop.f32.mrb[0].mxu0
  %v1752 = vpop.f32.mrb[0].mxu0
  %v1753 = vadd.f32 %v1381, %v1752
  %v1754 = vpop.f32.mrb[0].mxu0
  %1755 = vmatprep.mubr.bf16.mxu0 0
  %1756 = vmatmul.mubr.bf16.gmra.mrb[0].mxu0 %v1483
  %v1757 = vpop.f32.mrb[0].mxu0
  %v1758 = vadd.f32 %v1381, %v1757
  %v1759 = vpop.f32.mrb[0].mxu0
  %v1760 = vpop.f32.mrb[0].mxu0
  %v1761 = vadd.f32 %v1381, %v1760
  %v1762 = vpop.f32.mrb[0].mxu0
  %1763 = vmatprep.mubr.bf16.mxu0 0
  %1764 = vmatmul.mubr.bf16.gmra.mrb[0].mxu0 %v1486
  %v1765 = vpop.f32.mrb[0].mxu0
  %v1766 = vadd.f32 %v1381, %v1765
  %v1767 = vpop.f32.mrb[0].mxu0
  %v1768 = vpop.f32.mrb[0].mxu0
  %v1769 = vadd.f32 %v1381, %v1768
  %v1770 = vpop.f32.mrb[0].mxu0
  %1771 = vmatprep.mubr.bf16.mxu0 0
  %1772 = vmatmul.mubr.bf16.gmra.mrb[0].mxu0 %v1489
  %v1773 = vpop.f32.mrb[0].mxu0
  %v1774 = vadd.f32 %v1381, %v1773
  %v1775 = vpop.f32.mrb[0].mxu0
  %v1776 = vpop.f32.mrb[0].mxu0
  %v1777 = vadd.f32 %v1381, %v1776
  %v1778 = vpop.f32.mrb[0].mxu0
  %1779 = vdwg.mxu0
  %vm1780 = vcmp.ge.f32.partialorder %v1526, 0.0
  %vm1781 = vcmp.ge.f32.partialorder %v1529, 0.0
  %vm1782 = vcmp.ge.f32.partialorder %v1534, 0.0
  %vm1783 = vcmp.ge.f32.partialorder %v1537, 0.0
  %vm1784 = vcmp.ge.f32.partialorder %v1542, 0.0
  %vm1785 = vcmp.ge.f32.partialorder %v1545, 0.0
  %vm1786 = vcmp.ge.f32.partialorder %v1550, 0.0
  %vm1787 = vcmp.ge.f32.partialorder %v1553, 0.0
  %vm1788 = vcmp.ge.f32.partialorder %v1558, 0.0
  %vm1789 = vcmp.ge.f32.partialorder %v1561, 0.0
  %vm1790 = vcmp.ge.f32.partialorder %v1566, 0.0
  %vm1791 = vcmp.ge.f32.partialorder %v1569, 0.0
  %vm1792 = vcmp.ge.f32.partialorder %v1574, 0.0
  %vm1793 = vcmp.ge.f32.partialorder %v1577, 0.0
  %vm1794 = vcmp.ge.f32.partialorder %v1582, 0.0
  %vm1795 = vcmp.ge.f32.partialorder %v1585, 0.0
  %vm1796 = vcmp.ge.f32.partialorder %v1590, 0.0
  %vm1797 = vcmp.ge.f32.partialorder %v1593, 0.0
  %vm1798 = vcmp.ge.f32.partialorder %v1598, 0.0
  %vm1799 = vcmp.ge.f32.partialorder %v1601, 0.0
  %vm1800 = vcmp.ge.f32.partialorder %v1606, 0.0
  %vm1801 = vcmp.ge.f32.partialorder %v1609, 0.0
  %vm1802 = vcmp.ge.f32.partialorder %v1614, 0.0
  %vm1803 = vcmp.ge.f32.partialorder %v1617, 0.0
  %vm1804 = vcmp.ge.f32.partialorder %v1622, 0.0
  %vm1805 = vcmp.ge.f32.partialorder %v1625, 0.0
  %vm1806 = vcmp.ge.f32.partialorder %v1630, 0.0
  %vm1807 = vcmp.ge.f32.partialorder %v1633, 0.0
  %vm1808 = vcmp.ge.f32.partialorder %v1638, 0.0
  %vm1809 = vcmp.ge.f32.partialorder %v1641, 0.0
  %vm1810 = vcmp.ge.f32.partialorder %v1646, 0.0
  %vm1811 = vcmp.ge.f32.partialorder %v1649, 0.0
  %vm1812 = vcmp.ge.f32.partialorder %v1654, 0.0
  %vm1813 = vcmp.ge.f32.partialorder %v1657, 0.0
  %vm1814 = vcmp.ge.f32.partialorder %v1662, 0.0
  %vm1815 = vcmp.ge.f32.partialorder %v1665, 0.0
  %vm1816 = vcmp.ge.f32.partialorder %v1670, 0.0
  %vm1817 = vcmp.ge.f32.partialorder %v1673, 0.0
  %vm1818 = vcmp.ge.f32.partialorder %v1678, 0.0
  %vm1819 = vcmp.ge.f32.partialorder %v1681, 0.0
  %vm1820 = vcmp.ge.f32.partialorder %v1686, 0.0
  %vm1821 = vcmp.ge.f32.partialorder %v1689, 0.0
  %vm1822 = vcmp.ge.f32.partialorder %v1694, 0.0
  %vm1823 = vcmp.ge.f32.partialorder %v1697, 0.0
  %vm1824 = vcmp.ge.f32.partialorder %v1702, 0.0
  %vm1825 = vcmp.ge.f32.partialorder %v1705, 0.0
  %vm1826 = vcmp.ge.f32.partialorder %v1710, 0.0
  %vm1827 = vcmp.ge.f32.partialorder %v1713, 0.0
  %vm1828 = vcmp.ge.f32.partialorder %v1718, 0.0
  %vm1829 = vcmp.ge.f32.partialorder %v1721, 0.0
  %vm1830 = vcmp.ge.f32.partialorder %v1726, 0.0
  %vm1831 = vcmp.ge.f32.partialorder %v1729, 0.0
  %vm1832 = vcmp.ge.f32.partialorder %v1734, 0.0
  %vm1833 = vcmp.ge.f32.partialorder %v1737, 0.0
  %vm1834 = vcmp.ge.f32.partialorder %v1742, 0.0
  %vm1835 = vcmp.ge.f32.partialorder %v1745, 0.0
  %vm1836 = vcmp.ge.f32.partialorder %v1750, 0.0
  %vm1837 = vcmp.ge.f32.partialorder %v1753, 0.0
  %vm1838 = vcmp.ge.f32.partialorder %v1758, 0.0
  %vm1839 = vcmp.ge.f32.partialorder %v1761, 0.0
  %vm1840 = vcmp.ge.f32.partialorder %v1766, 0.0
  %vm1841 = vcmp.ge.f32.partialorder %v1769, 0.0
  %vm1842 = vcmp.ge.f32.partialorder %v1774, 0.0
  %vm1843 = vcmp.ge.f32.partialorder %v1777, 0.0
  %v1844 = vmul.f32 %v1526, 0.2
  %v1845 = vmul.f32 %v1529, 0.2
  %v1846 = vmul.f32 %v1534, 0.2
  %v1847 = vmul.f32 %v1537, 0.2
  %v1848 = vmul.f32 %v1542, 0.2
  %v1849 = vmul.f32 %v1545, 0.2
  %v1850 = vmul.f32 %v1550, 0.2
  %v1851 = vmul.f32 %v1553, 0.2
  %v1852 = vmul.f32 %v1558, 0.2
  %v1853 = vmul.f32 %v1561, 0.2
  %v1854 = vmul.f32 %v1566, 0.2
  %v1855 = vmul.f32 %v1569, 0.2
  %v1856 = vmul.f32 %v1574, 0.2
  %v1857 = vmul.f32 %v1577, 0.2
  %v1858 = vmul.f32 %v1582, 0.2
  %v1859 = vmul.f32 %v1585, 0.2
  %v1860 = vmul.f32 %v1590, 0.2
  %v1861 = vmul.f32 %v1593, 0.2
  %v1862 = vmul.f32 %v1598, 0.2
  %v1863 = vmul.f32 %v1601, 0.2
  %v1864 = vmul.f32 %v1606, 0.2
  %v1865 = vmul.f32 %v1609, 0.2
  %v1866 = vmul.f32 %v1614, 0.2
  %v1867 = vmul.f32 %v1617, 0.2
  %v1868 = vmul.f32 %v1622, 0.2
  %v1869 = vmul.f32 %v1625, 0.2
  %v1870 = vmul.f32 %v1630, 0.2
  %v1871 = vmul.f32 %v1633, 0.2
  %v1872 = vmul.f32 %v1638, 0.2
  %v1873 = vmul.f32 %v1641, 0.2
  %v1874 = vmul.f32 %v1646, 0.2
  %v1875 = vmul.f32 %v1649, 0.2
  %v1876 = vmul.f32 %v1654, 0.2
  %v1877 = vmul.f32 %v1657, 0.2
  %v1878 = vmul.f32 %v1662, 0.2
  %v1879 = vmul.f32 %v1665, 0.2
  %v1880 = vmul.f32 %v1670, 0.2
  %v1881 = vmul.f32 %v1673, 0.2
  %v1882 = vmul.f32 %v1678, 0.2
  %v1883 = vmul.f32 %v1681, 0.2
  %v1884 = vmul.f32 %v1686, 0.2
  %v1885 = vmul.f32 %v1689, 0.2
  %v1886 = vmul.f32 %v1694, 0.2
  %v1887 = vmul.f32 %v1697, 0.2
  %v1888 = vmul.f32 %v1702, 0.2
  %v1889 = vmul.f32 %v1705, 0.2
  %v1890 = vmul.f32 %v1710, 0.2
  %v1891 = vmul.f32 %v1713, 0.2
  %v1892 = vmul.f32 %v1718, 0.2
  %v1893 = vmul.f32 %v1721, 0.2
  %v1894 = vmul.f32 %v1726, 0.2
  %v1895 = vmul.f32 %v1729, 0.2
  %v1896 = vmul.f32 %v1734, 0.2
  %v1897 = vmul.f32 %v1737, 0.2
  %v1898 = vmul.f32 %v1742, 0.2
  %v1899 = vmul.f32 %v1745, 0.2
  %v1900 = vmul.f32 %v1750, 0.2
  %v1901 = vmul.f32 %v1753, 0.2
  %v1902 = vmul.f32 %v1758, 0.2
  %v1903 = vmul.f32 %v1761, 0.2
  %v1904 = vmul.f32 %v1766, 0.2
  %v1905 = vmul.f32 %v1769, 0.2
  %v1906 = vmul.f32 %v1774, 0.2
  %v1907 = vmul.f32 %v1777, 0.2
  %v1908 = vsel %vm1780, %v1526, %v1844
  %v1909 = vsel %vm1781, %v1529, %v1845
  %v1910 = vsel %vm1782, %v1534, %v1846
  %v1911 = vsel %vm1783, %v1537, %v1847
  %v1912 = vsel %vm1784, %v1542, %v1848
  %v1913 = vsel %vm1785, %v1545, %v1849
  %v1914 = vsel %vm1786, %v1550, %v1850
  %v1915 = vsel %vm1787, %v1553, %v1851
  %v1916 = vsel %vm1788, %v1558, %v1852
  %v1917 = vsel %vm1789, %v1561, %v1853
  %v1918 = vsel %vm1790, %v1566, %v1854
  %v1919 = vsel %vm1791, %v1569, %v1855
  %v1920 = vsel %vm1792, %v1574, %v1856
  %v1921 = vsel %vm1793, %v1577, %v1857
  %v1922 = vsel %vm1794, %v1582, %v1858
  %v1923 = vsel %vm1795, %v1585, %v1859
  %v1924 = vsel %vm1796, %v1590, %v1860
  %v1925 = vsel %vm1797, %v1593, %v1861
  %v1926 = vsel %vm1798, %v1598, %v1862
  %v1927 = vsel %vm1799, %v1601, %v1863
  %v1928 = vsel %vm1800, %v1606, %v1864
  %v1929 = vsel %vm1801, %v1609, %v1865
  %v1930 = vsel %vm1802, %v1614, %v1866
  %v1931 = vsel %vm1803, %v1617, %v1867
  %v1932 = vsel %vm1804, %v1622, %v1868
  %v1933 = vsel %vm1805, %v1625, %v1869
  %v1934 = vsel %vm1806, %v1630, %v1870
  %v1935 = vsel %vm1807, %v1633, %v1871
  %v1936 = vsel %vm1808, %v1638, %v1872
  %v1937 = vsel %vm1809, %v1641, %v1873
  %v1938 = vsel %vm1810, %v1646, %v1874
  %v1939 = vsel %vm1811, %v1649, %v1875
  %v1940 = vsel %vm1812, %v1654, %v1876
  %v1941 = vsel %vm1813, %v1657, %v1877
  %v1942 = vsel %vm1814, %v1662, %v1878
  %v1943 = vsel %vm1815, %v1665, %v1879
  %v1944 = vsel %vm1816, %v1670, %v1880
  %v1945 = vsel %vm1817, %v1673, %v1881
  %v1946 = vsel %vm1818, %v1678, %v1882
  %v1947 = vsel %vm1819, %v1681, %v1883
  %v1948 = vsel %vm1820, %v1686, %v1884
  %v1949 = vsel %vm1821, %v1689, %v1885
  %v1950 = vsel %vm1822, %v1694, %v1886
  %v1951 = vsel %vm1823, %v1697, %v1887
  %v1952 = vsel %vm1824, %v1702, %v1888
  %v1953 = vsel %vm1825, %v1705, %v1889
  %v1954 = vsel %vm1826, %v1710, %v1890
  %v1955 = vsel %vm1827, %v1713, %v1891
  %v1956 = vsel %vm1828, %v1718, %v1892
  %v1957 = vsel %vm1829, %v1721, %v1893
  %v1958 = vsel %vm1830, %v1726, %v1894
  %v1959 = vsel %vm1831, %v1729, %v1895
  %v1960 = vsel %vm1832, %v1734, %v1896
  %v1961 = vsel %vm1833, %v1737, %v1897
  %v1962 = vsel %vm1834, %v1742, %v1898
  %v1963 = vsel %vm1835, %v1745, %v1899
  %v1964 = vsel %vm1836, %v1750, %v1900
  %v1965 = vsel %vm1837, %v1753, %v1901
  %v1966 = vsel %vm1838, %v1758, %v1902
  %v1967 = vsel %vm1839, %v1761, %v1903
  %v1968 = vsel %vm1840, %v1766, %v1904
  %v1969 = vsel %vm1841, %v1769, %v1905
  %v1970 = vsel %vm1842, %v1774, %v1906
  %v1971 = vsel %vm1843, %v1777, %v1907
  %v1972 = vld [vmem:[%s33] sm:$0xf]
  %v1973 = vld [vmem:[%s33 + $0x4] sm:$0xf]
  %v1974 = vld [vmem:[%s33 + $0x8] sm:$0xf]
  %v1975 = vld [vmem:[%s33 + $0xc] sm:$0xf]
  %v1976 = vld [vmem:[%s33 + $0x10] sm:$0xf]
  %v1977 = vld [vmem:[%s33 + $0x14] sm:$0xf]
  %v1978 = vld [vmem:[%s33 + $0x18] sm:$0xf]
  %v1979 = vld [vmem:[%s33 + $0x1c] sm:$0xf]
  %v1980 = vpack.c.bf16 %v1909, %v1908
  %v1981 = vpack.c.bf16 %v1911, %v1910
  %v1982 = vpack.c.bf16 %v1913, %v1912
  %v1983 = vpack.c.bf16 %v1915, %v1914
  %v1984 = vpack.c.bf16 %v1917, %v1916
  %v1985 = vpack.c.bf16 %v1919, %v1918
  %v1986 = vpack.c.bf16 %v1921, %v1920
  %v1987 = vpack.c.bf16 %v1923, %v1922
  %v1988 = vpack.c.bf16 %v1925, %v1924
  %v1989 = vpack.c.bf16 %v1927, %v1926
  %v1990 = vpack.c.bf16 %v1929, %v1928
  %v1991 = vpack.c.bf16 %v1931, %v1930
  %v1992 = vpack.c.bf16 %v1933, %v1932
  %v1993 = vpack.c.bf16 %v1935, %v1934
  %v1994 = vpack.c.bf16 %v1937, %v1936
  %v1995 = vpack.c.bf16 %v1939, %v1938
  %v1996 = vpack.c.bf16 %v1941, %v1940
  %v1997 = vpack.c.bf16 %v1943, %v1942
  %v1998 = vpack.c.bf16 %v1945, %v1944
  %v1999 = vpack.c.bf16 %v1947, %v1946
  %v2000 = vpack.c.bf16 %v1949, %v1948
  %v2001 = vpack.c.bf16 %v1951, %v1950
  %v2002 = vpack.c.bf16 %v1953, %v1952
  %v2003 = vpack.c.bf16 %v1955, %v1954
  %v2004 = vpack.c.bf16 %v1957, %v1956
  %v2005 = vpack.c.bf16 %v1959, %v1958
  %v2006 = vpack.c.bf16 %v1961, %v1960
  %v2007 = vpack.c.bf16 %v1963, %v1962
  %v2008 = vpack.c.bf16 %v1965, %v1964
  %v2009 = vpack.c.bf16 %v1967, %v1966
  %v2010 = vpack.c.bf16 %v1969, %v1968
  %v2011 = vpack.c.bf16 %v1971, %v1970
  %v2012 = vld [vmem:[%s35] sm:$0x1]
  %v2014 = vlaneseq
  %v2015 = vshrl.u32 %v2014, 7
  %v2016 = vsub.s32 0, %v2015
  %v2017 = vrot.slane %v2012, %v2016
  %v2027 = vunpack.c.l.b16 %v1972
  %v2028 = vunpack.c.l.b16 %v1973
  %v2029 = vunpack.c.l.b16 %v1974
  %v2030 = vunpack.c.l.b16 %v1975
  %v2031 = vunpack.c.l.b16 %v1976
  %v2032 = vunpack.c.l.b16 %v1977
  %v2033 = vunpack.c.l.b16 %v1978
  %v2034 = vunpack.c.l.b16 %v1979
  %v2035 = vpack.c.b16 %v2028, %v2027
  %v2036 = vpack.c.b16 %v2030, %v2029
  %v2037 = vpack.c.b16 %v2032, %v2031
  %v2038 = vpack.c.b16 %v2034, %v2033
  %v2044 = vsel %vm280, %v1980, 0
  %v2047 = vsel %vm280, %v1981, 0
  %v2050 = vsel %vm280, %v1982, 0
  %v2053 = vsel %vm280, %v1983, 0
  %v2056 = vsel %vm280, %v1984, 0
  %v2059 = vsel %vm280, %v1985, 0
  %v2062 = vsel %vm280, %v1986, 0
  %v2065 = vsel %vm280, %v1987, 0
  %v2068 = vsel %vm280, %v1988, 0
  %v2071 = vsel %vm280, %v1989, 0
  %v2074 = vsel %vm280, %v1990, 0
  %v2077 = vsel %vm280, %v1991, 0
  %v2080 = vsel %vm280, %v1992, 0
  %v2083 = vsel %vm280, %v1993, 0
  %v2086 = vsel %vm280, %v1994, 0
  %v2089 = vsel %vm280, %v1995, 0
  %v2092 = vsel %vm280, %v1996, 0
  %v2095 = vsel %vm280, %v1997, 0
  %v2098 = vsel %vm280, %v1998, 0
  %v2101 = vsel %vm280, %v1999, 0
  %v2104 = vsel %vm280, %v2000, 0
  %v2107 = vsel %vm280, %v2001, 0
  %v2110 = vsel %vm280, %v2002, 0
  %v2113 = vsel %vm280, %v2003, 0
  %v2116 = vsel %vm280, %v2004, 0
  %v2119 = vsel %vm280, %v2005, 0
  %v2122 = vsel %vm280, %v2006, 0
  %v2125 = vsel %vm280, %v2007, 0
  %v2128 = vsel %vm280, %v2008, 0
  %v2131 = vsel %vm280, %v2009, 0
  %v2134 = vsel %vm280, %v2010, 0
  %v2137 = vsel %vm280, %v2011, 0
  %2139 = vmatprep.subr.bf16.mxu0 0
  %2140 = vmatpush1.bf16.msra.mxu0 %v2035
  %2141 = vmatprep.subr.bf16.mxu0 0
  %2142 = vmatpush1.bf16.msra.mxu0 %v2036
  %2143 = vmatprep.subr.bf16.mxu0 0
  %2144 = vmatpush1.bf16.msra.mxu0 %v2037
  %2145 = vmatprep.subr.bf16.mxu0 0
  %2146 = vmatpush1.bf16.msra.mxu0 %v2038
  %2147 = vmatprep.subr.bf16.mxu0 0
  %2148 = vmatpush1.bf16.msra.mxu0 0
  %2149 = vmatprep.subr.bf16.mxu0 0
  %2150 = vmatpush1.bf16.msra.mxu0 0
  %2151 = vmatprep.subr.bf16.mxu0 0
  %2152 = vmatpush1.bf16.msra.mxu0 0
  %2153 = vmatprep.subr.bf16.mxu0 0
  %2154 = vmatpush1.bf16.msra.mxu0 0
  %2155 = vmatprep.subr.bf16.mxu0 0
  %2156 = vmatpush1.bf16.msra.mxu0 0
  %2157 = vmatprep.subr.bf16.mxu0 0
  %2158 = vmatpush1.bf16.msra.mxu0 0
  %2159 = vmatprep.subr.bf16.mxu0 0
  %2160 = vmatpush1.bf16.msra.mxu0 0
  %2161 = vmatprep.subr.bf16.mxu0 0
  %2162 = vmatpush1.bf16.msra.mxu0 0
  %2163 = vmatprep.subr.bf16.mxu0 0
  %2164 = vmatpush1.bf16.msra.mxu0 0
  %2165 = vmatprep.subr.bf16.mxu0 0
  %2166 = vmatpush1.bf16.msra.mxu0 0
  %2167 = vmatprep.subr.bf16.mxu0 0
  %2168 = vmatpush1.bf16.msra.mxu0 0
  %2169 = vmatprep.subr.bf16.mxu0 0
  %2170 = vmatpush1.bf16.msra.mxu0 0
  %2171 = vmatprep.mubr.bf16.mxu0 0
  %2172 = vmatmul.mubr.bf16.gmra.mrb[0].mxu0 %v2044
  %v2173 = vpop.f32.mrb[0].mxu0
  %v2174 = vadd.f32 %v2017, %v2173
  %v2175 = vpop.f32.mrb[0].mxu0
  %v2176 = vpop.f32.mrb[0].mxu0
  %v2177 = vadd.f32 %v2017, %v2176
  %v2178 = vpop.f32.mrb[0].mxu0
  %2179 = vmatprep.mubr.bf16.mxu0 0
  %2180 = vmatmul.mubr.bf16.gmra.mrb[0].mxu0 %v2047
  %v2181 = vpop.f32.mrb[0].mxu0
  %v2182 = vadd.f32 %v2017, %v2181
  %v2183 = vpop.f32.mrb[0].mxu0
  %v2184 = vpop.f32.mrb[0].mxu0
  %v2185 = vadd.f32 %v2017, %v2184
  %v2186 = vpop.f32.mrb[0].mxu0
  %2187 = vmatprep.mubr.bf16.mxu0 0
  %2188 = vmatmul.mubr.bf16.gmra.mrb[0].mxu0 %v2050
  %v2189 = vpop.f32.mrb[0].mxu0
  %v2190 = vadd.f32 %v2017, %v2189
  %v2191 = vpop.f32.mrb[0].mxu0
  %v2192 = vpop.f32.mrb[0].mxu0
  %v2193 = vadd.f32 %v2017, %v2192
  %v2194 = vpop.f32.mrb[0].mxu0
  %2195 = vmatprep.mubr.bf16.mxu0 0
  %2196 = vmatmul.mubr.bf16.gmra.mrb[0].mxu0 %v2053
  %v2197 = vpop.f32.mrb[0].mxu0
  %v2198 = vadd.f32 %v2017, %v2197
  %v2199 = vpop.f32.mrb[0].mxu0
  %v2200 = vpop.f32.mrb[0].mxu0
  %v2201 = vadd.f32 %v2017, %v2200
  %v2202 = vpop.f32.mrb[0].mxu0
  %2203 = vmatprep.mubr.bf16.mxu0 0
  %2204 = vmatmul.mubr.bf16.gmra.mrb[0].mxu0 %v2056
  %v2205 = vpop.f32.mrb[0].mxu0
  %v2206 = vadd.f32 %v2017, %v2205
  %v2207 = vpop.f32.mrb[0].mxu0
  %v2208 = vpop.f32.mrb[0].mxu0
  %v2209 = vadd.f32 %v2017, %v2208
  %v2210 = vpop.f32.mrb[0].mxu0
  %2211 = vmatprep.mubr.bf16.mxu0 0
  %2212 = vmatmul.mubr.bf16.gmra.mrb[0].mxu0 %v2059
  %v2213 = vpop.f32.mrb[0].mxu0
  %v2214 = vadd.f32 %v2017, %v2213
  %v2215 = vpop.f32.mrb[0].mxu0
  %v2216 = vpop.f32.mrb[0].mxu0
  %v2217 = vadd.f32 %v2017, %v2216
  %v2218 = vpop.f32.mrb[0].mxu0
  %2219 = vmatprep.mubr.bf16.mxu0 0
  %2220 = vmatmul.mubr.bf16.gmra.mrb[0].mxu0 %v2062
  %v2221 = vpop.f32.mrb[0].mxu0
  %v2222 = vadd.f32 %v2017, %v2221
  %v2223 = vpop.f32.mrb[0].mxu0
  %v2224 = vpop.f32.mrb[0].mxu0
  %v2225 = vadd.f32 %v2017, %v2224
  %v2226 = vpop.f32.mrb[0].mxu0
  %2227 = vmatprep.mubr.bf16.mxu0 0
  %2228 = vmatmul.mubr.bf16.gmra.mrb[0].mxu0 %v2065
  %v2229 = vpop.f32.mrb[0].mxu0
  %v2230 = vadd.f32 %v2017, %v2229
  %v2231 = vpop.f32.mrb[0].mxu0
  %v2232 = vpop.f32.mrb[0].mxu0
  %v2233 = vadd.f32 %v2017, %v2232
  %v2234 = vpop.f32.mrb[0].mxu0
  %2235 = vmatprep.mubr.bf16.mxu0 0
  %2236 = vmatmul.mubr.bf16.gmra.mrb[0].mxu0 %v2068
  %v2237 = vpop.f32.mrb[0].mxu0
  %v2238 = vadd.f32 %v2017, %v2237
  %v2239 = vpop.f32.mrb[0].mxu0
  %v2240 = vpop.f32.mrb[0].mxu0
  %v2241 = vadd.f32 %v2017, %v2240
  %v2242 = vpop.f32.mrb[0].mxu0
  %2243 = vmatprep.mubr.bf16.mxu0 0
  %2244 = vmatmul.mubr.bf16.gmra.mrb[0].mxu0 %v2071
  %v2245 = vpop.f32.mrb[0].mxu0
  %v2246 = vadd.f32 %v2017, %v2245
  %v2247 = vpop.f32.mrb[0].mxu0
  %v2248 = vpop.f32.mrb[0].mxu0
  %v2249 = vadd.f32 %v2017, %v2248
  %v2250 = vpop.f32.mrb[0].mxu0
  %2251 = vmatprep.mubr.bf16.mxu0 0
  %2252 = vmatmul.mubr.bf16.gmra.mrb[0].mxu0 %v2074
  %v2253 = vpop.f32.mrb[0].mxu0
  %v2254 = vadd.f32 %v2017, %v2253
  %v2255 = vpop.f32.mrb[0].mxu0
  %v2256 = vpop.f32.mrb[0].mxu0
  %v2257 = vadd.f32 %v2017, %v2256
  %v2258 = vpop.f32.mrb[0].mxu0
  %2259 = vmatprep.mubr.bf16.mxu0 0
  %2260 = vmatmul.mubr.bf16.gmra.mrb[0].mxu0 %v2077
  %v2261 = vpop.f32.mrb[0].mxu0
  %v2262 = vadd.f32 %v2017, %v2261
  %v2263 = vpop.f32.mrb[0].mxu0
  %v2264 = vpop.f32.mrb[0].mxu0
  %v2265 = vadd.f32 %v2017, %v2264
  %v2266 = vpop.f32.mrb[0].mxu0
  %2267 = vmatprep.mubr.bf16.mxu0 0
  %2268 = vmatmul.mubr.bf16.gmra.mrb[0].mxu0 %v2080
  %v2269 = vpop.f32.mrb[0].mxu0
  %v2270 = vadd.f32 %v2017, %v2269
  %v2271 = vpop.f32.mrb[0].mxu0
  %v2272 = vpop.f32.mrb[0].mxu0
  %v2273 = vadd.f32 %v2017, %v2272
  %v2274 = vpop.f32.mrb[0].mxu0
  %2275 = vmatprep.mubr.bf16.mxu0 0
  %2276 = vmatmul.mubr.bf16.gmra.mrb[0].mxu0 %v2083
  %v2277 = vpop.f32.mrb[0].mxu0
  %v2278 = vadd.f32 %v2017, %v2277
  %v2279 = vpop.f32.mrb[0].mxu0
  %v2280 = vpop.f32.mrb[0].mxu0
  %v2281 = vadd.f32 %v2017, %v2280
  %v2282 = vpop.f32.mrb[0].mxu0
  %2283 = vmatprep.mubr.bf16.mxu0 0
  %2284 = vmatmul.mubr.bf16.gmra.mrb[0].mxu0 %v2086
  %v2285 = vpop.f32.mrb[0].mxu0
  %v2286 = vadd.f32 %v2017, %v2285
  %v2287 = vpop.f32.mrb[0].mxu0
  %v2288 = vpop.f32.mrb[0].mxu0
  %v2289 = vadd.f32 %v2017, %v2288
  %v2290 = vpop.f32.mrb[0].mxu0
  %2291 = vmatprep.mubr.bf16.mxu0 0
  %2292 = vmatmul.mubr.bf16.gmra.mrb[0].mxu0 %v2089
  %v2293 = vpop.f32.mrb[0].mxu0
  %v2294 = vadd.f32 %v2017, %v2293
  %v2295 = vpop.f32.mrb[0].mxu0
  %v2296 = vpop.f32.mrb[0].mxu0
  %v2297 = vadd.f32 %v2017, %v2296
  %v2298 = vpop.f32.mrb[0].mxu0
  %2299 = vmatprep.mubr.bf16.mxu0 0
  %2300 = vmatmul.mubr.bf16.gmra.mrb[0].mxu0 %v2092
  %v2301 = vpop.f32.mrb[0].mxu0
  %v2302 = vadd.f32 %v2017, %v2301
  %v2303 = vpop.f32.mrb[0].mxu0
  %v2304 = vpop.f32.mrb[0].mxu0
  %v2305 = vadd.f32 %v2017, %v2304
  %v2306 = vpop.f32.mrb[0].mxu0
  %2307 = vmatprep.mubr.bf16.mxu0 0
  %2308 = vmatmul.mubr.bf16.gmra.mrb[0].mxu0 %v2095
  %v2309 = vpop.f32.mrb[0].mxu0
  %v2310 = vadd.f32 %v2017, %v2309
  %v2311 = vpop.f32.mrb[0].mxu0
  %v2312 = vpop.f32.mrb[0].mxu0
  %v2313 = vadd.f32 %v2017, %v2312
  %v2314 = vpop.f32.mrb[0].mxu0
  %2315 = vmatprep.mubr.bf16.mxu0 0
  %2316 = vmatmul.mubr.bf16.gmra.mrb[0].mxu0 %v2098
  %v2317 = vpop.f32.mrb[0].mxu0
  %v2318 = vadd.f32 %v2017, %v2317
  %v2319 = vpop.f32.mrb[0].mxu0
  %v2320 = vpop.f32.mrb[0].mxu0
  %v2321 = vadd.f32 %v2017, %v2320
  %v2322 = vpop.f32.mrb[0].mxu0
  %2323 = vmatprep.mubr.bf16.mxu0 0
  %2324 = vmatmul.mubr.bf16.gmra.mrb[0].mxu0 %v2101
  %v2325 = vpop.f32.mrb[0].mxu0
  %v2326 = vadd.f32 %v2017, %v2325
  %v2327 = vpop.f32.mrb[0].mxu0
  %v2328 = vpop.f32.mrb[0].mxu0
  %v2329 = vadd.f32 %v2017, %v2328
  %v2330 = vpop.f32.mrb[0].mxu0
  %2331 = vmatprep.mubr.bf16.mxu0 0
  %2332 = vmatmul.mubr.bf16.gmra.mrb[0].mxu0 %v2104
  %v2333 = vpop.f32.mrb[0].mxu0
  %v2334 = vadd.f32 %v2017, %v2333
  %v2335 = vpop.f32.mrb[0].mxu0
  %v2336 = vpop.f32.mrb[0].mxu0
  %v2337 = vadd.f32 %v2017, %v2336
  %v2338 = vpop.f32.mrb[0].mxu0
  %2339 = vmatprep.mubr.bf16.mxu0 0
  %2340 = vmatmul.mubr.bf16.gmra.mrb[0].mxu0 %v2107
  %v2341 = vpop.f32.mrb[0].mxu0
  %v2342 = vadd.f32 %v2017, %v2341
  %v2343 = vpop.f32.mrb[0].mxu0
  %v2344 = vpop.f32.mrb[0].mxu0
  %v2345 = vadd.f32 %v2017, %v2344
  %v2346 = vpop.f32.mrb[0].mxu0
  %2347 = vmatprep.mubr.bf16.mxu0 0
  %2348 = vmatmul.mubr.bf16.gmra.mrb[0].mxu0 %v2110
  %v2349 = vpop.f32.mrb[0].mxu0
  %v2350 = vadd.f32 %v2017, %v2349
  %v2351 = vpop.f32.mrb[0].mxu0
  %v2352 = vpop.f32.mrb[0].mxu0
  %v2353 = vadd.f32 %v2017, %v2352
  %v2354 = vpop.f32.mrb[0].mxu0
  %2355 = vmatprep.mubr.bf16.mxu0 0
  %2356 = vmatmul.mubr.bf16.gmra.mrb[0].mxu0 %v2113
  %v2357 = vpop.f32.mrb[0].mxu0
  %v2358 = vadd.f32 %v2017, %v2357
  %v2359 = vpop.f32.mrb[0].mxu0
  %v2360 = vpop.f32.mrb[0].mxu0
  %v2361 = vadd.f32 %v2017, %v2360
  %v2362 = vpop.f32.mrb[0].mxu0
  %2363 = vmatprep.mubr.bf16.mxu0 0
  %2364 = vmatmul.mubr.bf16.gmra.mrb[0].mxu0 %v2116
  %v2365 = vpop.f32.mrb[0].mxu0
  %v2366 = vadd.f32 %v2017, %v2365
  %v2367 = vpop.f32.mrb[0].mxu0
  %v2368 = vpop.f32.mrb[0].mxu0
  %v2369 = vadd.f32 %v2017, %v2368
  %v2370 = vpop.f32.mrb[0].mxu0
  %2371 = vmatprep.mubr.bf16.mxu0 0
  %2372 = vmatmul.mubr.bf16.gmra.mrb[0].mxu0 %v2119
  %v2373 = vpop.f32.mrb[0].mxu0
  %v2374 = vadd.f32 %v2017, %v2373
  %v2375 = vpop.f32.mrb[0].mxu0
  %v2376 = vpop.f32.mrb[0].mxu0
  %v2377 = vadd.f32 %v2017, %v2376
  %v2378 = vpop.f32.mrb[0].mxu0
  %2379 = vmatprep.mubr.bf16.mxu0 0
  %2380 = vmatmul.mubr.bf16.gmra.mrb[0].mxu0 %v2122
  %v2381 = vpop.f32.mrb[0].mxu0
  %v2382 = vadd.f32 %v2017, %v2381
  %v2383 = vpop.f32.mrb[0].mxu0
  %v2384 = vpop.f32.mrb[0].mxu0
  %v2385 = vadd.f32 %v2017, %v2384
  %v2386 = vpop.f32.mrb[0].mxu0
  %2387 = vmatprep.mubr.bf16.mxu0 0
  %2388 = vmatmul.mubr.bf16.gmra.mrb[0].mxu0 %v2125
  %v2389 = vpop.f32.mrb[0].mxu0
  %v2390 = vadd.f32 %v2017, %v2389
  %v2391 = vpop.f32.mrb[0].mxu0
  %v2392 = vpop.f32.mrb[0].mxu0
  %v2393 = vadd.f32 %v2017, %v2392
  %v2394 = vpop.f32.mrb[0].mxu0
  %2395 = vmatprep.mubr.bf16.mxu0 0
  %2396 = vmatmul.mubr.bf16.gmra.mrb[0].mxu0 %v2128
  %v2397 = vpop.f32.mrb[0].mxu0
  %v2398 = vadd.f32 %v2017, %v2397
  %v2399 = vpop.f32.mrb[0].mxu0
  %v2400 = vpop.f32.mrb[0].mxu0
  %v2401 = vadd.f32 %v2017, %v2400
  %v2402 = vpop.f32.mrb[0].mxu0
  %2403 = vmatprep.mubr.bf16.mxu0 0
  %2404 = vmatmul.mubr.bf16.gmra.mrb[0].mxu0 %v2131
  %v2405 = vpop.f32.mrb[0].mxu0
  %v2406 = vadd.f32 %v2017, %v2405
  %v2407 = vpop.f32.mrb[0].mxu0
  %v2408 = vpop.f32.mrb[0].mxu0
  %v2409 = vadd.f32 %v2017, %v2408
  %v2410 = vpop.f32.mrb[0].mxu0
  %2411 = vmatprep.mubr.bf16.mxu0 0
  %2412 = vmatmul.mubr.bf16.gmra.mrb[0].mxu0 %v2134
  %v2413 = vpop.f32.mrb[0].mxu0
  %v2414 = vadd.f32 %v2017, %v2413
  %v2415 = vpop.f32.mrb[0].mxu0
  %v2416 = vpop.f32.mrb[0].mxu0
  %v2417 = vadd.f32 %v2017, %v2416
  %v2418 = vpop.f32.mrb[0].mxu0
  %2419 = vmatprep.mubr.bf16.mxu0 0
  %2420 = vmatmul.mubr.bf16.gmra.mrb[0].mxu0 %v2137
  %v2421 = vpop.f32.mrb[0].mxu0
  %v2422 = vadd.f32 %v2017, %v2421
  %v2423 = vpop.f32.mrb[0].mxu0
  %v2424 = vpop.f32.mrb[0].mxu0
  %v2425 = vadd.f32 %v2017, %v2424
  %v2426 = vpop.f32.mrb[0].mxu0
  %2427 = vdwg.mxu0
  %vm2428 = vcmp.ge.f32.partialorder %v2174, 0.0
  %vm2429 = vcmp.ge.f32.partialorder %v2177, 0.0
  %vm2430 = vcmp.ge.f32.partialorder %v2182, 0.0
  %vm2431 = vcmp.ge.f32.partialorder %v2185, 0.0
  %vm2432 = vcmp.ge.f32.partialorder %v2190, 0.0
  %vm2433 = vcmp.ge.f32.partialorder %v2193, 0.0
  %vm2434 = vcmp.ge.f32.partialorder %v2198, 0.0
  %vm2435 = vcmp.ge.f32.partialorder %v2201, 0.0
  %vm2436 = vcmp.ge.f32.partialorder %v2206, 0.0
  %vm2437 = vcmp.ge.f32.partialorder %v2209, 0.0
  %vm2438 = vcmp.ge.f32.partialorder %v2214, 0.0
  %vm2439 = vcmp.ge.f32.partialorder %v2217, 0.0
  %vm2440 = vcmp.ge.f32.partialorder %v2222, 0.0
  %vm2441 = vcmp.ge.f32.partialorder %v2225, 0.0
  %vm2442 = vcmp.ge.f32.partialorder %v2230, 0.0
  %vm2443 = vcmp.ge.f32.partialorder %v2233, 0.0
  %vm2444 = vcmp.ge.f32.partialorder %v2238, 0.0
  %vm2445 = vcmp.ge.f32.partialorder %v2241, 0.0
  %vm2446 = vcmp.ge.f32.partialorder %v2246, 0.0
  %vm2447 = vcmp.ge.f32.partialorder %v2249, 0.0
  %vm2448 = vcmp.ge.f32.partialorder %v2254, 0.0
  %vm2449 = vcmp.ge.f32.partialorder %v2257, 0.0
  %vm2450 = vcmp.ge.f32.partialorder %v2262, 0.0
  %vm2451 = vcmp.ge.f32.partialorder %v2265, 0.0
  %vm2452 = vcmp.ge.f32.partialorder %v2270, 0.0
  %vm2453 = vcmp.ge.f32.partialorder %v2273, 0.0
  %vm2454 = vcmp.ge.f32.partialorder %v2278, 0.0
  %vm2455 = vcmp.ge.f32.partialorder %v2281, 0.0
  %vm2456 = vcmp.ge.f32.partialorder %v2286, 0.0
  %vm2457 = vcmp.ge.f32.partialorder %v2289, 0.0
  %vm2458 = vcmp.ge.f32.partialorder %v2294, 0.0
  %vm2459 = vcmp.ge.f32.partialorder %v2297, 0.0
  %vm2460 = vcmp.ge.f32.partialorder %v2302, 0.0
  %vm2461 = vcmp.ge.f32.partialorder %v2305, 0.0
  %vm2462 = vcmp.ge.f32.partialorder %v2310, 0.0
  %vm2463 = vcmp.ge.f32.partialorder %v2313, 0.0
  %vm2464 = vcmp.ge.f32.partialorder %v2318, 0.0
  %vm2465 = vcmp.ge.f32.partialorder %v2321, 0.0
  %vm2466 = vcmp.ge.f32.partialorder %v2326, 0.0
  %vm2467 = vcmp.ge.f32.partialorder %v2329, 0.0
  %vm2468 = vcmp.ge.f32.partialorder %v2334, 0.0
  %vm2469 = vcmp.ge.f32.partialorder %v2337, 0.0
  %vm2470 = vcmp.ge.f32.partialorder %v2342, 0.0
  %vm2471 = vcmp.ge.f32.partialorder %v2345, 0.0
  %vm2472 = vcmp.ge.f32.partialorder %v2350, 0.0
  %vm2473 = vcmp.ge.f32.partialorder %v2353, 0.0
  %vm2474 = vcmp.ge.f32.partialorder %v2358, 0.0
  %vm2475 = vcmp.ge.f32.partialorder %v2361, 0.0
  %vm2476 = vcmp.ge.f32.partialorder %v2366, 0.0
  %vm2477 = vcmp.ge.f32.partialorder %v2369, 0.0
  %vm2478 = vcmp.ge.f32.partialorder %v2374, 0.0
  %vm2479 = vcmp.ge.f32.partialorder %v2377, 0.0
  %vm2480 = vcmp.ge.f32.partialorder %v2382, 0.0
  %vm2481 = vcmp.ge.f32.partialorder %v2385, 0.0
  %vm2482 = vcmp.ge.f32.partialorder %v2390, 0.0
  %vm2483 = vcmp.ge.f32.partialorder %v2393, 0.0
  %vm2484 = vcmp.ge.f32.partialorder %v2398, 0.0
  %vm2485 = vcmp.ge.f32.partialorder %v2401, 0.0
  %vm2486 = vcmp.ge.f32.partialorder %v2406, 0.0
  %vm2487 = vcmp.ge.f32.partialorder %v2409, 0.0
  %vm2488 = vcmp.ge.f32.partialorder %v2414, 0.0
  %vm2489 = vcmp.ge.f32.partialorder %v2417, 0.0
  %vm2490 = vcmp.ge.f32.partialorder %v2422, 0.0
  %vm2491 = vcmp.ge.f32.partialorder %v2425, 0.0
  %v2492 = vmul.f32 %v2174, 0.2
  %v2493 = vmul.f32 %v2177, 0.2
  %v2494 = vmul.f32 %v2182, 0.2
  %v2495 = vmul.f32 %v2185, 0.2
  %v2496 = vmul.f32 %v2190, 0.2
  %v2497 = vmul.f32 %v2193, 0.2
  %v2498 = vmul.f32 %v2198, 0.2
  %v2499 = vmul.f32 %v2201, 0.2
  %v2500 = vmul.f32 %v2206, 0.2
  %v2501 = vmul.f32 %v2209, 0.2
  %v2502 = vmul.f32 %v2214, 0.2
  %v2503 = vmul.f32 %v2217, 0.2
  %v2504 = vmul.f32 %v2222, 0.2
  %v2505 = vmul.f32 %v2225, 0.2
  %v2506 = vmul.f32 %v2230, 0.2
  %v2507 = vmul.f32 %v2233, 0.2
  %v2508 = vmul.f32 %v2238, 0.2
  %v2509 = vmul.f32 %v2241, 0.2
  %v2510 = vmul.f32 %v2246, 0.2
  %v2511 = vmul.f32 %v2249, 0.2
  %v2512 = vmul.f32 %v2254, 0.2
  %v2513 = vmul.f32 %v2257, 0.2
  %v2514 = vmul.f32 %v2262, 0.2
  %v2515 = vmul.f32 %v2265, 0.2
  %v2516 = vmul.f32 %v2270, 0.2
  %v2517 = vmul.f32 %v2273, 0.2
  %v2518 = vmul.f32 %v2278, 0.2
  %v2519 = vmul.f32 %v2281, 0.2
  %v2520 = vmul.f32 %v2286, 0.2
  %v2521 = vmul.f32 %v2289, 0.2
  %v2522 = vmul.f32 %v2294, 0.2
  %v2523 = vmul.f32 %v2297, 0.2
  %v2524 = vmul.f32 %v2302, 0.2
  %v2525 = vmul.f32 %v2305, 0.2
  %v2526 = vmul.f32 %v2310, 0.2
  %v2527 = vmul.f32 %v2313, 0.2
  %v2528 = vmul.f32 %v2318, 0.2
  %v2529 = vmul.f32 %v2321, 0.2
  %v2530 = vmul.f32 %v2326, 0.2
  %v2531 = vmul.f32 %v2329, 0.2
  %v2532 = vmul.f32 %v2334, 0.2
  %v2533 = vmul.f32 %v2337, 0.2
  %v2534 = vmul.f32 %v2342, 0.2
  %v2535 = vmul.f32 %v2345, 0.2
  %v2536 = vmul.f32 %v2350, 0.2
  %v2537 = vmul.f32 %v2353, 0.2
  %v2538 = vmul.f32 %v2358, 0.2
  %v2539 = vmul.f32 %v2361, 0.2
  %v2540 = vmul.f32 %v2366, 0.2
  %v2541 = vmul.f32 %v2369, 0.2
  %v2542 = vmul.f32 %v2374, 0.2
  %v2543 = vmul.f32 %v2377, 0.2
  %v2544 = vmul.f32 %v2382, 0.2
  %v2545 = vmul.f32 %v2385, 0.2
  %v2546 = vmul.f32 %v2390, 0.2
  %v2547 = vmul.f32 %v2393, 0.2
  %v2548 = vmul.f32 %v2398, 0.2
  %v2549 = vmul.f32 %v2401, 0.2
  %v2550 = vmul.f32 %v2406, 0.2
  %v2551 = vmul.f32 %v2409, 0.2
  %v2552 = vmul.f32 %v2414, 0.2
  %v2553 = vmul.f32 %v2417, 0.2
  %v2554 = vmul.f32 %v2422, 0.2
  %v2555 = vmul.f32 %v2425, 0.2
  %v2556 = vsel %vm2428, %v2174, %v2492
  %v2557 = vsel %vm2429, %v2177, %v2493
  %v2558 = vsel %vm2430, %v2182, %v2494
  %v2559 = vsel %vm2431, %v2185, %v2495
  %v2560 = vsel %vm2432, %v2190, %v2496
  %v2561 = vsel %vm2433, %v2193, %v2497
  %v2562 = vsel %vm2434, %v2198, %v2498
  %v2563 = vsel %vm2435, %v2201, %v2499
  %v2564 = vsel %vm2436, %v2206, %v2500
  %v2565 = vsel %vm2437, %v2209, %v2501
  %v2566 = vsel %vm2438, %v2214, %v2502
  %v2567 = vsel %vm2439, %v2217, %v2503
  %v2568 = vsel %vm2440, %v2222, %v2504
  %v2569 = vsel %vm2441, %v2225, %v2505
  %v2570 = vsel %vm2442, %v2230, %v2506
  %v2571 = vsel %vm2443, %v2233, %v2507
  %v2572 = vsel %vm2444, %v2238, %v2508
  %v2573 = vsel %vm2445, %v2241, %v2509
  %v2574 = vsel %vm2446, %v2246, %v2510
  %v2575 = vsel %vm2447, %v2249, %v2511
  %v2576 = vsel %vm2448, %v2254, %v2512
  %v2577 = vsel %vm2449, %v2257, %v2513
  %v2578 = vsel %vm2450, %v2262, %v2514
  %v2579 = vsel %vm2451, %v2265, %v2515
  %v2580 = vsel %vm2452, %v2270, %v2516
  %v2581 = vsel %vm2453, %v2273, %v2517
  %v2582 = vsel %vm2454, %v2278, %v2518
  %v2583 = vsel %vm2455, %v2281, %v2519
  %v2584 = vsel %vm2456, %v2286, %v2520
  %v2585 = vsel %vm2457, %v2289, %v2521
  %v2586 = vsel %vm2458, %v2294, %v2522
  %v2587 = vsel %vm2459, %v2297, %v2523
  %v2588 = vsel %vm2460, %v2302, %v2524
  %v2589 = vsel %vm2461, %v2305, %v2525
  %v2590 = vsel %vm2462, %v2310, %v2526
  %v2591 = vsel %vm2463, %v2313, %v2527
  %v2592 = vsel %vm2464, %v2318, %v2528
  %v2593 = vsel %vm2465, %v2321, %v2529
  %v2594 = vsel %vm2466, %v2326, %v2530
  %v2595 = vsel %vm2467, %v2329, %v2531
  %v2596 = vsel %vm2468, %v2334, %v2532
  %v2597 = vsel %vm2469, %v2337, %v2533
  %v2598 = vsel %vm2470, %v2342, %v2534
  %v2599 = vsel %vm2471, %v2345, %v2535
  %v2600 = vsel %vm2472, %v2350, %v2536
  %v2601 = vsel %vm2473, %v2353, %v2537
  %v2602 = vsel %vm2474, %v2358, %v2538
  %v2603 = vsel %vm2475, %v2361, %v2539
  %v2604 = vsel %vm2476, %v2366, %v2540
  %v2605 = vsel %vm2477, %v2369, %v2541
  %v2606 = vsel %vm2478, %v2374, %v2542
  %v2607 = vsel %vm2479, %v2377, %v2543
  %v2608 = vsel %vm2480, %v2382, %v2544
  %v2609 = vsel %vm2481, %v2385, %v2545
  %v2610 = vsel %vm2482, %v2390, %v2546
  %v2611 = vsel %vm2483, %v2393, %v2547
  %v2612 = vsel %vm2484, %v2398, %v2548
  %v2613 = vsel %vm2485, %v2401, %v2549
  %v2614 = vsel %vm2486, %v2406, %v2550
  %v2615 = vsel %vm2487, %v2409, %v2551
  %v2616 = vsel %vm2488, %v2414, %v2552
  %v2617 = vsel %vm2489, %v2417, %v2553
  %v2618 = vsel %vm2490, %v2422, %v2554
  %v2619 = vsel %vm2491, %v2425, %v2555
  %v2620 = vld [vmem:[%s37] sm:$0xf]
  %v2621 = vld [vmem:[%s37 + $0x4] sm:$0xf]
  %v2622 = vld [vmem:[%s37 + $0x8] sm:$0xf]
  %v2623 = vld [vmem:[%s37 + $0xc] sm:$0xf]
  %v2624 = vld [vmem:[%s37 + $0x10] sm:$0xf]
  %v2625 = vld [vmem:[%s37 + $0x14] sm:$0xf]
  %v2626 = vld [vmem:[%s37 + $0x18] sm:$0xf]
  %v2627 = vld [vmem:[%s37 + $0x1c] sm:$0xf]
  %v2628 = vld [vmem:[%s37 + $0x20] sm:$0xf]
  %v2629 = vld [vmem:[%s37 + $0x24] sm:$0xf]
  %v2630 = vld [vmem:[%s37 + $0x28] sm:$0xf]
  %v2631 = vld [vmem:[%s37 + $0x2c] sm:$0xf]
  %v2632 = vld [vmem:[%s37 + $0x30] sm:$0xf]
  %v2633 = vld [vmem:[%s37 + $0x34] sm:$0xf]
  %v2634 = vld [vmem:[%s37 + $0x38] sm:$0xf]
  %v2635 = vld [vmem:[%s37 + $0x3c] sm:$0xf]
  %v2636 = vpack.c.bf16 %v2557, %v2556
  %v2637 = vpack.c.bf16 %v2559, %v2558
  %v2638 = vpack.c.bf16 %v2561, %v2560
  %v2639 = vpack.c.bf16 %v2563, %v2562
  %v2640 = vpack.c.bf16 %v2565, %v2564
  %v2641 = vpack.c.bf16 %v2567, %v2566
  %v2642 = vpack.c.bf16 %v2569, %v2568
  %v2643 = vpack.c.bf16 %v2571, %v2570
  %v2644 = vpack.c.bf16 %v2573, %v2572
  %v2645 = vpack.c.bf16 %v2575, %v2574
  %v2646 = vpack.c.bf16 %v2577, %v2576
  %v2647 = vpack.c.bf16 %v2579, %v2578
  %v2648 = vpack.c.bf16 %v2581, %v2580
  %v2649 = vpack.c.bf16 %v2583, %v2582
  %v2650 = vpack.c.bf16 %v2585, %v2584
  %v2651 = vpack.c.bf16 %v2587, %v2586
  %v2652 = vpack.c.bf16 %v2589, %v2588
  %v2653 = vpack.c.bf16 %v2591, %v2590
  %v2654 = vpack.c.bf16 %v2593, %v2592
  %v2655 = vpack.c.bf16 %v2595, %v2594
  %v2656 = vpack.c.bf16 %v2597, %v2596
  %v2657 = vpack.c.bf16 %v2599, %v2598
  %v2658 = vpack.c.bf16 %v2601, %v2600
  %v2659 = vpack.c.bf16 %v2603, %v2602
  %v2660 = vpack.c.bf16 %v2605, %v2604
  %v2661 = vpack.c.bf16 %v2607, %v2606
  %v2662 = vpack.c.bf16 %v2609, %v2608
  %v2663 = vpack.c.bf16 %v2611, %v2610
  %v2664 = vpack.c.bf16 %v2613, %v2612
  %v2665 = vpack.c.bf16 %v2615, %v2614
  %v2666 = vpack.c.bf16 %v2617, %v2616
  %v2667 = vpack.c.bf16 %v2619, %v2618
  %v2668 = vld [vmem:[%s39] sm:$0x1]
  %v2670 = vlaneseq
  %v2671 = vshrl.u32 %v2670, 7
  %v2672 = vsub.s32 0, %v2671
  %v2673 = vrot.slane %v2668, %v2672
  %v2691 = vunpack.c.l.b16 %v2620
  %v2692 = vunpack.c.l.b16 %v2621
  %v2693 = vunpack.c.l.b16 %v2622
  %v2694 = vunpack.c.l.b16 %v2623
  %v2695 = vunpack.c.l.b16 %v2624
  %v2696 = vunpack.c.l.b16 %v2625
  %v2697 = vunpack.c.l.b16 %v2626
  %v2698 = vunpack.c.l.b16 %v2627
  %v2699 = vunpack.c.l.b16 %v2628
  %v2700 = vunpack.c.l.b16 %v2629
  %v2701 = vunpack.c.l.b16 %v2630
  %v2702 = vunpack.c.l.b16 %v2631
  %v2703 = vunpack.c.l.b16 %v2632
  %v2704 = vunpack.c.l.b16 %v2633
  %v2705 = vunpack.c.l.b16 %v2634
  %v2706 = vunpack.c.l.b16 %v2635
  %v2707 = vpack.c.b16 %v2692, %v2691
  %v2708 = vpack.c.b16 %v2694, %v2693
  %v2709 = vpack.c.b16 %v2696, %v2695
  %v2710 = vpack.c.b16 %v2698, %v2697
  %v2711 = vpack.c.b16 %v2700, %v2699
  %v2712 = vpack.c.b16 %v2702, %v2701
  %v2713 = vpack.c.b16 %v2704, %v2703
  %v2714 = vpack.c.b16 %v2706, %v2705
  %2723 = vmatprep.subr.bf16.mxu0 0
  %2724 = vmatpush1.bf16.msra.mxu0 %v2707
  %2725 = vmatprep.subr.bf16.mxu0 0
  %2726 = vmatpush1.bf16.msra.mxu0 %v2708
  %2727 = vmatprep.subr.bf16.mxu0 0
  %2728 = vmatpush1.bf16.msra.mxu0 %v2709
  %2729 = vmatprep.subr.bf16.mxu0 0
  %2730 = vmatpush1.bf16.msra.mxu0 %v2710
  %2731 = vmatprep.subr.bf16.mxu0 0
  %2732 = vmatpush1.bf16.msra.mxu0 %v2711
  %2733 = vmatprep.subr.bf16.mxu0 0
  %2734 = vmatpush1.bf16.msra.mxu0 %v2712
  %2735 = vmatprep.subr.bf16.mxu0 0
  %2736 = vmatpush1.bf16.msra.mxu0 %v2713
  %2737 = vmatprep.subr.bf16.mxu0 0
  %2738 = vmatpush1.bf16.msra.mxu0 %v2714
  %2739 = vmatprep.subr.bf16.mxu0 0
  %2740 = vmatpush1.bf16.msra.mxu0 0
  %2741 = vmatprep.subr.bf16.mxu0 0
  %2742 = vmatpush1.bf16.msra.mxu0 0
  %2743 = vmatprep.subr.bf16.mxu0 0
  %2744 = vmatpush1.bf16.msra.mxu0 0
  %2745 = vmatprep.subr.bf16.mxu0 0
  %2746 = vmatpush1.bf16.msra.mxu0 0
  %2747 = vmatprep.subr.bf16.mxu0 0
  %2748 = vmatpush1.bf16.msra.mxu0 0
  %2749 = vmatprep.subr.bf16.mxu0 0
  %2750 = vmatpush1.bf16.msra.mxu0 0
  %2751 = vmatprep.subr.bf16.mxu0 0
  %2752 = vmatpush1.bf16.msra.mxu0 0
  %2753 = vmatprep.subr.bf16.mxu0 0
  %2754 = vmatpush1.bf16.msra.mxu0 0
  %2755 = vmatprep.mubr.bf16.mxu0 0
  %2756 = vmatmul.mubr.bf16.gmra.mrb[0].mxu0 %v2636
  %v2757 = vpop.f32.mrb[0].mxu0
  %v2758 = vadd.f32 %v2673, %v2757
  %v2759 = vpop.f32.mrb[0].mxu0
  %v2760 = vpop.f32.mrb[0].mxu0
  %v2761 = vadd.f32 %v2673, %v2760
  %v2762 = vpop.f32.mrb[0].mxu0
  %2763 = vmatprep.mubr.bf16.mxu0 0
  %2764 = vmatmul.mubr.bf16.gmra.mrb[0].mxu0 %v2637
  %v2765 = vpop.f32.mrb[0].mxu0
  %v2766 = vadd.f32 %v2673, %v2765
  %v2767 = vpop.f32.mrb[0].mxu0
  %v2768 = vpop.f32.mrb[0].mxu0
  %v2769 = vadd.f32 %v2673, %v2768
  %v2770 = vpop.f32.mrb[0].mxu0
  %2771 = vmatprep.mubr.bf16.mxu0 0
  %2772 = vmatmul.mubr.bf16.gmra.mrb[0].mxu0 %v2638
  %v2773 = vpop.f32.mrb[0].mxu0
  %v2774 = vadd.f32 %v2673, %v2773
  %v2775 = vpop.f32.mrb[0].mxu0
  %v2776 = vpop.f32.mrb[0].mxu0
  %v2777 = vadd.f32 %v2673, %v2776
  %v2778 = vpop.f32.mrb[0].mxu0
  %2779 = vmatprep.mubr.bf16.mxu0 0
  %2780 = vmatmul.mubr.bf16.gmra.mrb[0].mxu0 %v2639
  %v2781 = vpop.f32.mrb[0].mxu0
  %v2782 = vadd.f32 %v2673, %v2781
  %v2783 = vpop.f32.mrb[0].mxu0
  %v2784 = vpop.f32.mrb[0].mxu0
  %v2785 = vadd.f32 %v2673, %v2784
  %v2786 = vpop.f32.mrb[0].mxu0
  %2787 = vmatprep.mubr.bf16.mxu0 0
  %2788 = vmatmul.mubr.bf16.gmra.mrb[0].mxu0 %v2640
  %v2789 = vpop.f32.mrb[0].mxu0
  %v2790 = vadd.f32 %v2673, %v2789
  %v2791 = vpop.f32.mrb[0].mxu0
  %v2792 = vpop.f32.mrb[0].mxu0
  %v2793 = vadd.f32 %v2673, %v2792
  %v2794 = vpop.f32.mrb[0].mxu0
  %2795 = vmatprep.mubr.bf16.mxu0 0
  %2796 = vmatmul.mubr.bf16.gmra.mrb[0].mxu0 %v2641
  %v2797 = vpop.f32.mrb[0].mxu0
  %v2798 = vadd.f32 %v2673, %v2797
  %v2799 = vpop.f32.mrb[0].mxu0
  %v2800 = vpop.f32.mrb[0].mxu0
  %v2801 = vadd.f32 %v2673, %v2800
  %v2802 = vpop.f32.mrb[0].mxu0
  %2803 = vmatprep.mubr.bf16.mxu0 0
  %2804 = vmatmul.mubr.bf16.gmra.mrb[0].mxu0 %v2642
  %v2805 = vpop.f32.mrb[0].mxu0
  %v2806 = vadd.f32 %v2673, %v2805
  %v2807 = vpop.f32.mrb[0].mxu0
  %v2808 = vpop.f32.mrb[0].mxu0
  %v2809 = vadd.f32 %v2673, %v2808
  %v2810 = vpop.f32.mrb[0].mxu0
  %2811 = vmatprep.mubr.bf16.mxu0 0
  %2812 = vmatmul.mubr.bf16.gmra.mrb[0].mxu0 %v2643
  %v2813 = vpop.f32.mrb[0].mxu0
  %v2814 = vadd.f32 %v2673, %v2813
  %v2815 = vpop.f32.mrb[0].mxu0
  %v2816 = vpop.f32.mrb[0].mxu0
  %v2817 = vadd.f32 %v2673, %v2816
  %v2818 = vpop.f32.mrb[0].mxu0
  %2819 = vmatprep.mubr.bf16.mxu0 0
  %2820 = vmatmul.mubr.bf16.gmra.mrb[0].mxu0 %v2644
  %v2821 = vpop.f32.mrb[0].mxu0
  %v2822 = vadd.f32 %v2673, %v2821
  %v2823 = vpop.f32.mrb[0].mxu0
  %v2824 = vpop.f32.mrb[0].mxu0
  %v2825 = vadd.f32 %v2673, %v2824
  %v2826 = vpop.f32.mrb[0].mxu0
  %2827 = vmatprep.mubr.bf16.mxu0 0
  %2828 = vmatmul.mubr.bf16.gmra.mrb[0].mxu0 %v2645
  %v2829 = vpop.f32.mrb[0].mxu0
  %v2830 = vadd.f32 %v2673, %v2829
  %v2831 = vpop.f32.mrb[0].mxu0
  %v2832 = vpop.f32.mrb[0].mxu0
  %v2833 = vadd.f32 %v2673, %v2832
  %v2834 = vpop.f32.mrb[0].mxu0
  %2835 = vmatprep.mubr.bf16.mxu0 0
  %2836 = vmatmul.mubr.bf16.gmra.mrb[0].mxu0 %v2646
  %v2837 = vpop.f32.mrb[0].mxu0
  %v2838 = vadd.f32 %v2673, %v2837
  %v2839 = vpop.f32.mrb[0].mxu0
  %v2840 = vpop.f32.mrb[0].mxu0
  %v2841 = vadd.f32 %v2673, %v2840
  %v2842 = vpop.f32.mrb[0].mxu0
  %2843 = vmatprep.mubr.bf16.mxu0 0
  %2844 = vmatmul.mubr.bf16.gmra.mrb[0].mxu0 %v2647
  %v2845 = vpop.f32.mrb[0].mxu0
  %v2846 = vadd.f32 %v2673, %v2845
  %v2847 = vpop.f32.mrb[0].mxu0
  %v2848 = vpop.f32.mrb[0].mxu0
  %v2849 = vadd.f32 %v2673, %v2848
  %v2850 = vpop.f32.mrb[0].mxu0
  %2851 = vmatprep.mubr.bf16.mxu0 0
  %2852 = vmatmul.mubr.bf16.gmra.mrb[0].mxu0 %v2648
  %v2853 = vpop.f32.mrb[0].mxu0
  %v2854 = vadd.f32 %v2673, %v2853
  %v2855 = vpop.f32.mrb[0].mxu0
  %v2856 = vpop.f32.mrb[0].mxu0
  %v2857 = vadd.f32 %v2673, %v2856
  %v2858 = vpop.f32.mrb[0].mxu0
  %2859 = vmatprep.mubr.bf16.mxu0 0
  %2860 = vmatmul.mubr.bf16.gmra.mrb[0].mxu0 %v2649
  %v2861 = vpop.f32.mrb[0].mxu0
  %v2862 = vadd.f32 %v2673, %v2861
  %v2863 = vpop.f32.mrb[0].mxu0
  %v2864 = vpop.f32.mrb[0].mxu0
  %v2865 = vadd.f32 %v2673, %v2864
  %v2866 = vpop.f32.mrb[0].mxu0
  %2867 = vmatprep.mubr.bf16.mxu0 0
  %2868 = vmatmul.mubr.bf16.gmra.mrb[0].mxu0 %v2650
  %v2869 = vpop.f32.mrb[0].mxu0
  %v2870 = vadd.f32 %v2673, %v2869
  %v2871 = vpop.f32.mrb[0].mxu0
  %v2872 = vpop.f32.mrb[0].mxu0
  %v2873 = vadd.f32 %v2673, %v2872
  %v2874 = vpop.f32.mrb[0].mxu0
  %2875 = vmatprep.mubr.bf16.mxu0 0
  %2876 = vmatmul.mubr.bf16.gmra.mrb[0].mxu0 %v2651
  %v2877 = vpop.f32.mrb[0].mxu0
  %v2878 = vadd.f32 %v2673, %v2877
  %v2879 = vpop.f32.mrb[0].mxu0
  %v2880 = vpop.f32.mrb[0].mxu0
  %v2881 = vadd.f32 %v2673, %v2880
  %v2882 = vpop.f32.mrb[0].mxu0
  %2883 = vmatprep.mubr.bf16.mxu0 0
  %2884 = vmatmul.mubr.bf16.gmra.mrb[0].mxu0 %v2652
  %v2885 = vpop.f32.mrb[0].mxu0
  %v2886 = vadd.f32 %v2673, %v2885
  %v2887 = vpop.f32.mrb[0].mxu0
  %v2888 = vpop.f32.mrb[0].mxu0
  %v2889 = vadd.f32 %v2673, %v2888
  %v2890 = vpop.f32.mrb[0].mxu0
  %2891 = vmatprep.mubr.bf16.mxu0 0
  %2892 = vmatmul.mubr.bf16.gmra.mrb[0].mxu0 %v2653
  %v2893 = vpop.f32.mrb[0].mxu0
  %v2894 = vadd.f32 %v2673, %v2893
  %v2895 = vpop.f32.mrb[0].mxu0
  %v2896 = vpop.f32.mrb[0].mxu0
  %v2897 = vadd.f32 %v2673, %v2896
  %v2898 = vpop.f32.mrb[0].mxu0
  %2899 = vmatprep.mubr.bf16.mxu0 0
  %2900 = vmatmul.mubr.bf16.gmra.mrb[0].mxu0 %v2654
  %v2901 = vpop.f32.mrb[0].mxu0
  %v2902 = vadd.f32 %v2673, %v2901
  %v2903 = vpop.f32.mrb[0].mxu0
  %v2904 = vpop.f32.mrb[0].mxu0
  %v2905 = vadd.f32 %v2673, %v2904
  %v2906 = vpop.f32.mrb[0].mxu0
  %2907 = vmatprep.mubr.bf16.mxu0 0
  %2908 = vmatmul.mubr.bf16.gmra.mrb[0].mxu0 %v2655
  %v2909 = vpop.f32.mrb[0].mxu0
  %v2910 = vadd.f32 %v2673, %v2909
  %v2911 = vpop.f32.mrb[0].mxu0
  %v2912 = vpop.f32.mrb[0].mxu0
  %v2913 = vadd.f32 %v2673, %v2912
  %v2914 = vpop.f32.mrb[0].mxu0
  %2915 = vmatprep.mubr.bf16.mxu0 0
  %2916 = vmatmul.mubr.bf16.gmra.mrb[0].mxu0 %v2656
  %v2917 = vpop.f32.mrb[0].mxu0
  %v2918 = vadd.f32 %v2673, %v2917
  %v2919 = vpop.f32.mrb[0].mxu0
  %v2920 = vpop.f32.mrb[0].mxu0
  %v2921 = vadd.f32 %v2673, %v2920
  %v2922 = vpop.f32.mrb[0].mxu0
  %2923 = vmatprep.mubr.bf16.mxu0 0
  %2924 = vmatmul.mubr.bf16.gmra.mrb[0].mxu0 %v2657
  %v2925 = vpop.f32.mrb[0].mxu0
  %v2926 = vadd.f32 %v2673, %v2925
  %v2927 = vpop.f32.mrb[0].mxu0
  %v2928 = vpop.f32.mrb[0].mxu0
  %v2929 = vadd.f32 %v2673, %v2928
  %v2930 = vpop.f32.mrb[0].mxu0
  %2931 = vmatprep.mubr.bf16.mxu0 0
  %2932 = vmatmul.mubr.bf16.gmra.mrb[0].mxu0 %v2658
  %v2933 = vpop.f32.mrb[0].mxu0
  %v2934 = vadd.f32 %v2673, %v2933
  %v2935 = vpop.f32.mrb[0].mxu0
  %v2936 = vpop.f32.mrb[0].mxu0
  %v2937 = vadd.f32 %v2673, %v2936
  %v2938 = vpop.f32.mrb[0].mxu0
  %2939 = vmatprep.mubr.bf16.mxu0 0
  %2940 = vmatmul.mubr.bf16.gmra.mrb[0].mxu0 %v2659
  %v2941 = vpop.f32.mrb[0].mxu0
  %v2942 = vadd.f32 %v2673, %v2941
  %v2943 = vpop.f32.mrb[0].mxu0
  %v2944 = vpop.f32.mrb[0].mxu0
  %v2945 = vadd.f32 %v2673, %v2944
  %v2946 = vpop.f32.mrb[0].mxu0
  %2947 = vmatprep.mubr.bf16.mxu0 0
  %2948 = vmatmul.mubr.bf16.gmra.mrb[0].mxu0 %v2660
  %v2949 = vpop.f32.mrb[0].mxu0
  %v2950 = vadd.f32 %v2673, %v2949
  %v2951 = vpop.f32.mrb[0].mxu0
  %v2952 = vpop.f32.mrb[0].mxu0
  %v2953 = vadd.f32 %v2673, %v2952
  %v2954 = vpop.f32.mrb[0].mxu0
  %2955 = vmatprep.mubr.bf16.mxu0 0
  %2956 = vmatmul.mubr.bf16.gmra.mrb[0].mxu0 %v2661
  %v2957 = vpop.f32.mrb[0].mxu0
  %v2958 = vadd.f32 %v2673, %v2957
  %v2959 = vpop.f32.mrb[0].mxu0
  %v2960 = vpop.f32.mrb[0].mxu0
  %v2961 = vadd.f32 %v2673, %v2960
  %v2962 = vpop.f32.mrb[0].mxu0
  %2963 = vmatprep.mubr.bf16.mxu0 0
  %2964 = vmatmul.mubr.bf16.gmra.mrb[0].mxu0 %v2662
  %v2965 = vpop.f32.mrb[0].mxu0
  %v2966 = vadd.f32 %v2673, %v2965
  %v2967 = vpop.f32.mrb[0].mxu0
  %v2968 = vpop.f32.mrb[0].mxu0
  %v2969 = vadd.f32 %v2673, %v2968
  %v2970 = vpop.f32.mrb[0].mxu0
  %2971 = vmatprep.mubr.bf16.mxu0 0
  %2972 = vmatmul.mubr.bf16.gmra.mrb[0].mxu0 %v2663
  %v2973 = vpop.f32.mrb[0].mxu0
  %v2974 = vadd.f32 %v2673, %v2973
  %v2975 = vpop.f32.mrb[0].mxu0
  %v2976 = vpop.f32.mrb[0].mxu0
  %v2977 = vadd.f32 %v2673, %v2976
  %v2978 = vpop.f32.mrb[0].mxu0
  %2979 = vmatprep.mubr.bf16.mxu0 0
  %2980 = vmatmul.mubr.bf16.gmra.mrb[0].mxu0 %v2664
  %v2981 = vpop.f32.mrb[0].mxu0
  %v2982 = vadd.f32 %v2673, %v2981
  %v2983 = vpop.f32.mrb[0].mxu0
  %v2984 = vpop.f32.mrb[0].mxu0
  %v2985 = vadd.f32 %v2673, %v2984
  %v2986 = vpop.f32.mrb[0].mxu0
  %2987 = vmatprep.mubr.bf16.mxu0 0
  %2988 = vmatmul.mubr.bf16.gmra.mrb[0].mxu0 %v2665
  %v2989 = vpop.f32.mrb[0].mxu0
  %v2990 = vadd.f32 %v2673, %v2989
  %v2991 = vpop.f32.mrb[0].mxu0
  %v2992 = vpop.f32.mrb[0].mxu0
  %v2993 = vadd.f32 %v2673, %v2992
  %v2994 = vpop.f32.mrb[0].mxu0
  %2995 = vmatprep.mubr.bf16.mxu0 0
  %2996 = vmatmul.mubr.bf16.gmra.mrb[0].mxu0 %v2666
  %v2997 = vpop.f32.mrb[0].mxu0
  %v2998 = vadd.f32 %v2673, %v2997
  %v2999 = vpop.f32.mrb[0].mxu0
  %v3000 = vpop.f32.mrb[0].mxu0
  %v3001 = vadd.f32 %v2673, %v3000
  %v3002 = vpop.f32.mrb[0].mxu0
  %3003 = vmatprep.mubr.bf16.mxu0 0
  %3004 = vmatmul.mubr.bf16.gmra.mrb[0].mxu0 %v2667
  %v3005 = vpop.f32.mrb[0].mxu0
  %v3006 = vadd.f32 %v2673, %v3005
  %v3007 = vpop.f32.mrb[0].mxu0
  %v3008 = vpop.f32.mrb[0].mxu0
  %v3009 = vadd.f32 %v2673, %v3008
  %v3010 = vpop.f32.mrb[0].mxu0
  %3011 = vdwg.mxu0
  %v3012 = vadd.f32 %v2758, %v1908
  %v3013 = vadd.f32 %v2761, %v1909
  %v3014 = vadd.f32 %v2766, %v1910
  %v3015 = vadd.f32 %v2769, %v1911
  %v3016 = vadd.f32 %v2774, %v1912
  %v3017 = vadd.f32 %v2777, %v1913
  %v3018 = vadd.f32 %v2782, %v1914
  %v3019 = vadd.f32 %v2785, %v1915
  %v3020 = vadd.f32 %v2790, %v1916
  %v3021 = vadd.f32 %v2793, %v1917
  %v3022 = vadd.f32 %v2798, %v1918
  %v3023 = vadd.f32 %v2801, %v1919
  %v3024 = vadd.f32 %v2806, %v1920
  %v3025 = vadd.f32 %v2809, %v1921
  %v3026 = vadd.f32 %v2814, %v1922
  %v3027 = vadd.f32 %v2817, %v1923
  %v3028 = vadd.f32 %v2822, %v1924
  %v3029 = vadd.f32 %v2825, %v1925
  %v3030 = vadd.f32 %v2830, %v1926
  %v3031 = vadd.f32 %v2833, %v1927
  %v3032 = vadd.f32 %v2838, %v1928
  %v3033 = vadd.f32 %v2841, %v1929
  %v3034 = vadd.f32 %v2846, %v1930
  %v3035 = vadd.f32 %v2849, %v1931
  %v3036 = vadd.f32 %v2854, %v1932
  %v3037 = vadd.f32 %v2857, %v1933
  %v3038 = vadd.f32 %v2862, %v1934
  %v3039 = vadd.f32 %v2865, %v1935
  %v3040 = vadd.f32 %v2870, %v1936
  %v3041 = vadd.f32 %v2873, %v1937
  %v3042 = vadd.f32 %v2878, %v1938
  %v3043 = vadd.f32 %v2881, %v1939
  %v3044 = vadd.f32 %v2886, %v1940
  %v3045 = vadd.f32 %v2889, %v1941
  %v3046 = vadd.f32 %v2894, %v1942
  %v3047 = vadd.f32 %v2897, %v1943
  %v3048 = vadd.f32 %v2902, %v1944
  %v3049 = vadd.f32 %v2905, %v1945
  %v3050 = vadd.f32 %v2910, %v1946
  %v3051 = vadd.f32 %v2913, %v1947
  %v3052 = vadd.f32 %v2918, %v1948
  %v3053 = vadd.f32 %v2921, %v1949
  %v3054 = vadd.f32 %v2926, %v1950
  %v3055 = vadd.f32 %v2929, %v1951
  %v3056 = vadd.f32 %v2934, %v1952
  %v3057 = vadd.f32 %v2937, %v1953
  %v3058 = vadd.f32 %v2942, %v1954
  %v3059 = vadd.f32 %v2945, %v1955
  %v3060 = vadd.f32 %v2950, %v1956
  %v3061 = vadd.f32 %v2953, %v1957
  %v3062 = vadd.f32 %v2958, %v1958
  %v3063 = vadd.f32 %v2961, %v1959
  %v3064 = vadd.f32 %v2966, %v1960
  %v3065 = vadd.f32 %v2969, %v1961
  %v3066 = vadd.f32 %v2974, %v1962
  %v3067 = vadd.f32 %v2977, %v1963
  %v3068 = vadd.f32 %v2982, %v1964
  %v3069 = vadd.f32 %v2985, %v1965
  %v3070 = vadd.f32 %v2990, %v1966
  %v3071 = vadd.f32 %v2993, %v1967
  %v3072 = vadd.f32 %v2998, %v1968
  %v3073 = vadd.f32 %v3001, %v1969
  %v3074 = vadd.f32 %v3006, %v1970
  %v3075 = vadd.f32 %v3009, %v1971
  %vm3076 = vcmp.ge.f32.partialorder %v3012, 0.0
  %vm3077 = vcmp.ge.f32.partialorder %v3013, 0.0
  %vm3078 = vcmp.ge.f32.partialorder %v3014, 0.0
  %vm3079 = vcmp.ge.f32.partialorder %v3015, 0.0
  %vm3080 = vcmp.ge.f32.partialorder %v3016, 0.0
  %vm3081 = vcmp.ge.f32.partialorder %v3017, 0.0
  %vm3082 = vcmp.ge.f32.partialorder %v3018, 0.0
  %vm3083 = vcmp.ge.f32.partialorder %v3019, 0.0
  %vm3084 = vcmp.ge.f32.partialorder %v3020, 0.0
  %vm3085 = vcmp.ge.f32.partialorder %v3021, 0.0
  %vm3086 = vcmp.ge.f32.partialorder %v3022, 0.0
  %vm3087 = vcmp.ge.f32.partialorder %v3023, 0.0
  %vm3088 = vcmp.ge.f32.partialorder %v3024, 0.0
  %vm3089 = vcmp.ge.f32.partialorder %v3025, 0.0
  %vm3090 = vcmp.ge.f32.partialorder %v3026, 0.0
  %vm3091 = vcmp.ge.f32.partialorder %v3027, 0.0
  %vm3092 = vcmp.ge.f32.partialorder %v3028, 0.0
  %vm3093 = vcmp.ge.f32.partialorder %v3029, 0.0
  %vm3094 = vcmp.ge.f32.partialorder %v3030, 0.0
  %vm3095 = vcmp.ge.f32.partialorder %v3031, 0.0
  %vm3096 = vcmp.ge.f32.partialorder %v3032, 0.0
  %vm3097 = vcmp.ge.f32.partialorder %v3033, 0.0
  %vm3098 = vcmp.ge.f32.partialorder %v3034, 0.0
  %vm3099 = vcmp.ge.f32.partialorder %v3035, 0.0
  %vm3100 = vcmp.ge.f32.partialorder %v3036, 0.0
  %vm3101 = vcmp.ge.f32.partialorder %v3037, 0.0
  %vm3102 = vcmp.ge.f32.partialorder %v3038, 0.0
  %vm3103 = vcmp.ge.f32.partialorder %v3039, 0.0
  %vm3104 = vcmp.ge.f32.partialorder %v3040, 0.0
  %vm3105 = vcmp.ge.f32.partialorder %v3041, 0.0
  %vm3106 = vcmp.ge.f32.partialorder %v3042, 0.0
  %vm3107 = vcmp.ge.f32.partialorder %v3043, 0.0
  %vm3108 = vcmp.ge.f32.partialorder %v3044, 0.0
  %vm3109 = vcmp.ge.f32.partialorder %v3045, 0.0
  %vm3110 = vcmp.ge.f32.partialorder %v3046, 0.0
  %vm3111 = vcmp.ge.f32.partialorder %v3047, 0.0
  %vm3112 = vcmp.ge.f32.partialorder %v3048, 0.0
  %vm3113 = vcmp.ge.f32.partialorder %v3049, 0.0
  %vm3114 = vcmp.ge.f32.partialorder %v3050, 0.0
  %vm3115 = vcmp.ge.f32.partialorder %v3051, 0.0
  %vm3116 = vcmp.ge.f32.partialorder %v3052, 0.0
  %vm3117 = vcmp.ge.f32.partialorder %v3053, 0.0
  %vm3118 = vcmp.ge.f32.partialorder %v3054, 0.0
  %vm3119 = vcmp.ge.f32.partialorder %v3055, 0.0
  %vm3120 = vcmp.ge.f32.partialorder %v3056, 0.0
  %vm3121 = vcmp.ge.f32.partialorder %v3057, 0.0
  %vm3122 = vcmp.ge.f32.partialorder %v3058, 0.0
  %vm3123 = vcmp.ge.f32.partialorder %v3059, 0.0
  %vm3124 = vcmp.ge.f32.partialorder %v3060, 0.0
  %vm3125 = vcmp.ge.f32.partialorder %v3061, 0.0
  %vm3126 = vcmp.ge.f32.partialorder %v3062, 0.0
  %vm3127 = vcmp.ge.f32.partialorder %v3063, 0.0
  %vm3128 = vcmp.ge.f32.partialorder %v3064, 0.0
  %vm3129 = vcmp.ge.f32.partialorder %v3065, 0.0
  %vm3130 = vcmp.ge.f32.partialorder %v3066, 0.0
  %vm3131 = vcmp.ge.f32.partialorder %v3067, 0.0
  %vm3132 = vcmp.ge.f32.partialorder %v3068, 0.0
  %vm3133 = vcmp.ge.f32.partialorder %v3069, 0.0
  %vm3134 = vcmp.ge.f32.partialorder %v3070, 0.0
  %vm3135 = vcmp.ge.f32.partialorder %v3071, 0.0
  %vm3136 = vcmp.ge.f32.partialorder %v3072, 0.0
  %vm3137 = vcmp.ge.f32.partialorder %v3073, 0.0
  %vm3138 = vcmp.ge.f32.partialorder %v3074, 0.0
  %vm3139 = vcmp.ge.f32.partialorder %v3075, 0.0
  %v3140 = vmul.f32 %v3012, 0.2
  %v3141 = vmul.f32 %v3013, 0.2
  %v3142 = vmul.f32 %v3014, 0.2
  %v3143 = vmul.f32 %v3015, 0.2
  %v3144 = vmul.f32 %v3016, 0.2
  %v3145 = vmul.f32 %v3017, 0.2
  %v3146 = vmul.f32 %v3018, 0.2
  %v3147 = vmul.f32 %v3019, 0.2
  %v3148 = vmul.f32 %v3020, 0.2
  %v3149 = vmul.f32 %v3021, 0.2
  %v3150 = vmul.f32 %v3022, 0.2
  %v3151 = vmul.f32 %v3023, 0.2
  %v3152 = vmul.f32 %v3024, 0.2
  %v3153 = vmul.f32 %v3025, 0.2
  %v3154 = vmul.f32 %v3026, 0.2
  %v3155 = vmul.f32 %v3027, 0.2
  %v3156 = vmul.f32 %v3028, 0.2
  %v3157 = vmul.f32 %v3029, 0.2
  %v3158 = vmul.f32 %v3030, 0.2
  %v3159 = vmul.f32 %v3031, 0.2
  %v3160 = vmul.f32 %v3032, 0.2
  %v3161 = vmul.f32 %v3033, 0.2
  %v3162 = vmul.f32 %v3034, 0.2
  %v3163 = vmul.f32 %v3035, 0.2
  %v3164 = vmul.f32 %v3036, 0.2
  %v3165 = vmul.f32 %v3037, 0.2
  %v3166 = vmul.f32 %v3038, 0.2
  %v3167 = vmul.f32 %v3039, 0.2
  %v3168 = vmul.f32 %v3040, 0.2
  %v3169 = vmul.f32 %v3041, 0.2
  %v3170 = vmul.f32 %v3042, 0.2
  %v3171 = vmul.f32 %v3043, 0.2
  %v3172 = vmul.f32 %v3044, 0.2
  %v3173 = vmul.f32 %v3045, 0.2
  %v3174 = vmul.f32 %v3046, 0.2
  %v3175 = vmul.f32 %v3047, 0.2
  %v3176 = vmul.f32 %v3048, 0.2
  %v3177 = vmul.f32 %v3049, 0.2
  %v3178 = vmul.f32 %v3050, 0.2
  %v3179 = vmul.f32 %v3051, 0.2
  %v3180 = vmul.f32 %v3052, 0.2
  %v3181 = vmul.f32 %v3053, 0.2
  %v3182 = vmul.f32 %v3054, 0.2
  %v3183 = vmul.f32 %v3055, 0.2
  %v3184 = vmul.f32 %v3056, 0.2
  %v3185 = vmul.f32 %v3057, 0.2
  %v3186 = vmul.f32 %v3058, 0.2
  %v3187 = vmul.f32 %v3059, 0.2
  %v3188 = vmul.f32 %v3060, 0.2
  %v3189 = vmul.f32 %v3061, 0.2
  %v3190 = vmul.f32 %v3062, 0.2
  %v3191 = vmul.f32 %v3063, 0.2
  %v3192 = vmul.f32 %v3064, 0.2
  %v3193 = vmul.f32 %v3065, 0.2
  %v3194 = vmul.f32 %v3066, 0.2
  %v3195 = vmul.f32 %v3067, 0.2
  %v3196 = vmul.f32 %v3068, 0.2
  %v3197 = vmul.f32 %v3069, 0.2
  %v3198 = vmul.f32 %v3070, 0.2
  %v3199 = vmul.f32 %v3071, 0.2
  %v3200 = vmul.f32 %v3072, 0.2
  %v3201 = vmul.f32 %v3073, 0.2
  %v3202 = vmul.f32 %v3074, 0.2
  %v3203 = vmul.f32 %v3075, 0.2
  %v3204 = vsel %vm3076, %v3012, %v3140
  %v3205 = vsel %vm3077, %v3013, %v3141
  %v3206 = vsel %vm3078, %v3014, %v3142
  %v3207 = vsel %vm3079, %v3015, %v3143
  %v3208 = vsel %vm3080, %v3016, %v3144
  %v3209 = vsel %vm3081, %v3017, %v3145
  %v3210 = vsel %vm3082, %v3018, %v3146
  %v3211 = vsel %vm3083, %v3019, %v3147
  %v3212 = vsel %vm3084, %v3020, %v3148
  %v3213 = vsel %vm3085, %v3021, %v3149
  %v3214 = vsel %vm3086, %v3022, %v3150
  %v3215 = vsel %vm3087, %v3023, %v3151
  %v3216 = vsel %vm3088, %v3024, %v3152
  %v3217 = vsel %vm3089, %v3025, %v3153
  %v3218 = vsel %vm3090, %v3026, %v3154
  %v3219 = vsel %vm3091, %v3027, %v3155
  %v3220 = vsel %vm3092, %v3028, %v3156
  %v3221 = vsel %vm3093, %v3029, %v3157
  %v3222 = vsel %vm3094, %v3030, %v3158
  %v3223 = vsel %vm3095, %v3031, %v3159
  %v3224 = vsel %vm3096, %v3032, %v3160
  %v3225 = vsel %vm3097, %v3033, %v3161
  %v3226 = vsel %vm3098, %v3034, %v3162
  %v3227 = vsel %vm3099, %v3035, %v3163
  %v3228 = vsel %vm3100, %v3036, %v3164
  %v3229 = vsel %vm3101, %v3037, %v3165
  %v3230 = vsel %vm3102, %v3038, %v3166
  %v3231 = vsel %vm3103, %v3039, %v3167
  %v3232 = vsel %vm3104, %v3040, %v3168
  %v3233 = vsel %vm3105, %v3041, %v3169
  %v3234 = vsel %vm3106, %v3042, %v3170
  %v3235 = vsel %vm3107, %v3043, %v3171
  %v3236 = vsel %vm3108, %v3044, %v3172
  %v3237 = vsel %vm3109, %v3045, %v3173
  %v3238 = vsel %vm3110, %v3046, %v3174
  %v3239 = vsel %vm3111, %v3047, %v3175
  %v3240 = vsel %vm3112, %v3048, %v3176
  %v3241 = vsel %vm3113, %v3049, %v3177
  %v3242 = vsel %vm3114, %v3050, %v3178
  %v3243 = vsel %vm3115, %v3051, %v3179
  %v3244 = vsel %vm3116, %v3052, %v3180
  %v3245 = vsel %vm3117, %v3053, %v3181
  %v3246 = vsel %vm3118, %v3054, %v3182
  %v3247 = vsel %vm3119, %v3055, %v3183
  %v3248 = vsel %vm3120, %v3056, %v3184
  %v3249 = vsel %vm3121, %v3057, %v3185
  %v3250 = vsel %vm3122, %v3058, %v3186
  %v3251 = vsel %vm3123, %v3059, %v3187
  %v3252 = vsel %vm3124, %v3060, %v3188
  %v3253 = vsel %vm3125, %v3061, %v3189
  %v3254 = vsel %vm3126, %v3062, %v3190
  %v3255 = vsel %vm3127, %v3063, %v3191
  %v3256 = vsel %vm3128, %v3064, %v3192
  %v3257 = vsel %vm3129, %v3065, %v3193
  %v3258 = vsel %vm3130, %v3066, %v3194
  %v3259 = vsel %vm3131, %v3067, %v3195
  %v3260 = vsel %vm3132, %v3068, %v3196
  %v3261 = vsel %vm3133, %v3069, %v3197
  %v3262 = vsel %vm3134, %v3070, %v3198
  %v3263 = vsel %vm3135, %v3071, %v3199
  %v3264 = vsel %vm3136, %v3072, %v3200
  %v3265 = vsel %vm3137, %v3073, %v3201
  %v3266 = vsel %vm3138, %v3074, %v3202
  %v3267 = vsel %vm3139, %v3075, %v3203
  %v3268 = vld [vmem:[%s41] sm:$0xf]
  %v3269 = vld [vmem:[%s41 + $0x4] sm:$0xf]
  %v3270 = vld [vmem:[%s41 + $0x8] sm:$0xf]
  %v3271 = vld [vmem:[%s41 + $0xc] sm:$0xf]
  %v3272 = vld [vmem:[%s41 + $0x10] sm:$0xf]
  %v3273 = vld [vmem:[%s41 + $0x14] sm:$0xf]
  %v3274 = vld [vmem:[%s41 + $0x18] sm:$0xf]
  %v3275 = vld [vmem:[%s41 + $0x1c] sm:$0xf]
  %v3276 = vld [vmem:[%s41 + $0x20] sm:$0xf]
  %v3277 = vld [vmem:[%s41 + $0x24] sm:$0xf]
  %v3278 = vld [vmem:[%s41 + $0x28] sm:$0xf]
  %v3279 = vld [vmem:[%s41 + $0x2c] sm:$0xf]
  %v3280 = vld [vmem:[%s41 + $0x30] sm:$0xf]
  %v3281 = vld [vmem:[%s41 + $0x34] sm:$0xf]
  %v3282 = vld [vmem:[%s41 + $0x38] sm:$0xf]
  %v3283 = vld [vmem:[%s41 + $0x3c] sm:$0xf]
  %v3284 = vld [vmem:[%s41 + $0x40] sm:$0xf]
  %v3285 = vld [vmem:[%s41 + $0x44] sm:$0xf]
  %v3286 = vld [vmem:[%s41 + $0x48] sm:$0xf]
  %v3287 = vld [vmem:[%s41 + $0x4c] sm:$0xf]
  %v3288 = vld [vmem:[%s41 + $0x50] sm:$0xf]
  %v3289 = vld [vmem:[%s41 + $0x54] sm:$0xf]
  %v3290 = vld [vmem:[%s41 + $0x58] sm:$0xf]
  %v3291 = vld [vmem:[%s41 + $0x5c] sm:$0xf]
  %v3292 = vld [vmem:[%s41 + $0x60] sm:$0xf]
  %v3293 = vld [vmem:[%s41 + $0x64] sm:$0xf]
  %v3294 = vld [vmem:[%s41 + $0x68] sm:$0xf]
  %v3295 = vld [vmem:[%s41 + $0x6c] sm:$0xf]
  %v3296 = vld [vmem:[%s41 + $0x70] sm:$0xf]
  %v3297 = vld [vmem:[%s41 + $0x74] sm:$0xf]
  %v3298 = vld [vmem:[%s41 + $0x78] sm:$0xf]
  %v3299 = vld [vmem:[%s41 + $0x7c] sm:$0xf]
  %v3300 = vunpack.c.l.bf16 %v3268
  %v3301 = vunpack.c.l.bf16 %v3269
  %v3302 = vunpack.c.l.bf16 %v3270
  %v3303 = vunpack.c.l.bf16 %v3271
  %v3304 = vunpack.c.l.bf16 %v3272
  %v3305 = vunpack.c.l.bf16 %v3273
  %v3306 = vunpack.c.l.bf16 %v3274
  %v3307 = vunpack.c.l.bf16 %v3275
  %v3308 = vunpack.c.l.bf16 %v3276
  %v3309 = vunpack.c.l.bf16 %v3277
  %v3310 = vunpack.c.l.bf16 %v3278
  %v3311 = vunpack.c.l.bf16 %v3279
  %v3312 = vunpack.c.l.bf16 %v3280
  %v3313 = vunpack.c.l.bf16 %v3281
  %v3314 = vunpack.c.l.bf16 %v3282
  %v3315 = vunpack.c.l.bf16 %v3283
  %v3316 = vunpack.c.l.bf16 %v3284
  %v3317 = vunpack.c.l.bf16 %v3285
  %v3318 = vunpack.c.l.bf16 %v3286
  %v3319 = vunpack.c.l.bf16 %v3287
  %v3320 = vunpack.c.l.bf16 %v3288
  %v3321 = vunpack.c.l.bf16 %v3289
  %v3322 = vunpack.c.l.bf16 %v3290
  %v3323 = vunpack.c.l.bf16 %v3291
  %v3324 = vunpack.c.l.bf16 %v3292
  %v3325 = vunpack.c.l.bf16 %v3293
  %v3326 = vunpack.c.l.bf16 %v3294
  %v3327 = vunpack.c.l.bf16 %v3295
  %v3328 = vunpack.c.l.bf16 %v3296
  %v3329 = vunpack.c.l.bf16 %v3297
  %v3330 = vunpack.c.l.bf16 %v3298
  %v3331 = vunpack.c.l.bf16 %v3299
  %v3332 = vmul.f32 %v3204, %v3300
  %v3333 = vmul.f32 %v3205, %v3301
  %v3334 = vmul.f32 %v3206, %v3302
  %v3335 = vmul.f32 %v3207, %v3303
  %v3336 = vmul.f32 %v3208, %v3304
  %v3337 = vmul.f32 %v3209, %v3305
  %v3338 = vmul.f32 %v3210, %v3306
  %v3339 = vmul.f32 %v3211, %v3307
  %v3340 = vmul.f32 %v3212, %v3308
  %v3341 = vmul.f32 %v3213, %v3309
  %v3342 = vmul.f32 %v3214, %v3310
  %v3343 = vmul.f32 %v3215, %v3311
  %v3344 = vmul.f32 %v3216, %v3312
  %v3345 = vmul.f32 %v3217, %v3313
  %v3346 = vmul.f32 %v3218, %v3314
  %v3347 = vmul.f32 %v3219, %v3315
  %v3348 = vmul.f32 %v3220, %v3316
  %v3349 = vmul.f32 %v3221, %v3317
  %v3350 = vmul.f32 %v3222, %v3318
  %v3351 = vmul.f32 %v3223, %v3319
  %v3352 = vmul.f32 %v3224, %v3320
  %v3353 = vmul.f32 %v3225, %v3321
  %v3354 = vmul.f32 %v3226, %v3322
  %v3355 = vmul.f32 %v3227, %v3323
  %v3356 = vmul.f32 %v3228, %v3324
  %v3357 = vmul.f32 %v3229, %v3325
  %v3358 = vmul.f32 %v3230, %v3326
  %v3359 = vmul.f32 %v3231, %v3327
  %v3360 = vmul.f32 %v3232, %v3328
  %v3361 = vmul.f32 %v3233, %v3329
  %v3362 = vmul.f32 %v3234, %v3330
  %v3363 = vmul.f32 %v3235, %v3331
  %v3364 = vmul.f32 %v3236, %v3300
  %v3365 = vmul.f32 %v3237, %v3301
  %v3366 = vmul.f32 %v3238, %v3302
  %v3367 = vmul.f32 %v3239, %v3303
  %v3368 = vmul.f32 %v3240, %v3304
  %v3369 = vmul.f32 %v3241, %v3305
  %v3370 = vmul.f32 %v3242, %v3306
  %v3371 = vmul.f32 %v3243, %v3307
  %v3372 = vmul.f32 %v3244, %v3308
  %v3373 = vmul.f32 %v3245, %v3309
  %v3374 = vmul.f32 %v3246, %v3310
  %v3375 = vmul.f32 %v3247, %v3311
  %v3376 = vmul.f32 %v3248, %v3312
  %v3377 = vmul.f32 %v3249, %v3313
  %v3378 = vmul.f32 %v3250, %v3314
  %v3379 = vmul.f32 %v3251, %v3315
  %v3380 = vmul.f32 %v3252, %v3316
  %v3381 = vmul.f32 %v3253, %v3317
  %v3382 = vmul.f32 %v3254, %v3318
  %v3383 = vmul.f32 %v3255, %v3319
  %v3384 = vmul.f32 %v3256, %v3320
  %v3385 = vmul.f32 %v3257, %v3321
  %v3386 = vmul.f32 %v3258, %v3322
  %v3387 = vmul.f32 %v3259, %v3323
  %v3388 = vmul.f32 %v3260, %v3324
  %v3389 = vmul.f32 %v3261, %v3325
  %v3390 = vmul.f32 %v3262, %v3326
  %v3391 = vmul.f32 %v3263, %v3327
  %v3392 = vmul.f32 %v3264, %v3328
  %v3393 = vmul.f32 %v3265, %v3329
  %v3394 = vmul.f32 %v3266, %v3330
  %v3395 = vmul.f32 %v3267, %v3331
  %3396 = vst.msk [vmem:[%s67] sm:$0xff] %vm280, %v3332
  %3397 = vst.msk [vmem:[%s67 + $0x8] sm:$0xff] %vm280, %v3333
  %3398 = vst.msk [vmem:[%s67 + $0x10] sm:$0xff] %vm280, %v3334
  %3399 = vst.msk [vmem:[%s67 + $0x18] sm:$0xff] %vm280, %v3335
  %3400 = vst.msk [vmem:[%s67 + $0x20] sm:$0xff] %vm280, %v3336
  %3401 = vst.msk [vmem:[%s67 + $0x28] sm:$0xff] %vm280, %v3337
  %3402 = vst.msk [vmem:[%s67 + $0x30] sm:$0xff] %vm280, %v3338
  %3403 = vst.msk [vmem:[%s67 + $0x38] sm:$0xff] %vm280, %v3339
  %3404 = vst.msk [vmem:[%s67 + $0x40] sm:$0xff] %vm280, %v3340
  %3405 = vst.msk [vmem:[%s67 + $0x48] sm:$0xff] %vm280, %v3341
  %3406 = vst.msk [vmem:[%s67 + $0x50] sm:$0xff] %vm280, %v3342
  %3407 = vst.msk [vmem:[%s67 + $0x58] sm:$0xff] %vm280, %v3343
  %3408 = vst.msk [vmem:[%s67 + $0x60] sm:$0xff] %vm280, %v3344
  %3409 = vst.msk [vmem:[%s67 + $0x68] sm:$0xff] %vm280, %v3345
  %3410 = vst.msk [vmem:[%s67 + $0x70] sm:$0xff] %vm280, %v3346
  %3411 = vst.msk [vmem:[%s67 + $0x78] sm:$0xff] %vm280, %v3347
  %3412 = vst.msk [vmem:[%s67 + $0x80] sm:$0xff] %vm280, %v3348
  %3413 = vst.msk [vmem:[%s67 + $0x88] sm:$0xff] %vm280, %v3349
  %3414 = vst.msk [vmem:[%s67 + $0x90] sm:$0xff] %vm280, %v3350
  %3415 = vst.msk [vmem:[%s67 + $0x98] sm:$0xff] %vm280, %v3351
  %3416 = vst.msk [vmem:[%s67 + $0xa0] sm:$0xff] %vm280, %v3352
  %3417 = vst.msk [vmem:[%s67 + $0xa8] sm:$0xff] %vm280, %v3353
  %3418 = vst.msk [vmem:[%s67 + $0xb0] sm:$0xff] %vm280, %v3354
  %3419 = vst.msk [vmem:[%s67 + $0xb8] sm:$0xff] %vm280, %v3355
  %3420 = vst.msk [vmem:[%s67 + $0xc0] sm:$0xff] %vm280, %v3356
  %3421 = vst.msk [vmem:[%s67 + $0xc8] sm:$0xff] %vm280, %v3357
  %3422 = vst.msk [vmem:[%s67 + $0xd0] sm:$0xff] %vm280, %v3358
  %3423 = vst.msk [vmem:[%s67 + $0xd8] sm:$0xff] %vm280, %v3359
  %3424 = vst.msk [vmem:[%s67 + $0xe0] sm:$0xff] %vm280, %v3360
  %3425 = vst.msk [vmem:[%s67 + $0xe8] sm:$0xff] %vm280, %v3361
  %3426 = vst.msk [vmem:[%s67 + $0xf0] sm:$0xff] %vm280, %v3362
  %3427 = vst.msk [vmem:[%s67 + $0xf8] sm:$0xff] %vm280, %v3363
  %3428 = vst.msk [vmem:[%s67 + $0x100] sm:$0xff] %vm280, %v3364
  %3429 = vst.msk [vmem:[%s67 + $0x108] sm:$0xff] %vm280, %v3365
  %3430 = vst.msk [vmem:[%s67 + $0x110] sm:$0xff] %vm280, %v3366
  %3431 = vst.msk [vmem:[%s67 + $0x118] sm:$0xff] %vm280, %v3367
  %3432 = vst.msk [vmem:[%s67 + $0x120] sm:$0xff] %vm280, %v3368
  %3433 = vst.msk [vmem:[%s67 + $0x128] sm:$0xff] %vm280, %v3369
  %3434 = vst.msk [vmem:[%s67 + $0x130] sm:$0xff] %vm280, %v3370
  %3435 = vst.msk [vmem:[%s67 + $0x138] sm:$0xff] %vm280, %v3371
  %3436 = vst.msk [vmem:[%s67 + $0x140] sm:$0xff] %vm280, %v3372
  %3437 = vst.msk [vmem:[%s67 + $0x148] sm:$0xff] %vm280, %v3373
  %3438 = vst.msk [vmem:[%s67 + $0x150] sm:$0xff] %vm280, %v3374
  %3439 = vst.msk [vmem:[%s67 + $0x158] sm:$0xff] %vm280, %v3375
  %3440 = vst.msk [vmem:[%s67 + $0x160] sm:$0xff] %vm280, %v3376
  %3441 = vst.msk [vmem:[%s67 + $0x168] sm:$0xff] %vm280, %v3377
  %3442 = vst.msk [vmem:[%s67 + $0x170] sm:$0xff] %vm280, %v3378
  %3443 = vst.msk [vmem:[%s67 + $0x178] sm:$0xff] %vm280, %v3379
  %3444 = vst.msk [vmem:[%s67 + $0x180] sm:$0xff] %vm280, %v3380
  %3445 = vst.msk [vmem:[%s67 + $0x188] sm:$0xff] %vm280, %v3381
  %3446 = vst.msk [vmem:[%s67 + $0x190] sm:$0xff] %vm280, %v3382
  %3447 = vst.msk [vmem:[%s67 + $0x198] sm:$0xff] %vm280, %v3383
  %3448 = vst.msk [vmem:[%s67 + $0x1a0] sm:$0xff] %vm280, %v3384
  %3449 = vst.msk [vmem:[%s67 + $0x1a8] sm:$0xff] %vm280, %v3385
  %3450 = vst.msk [vmem:[%s67 + $0x1b0] sm:$0xff] %vm280, %v3386
  %3451 = vst.msk [vmem:[%s67 + $0x1b8] sm:$0xff] %vm280, %v3387
  %3452 = vst.msk [vmem:[%s67 + $0x1c0] sm:$0xff] %vm280, %v3388
  %3453 = vst.msk [vmem:[%s67 + $0x1c8] sm:$0xff] %vm280, %v3389
  %3454 = vst.msk [vmem:[%s67 + $0x1d0] sm:$0xff] %vm280, %v3390
  %3455 = vst.msk [vmem:[%s67 + $0x1d8] sm:$0xff] %vm280, %v3391
  %3456 = vst.msk [vmem:[%s67 + $0x1e0] sm:$0xff] %vm280, %v3392
  %3457 = vst.msk [vmem:[%s67 + $0x1e8] sm:$0xff] %vm280, %v3393
  %3458 = vst.msk [vmem:[%s67 + $0x1f0] sm:$0xff] %vm280, %v3394
  %3459 = vst.msk [vmem:[%s67 + $0x1f8] sm:$0xff] %vm280, %v3395
  %3460 = vst.msk [vmem:[%s69] sm:$0xff] %vm280, %v3364
  %3461 = vst.msk [vmem:[%s69 + $0x8] sm:$0xff] %vm280, %v3365
  %3462 = vst.msk [vmem:[%s69 + $0x10] sm:$0xff] %vm280, %v3366
  %3463 = vst.msk [vmem:[%s69 + $0x18] sm:$0xff] %vm280, %v3367
  %3464 = vst.msk [vmem:[%s69 + $0x20] sm:$0xff] %vm280, %v3368
  %3465 = vst.msk [vmem:[%s69 + $0x28] sm:$0xff] %vm280, %v3369
  %3466 = vst.msk [vmem:[%s69 + $0x30] sm:$0xff] %vm280, %v3370
  %3467 = vst.msk [vmem:[%s69 + $0x38] sm:$0xff] %vm280, %v3371
  %3468 = vst.msk [vmem:[%s69 + $0x40] sm:$0xff] %vm280, %v3372
  %3469 = vst.msk [vmem:[%s69 + $0x48] sm:$0xff] %vm280, %v3373
  %3470 = vst.msk [vmem:[%s69 + $0x50] sm:$0xff] %vm280, %v3374
  %3471 = vst.msk [vmem:[%s69 + $0x58] sm:$0xff] %vm280, %v3375
  %3472 = vst.msk [vmem:[%s69 + $0x60] sm:$0xff] %vm280, %v3376
  %3473 = vst.msk [vmem:[%s69 + $0x68] sm:$0xff] %vm280, %v3377
  %3474 = vst.msk [vmem:[%s69 + $0x70] sm:$0xff] %vm280, %v3378
  %3475 = vst.msk [vmem:[%s69 + $0x78] sm:$0xff] %vm280, %v3379
  %3476 = vst.msk [vmem:[%s69 + $0x80] sm:$0xff] %vm280, %v3380
  %3477 = vst.msk [vmem:[%s69 + $0x88] sm:$0xff] %vm280, %v3381
  %3478 = vst.msk [vmem:[%s69 + $0x90] sm:$0xff] %vm280, %v3382
  %3479 = vst.msk [vmem:[%s69 + $0x98] sm:$0xff] %vm280, %v3383
  %3480 = vst.msk [vmem:[%s69 + $0xa0] sm:$0xff] %vm280, %v3384
  %3481 = vst.msk [vmem:[%s69 + $0xa8] sm:$0xff] %vm280, %v3385
  %3482 = vst.msk [vmem:[%s69 + $0xb0] sm:$0xff] %vm280, %v3386
  %3483 = vst.msk [vmem:[%s69 + $0xb8] sm:$0xff] %vm280, %v3387
  %3484 = vst.msk [vmem:[%s69 + $0xc0] sm:$0xff] %vm280, %v3388
  %3485 = vst.msk [vmem:[%s69 + $0xc8] sm:$0xff] %vm280, %v3389
  %3486 = vst.msk [vmem:[%s69 + $0xd0] sm:$0xff] %vm280, %v3390
  %3487 = vst.msk [vmem:[%s69 + $0xd8] sm:$0xff] %vm280, %v3391
  %3488 = vst.msk [vmem:[%s69 + $0xe0] sm:$0xff] %vm280, %v3392
  %3489 = vst.msk [vmem:[%s69 + $0xe8] sm:$0xff] %vm280, %v3393
  %3490 = vst.msk [vmem:[%s69 + $0xf0] sm:$0xff] %vm280, %v3394
  %3491 = vst.msk [vmem:[%s69 + $0xf8] sm:$0xff] %vm280, %v3395
  %3492 = vst.msk [vmem:[%s69 + $0x100] sm:$0xff] %vm280, %v3332
  %3493 = vst.msk [vmem:[%s69 + $0x108] sm:$0xff] %vm280, %v3333
  %3494 = vst.msk [vmem:[%s69 + $0x110] sm:$0xff] %vm280, %v3334
  %3495 = vst.msk [vmem:[%s69 + $0x118] sm:$0xff] %vm280, %v3335
  %3496 = vst.msk [vmem:[%s69 + $0x120] sm:$0xff] %vm280, %v3336
  %3497 = vst.msk [vmem:[%s69 + $0x128] sm:$0xff] %vm280, %v3337
  %3498 = vst.msk [vmem:[%s69 + $0x130] sm:$0xff] %vm280, %v3338
  %3499 = vst.msk [vmem:[%s69 + $0x138] sm:$0xff] %vm280, %v3339
  %3500 = vst.msk [vmem:[%s69 + $0x140] sm:$0xff] %vm280, %v3340
  %3501 = vst.msk [vmem:[%s69 + $0x148] sm:$0xff] %vm280, %v3341
  %3502 = vst.msk [vmem:[%s69 + $0x150] sm:$0xff] %vm280, %v3342
  %3503 = vst.msk [vmem:[%s69 + $0x158] sm:$0xff] %vm280, %v3343
  %3504 = vst.msk [vmem:[%s69 + $0x160] sm:$0xff] %vm280, %v3344
  %3505 = vst.msk [vmem:[%s69 + $0x168] sm:$0xff] %vm280, %v3345
  %3506 = vst.msk [vmem:[%s69 + $0x170] sm:$0xff] %vm280, %v3346
  %3507 = vst.msk [vmem:[%s69 + $0x178] sm:$0xff] %vm280, %v3347
  %3508 = vst.msk [vmem:[%s69 + $0x180] sm:$0xff] %vm280, %v3348
  %3509 = vst.msk [vmem:[%s69 + $0x188] sm:$0xff] %vm280, %v3349
  %3510 = vst.msk [vmem:[%s69 + $0x190] sm:$0xff] %vm280, %v3350
  %3511 = vst.msk [vmem:[%s69 + $0x198] sm:$0xff] %vm280, %v3351
  %3512 = vst.msk [vmem:[%s69 + $0x1a0] sm:$0xff] %vm280, %v3352
  %3513 = vst.msk [vmem:[%s69 + $0x1a8] sm:$0xff] %vm280, %v3353
  %3514 = vst.msk [vmem:[%s69 + $0x1b0] sm:$0xff] %vm280, %v3354
  %3515 = vst.msk [vmem:[%s69 + $0x1b8] sm:$0xff] %vm280, %v3355
  %3516 = vst.msk [vmem:[%s69 + $0x1c0] sm:$0xff] %vm280, %v3356
  %3517 = vst.msk [vmem:[%s69 + $0x1c8] sm:$0xff] %vm280, %v3357
  %3518 = vst.msk [vmem:[%s69 + $0x1d0] sm:$0xff] %vm280, %v3358
  %3519 = vst.msk [vmem:[%s69 + $0x1d8] sm:$0xff] %vm280, %v3359
  %3520 = vst.msk [vmem:[%s69 + $0x1e0] sm:$0xff] %vm280, %v3360
  %3521 = vst.msk [vmem:[%s69 + $0x1e8] sm:$0xff] %vm280, %v3361
  %3522 = vst.msk [vmem:[%s69 + $0x1f0] sm:$0xff] %vm280, %v3362
  %3523 = vst.msk [vmem:[%s69 + $0x1f8] sm:$0xff] %vm280, %v3363
  %v3524 = vld [vmem:[%s43] sm:$0xf]
  %v3525 = vld [vmem:[%s43 + $0x4] sm:$0xf]
  %v3526 = vld [vmem:[%s43 + $0x8] sm:$0xf]
  %v3527 = vld [vmem:[%s43 + $0xc] sm:$0xf]
  %v3528 = vld [vmem:[%s43 + $0x10] sm:$0xf]
  %v3529 = vld [vmem:[%s43 + $0x14] sm:$0xf]
  %v3530 = vld [vmem:[%s43 + $0x18] sm:$0xf]
  %v3531 = vld [vmem:[%s43 + $0x1c] sm:$0xf]
  %v3532 = vpack.c.bf16 %v3365, %v3364
  %v3533 = vpack.c.bf16 %v3367, %v3366
  %v3534 = vpack.c.bf16 %v3369, %v3368
  %v3535 = vpack.c.bf16 %v3371, %v3370
  %v3536 = vpack.c.bf16 %v3373, %v3372
  %v3537 = vpack.c.bf16 %v3375, %v3374
  %v3538 = vpack.c.bf16 %v3377, %v3376
  %v3539 = vpack.c.bf16 %v3379, %v3378
  %v3540 = vpack.c.bf16 %v3381, %v3380
  %v3541 = vpack.c.bf16 %v3383, %v3382
  %v3542 = vpack.c.bf16 %v3385, %v3384
  %v3543 = vpack.c.bf16 %v3387, %v3386
  %v3544 = vpack.c.bf16 %v3389, %v3388
  %v3545 = vpack.c.bf16 %v3391, %v3390
  %v3546 = vpack.c.bf16 %v3393, %v3392
  %v3547 = vpack.c.bf16 %v3395, %v3394
  %v3548 = vpack.c.bf16 %v3333, %v3332
  %v3549 = vpack.c.bf16 %v3335, %v3334
  %v3550 = vpack.c.bf16 %v3337, %v3336
  %v3551 = vpack.c.bf16 %v3339, %v3338
  %v3552 = vpack.c.bf16 %v3341, %v3340
  %v3553 = vpack.c.bf16 %v3343, %v3342
  %v3554 = vpack.c.bf16 %v3345, %v3344
  %v3555 = vpack.c.bf16 %v3347, %v3346
  %v3556 = vpack.c.bf16 %v3349, %v3348
  %v3557 = vpack.c.bf16 %v3351, %v3350
  %v3558 = vpack.c.bf16 %v3353, %v3352
  %v3559 = vpack.c.bf16 %v3355, %v3354
  %v3560 = vpack.c.bf16 %v3357, %v3356
  %v3561 = vpack.c.bf16 %v3359, %v3358
  %v3562 = vpack.c.bf16 %v3361, %v3360
  %v3563 = vpack.c.bf16 %v3363, %v3362
  %v3564 = vld [vmem:[%s45] sm:$0x1]
  %v3566 = vlaneseq
  %v3567 = vshrl.u32 %v3566, 7
  %v3568 = vsub.s32 0, %v3567
  %v3569 = vrot.slane %v3564, %v3568
  %v3579 = vunpack.c.l.b16 %v3524
  %v3580 = vunpack.c.l.b16 %v3525
  %v3581 = vunpack.c.l.b16 %v3526
  %v3582 = vunpack.c.l.b16 %v3527
  %v3583 = vunpack.c.l.b16 %v3528
  %v3584 = vunpack.c.l.b16 %v3529
  %v3585 = vunpack.c.l.b16 %v3530
  %v3586 = vunpack.c.l.b16 %v3531
  %v3587 = vpack.c.b16 %v3580, %v3579
  %v3588 = vpack.c.b16 %v3582, %v3581
  %v3589 = vpack.c.b16 %v3584, %v3583
  %v3590 = vpack.c.b16 %v3586, %v3585
  %v3596 = vsel %vm280, %v3532, 0
  %v3599 = vsel %vm280, %v3533, 0
  %v3602 = vsel %vm280, %v3534, 0
  %v3605 = vsel %vm280, %v3535, 0
  %v3608 = vsel %vm280, %v3536, 0
  %v3611 = vsel %vm280, %v3537, 0
  %v3614 = vsel %vm280, %v3538, 0
  %v3617 = vsel %vm280, %v3539, 0
  %v3620 = vsel %vm280, %v3540, 0
  %v3623 = vsel %vm280, %v3541, 0
  %v3626 = vsel %vm280, %v3542, 0
  %v3629 = vsel %vm280, %v3543, 0
  %v3632 = vsel %vm280, %v3544, 0
  %v3635 = vsel %vm280, %v3545, 0
  %v3638 = vsel %vm280, %v3546, 0
  %v3641 = vsel %vm280, %v3547, 0
  %v3644 = vsel %vm280, %v3548, 0
  %v3647 = vsel %vm280, %v3549, 0
  %v3650 = vsel %vm280, %v3550, 0
  %v3653 = vsel %vm280, %v3551, 0
  %v3656 = vsel %vm280, %v3552, 0
  %v3659 = vsel %vm280, %v3553, 0
  %v3662 = vsel %vm280, %v3554, 0
  %v3665 = vsel %vm280, %v3555, 0
  %v3668 = vsel %vm280, %v3556, 0
  %v3671 = vsel %vm280, %v3557, 0
  %v3674 = vsel %vm280, %v3558, 0
  %v3677 = vsel %vm280, %v3559, 0
  %v3680 = vsel %vm280, %v3560, 0
  %v3683 = vsel %vm280, %v3561, 0
  %v3686 = vsel %vm280, %v3562, 0
  %v3689 = vsel %vm280, %v3563, 0
  %3691 = vmatprep.subr.bf16.mxu0 0
  %3692 = vmatpush1.bf16.msra.mxu0 %v3587
  %3693 = vmatprep.subr.bf16.mxu0 0
  %3694 = vmatpush1.bf16.msra.mxu0 %v3588
  %3695 = vmatprep.subr.bf16.mxu0 0
  %3696 = vmatpush1.bf16.msra.mxu0 %v3589
  %3697 = vmatprep.subr.bf16.mxu0 0
  %3698 = vmatpush1.bf16.msra.mxu0 %v3590
  %3699 = vmatprep.subr.bf16.mxu0 0
  %3700 = vmatpush1.bf16.msra.mxu0 0
  %3701 = vmatprep.subr.bf16.mxu0 0
  %3702 = vmatpush1.bf16.msra.mxu0 0
  %3703 = vmatprep.subr.bf16.mxu0 0
  %3704 = vmatpush1.bf16.msra.mxu0 0
  %3705 = vmatprep.subr.bf16.mxu0 0
  %3706 = vmatpush1.bf16.msra.mxu0 0
  %3707 = vmatprep.subr.bf16.mxu0 0
  %3708 = vmatpush1.bf16.msra.mxu0 0
  %3709 = vmatprep.subr.bf16.mxu0 0
  %3710 = vmatpush1.bf16.msra.mxu0 0
  %3711 = vmatprep.subr.bf16.mxu0 0
  %3712 = vmatpush1.bf16.msra.mxu0 0
  %3713 = vmatprep.subr.bf16.mxu0 0
  %3714 = vmatpush1.bf16.msra.mxu0 0
  %3715 = vmatprep.subr.bf16.mxu0 0
  %3716 = vmatpush1.bf16.msra.mxu0 0
  %3717 = vmatprep.subr.bf16.mxu0 0
  %3718 = vmatpush1.bf16.msra.mxu0 0
  %3719 = vmatprep.subr.bf16.mxu0 0
  %3720 = vmatpush1.bf16.msra.mxu0 0
  %3721 = vmatprep.subr.bf16.mxu0 0
  %3722 = vmatpush1.bf16.msra.mxu0 0
  %3723 = vmatprep.mubr.bf16.mxu0 0
  %3724 = vmatmul.mubr.bf16.gmra.mrb[0].mxu0 %v3596
  %v3725 = vpop.f32.mrb[0].mxu0
  %v3726 = vadd.f32 %v3569, %v3725
  %v3727 = vpop.f32.mrb[0].mxu0
  %v3728 = vpop.f32.mrb[0].mxu0
  %v3729 = vadd.f32 %v3569, %v3728
  %v3730 = vpop.f32.mrb[0].mxu0
  %3731 = vmatprep.mubr.bf16.mxu0 0
  %3732 = vmatmul.mubr.bf16.gmra.mrb[0].mxu0 %v3599
  %v3733 = vpop.f32.mrb[0].mxu0
  %v3734 = vadd.f32 %v3569, %v3733
  %v3735 = vpop.f32.mrb[0].mxu0
  %v3736 = vpop.f32.mrb[0].mxu0
  %v3737 = vadd.f32 %v3569, %v3736
  %v3738 = vpop.f32.mrb[0].mxu0
  %3739 = vmatprep.mubr.bf16.mxu0 0
  %3740 = vmatmul.mubr.bf16.gmra.mrb[0].mxu0 %v3602
  %v3741 = vpop.f32.mrb[0].mxu0
  %v3742 = vadd.f32 %v3569, %v3741
  %v3743 = vpop.f32.mrb[0].mxu0
  %v3744 = vpop.f32.mrb[0].mxu0
  %v3745 = vadd.f32 %v3569, %v3744
  %v3746 = vpop.f32.mrb[0].mxu0
  %3747 = vmatprep.mubr.bf16.mxu0 0
  %3748 = vmatmul.mubr.bf16.gmra.mrb[0].mxu0 %v3605
  %v3749 = vpop.f32.mrb[0].mxu0
  %v3750 = vadd.f32 %v3569, %v3749
  %v3751 = vpop.f32.mrb[0].mxu0
  %v3752 = vpop.f32.mrb[0].mxu0
  %v3753 = vadd.f32 %v3569, %v3752
  %v3754 = vpop.f32.mrb[0].mxu0
  %3755 = vmatprep.mubr.bf16.mxu0 0
  %3756 = vmatmul.mubr.bf16.gmra.mrb[0].mxu0 %v3608
  %v3757 = vpop.f32.mrb[0].mxu0
  %v3758 = vadd.f32 %v3569, %v3757
  %v3759 = vpop.f32.mrb[0].mxu0
  %v3760 = vpop.f32.mrb[0].mxu0
  %v3761 = vadd.f32 %v3569, %v3760
  %v3762 = vpop.f32.mrb[0].mxu0
  %3763 = vmatprep.mubr.bf16.mxu0 0
  %3764 = vmatmul.mubr.bf16.gmra.mrb[0].mxu0 %v3611
  %v3765 = vpop.f32.mrb[0].mxu0
  %v3766 = vadd.f32 %v3569, %v3765
  %v3767 = vpop.f32.mrb[0].mxu0
  %v3768 = vpop.f32.mrb[0].mxu0
  %v3769 = vadd.f32 %v3569, %v3768
  %v3770 = vpop.f32.mrb[0].mxu0
  %3771 = vmatprep.mubr.bf16.mxu0 0
  %3772 = vmatmul.mubr.bf16.gmra.mrb[0].mxu0 %v3614
  %v3773 = vpop.f32.mrb[0].mxu0
  %v3774 = vadd.f32 %v3569, %v3773
  %v3775 = vpop.f32.mrb[0].mxu0
  %v3776 = vpop.f32.mrb[0].mxu0
  %v3777 = vadd.f32 %v3569, %v3776
  %v3778 = vpop.f32.mrb[0].mxu0
  %3779 = vmatprep.mubr.bf16.mxu0 0
  %3780 = vmatmul.mubr.bf16.gmra.mrb[0].mxu0 %v3617
  %v3781 = vpop.f32.mrb[0].mxu0
  %v3782 = vadd.f32 %v3569, %v3781
  %v3783 = vpop.f32.mrb[0].mxu0
  %v3784 = vpop.f32.mrb[0].mxu0
  %v3785 = vadd.f32 %v3569, %v3784
  %v3786 = vpop.f32.mrb[0].mxu0
  %3787 = vmatprep.mubr.bf16.mxu0 0
  %3788 = vmatmul.mubr.bf16.gmra.mrb[0].mxu0 %v3620
  %v3789 = vpop.f32.mrb[0].mxu0
  %v3790 = vadd.f32 %v3569, %v3789
  %v3791 = vpop.f32.mrb[0].mxu0
  %v3792 = vpop.f32.mrb[0].mxu0
  %v3793 = vadd.f32 %v3569, %v3792
  %v3794 = vpop.f32.mrb[0].mxu0
  %3795 = vmatprep.mubr.bf16.mxu0 0
  %3796 = vmatmul.mubr.bf16.gmra.mrb[0].mxu0 %v3623
  %v3797 = vpop.f32.mrb[0].mxu0
  %v3798 = vadd.f32 %v3569, %v3797
  %v3799 = vpop.f32.mrb[0].mxu0
  %v3800 = vpop.f32.mrb[0].mxu0
  %v3801 = vadd.f32 %v3569, %v3800
  %v3802 = vpop.f32.mrb[0].mxu0
  %3803 = vmatprep.mubr.bf16.mxu0 0
  %3804 = vmatmul.mubr.bf16.gmra.mrb[0].mxu0 %v3626
  %v3805 = vpop.f32.mrb[0].mxu0
  %v3806 = vadd.f32 %v3569, %v3805
  %v3807 = vpop.f32.mrb[0].mxu0
  %v3808 = vpop.f32.mrb[0].mxu0
  %v3809 = vadd.f32 %v3569, %v3808
  %v3810 = vpop.f32.mrb[0].mxu0
  %3811 = vmatprep.mubr.bf16.mxu0 0
  %3812 = vmatmul.mubr.bf16.gmra.mrb[0].mxu0 %v3629
  %v3813 = vpop.f32.mrb[0].mxu0
  %v3814 = vadd.f32 %v3569, %v3813
  %v3815 = vpop.f32.mrb[0].mxu0
  %v3816 = vpop.f32.mrb[0].mxu0
  %v3817 = vadd.f32 %v3569, %v3816
  %v3818 = vpop.f32.mrb[0].mxu0
  %3819 = vmatprep.mubr.bf16.mxu0 0
  %3820 = vmatmul.mubr.bf16.gmra.mrb[0].mxu0 %v3632
  %v3821 = vpop.f32.mrb[0].mxu0
  %v3822 = vadd.f32 %v3569, %v3821
  %v3823 = vpop.f32.mrb[0].mxu0
  %v3824 = vpop.f32.mrb[0].mxu0
  %v3825 = vadd.f32 %v3569, %v3824
  %v3826 = vpop.f32.mrb[0].mxu0
  %3827 = vmatprep.mubr.bf16.mxu0 0
  %3828 = vmatmul.mubr.bf16.gmra.mrb[0].mxu0 %v3635
  %v3829 = vpop.f32.mrb[0].mxu0
  %v3830 = vadd.f32 %v3569, %v3829
  %v3831 = vpop.f32.mrb[0].mxu0
  %v3832 = vpop.f32.mrb[0].mxu0
  %v3833 = vadd.f32 %v3569, %v3832
  %v3834 = vpop.f32.mrb[0].mxu0
  %3835 = vmatprep.mubr.bf16.mxu0 0
  %3836 = vmatmul.mubr.bf16.gmra.mrb[0].mxu0 %v3638
  %v3837 = vpop.f32.mrb[0].mxu0
  %v3838 = vadd.f32 %v3569, %v3837
  %v3839 = vpop.f32.mrb[0].mxu0
  %v3840 = vpop.f32.mrb[0].mxu0
  %v3841 = vadd.f32 %v3569, %v3840
  %v3842 = vpop.f32.mrb[0].mxu0
  %3843 = vmatprep.mubr.bf16.mxu0 0
  %3844 = vmatmul.mubr.bf16.gmra.mrb[0].mxu0 %v3641
  %v3845 = vpop.f32.mrb[0].mxu0
  %v3846 = vadd.f32 %v3569, %v3845
  %v3847 = vpop.f32.mrb[0].mxu0
  %v3848 = vpop.f32.mrb[0].mxu0
  %v3849 = vadd.f32 %v3569, %v3848
  %v3850 = vpop.f32.mrb[0].mxu0
  %3851 = vmatprep.mubr.bf16.mxu0 0
  %3852 = vmatmul.mubr.bf16.gmra.mrb[0].mxu0 %v3644
  %v3853 = vpop.f32.mrb[0].mxu0
  %v3854 = vadd.f32 %v3569, %v3853
  %v3855 = vpop.f32.mrb[0].mxu0
  %v3856 = vpop.f32.mrb[0].mxu0
  %v3857 = vadd.f32 %v3569, %v3856
  %v3858 = vpop.f32.mrb[0].mxu0
  %3859 = vmatprep.mubr.bf16.mxu0 0
  %3860 = vmatmul.mubr.bf16.gmra.mrb[0].mxu0 %v3647
  %v3861 = vpop.f32.mrb[0].mxu0
  %v3862 = vadd.f32 %v3569, %v3861
  %v3863 = vpop.f32.mrb[0].mxu0
  %v3864 = vpop.f32.mrb[0].mxu0
  %v3865 = vadd.f32 %v3569, %v3864
  %v3866 = vpop.f32.mrb[0].mxu0
  %3867 = vmatprep.mubr.bf16.mxu0 0
  %3868 = vmatmul.mubr.bf16.gmra.mrb[0].mxu0 %v3650
  %v3869 = vpop.f32.mrb[0].mxu0
  %v3870 = vadd.f32 %v3569, %v3869
  %v3871 = vpop.f32.mrb[0].mxu0
  %v3872 = vpop.f32.mrb[0].mxu0
  %v3873 = vadd.f32 %v3569, %v3872
  %v3874 = vpop.f32.mrb[0].mxu0
  %3875 = vmatprep.mubr.bf16.mxu0 0
  %3876 = vmatmul.mubr.bf16.gmra.mrb[0].mxu0 %v3653
  %v3877 = vpop.f32.mrb[0].mxu0
  %v3878 = vadd.f32 %v3569, %v3877
  %v3879 = vpop.f32.mrb[0].mxu0
  %v3880 = vpop.f32.mrb[0].mxu0
  %v3881 = vadd.f32 %v3569, %v3880
  %v3882 = vpop.f32.mrb[0].mxu0
  %3883 = vmatprep.mubr.bf16.mxu0 0
  %3884 = vmatmul.mubr.bf16.gmra.mrb[0].mxu0 %v3656
  %v3885 = vpop.f32.mrb[0].mxu0
  %v3886 = vadd.f32 %v3569, %v3885
  %v3887 = vpop.f32.mrb[0].mxu0
  %v3888 = vpop.f32.mrb[0].mxu0
  %v3889 = vadd.f32 %v3569, %v3888
  %v3890 = vpop.f32.mrb[0].mxu0
  %3891 = vmatprep.mubr.bf16.mxu0 0
  %3892 = vmatmul.mubr.bf16.gmra.mrb[0].mxu0 %v3659
  %v3893 = vpop.f32.mrb[0].mxu0
  %v3894 = vadd.f32 %v3569, %v3893
  %v3895 = vpop.f32.mrb[0].mxu0
  %v3896 = vpop.f32.mrb[0].mxu0
  %v3897 = vadd.f32 %v3569, %v3896
  %v3898 = vpop.f32.mrb[0].mxu0
  %3899 = vmatprep.mubr.bf16.mxu0 0
  %3900 = vmatmul.mubr.bf16.gmra.mrb[0].mxu0 %v3662
  %v3901 = vpop.f32.mrb[0].mxu0
  %v3902 = vadd.f32 %v3569, %v3901
  %v3903 = vpop.f32.mrb[0].mxu0
  %v3904 = vpop.f32.mrb[0].mxu0
  %v3905 = vadd.f32 %v3569, %v3904
  %v3906 = vpop.f32.mrb[0].mxu0
  %3907 = vmatprep.mubr.bf16.mxu0 0
  %3908 = vmatmul.mubr.bf16.gmra.mrb[0].mxu0 %v3665
  %v3909 = vpop.f32.mrb[0].mxu0
  %v3910 = vadd.f32 %v3569, %v3909
  %v3911 = vpop.f32.mrb[0].mxu0
  %v3912 = vpop.f32.mrb[0].mxu0
  %v3913 = vadd.f32 %v3569, %v3912
  %v3914 = vpop.f32.mrb[0].mxu0
  %3915 = vmatprep.mubr.bf16.mxu0 0
  %3916 = vmatmul.mubr.bf16.gmra.mrb[0].mxu0 %v3668
  %v3917 = vpop.f32.mrb[0].mxu0
  %v3918 = vadd.f32 %v3569, %v3917
  %v3919 = vpop.f32.mrb[0].mxu0
  %v3920 = vpop.f32.mrb[0].mxu0
  %v3921 = vadd.f32 %v3569, %v3920
  %v3922 = vpop.f32.mrb[0].mxu0
  %3923 = vmatprep.mubr.bf16.mxu0 0
  %3924 = vmatmul.mubr.bf16.gmra.mrb[0].mxu0 %v3671
  %v3925 = vpop.f32.mrb[0].mxu0
  %v3926 = vadd.f32 %v3569, %v3925
  %v3927 = vpop.f32.mrb[0].mxu0
  %v3928 = vpop.f32.mrb[0].mxu0
  %v3929 = vadd.f32 %v3569, %v3928
  %v3930 = vpop.f32.mrb[0].mxu0
  %3931 = vmatprep.mubr.bf16.mxu0 0
  %3932 = vmatmul.mubr.bf16.gmra.mrb[0].mxu0 %v3674
  %v3933 = vpop.f32.mrb[0].mxu0
  %v3934 = vadd.f32 %v3569, %v3933
  %v3935 = vpop.f32.mrb[0].mxu0
  %v3936 = vpop.f32.mrb[0].mxu0
  %v3937 = vadd.f32 %v3569, %v3936
  %v3938 = vpop.f32.mrb[0].mxu0
  %3939 = vmatprep.mubr.bf16.mxu0 0
  %3940 = vmatmul.mubr.bf16.gmra.mrb[0].mxu0 %v3677
  %v3941 = vpop.f32.mrb[0].mxu0
  %v3942 = vadd.f32 %v3569, %v3941
  %v3943 = vpop.f32.mrb[0].mxu0
  %v3944 = vpop.f32.mrb[0].mxu0
  %v3945 = vadd.f32 %v3569, %v3944
  %v3946 = vpop.f32.mrb[0].mxu0
  %3947 = vmatprep.mubr.bf16.mxu0 0
  %3948 = vmatmul.mubr.bf16.gmra.mrb[0].mxu0 %v3680
  %v3949 = vpop.f32.mrb[0].mxu0
  %v3950 = vadd.f32 %v3569, %v3949
  %v3951 = vpop.f32.mrb[0].mxu0
  %v3952 = vpop.f32.mrb[0].mxu0
  %v3953 = vadd.f32 %v3569, %v3952
  %v3954 = vpop.f32.mrb[0].mxu0
  %3955 = vmatprep.mubr.bf16.mxu0 0
  %3956 = vmatmul.mubr.bf16.gmra.mrb[0].mxu0 %v3683
  %v3957 = vpop.f32.mrb[0].mxu0
  %v3958 = vadd.f32 %v3569, %v3957
  %v3959 = vpop.f32.mrb[0].mxu0
  %v3960 = vpop.f32.mrb[0].mxu0
  %v3961 = vadd.f32 %v3569, %v3960
  %v3962 = vpop.f32.mrb[0].mxu0
  %3963 = vmatprep.mubr.bf16.mxu0 0
  %3964 = vmatmul.mubr.bf16.gmra.mrb[0].mxu0 %v3686
  %v3965 = vpop.f32.mrb[0].mxu0
  %v3966 = vadd.f32 %v3569, %v3965
  %v3967 = vpop.f32.mrb[0].mxu0
  %v3968 = vpop.f32.mrb[0].mxu0
  %v3969 = vadd.f32 %v3569, %v3968
  %v3970 = vpop.f32.mrb[0].mxu0
  %3971 = vmatprep.mubr.bf16.mxu0 0
  %3972 = vmatmul.mubr.bf16.gmra.mrb[0].mxu0 %v3689
  %v3973 = vpop.f32.mrb[0].mxu0
  %v3974 = vadd.f32 %v3569, %v3973
  %v3975 = vpop.f32.mrb[0].mxu0
  %v3976 = vpop.f32.mrb[0].mxu0
  %v3977 = vadd.f32 %v3569, %v3976
  %v3978 = vpop.f32.mrb[0].mxu0
  %3979 = vdwg.mxu0
  %vm3980 = vcmp.ge.f32.partialorder %v3726, 0.0
  %vm3981 = vcmp.ge.f32.partialorder %v3729, 0.0
  %vm3982 = vcmp.ge.f32.partialorder %v3734, 0.0
  %vm3983 = vcmp.ge.f32.partialorder %v3737, 0.0
  %vm3984 = vcmp.ge.f32.partialorder %v3742, 0.0
  %vm3985 = vcmp.ge.f32.partialorder %v3745, 0.0
  %vm3986 = vcmp.ge.f32.partialorder %v3750, 0.0
  %vm3987 = vcmp.ge.f32.partialorder %v3753, 0.0
  %vm3988 = vcmp.ge.f32.partialorder %v3758, 0.0
  %vm3989 = vcmp.ge.f32.partialorder %v3761, 0.0
  %vm3990 = vcmp.ge.f32.partialorder %v3766, 0.0
  %vm3991 = vcmp.ge.f32.partialorder %v3769, 0.0
  %vm3992 = vcmp.ge.f32.partialorder %v3774, 0.0
  %vm3993 = vcmp.ge.f32.partialorder %v3777, 0.0
  %vm3994 = vcmp.ge.f32.partialorder %v3782, 0.0
  %vm3995 = vcmp.ge.f32.partialorder %v3785, 0.0
  %vm3996 = vcmp.ge.f32.partialorder %v3790, 0.0
  %vm3997 = vcmp.ge.f32.partialorder %v3793, 0.0
  %vm3998 = vcmp.ge.f32.partialorder %v3798, 0.0
  %vm3999 = vcmp.ge.f32.partialorder %v3801, 0.0
  %vm4000 = vcmp.ge.f32.partialorder %v3806, 0.0
  %vm4001 = vcmp.ge.f32.partialorder %v3809, 0.0
  %vm4002 = vcmp.ge.f32.partialorder %v3814, 0.0
  %vm4003 = vcmp.ge.f32.partialorder %v3817, 0.0
  %vm4004 = vcmp.ge.f32.partialorder %v3822, 0.0
  %vm4005 = vcmp.ge.f32.partialorder %v3825, 0.0
  %vm4006 = vcmp.ge.f32.partialorder %v3830, 0.0
  %vm4007 = vcmp.ge.f32.partialorder %v3833, 0.0
  %vm4008 = vcmp.ge.f32.partialorder %v3838, 0.0
  %vm4009 = vcmp.ge.f32.partialorder %v3841, 0.0
  %vm4010 = vcmp.ge.f32.partialorder %v3846, 0.0
  %vm4011 = vcmp.ge.f32.partialorder %v3849, 0.0
  %vm4012 = vcmp.ge.f32.partialorder %v3854, 0.0
  %vm4013 = vcmp.ge.f32.partialorder %v3857, 0.0
  %vm4014 = vcmp.ge.f32.partialorder %v3862, 0.0
  %vm4015 = vcmp.ge.f32.partialorder %v3865, 0.0
  %vm4016 = vcmp.ge.f32.partialorder %v3870, 0.0
  %vm4017 = vcmp.ge.f32.partialorder %v3873, 0.0
  %vm4018 = vcmp.ge.f32.partialorder %v3878, 0.0
  %vm4019 = vcmp.ge.f32.partialorder %v3881, 0.0
  %vm4020 = vcmp.ge.f32.partialorder %v3886, 0.0
  %vm4021 = vcmp.ge.f32.partialorder %v3889, 0.0
  %vm4022 = vcmp.ge.f32.partialorder %v3894, 0.0
  %vm4023 = vcmp.ge.f32.partialorder %v3897, 0.0
  %vm4024 = vcmp.ge.f32.partialorder %v3902, 0.0
  %vm4025 = vcmp.ge.f32.partialorder %v3905, 0.0
  %vm4026 = vcmp.ge.f32.partialorder %v3910, 0.0
  %vm4027 = vcmp.ge.f32.partialorder %v3913, 0.0
  %vm4028 = vcmp.ge.f32.partialorder %v3918, 0.0
  %vm4029 = vcmp.ge.f32.partialorder %v3921, 0.0
  %vm4030 = vcmp.ge.f32.partialorder %v3926, 0.0
  %vm4031 = vcmp.ge.f32.partialorder %v3929, 0.0
  %vm4032 = vcmp.ge.f32.partialorder %v3934, 0.0
  %vm4033 = vcmp.ge.f32.partialorder %v3937, 0.0
  %vm4034 = vcmp.ge.f32.partialorder %v3942, 0.0
  %vm4035 = vcmp.ge.f32.partialorder %v3945, 0.0
  %vm4036 = vcmp.ge.f32.partialorder %v3950, 0.0
  %vm4037 = vcmp.ge.f32.partialorder %v3953, 0.0
  %vm4038 = vcmp.ge.f32.partialorder %v3958, 0.0
  %vm4039 = vcmp.ge.f32.partialorder %v3961, 0.0
  %vm4040 = vcmp.ge.f32.partialorder %v3966, 0.0
  %vm4041 = vcmp.ge.f32.partialorder %v3969, 0.0
  %vm4042 = vcmp.ge.f32.partialorder %v3974, 0.0
  %vm4043 = vcmp.ge.f32.partialorder %v3977, 0.0
  %v4044 = vmul.f32 %v3726, 0.2
  %v4045 = vmul.f32 %v3729, 0.2
  %v4046 = vmul.f32 %v3734, 0.2
  %v4047 = vmul.f32 %v3737, 0.2
  %v4048 = vmul.f32 %v3742, 0.2
  %v4049 = vmul.f32 %v3745, 0.2
  %v4050 = vmul.f32 %v3750, 0.2
  %v4051 = vmul.f32 %v3753, 0.2
  %v4052 = vmul.f32 %v3758, 0.2
  %v4053 = vmul.f32 %v3761, 0.2
  %v4054 = vmul.f32 %v3766, 0.2
  %v4055 = vmul.f32 %v3769, 0.2
  %v4056 = vmul.f32 %v3774, 0.2
  %v4057 = vmul.f32 %v3777, 0.2
  %v4058 = vmul.f32 %v3782, 0.2
  %v4059 = vmul.f32 %v3785, 0.2
  %v4060 = vmul.f32 %v3790, 0.2
  %v4061 = vmul.f32 %v3793, 0.2
  %v4062 = vmul.f32 %v3798, 0.2
  %v4063 = vmul.f32 %v3801, 0.2
  %v4064 = vmul.f32 %v3806, 0.2
  %v4065 = vmul.f32 %v3809, 0.2
  %v4066 = vmul.f32 %v3814, 0.2
  %v4067 = vmul.f32 %v3817, 0.2
  %v4068 = vmul.f32 %v3822, 0.2
  %v4069 = vmul.f32 %v3825, 0.2
  %v4070 = vmul.f32 %v3830, 0.2
  %v4071 = vmul.f32 %v3833, 0.2
  %v4072 = vmul.f32 %v3838, 0.2
  %v4073 = vmul.f32 %v3841, 0.2
  %v4074 = vmul.f32 %v3846, 0.2
  %v4075 = vmul.f32 %v3849, 0.2
  %v4076 = vmul.f32 %v3854, 0.2
  %v4077 = vmul.f32 %v3857, 0.2
  %v4078 = vmul.f32 %v3862, 0.2
  %v4079 = vmul.f32 %v3865, 0.2
  %v4080 = vmul.f32 %v3870, 0.2
  %v4081 = vmul.f32 %v3873, 0.2
  %v4082 = vmul.f32 %v3878, 0.2
  %v4083 = vmul.f32 %v3881, 0.2
  %v4084 = vmul.f32 %v3886, 0.2
  %v4085 = vmul.f32 %v3889, 0.2
  %v4086 = vmul.f32 %v3894, 0.2
  %v4087 = vmul.f32 %v3897, 0.2
  %v4088 = vmul.f32 %v3902, 0.2
  %v4089 = vmul.f32 %v3905, 0.2
  %v4090 = vmul.f32 %v3910, 0.2
  %v4091 = vmul.f32 %v3913, 0.2
  %v4092 = vmul.f32 %v3918, 0.2
  %v4093 = vmul.f32 %v3921, 0.2
  %v4094 = vmul.f32 %v3926, 0.2
  %v4095 = vmul.f32 %v3929, 0.2
  %v4096 = vmul.f32 %v3934, 0.2
  %v4097 = vmul.f32 %v3937, 0.2
  %v4098 = vmul.f32 %v3942, 0.2
  %v4099 = vmul.f32 %v3945, 0.2
  %v4100 = vmul.f32 %v3950, 0.2
  %v4101 = vmul.f32 %v3953, 0.2
  %v4102 = vmul.f32 %v3958, 0.2
  %v4103 = vmul.f32 %v3961, 0.2
  %v4104 = vmul.f32 %v3966, 0.2
  %v4105 = vmul.f32 %v3969, 0.2
  %v4106 = vmul.f32 %v3974, 0.2
  %v4107 = vmul.f32 %v3977, 0.2
  %v4108 = vsel %vm3980, %v3726, %v4044
  %v4109 = vsel %vm3981, %v3729, %v4045
  %v4110 = vsel %vm3982, %v3734, %v4046
  %v4111 = vsel %vm3983, %v3737, %v4047
  %v4112 = vsel %vm3984, %v3742, %v4048
  %v4113 = vsel %vm3985, %v3745, %v4049
  %v4114 = vsel %vm3986, %v3750, %v4050
  %v4115 = vsel %vm3987, %v3753, %v4051
  %v4116 = vsel %vm3988, %v3758, %v4052
  %v4117 = vsel %vm3989, %v3761, %v4053
  %v4118 = vsel %vm3990, %v3766, %v4054
  %v4119 = vsel %vm3991, %v3769, %v4055
  %v4120 = vsel %vm3992, %v3774, %v4056
  %v4121 = vsel %vm3993, %v3777, %v4057
  %v4122 = vsel %vm3994, %v3782, %v4058
  %v4123 = vsel %vm3995, %v3785, %v4059
  %v4124 = vsel %vm3996, %v3790, %v4060
  %v4125 = vsel %vm3997, %v3793, %v4061
  %v4126 = vsel %vm3998, %v3798, %v4062
  %v4127 = vsel %vm3999, %v3801, %v4063
  %v4128 = vsel %vm4000, %v3806, %v4064
  %v4129 = vsel %vm4001, %v3809, %v4065
  %v4130 = vsel %vm4002, %v3814, %v4066
  %v4131 = vsel %vm4003, %v3817, %v4067
  %v4132 = vsel %vm4004, %v3822, %v4068
  %v4133 = vsel %vm4005, %v3825, %v4069
  %v4134 = vsel %vm4006, %v3830, %v4070
  %v4135 = vsel %vm4007, %v3833, %v4071
  %v4136 = vsel %vm4008, %v3838, %v4072
  %v4137 = vsel %vm4009, %v3841, %v4073
  %v4138 = vsel %vm4010, %v3846, %v4074
  %v4139 = vsel %vm4011, %v3849, %v4075
  %v4140 = vsel %vm4012, %v3854, %v4076
  %v4141 = vsel %vm4013, %v3857, %v4077
  %v4142 = vsel %vm4014, %v3862, %v4078
  %v4143 = vsel %vm4015, %v3865, %v4079
  %v4144 = vsel %vm4016, %v3870, %v4080
  %v4145 = vsel %vm4017, %v3873, %v4081
  %v4146 = vsel %vm4018, %v3878, %v4082
  %v4147 = vsel %vm4019, %v3881, %v4083
  %v4148 = vsel %vm4020, %v3886, %v4084
  %v4149 = vsel %vm4021, %v3889, %v4085
  %v4150 = vsel %vm4022, %v3894, %v4086
  %v4151 = vsel %vm4023, %v3897, %v4087
  %v4152 = vsel %vm4024, %v3902, %v4088
  %v4153 = vsel %vm4025, %v3905, %v4089
  %v4154 = vsel %vm4026, %v3910, %v4090
  %v4155 = vsel %vm4027, %v3913, %v4091
  %v4156 = vsel %vm4028, %v3918, %v4092
  %v4157 = vsel %vm4029, %v3921, %v4093
  %v4158 = vsel %vm4030, %v3926, %v4094
  %v4159 = vsel %vm4031, %v3929, %v4095
  %v4160 = vsel %vm4032, %v3934, %v4096
  %v4161 = vsel %vm4033, %v3937, %v4097
  %v4162 = vsel %vm4034, %v3942, %v4098
  %v4163 = vsel %vm4035, %v3945, %v4099
  %v4164 = vsel %vm4036, %v3950, %v4100
  %v4165 = vsel %vm4037, %v3953, %v4101
  %v4166 = vsel %vm4038, %v3958, %v4102
  %v4167 = vsel %vm4039, %v3961, %v4103
  %v4168 = vsel %vm4040, %v3966, %v4104
  %v4169 = vsel %vm4041, %v3969, %v4105
  %v4170 = vsel %vm4042, %v3974, %v4106
  %v4171 = vsel %vm4043, %v3977, %v4107
  %v4172 = vld [vmem:[%s47] sm:$0xf]
  %v4173 = vld [vmem:[%s47 + $0x4] sm:$0xf]
  %v4174 = vld [vmem:[%s47 + $0x8] sm:$0xf]
  %v4175 = vld [vmem:[%s47 + $0xc] sm:$0xf]
  %v4176 = vld [vmem:[%s47 + $0x10] sm:$0xf]
  %v4177 = vld [vmem:[%s47 + $0x14] sm:$0xf]
  %v4178 = vld [vmem:[%s47 + $0x18] sm:$0xf]
  %v4179 = vld [vmem:[%s47 + $0x1c] sm:$0xf]
  %v4180 = vld [vmem:[%s47 + $0x20] sm:$0xf]
  %v4181 = vld [vmem:[%s47 + $0x24] sm:$0xf]
  %v4182 = vld [vmem:[%s47 + $0x28] sm:$0xf]
  %v4183 = vld [vmem:[%s47 + $0x2c] sm:$0xf]
  %v4184 = vld [vmem:[%s47 + $0x30] sm:$0xf]
  %v4185 = vld [vmem:[%s47 + $0x34] sm:$0xf]
  %v4186 = vld [vmem:[%s47 + $0x38] sm:$0xf]
  %v4187 = vld [vmem:[%s47 + $0x3c] sm:$0xf]
  %v4188 = vpack.c.bf16 %v4109, %v4108
  %v4189 = vpack.c.bf16 %v4111, %v4110
  %v4190 = vpack.c.bf16 %v4113, %v4112
  %v4191 = vpack.c.bf16 %v4115, %v4114
  %v4192 = vpack.c.bf16 %v4117, %v4116
  %v4193 = vpack.c.bf16 %v4119, %v4118
  %v4194 = vpack.c.bf16 %v4121, %v4120
  %v4195 = vpack.c.bf16 %v4123, %v4122
  %v4196 = vpack.c.bf16 %v4125, %v4124
  %v4197 = vpack.c.bf16 %v4127, %v4126
  %v4198 = vpack.c.bf16 %v4129, %v4128
  %v4199 = vpack.c.bf16 %v4131, %v4130
  %v4200 = vpack.c.bf16 %v4133, %v4132
  %v4201 = vpack.c.bf16 %v4135, %v4134
  %v4202 = vpack.c.bf16 %v4137, %v4136
  %v4203 = vpack.c.bf16 %v4139, %v4138
  %v4204 = vpack.c.bf16 %v4141, %v4140
  %v4205 = vpack.c.bf16 %v4143, %v4142
  %v4206 = vpack.c.bf16 %v4145, %v4144
  %v4207 = vpack.c.bf16 %v4147, %v4146
  %v4208 = vpack.c.bf16 %v4149, %v4148
  %v4209 = vpack.c.bf16 %v4151, %v4150
  %v4210 = vpack.c.bf16 %v4153, %v4152
  %v4211 = vpack.c.bf16 %v4155, %v4154
  %v4212 = vpack.c.bf16 %v4157, %v4156
  %v4213 = vpack.c.bf16 %v4159, %v4158
  %v4214 = vpack.c.bf16 %v4161, %v4160
  %v4215 = vpack.c.bf16 %v4163, %v4162
  %v4216 = vpack.c.bf16 %v4165, %v4164
  %v4217 = vpack.c.bf16 %v4167, %v4166
  %v4218 = vpack.c.bf16 %v4169, %v4168
  %v4219 = vpack.c.bf16 %v4171, %v4170
  %v4220 = vld [vmem:[%s49] sm:$0x1]
  %v4222 = vlaneseq
  %v4223 = vshrl.u32 %v4222, 7
  %v4224 = vsub.s32 0, %v4223
  %v4225 = vrot.slane %v4220, %v4224
  %v4243 = vunpack.c.l.b16 %v4172
  %v4244 = vunpack.c.l.b16 %v4173
  %v4245 = vunpack.c.l.b16 %v4174
  %v4246 = vunpack.c.l.b16 %v4175
  %v4247 = vunpack.c.l.b16 %v4176
  %v4248 = vunpack.c.l.b16 %v4177
  %v4249 = vunpack.c.l.b16 %v4178
  %v4250 = vunpack.c.l.b16 %v4179
  %v4251 = vunpack.c.l.b16 %v4180
  %v4252 = vunpack.c.l.b16 %v4181
  %v4253 = vunpack.c.l.b16 %v4182
  %v4254 = vunpack.c.l.b16 %v4183
  %v4255 = vunpack.c.l.b16 %v4184
  %v4256 = vunpack.c.l.b16 %v4185
  %v4257 = vunpack.c.l.b16 %v4186
  %v4258 = vunpack.c.l.b16 %v4187
  %v4259 = vpack.c.b16 %v4244, %v4243
  %v4260 = vpack.c.b16 %v4246, %v4245
  %v4261 = vpack.c.b16 %v4248, %v4247
  %v4262 = vpack.c.b16 %v4250, %v4249
  %v4263 = vpack.c.b16 %v4252, %v4251
  %v4264 = vpack.c.b16 %v4254, %v4253
  %v4265 = vpack.c.b16 %v4256, %v4255
  %v4266 = vpack.c.b16 %v4258, %v4257
  %4275 = vmatprep.subr.bf16.mxu0 0
  %4276 = vmatpush1.bf16.msra.mxu0 %v4259
  %4277 = vmatprep.subr.bf16.mxu0 0
  %4278 = vmatpush1.bf16.msra.mxu0 %v4260
  %4279 = vmatprep.subr.bf16.mxu0 0
  %4280 = vmatpush1.bf16.msra.mxu0 %v4261
  %4281 = vmatprep.subr.bf16.mxu0 0
  %4282 = vmatpush1.bf16.msra.mxu0 %v4262
  %4283 = vmatprep.subr.bf16.mxu0 0
  %4284 = vmatpush1.bf16.msra.mxu0 %v4263
  %4285 = vmatprep.subr.bf16.mxu0 0
  %4286 = vmatpush1.bf16.msra.mxu0 %v4264
  %4287 = vmatprep.subr.bf16.mxu0 0
  %4288 = vmatpush1.bf16.msra.mxu0 %v4265
  %4289 = vmatprep.subr.bf16.mxu0 0
  %4290 = vmatpush1.bf16.msra.mxu0 %v4266
  %4291 = vmatprep.subr.bf16.mxu0 0
  %4292 = vmatpush1.bf16.msra.mxu0 0
  %4293 = vmatprep.subr.bf16.mxu0 0
  %4294 = vmatpush1.bf16.msra.mxu0 0
  %4295 = vmatprep.subr.bf16.mxu0 0
  %4296 = vmatpush1.bf16.msra.mxu0 0
  %4297 = vmatprep.subr.bf16.mxu0 0
  %4298 = vmatpush1.bf16.msra.mxu0 0
  %4299 = vmatprep.subr.bf16.mxu0 0
  %4300 = vmatpush1.bf16.msra.mxu0 0
  %4301 = vmatprep.subr.bf16.mxu0 0
  %4302 = vmatpush1.bf16.msra.mxu0 0
  %4303 = vmatprep.subr.bf16.mxu0 0
  %4304 = vmatpush1.bf16.msra.mxu0 0
  %4305 = vmatprep.subr.bf16.mxu0 0
  %4306 = vmatpush1.bf16.msra.mxu0 0
  %4307 = vmatprep.mubr.bf16.mxu0 0
  %4308 = vmatmul.mubr.bf16.gmra.mrb[0].mxu0 %v4188
  %v4309 = vpop.f32.mrb[0].mxu0
  %v4310 = vadd.f32 %v4225, %v4309
  %v4311 = vpop.f32.mrb[0].mxu0
  %v4312 = vpop.f32.mrb[0].mxu0
  %v4313 = vadd.f32 %v4225, %v4312
  %v4314 = vpop.f32.mrb[0].mxu0
  %4315 = vmatprep.mubr.bf16.mxu0 0
  %4316 = vmatmul.mubr.bf16.gmra.mrb[0].mxu0 %v4189
  %v4317 = vpop.f32.mrb[0].mxu0
  %v4318 = vadd.f32 %v4225, %v4317
  %v4319 = vpop.f32.mrb[0].mxu0
  %v4320 = vpop.f32.mrb[0].mxu0
  %v4321 = vadd.f32 %v4225, %v4320
  %v4322 = vpop.f32.mrb[0].mxu0
  %4323 = vmatprep.mubr.bf16.mxu0 0
  %4324 = vmatmul.mubr.bf16.gmra.mrb[0].mxu0 %v4190
  %v4325 = vpop.f32.mrb[0].mxu0
  %v4326 = vadd.f32 %v4225, %v4325
  %v4327 = vpop.f32.mrb[0].mxu0
  %v4328 = vpop.f32.mrb[0].mxu0
  %v4329 = vadd.f32 %v4225, %v4328
  %v4330 = vpop.f32.mrb[0].mxu0
  %4331 = vmatprep.mubr.bf16.mxu0 0
  %4332 = vmatmul.mubr.bf16.gmra.mrb[0].mxu0 %v4191
  %v4333 = vpop.f32.mrb[0].mxu0
  %v4334 = vadd.f32 %v4225, %v4333
  %v4335 = vpop.f32.mrb[0].mxu0
  %v4336 = vpop.f32.mrb[0].mxu0
  %v4337 = vadd.f32 %v4225, %v4336
  %v4338 = vpop.f32.mrb[0].mxu0
  %4339 = vmatprep.mubr.bf16.mxu0 0
  %4340 = vmatmul.mubr.bf16.gmra.mrb[0].mxu0 %v4192
  %v4341 = vpop.f32.mrb[0].mxu0
  %v4342 = vadd.f32 %v4225, %v4341
  %v4343 = vpop.f32.mrb[0].mxu0
  %v4344 = vpop.f32.mrb[0].mxu0
  %v4345 = vadd.f32 %v4225, %v4344
  %v4346 = vpop.f32.mrb[0].mxu0
  %4347 = vmatprep.mubr.bf16.mxu0 0
  %4348 = vmatmul.mubr.bf16.gmra.mrb[0].mxu0 %v4193
  %v4349 = vpop.f32.mrb[0].mxu0
  %v4350 = vadd.f32 %v4225, %v4349
  %v4351 = vpop.f32.mrb[0].mxu0
  %v4352 = vpop.f32.mrb[0].mxu0
  %v4353 = vadd.f32 %v4225, %v4352
  %v4354 = vpop.f32.mrb[0].mxu0
  %4355 = vmatprep.mubr.bf16.mxu0 0
  %4356 = vmatmul.mubr.bf16.gmra.mrb[0].mxu0 %v4194
  %v4357 = vpop.f32.mrb[0].mxu0
  %v4358 = vadd.f32 %v4225, %v4357
  %v4359 = vpop.f32.mrb[0].mxu0
  %v4360 = vpop.f32.mrb[0].mxu0
  %v4361 = vadd.f32 %v4225, %v4360
  %v4362 = vpop.f32.mrb[0].mxu0
  %4363 = vmatprep.mubr.bf16.mxu0 0
  %4364 = vmatmul.mubr.bf16.gmra.mrb[0].mxu0 %v4195
  %v4365 = vpop.f32.mrb[0].mxu0
  %v4366 = vadd.f32 %v4225, %v4365
  %v4367 = vpop.f32.mrb[0].mxu0
  %v4368 = vpop.f32.mrb[0].mxu0
  %v4369 = vadd.f32 %v4225, %v4368
  %v4370 = vpop.f32.mrb[0].mxu0
  %4371 = vmatprep.mubr.bf16.mxu0 0
  %4372 = vmatmul.mubr.bf16.gmra.mrb[0].mxu0 %v4196
  %v4373 = vpop.f32.mrb[0].mxu0
  %v4374 = vadd.f32 %v4225, %v4373
  %v4375 = vpop.f32.mrb[0].mxu0
  %v4376 = vpop.f32.mrb[0].mxu0
  %v4377 = vadd.f32 %v4225, %v4376
  %v4378 = vpop.f32.mrb[0].mxu0
  %4379 = vmatprep.mubr.bf16.mxu0 0
  %4380 = vmatmul.mubr.bf16.gmra.mrb[0].mxu0 %v4197
  %v4381 = vpop.f32.mrb[0].mxu0
  %v4382 = vadd.f32 %v4225, %v4381
  %v4383 = vpop.f32.mrb[0].mxu0
  %v4384 = vpop.f32.mrb[0].mxu0
  %v4385 = vadd.f32 %v4225, %v4384
  %v4386 = vpop.f32.mrb[0].mxu0
  %4387 = vmatprep.mubr.bf16.mxu0 0
  %4388 = vmatmul.mubr.bf16.gmra.mrb[0].mxu0 %v4198
  %v4389 = vpop.f32.mrb[0].mxu0
  %v4390 = vadd.f32 %v4225, %v4389
  %v4391 = vpop.f32.mrb[0].mxu0
  %v4392 = vpop.f32.mrb[0].mxu0
  %v4393 = vadd.f32 %v4225, %v4392
  %v4394 = vpop.f32.mrb[0].mxu0
  %4395 = vmatprep.mubr.bf16.mxu0 0
  %4396 = vmatmul.mubr.bf16.gmra.mrb[0].mxu0 %v4199
  %v4397 = vpop.f32.mrb[0].mxu0
  %v4398 = vadd.f32 %v4225, %v4397
  %v4399 = vpop.f32.mrb[0].mxu0
  %v4400 = vpop.f32.mrb[0].mxu0
  %v4401 = vadd.f32 %v4225, %v4400
  %v4402 = vpop.f32.mrb[0].mxu0
  %4403 = vmatprep.mubr.bf16.mxu0 0
  %4404 = vmatmul.mubr.bf16.gmra.mrb[0].mxu0 %v4200
  %v4405 = vpop.f32.mrb[0].mxu0
  %v4406 = vadd.f32 %v4225, %v4405
  %v4407 = vpop.f32.mrb[0].mxu0
  %v4408 = vpop.f32.mrb[0].mxu0
  %v4409 = vadd.f32 %v4225, %v4408
  %v4410 = vpop.f32.mrb[0].mxu0
  %4411 = vmatprep.mubr.bf16.mxu0 0
  %4412 = vmatmul.mubr.bf16.gmra.mrb[0].mxu0 %v4201
  %v4413 = vpop.f32.mrb[0].mxu0
  %v4414 = vadd.f32 %v4225, %v4413
  %v4415 = vpop.f32.mrb[0].mxu0
  %v4416 = vpop.f32.mrb[0].mxu0
  %v4417 = vadd.f32 %v4225, %v4416
  %v4418 = vpop.f32.mrb[0].mxu0
  %4419 = vmatprep.mubr.bf16.mxu0 0
  %4420 = vmatmul.mubr.bf16.gmra.mrb[0].mxu0 %v4202
  %v4421 = vpop.f32.mrb[0].mxu0
  %v4422 = vadd.f32 %v4225, %v4421
  %v4423 = vpop.f32.mrb[0].mxu0
  %v4424 = vpop.f32.mrb[0].mxu0
  %v4425 = vadd.f32 %v4225, %v4424
  %v4426 = vpop.f32.mrb[0].mxu0
  %4427 = vmatprep.mubr.bf16.mxu0 0
  %4428 = vmatmul.mubr.bf16.gmra.mrb[0].mxu0 %v4203
  %v4429 = vpop.f32.mrb[0].mxu0
  %v4430 = vadd.f32 %v4225, %v4429
  %v4431 = vpop.f32.mrb[0].mxu0
  %v4432 = vpop.f32.mrb[0].mxu0
  %v4433 = vadd.f32 %v4225, %v4432
  %v4434 = vpop.f32.mrb[0].mxu0
  %4435 = vmatprep.mubr.bf16.mxu0 0
  %4436 = vmatmul.mubr.bf16.gmra.mrb[0].mxu0 %v4204
  %v4437 = vpop.f32.mrb[0].mxu0
  %v4438 = vadd.f32 %v4225, %v4437
  %v4439 = vpop.f32.mrb[0].mxu0
  %v4440 = vpop.f32.mrb[0].mxu0
  %v4441 = vadd.f32 %v4225, %v4440
  %v4442 = vpop.f32.mrb[0].mxu0
  %4443 = vmatprep.mubr.bf16.mxu0 0
  %4444 = vmatmul.mubr.bf16.gmra.mrb[0].mxu0 %v4205
  %v4445 = vpop.f32.mrb[0].mxu0
  %v4446 = vadd.f32 %v4225, %v4445
  %v4447 = vpop.f32.mrb[0].mxu0
  %v4448 = vpop.f32.mrb[0].mxu0
  %v4449 = vadd.f32 %v4225, %v4448
  %v4450 = vpop.f32.mrb[0].mxu0
  %4451 = vmatprep.mubr.bf16.mxu0 0
  %4452 = vmatmul.mubr.bf16.gmra.mrb[0].mxu0 %v4206
  %v4453 = vpop.f32.mrb[0].mxu0
  %v4454 = vadd.f32 %v4225, %v4453
  %v4455 = vpop.f32.mrb[0].mxu0
  %v4456 = vpop.f32.mrb[0].mxu0
  %v4457 = vadd.f32 %v4225, %v4456
  %v4458 = vpop.f32.mrb[0].mxu0
  %4459 = vmatprep.mubr.bf16.mxu0 0
  %4460 = vmatmul.mubr.bf16.gmra.mrb[0].mxu0 %v4207
  %v4461 = vpop.f32.mrb[0].mxu0
  %v4462 = vadd.f32 %v4225, %v4461
  %v4463 = vpop.f32.mrb[0].mxu0
  %v4464 = vpop.f32.mrb[0].mxu0
  %v4465 = vadd.f32 %v4225, %v4464
  %v4466 = vpop.f32.mrb[0].mxu0
  %4467 = vmatprep.mubr.bf16.mxu0 0
  %4468 = vmatmul.mubr.bf16.gmra.mrb[0].mxu0 %v4208
  %v4469 = vpop.f32.mrb[0].mxu0
  %v4470 = vadd.f32 %v4225, %v4469
  %v4471 = vpop.f32.mrb[0].mxu0
  %v4472 = vpop.f32.mrb[0].mxu0
  %v4473 = vadd.f32 %v4225, %v4472
  %v4474 = vpop.f32.mrb[0].mxu0
  %4475 = vmatprep.mubr.bf16.mxu0 0
  %4476 = vmatmul.mubr.bf16.gmra.mrb[0].mxu0 %v4209
  %v4477 = vpop.f32.mrb[0].mxu0
  %v4478 = vadd.f32 %v4225, %v4477
  %v4479 = vpop.f32.mrb[0].mxu0
  %v4480 = vpop.f32.mrb[0].mxu0
  %v4481 = vadd.f32 %v4225, %v4480
  %v4482 = vpop.f32.mrb[0].mxu0
  %4483 = vmatprep.mubr.bf16.mxu0 0
  %4484 = vmatmul.mubr.bf16.gmra.mrb[0].mxu0 %v4210
  %v4485 = vpop.f32.mrb[0].mxu0
  %v4486 = vadd.f32 %v4225, %v4485
  %v4487 = vpop.f32.mrb[0].mxu0
  %v4488 = vpop.f32.mrb[0].mxu0
  %v4489 = vadd.f32 %v4225, %v4488
  %v4490 = vpop.f32.mrb[0].mxu0
  %4491 = vmatprep.mubr.bf16.mxu0 0
  %4492 = vmatmul.mubr.bf16.gmra.mrb[0].mxu0 %v4211
  %v4493 = vpop.f32.mrb[0].mxu0
  %v4494 = vadd.f32 %v4225, %v4493
  %v4495 = vpop.f32.mrb[0].mxu0
  %v4496 = vpop.f32.mrb[0].mxu0
  %v4497 = vadd.f32 %v4225, %v4496
  %v4498 = vpop.f32.mrb[0].mxu0
  %4499 = vmatprep.mubr.bf16.mxu0 0
  %4500 = vmatmul.mubr.bf16.gmra.mrb[0].mxu0 %v4212
  %v4501 = vpop.f32.mrb[0].mxu0
  %v4502 = vadd.f32 %v4225, %v4501
  %v4503 = vpop.f32.mrb[0].mxu0
  %v4504 = vpop.f32.mrb[0].mxu0
  %v4505 = vadd.f32 %v4225, %v4504
  %v4506 = vpop.f32.mrb[0].mxu0
  %4507 = vmatprep.mubr.bf16.mxu0 0
  %4508 = vmatmul.mubr.bf16.gmra.mrb[0].mxu0 %v4213
  %v4509 = vpop.f32.mrb[0].mxu0
  %v4510 = vadd.f32 %v4225, %v4509
  %v4511 = vpop.f32.mrb[0].mxu0
  %v4512 = vpop.f32.mrb[0].mxu0
  %v4513 = vadd.f32 %v4225, %v4512
  %v4514 = vpop.f32.mrb[0].mxu0
  %4515 = vmatprep.mubr.bf16.mxu0 0
  %4516 = vmatmul.mubr.bf16.gmra.mrb[0].mxu0 %v4214
  %v4517 = vpop.f32.mrb[0].mxu0
  %v4518 = vadd.f32 %v4225, %v4517
  %v4519 = vpop.f32.mrb[0].mxu0
  %v4520 = vpop.f32.mrb[0].mxu0
  %v4521 = vadd.f32 %v4225, %v4520
  %v4522 = vpop.f32.mrb[0].mxu0
  %4523 = vmatprep.mubr.bf16.mxu0 0
  %4524 = vmatmul.mubr.bf16.gmra.mrb[0].mxu0 %v4215
  %v4525 = vpop.f32.mrb[0].mxu0
  %v4526 = vadd.f32 %v4225, %v4525
  %v4527 = vpop.f32.mrb[0].mxu0
  %v4528 = vpop.f32.mrb[0].mxu0
  %v4529 = vadd.f32 %v4225, %v4528
  %v4530 = vpop.f32.mrb[0].mxu0
  %4531 = vmatprep.mubr.bf16.mxu0 0
  %4532 = vmatmul.mubr.bf16.gmra.mrb[0].mxu0 %v4216
  %v4533 = vpop.f32.mrb[0].mxu0
  %v4534 = vadd.f32 %v4225, %v4533
  %v4535 = vpop.f32.mrb[0].mxu0
  %v4536 = vpop.f32.mrb[0].mxu0
  %v4537 = vadd.f32 %v4225, %v4536
  %v4538 = vpop.f32.mrb[0].mxu0
  %4539 = vmatprep.mubr.bf16.mxu0 0
  %4540 = vmatmul.mubr.bf16.gmra.mrb[0].mxu0 %v4217
  %v4541 = vpop.f32.mrb[0].mxu0
  %v4542 = vadd.f32 %v4225, %v4541
  %v4543 = vpop.f32.mrb[0].mxu0
  %v4544 = vpop.f32.mrb[0].mxu0
  %v4545 = vadd.f32 %v4225, %v4544
  %v4546 = vpop.f32.mrb[0].mxu0
  %4547 = vmatprep.mubr.bf16.mxu0 0
  %4548 = vmatmul.mubr.bf16.gmra.mrb[0].mxu0 %v4218
  %v4549 = vpop.f32.mrb[0].mxu0
  %v4550 = vadd.f32 %v4225, %v4549
  %v4551 = vpop.f32.mrb[0].mxu0
  %v4552 = vpop.f32.mrb[0].mxu0
  %v4553 = vadd.f32 %v4225, %v4552
  %v4554 = vpop.f32.mrb[0].mxu0
  %4555 = vmatprep.mubr.bf16.mxu0 0
  %4556 = vmatmul.mubr.bf16.gmra.mrb[0].mxu0 %v4219
  %v4557 = vpop.f32.mrb[0].mxu0
  %v4558 = vadd.f32 %v4225, %v4557
  %v4559 = vpop.f32.mrb[0].mxu0
  %v4560 = vpop.f32.mrb[0].mxu0
  %v4561 = vadd.f32 %v4225, %v4560
  %v4562 = vpop.f32.mrb[0].mxu0
  %4563 = vdwg.mxu0
  %v4564 = vadd.f32 %v4310, %v3364
  %v4565 = vadd.f32 %v4313, %v3365
  %v4566 = vadd.f32 %v4318, %v3366
  %v4567 = vadd.f32 %v4321, %v3367
  %v4568 = vadd.f32 %v4326, %v3368
  %v4569 = vadd.f32 %v4329, %v3369
  %v4570 = vadd.f32 %v4334, %v3370
  %v4571 = vadd.f32 %v4337, %v3371
  %v4572 = vadd.f32 %v4342, %v3372
  %v4573 = vadd.f32 %v4345, %v3373
  %v4574 = vadd.f32 %v4350, %v3374
  %v4575 = vadd.f32 %v4353, %v3375
  %v4576 = vadd.f32 %v4358, %v3376
  %v4577 = vadd.f32 %v4361, %v3377
  %v4578 = vadd.f32 %v4366, %v3378
  %v4579 = vadd.f32 %v4369, %v3379
  %v4580 = vadd.f32 %v4374, %v3380
  %v4581 = vadd.f32 %v4377, %v3381
  %v4582 = vadd.f32 %v4382, %v3382
  %v4583 = vadd.f32 %v4385, %v3383
  %v4584 = vadd.f32 %v4390, %v3384
  %v4585 = vadd.f32 %v4393, %v3385
  %v4586 = vadd.f32 %v4398, %v3386
  %v4587 = vadd.f32 %v4401, %v3387
  %v4588 = vadd.f32 %v4406, %v3388
  %v4589 = vadd.f32 %v4409, %v3389
  %v4590 = vadd.f32 %v4414, %v3390
  %v4591 = vadd.f32 %v4417, %v3391
  %v4592 = vadd.f32 %v4422, %v3392
  %v4593 = vadd.f32 %v4425, %v3393
  %v4594 = vadd.f32 %v4430, %v3394
  %v4595 = vadd.f32 %v4433, %v3395
  %v4596 = vadd.f32 %v4438, %v3332
  %v4597 = vadd.f32 %v4441, %v3333
  %v4598 = vadd.f32 %v4446, %v3334
  %v4599 = vadd.f32 %v4449, %v3335
  %v4600 = vadd.f32 %v4454, %v3336
  %v4601 = vadd.f32 %v4457, %v3337
  %v4602 = vadd.f32 %v4462, %v3338
  %v4603 = vadd.f32 %v4465, %v3339
  %v4604 = vadd.f32 %v4470, %v3340
  %v4605 = vadd.f32 %v4473, %v3341
  %v4606 = vadd.f32 %v4478, %v3342
  %v4607 = vadd.f32 %v4481, %v3343
  %v4608 = vadd.f32 %v4486, %v3344
  %v4609 = vadd.f32 %v4489, %v3345
  %v4610 = vadd.f32 %v4494, %v3346
  %v4611 = vadd.f32 %v4497, %v3347
  %v4612 = vadd.f32 %v4502, %v3348
  %v4613 = vadd.f32 %v4505, %v3349
  %v4614 = vadd.f32 %v4510, %v3350
  %v4615 = vadd.f32 %v4513, %v3351
  %v4616 = vadd.f32 %v4518, %v3352
  %v4617 = vadd.f32 %v4521, %v3353
  %v4618 = vadd.f32 %v4526, %v3354
  %v4619 = vadd.f32 %v4529, %v3355
  %v4620 = vadd.f32 %v4534, %v3356
  %v4621 = vadd.f32 %v4537, %v3357
  %v4622 = vadd.f32 %v4542, %v3358
  %v4623 = vadd.f32 %v4545, %v3359
  %v4624 = vadd.f32 %v4550, %v3360
  %v4625 = vadd.f32 %v4553, %v3361
  %v4626 = vadd.f32 %v4558, %v3362
  %v4627 = vadd.f32 %v4561, %v3363
  %vm4628 = vcmp.ge.f32.partialorder %v4564, 0.0
  %vm4629 = vcmp.ge.f32.partialorder %v4565, 0.0
  %vm4630 = vcmp.ge.f32.partialorder %v4566, 0.0
  %vm4631 = vcmp.ge.f32.partialorder %v4567, 0.0
  %vm4632 = vcmp.ge.f32.partialorder %v4568, 0.0
  %vm4633 = vcmp.ge.f32.partialorder %v4569, 0.0
  %vm4634 = vcmp.ge.f32.partialorder %v4570, 0.0
  %vm4635 = vcmp.ge.f32.partialorder %v4571, 0.0
  %vm4636 = vcmp.ge.f32.partialorder %v4572, 0.0
  %vm4637 = vcmp.ge.f32.partialorder %v4573, 0.0
  %vm4638 = vcmp.ge.f32.partialorder %v4574, 0.0
  %vm4639 = vcmp.ge.f32.partialorder %v4575, 0.0
  %vm4640 = vcmp.ge.f32.partialorder %v4576, 0.0
  %vm4641 = vcmp.ge.f32.partialorder %v4577, 0.0
  %vm4642 = vcmp.ge.f32.partialorder %v4578, 0.0
  %vm4643 = vcmp.ge.f32.partialorder %v4579, 0.0
  %vm4644 = vcmp.ge.f32.partialorder %v4580, 0.0
  %vm4645 = vcmp.ge.f32.partialorder %v4581, 0.0
  %vm4646 = vcmp.ge.f32.partialorder %v4582, 0.0
  %vm4647 = vcmp.ge.f32.partialorder %v4583, 0.0
  %vm4648 = vcmp.ge.f32.partialorder %v4584, 0.0
  %vm4649 = vcmp.ge.f32.partialorder %v4585, 0.0
  %vm4650 = vcmp.ge.f32.partialorder %v4586, 0.0
  %vm4651 = vcmp.ge.f32.partialorder %v4587, 0.0
  %vm4652 = vcmp.ge.f32.partialorder %v4588, 0.0
  %vm4653 = vcmp.ge.f32.partialorder %v4589, 0.0
  %vm4654 = vcmp.ge.f32.partialorder %v4590, 0.0
  %vm4655 = vcmp.ge.f32.partialorder %v4591, 0.0
  %vm4656 = vcmp.ge.f32.partialorder %v4592, 0.0
  %vm4657 = vcmp.ge.f32.partialorder %v4593, 0.0
  %vm4658 = vcmp.ge.f32.partialorder %v4594, 0.0
  %vm4659 = vcmp.ge.f32.partialorder %v4595, 0.0
  %vm4660 = vcmp.ge.f32.partialorder %v4596, 0.0
  %vm4661 = vcmp.ge.f32.partialorder %v4597, 0.0
  %vm4662 = vcmp.ge.f32.partialorder %v4598, 0.0
  %vm4663 = vcmp.ge.f32.partialorder %v4599, 0.0
  %vm4664 = vcmp.ge.f32.partialorder %v4600, 0.0
  %vm4665 = vcmp.ge.f32.partialorder %v4601, 0.0
  %vm4666 = vcmp.ge.f32.partialorder %v4602, 0.0
  %vm4667 = vcmp.ge.f32.partialorder %v4603, 0.0
  %vm4668 = vcmp.ge.f32.partialorder %v4604, 0.0
  %vm4669 = vcmp.ge.f32.partialorder %v4605, 0.0
  %vm4670 = vcmp.ge.f32.partialorder %v4606, 0.0
  %vm4671 = vcmp.ge.f32.partialorder %v4607, 0.0
  %vm4672 = vcmp.ge.f32.partialorder %v4608, 0.0
  %vm4673 = vcmp.ge.f32.partialorder %v4609, 0.0
  %vm4674 = vcmp.ge.f32.partialorder %v4610, 0.0
  %vm4675 = vcmp.ge.f32.partialorder %v4611, 0.0
  %vm4676 = vcmp.ge.f32.partialorder %v4612, 0.0
  %vm4677 = vcmp.ge.f32.partialorder %v4613, 0.0
  %vm4678 = vcmp.ge.f32.partialorder %v4614, 0.0
  %vm4679 = vcmp.ge.f32.partialorder %v4615, 0.0
  %vm4680 = vcmp.ge.f32.partialorder %v4616, 0.0
  %vm4681 = vcmp.ge.f32.partialorder %v4617, 0.0
  %vm4682 = vcmp.ge.f32.partialorder %v4618, 0.0
  %vm4683 = vcmp.ge.f32.partialorder %v4619, 0.0
  %vm4684 = vcmp.ge.f32.partialorder %v4620, 0.0
  %vm4685 = vcmp.ge.f32.partialorder %v4621, 0.0
  %vm4686 = vcmp.ge.f32.partialorder %v4622, 0.0
  %vm4687 = vcmp.ge.f32.partialorder %v4623, 0.0
  %vm4688 = vcmp.ge.f32.partialorder %v4624, 0.0
  %vm4689 = vcmp.ge.f32.partialorder %v4625, 0.0
  %vm4690 = vcmp.ge.f32.partialorder %v4626, 0.0
  %vm4691 = vcmp.ge.f32.partialorder %v4627, 0.0
  %v4692 = vmul.f32 %v4564, 0.2
  %v4693 = vmul.f32 %v4565, 0.2
  %v4694 = vmul.f32 %v4566, 0.2
  %v4695 = vmul.f32 %v4567, 0.2
  %v4696 = vmul.f32 %v4568, 0.2
  %v4697 = vmul.f32 %v4569, 0.2
  %v4698 = vmul.f32 %v4570, 0.2
  %v4699 = vmul.f32 %v4571, 0.2
  %v4700 = vmul.f32 %v4572, 0.2
  %v4701 = vmul.f32 %v4573, 0.2
  %v4702 = vmul.f32 %v4574, 0.2
  %v4703 = vmul.f32 %v4575, 0.2
  %v4704 = vmul.f32 %v4576, 0.2
  %v4705 = vmul.f32 %v4577, 0.2
  %v4706 = vmul.f32 %v4578, 0.2
  %v4707 = vmul.f32 %v4579, 0.2
  %v4708 = vmul.f32 %v4580, 0.2
  %v4709 = vmul.f32 %v4581, 0.2
  %v4710 = vmul.f32 %v4582, 0.2
  %v4711 = vmul.f32 %v4583, 0.2
  %v4712 = vmul.f32 %v4584, 0.2
  %v4713 = vmul.f32 %v4585, 0.2
  %v4714 = vmul.f32 %v4586, 0.2
  %v4715 = vmul.f32 %v4587, 0.2
  %v4716 = vmul.f32 %v4588, 0.2
  %v4717 = vmul.f32 %v4589, 0.2
  %v4718 = vmul.f32 %v4590, 0.2
  %v4719 = vmul.f32 %v4591, 0.2
  %v4720 = vmul.f32 %v4592, 0.2
  %v4721 = vmul.f32 %v4593, 0.2
  %v4722 = vmul.f32 %v4594, 0.2
  %v4723 = vmul.f32 %v4595, 0.2
  %v4724 = vmul.f32 %v4596, 0.2
  %v4725 = vmul.f32 %v4597, 0.2
  %v4726 = vmul.f32 %v4598, 0.2
  %v4727 = vmul.f32 %v4599, 0.2
  %v4728 = vmul.f32 %v4600, 0.2
  %v4729 = vmul.f32 %v4601, 0.2
  %v4730 = vmul.f32 %v4602, 0.2
  %v4731 = vmul.f32 %v4603, 0.2
  %v4732 = vmul.f32 %v4604, 0.2
  %v4733 = vmul.f32 %v4605, 0.2
  %v4734 = vmul.f32 %v4606, 0.2
  %v4735 = vmul.f32 %v4607, 0.2
  %v4736 = vmul.f32 %v4608, 0.2
  %v4737 = vmul.f32 %v4609, 0.2
  %v4738 = vmul.f32 %v4610, 0.2
  %v4739 = vmul.f32 %v4611, 0.2
  %v4740 = vmul.f32 %v4612, 0.2
  %v4741 = vmul.f32 %v4613, 0.2
  %v4742 = vmul.f32 %v4614, 0.2
  %v4743 = vmul.f32 %v4615, 0.2
  %v4744 = vmul.f32 %v4616, 0.2
  %v4745 = vmul.f32 %v4617, 0.2
  %v4746 = vmul.f32 %v4618, 0.2
  %v4747 = vmul.f32 %v4619, 0.2
  %v4748 = vmul.f32 %v4620, 0.2
  %v4749 = vmul.f32 %v4621, 0.2
  %v4750 = vmul.f32 %v4622, 0.2
  %v4751 = vmul.f32 %v4623, 0.2
  %v4752 = vmul.f32 %v4624, 0.2
  %v4753 = vmul.f32 %v4625, 0.2
  %v4754 = vmul.f32 %v4626, 0.2
  %v4755 = vmul.f32 %v4627, 0.2
  %v4756 = vsel %vm4628, %v4564, %v4692
  %v4757 = vsel %vm4629, %v4565, %v4693
  %v4758 = vsel %vm4630, %v4566, %v4694
  %v4759 = vsel %vm4631, %v4567, %v4695
  %v4760 = vsel %vm4632, %v4568, %v4696
  %v4761 = vsel %vm4633, %v4569, %v4697
  %v4762 = vsel %vm4634, %v4570, %v4698
  %v4763 = vsel %vm4635, %v4571, %v4699
  %v4764 = vsel %vm4636, %v4572, %v4700
  %v4765 = vsel %vm4637, %v4573, %v4701
  %v4766 = vsel %vm4638, %v4574, %v4702
  %v4767 = vsel %vm4639, %v4575, %v4703
  %v4768 = vsel %vm4640, %v4576, %v4704
  %v4769 = vsel %vm4641, %v4577, %v4705
  %v4770 = vsel %vm4642, %v4578, %v4706
  %v4771 = vsel %vm4643, %v4579, %v4707
  %v4772 = vsel %vm4644, %v4580, %v4708
  %v4773 = vsel %vm4645, %v4581, %v4709
  %v4774 = vsel %vm4646, %v4582, %v4710
  %v4775 = vsel %vm4647, %v4583, %v4711
  %v4776 = vsel %vm4648, %v4584, %v4712
  %v4777 = vsel %vm4649, %v4585, %v4713
  %v4778 = vsel %vm4650, %v4586, %v4714
  %v4779 = vsel %vm4651, %v4587, %v4715
  %v4780 = vsel %vm4652, %v4588, %v4716
  %v4781 = vsel %vm4653, %v4589, %v4717
  %v4782 = vsel %vm4654, %v4590, %v4718
  %v4783 = vsel %vm4655, %v4591, %v4719
  %v4784 = vsel %vm4656, %v4592, %v4720
  %v4785 = vsel %vm4657, %v4593, %v4721
  %v4786 = vsel %vm4658, %v4594, %v4722
  %v4787 = vsel %vm4659, %v4595, %v4723
  %v4788 = vsel %vm4660, %v4596, %v4724
  %v4789 = vsel %vm4661, %v4597, %v4725
  %v4790 = vsel %vm4662, %v4598, %v4726
  %v4791 = vsel %vm4663, %v4599, %v4727
  %v4792 = vsel %vm4664, %v4600, %v4728
  %v4793 = vsel %vm4665, %v4601, %v4729
  %v4794 = vsel %vm4666, %v4602, %v4730
  %v4795 = vsel %vm4667, %v4603, %v4731
  %v4796 = vsel %vm4668, %v4604, %v4732
  %v4797 = vsel %vm4669, %v4605, %v4733
  %v4798 = vsel %vm4670, %v4606, %v4734
  %v4799 = vsel %vm4671, %v4607, %v4735
  %v4800 = vsel %vm4672, %v4608, %v4736
  %v4801 = vsel %vm4673, %v4609, %v4737
  %v4802 = vsel %vm4674, %v4610, %v4738
  %v4803 = vsel %vm4675, %v4611, %v4739
  %v4804 = vsel %vm4676, %v4612, %v4740
  %v4805 = vsel %vm4677, %v4613, %v4741
  %v4806 = vsel %vm4678, %v4614, %v4742
  %v4807 = vsel %vm4679, %v4615, %v4743
  %v4808 = vsel %vm4680, %v4616, %v4744
  %v4809 = vsel %vm4681, %v4617, %v4745
  %v4810 = vsel %vm4682, %v4618, %v4746
  %v4811 = vsel %vm4683, %v4619, %v4747
  %v4812 = vsel %vm4684, %v4620, %v4748
  %v4813 = vsel %vm4685, %v4621, %v4749
  %v4814 = vsel %vm4686, %v4622, %v4750
  %v4815 = vsel %vm4687, %v4623, %v4751
  %v4816 = vsel %vm4688, %v4624, %v4752
  %v4817 = vsel %vm4689, %v4625, %v4753
  %v4818 = vsel %vm4690, %v4626, %v4754
  %v4819 = vsel %vm4691, %v4627, %v4755
  %v4820 = vld [vmem:[%s51] sm:$0xf]
  %v4821 = vld [vmem:[%s51 + $0x4] sm:$0xf]
  %v4822 = vld [vmem:[%s51 + $0x8] sm:$0xf]
  %v4823 = vld [vmem:[%s51 + $0xc] sm:$0xf]
  %v4824 = vld [vmem:[%s51 + $0x10] sm:$0xf]
  %v4825 = vld [vmem:[%s51 + $0x14] sm:$0xf]
  %v4826 = vld [vmem:[%s51 + $0x18] sm:$0xf]
  %v4827 = vld [vmem:[%s51 + $0x1c] sm:$0xf]
  %v4828 = vpack.c.bf16 %v4757, %v4756
  %v4829 = vpack.c.bf16 %v4759, %v4758
  %v4830 = vpack.c.bf16 %v4761, %v4760
  %v4831 = vpack.c.bf16 %v4763, %v4762
  %v4832 = vpack.c.bf16 %v4765, %v4764
  %v4833 = vpack.c.bf16 %v4767, %v4766
  %v4834 = vpack.c.bf16 %v4769, %v4768
  %v4835 = vpack.c.bf16 %v4771, %v4770
  %v4836 = vpack.c.bf16 %v4773, %v4772
  %v4837 = vpack.c.bf16 %v4775, %v4774
  %v4838 = vpack.c.bf16 %v4777, %v4776
  %v4839 = vpack.c.bf16 %v4779, %v4778
  %v4840 = vpack.c.bf16 %v4781, %v4780
  %v4841 = vpack.c.bf16 %v4783, %v4782
  %v4842 = vpack.c.bf16 %v4785, %v4784
  %v4843 = vpack.c.bf16 %v4787, %v4786
  %v4844 = vpack.c.bf16 %v4789, %v4788
  %v4845 = vpack.c.bf16 %v4791, %v4790
  %v4846 = vpack.c.bf16 %v4793, %v4792
  %v4847 = vpack.c.bf16 %v4795, %v4794
  %v4848 = vpack.c.bf16 %v4797, %v4796
  %v4849 = vpack.c.bf16 %v4799, %v4798
  %v4850 = vpack.c.bf16 %v4801, %v4800
  %v4851 = vpack.c.bf16 %v4803, %v4802
  %v4852 = vpack.c.bf16 %v4805, %v4804
  %v4853 = vpack.c.bf16 %v4807, %v4806
  %v4854 = vpack.c.bf16 %v4809, %v4808
  %v4855 = vpack.c.bf16 %v4811, %v4810
  %v4856 = vpack.c.bf16 %v4813, %v4812
  %v4857 = vpack.c.bf16 %v4815, %v4814
  %v4858 = vpack.c.bf16 %v4817, %v4816
  %v4859 = vpack.c.bf16 %v4819, %v4818
  %v4860 = vld [vmem:[%s53] sm:$0x1]
  %v4862 = vlaneseq
  %v4863 = vshrl.u32 %v4862, 7
  %v4864 = vsub.s32 0, %v4863
  %v4865 = vrot.slane %v4860, %v4864
  %v4875 = vunpack.c.l.b16 %v4820
  %v4876 = vunpack.c.l.b16 %v4821
  %v4877 = vunpack.c.l.b16 %v4822
  %v4878 = vunpack.c.l.b16 %v4823
  %v4879 = vunpack.c.l.b16 %v4824
  %v4880 = vunpack.c.l.b16 %v4825
  %v4881 = vunpack.c.l.b16 %v4826
  %v4882 = vunpack.c.l.b16 %v4827
  %v4883 = vpack.c.b16 %v4876, %v4875
  %v4884 = vpack.c.b16 %v4878, %v4877
  %v4885 = vpack.c.b16 %v4880, %v4879
  %v4886 = vpack.c.b16 %v4882, %v4881
  %v4892 = vsel %vm280, %v4828, 0
  %v4895 = vsel %vm280, %v4829, 0
  %v4898 = vsel %vm280, %v4830, 0
  %v4901 = vsel %vm280, %v4831, 0
  %v4904 = vsel %vm280, %v4832, 0
  %v4907 = vsel %vm280, %v4833, 0
  %v4910 = vsel %vm280, %v4834, 0
  %v4913 = vsel %vm280, %v4835, 0
  %v4916 = vsel %vm280, %v4836, 0
  %v4919 = vsel %vm280, %v4837, 0
  %v4922 = vsel %vm280, %v4838, 0
  %v4925 = vsel %vm280, %v4839, 0
  %v4928 = vsel %vm280, %v4840, 0
  %v4931 = vsel %vm280, %v4841, 0
  %v4934 = vsel %vm280, %v4842, 0
  %v4937 = vsel %vm280, %v4843, 0
  %v4940 = vsel %vm280, %v4844, 0
  %v4943 = vsel %vm280, %v4845, 0
  %v4946 = vsel %vm280, %v4846, 0
  %v4949 = vsel %vm280, %v4847, 0
  %v4952 = vsel %vm280, %v4848, 0
  %v4955 = vsel %vm280, %v4849, 0
  %v4958 = vsel %vm280, %v4850, 0
  %v4961 = vsel %vm280, %v4851, 0
  %v4964 = vsel %vm280, %v4852, 0
  %v4967 = vsel %vm280, %v4853, 0
  %v4970 = vsel %vm280, %v4854, 0
  %v4973 = vsel %vm280, %v4855, 0
  %v4976 = vsel %vm280, %v4856, 0
  %v4979 = vsel %vm280, %v4857, 0
  %v4982 = vsel %vm280, %v4858, 0
  %v4985 = vsel %vm280, %v4859, 0
  %4987 = vmatprep.subr.bf16.mxu0 0
  %4988 = vmatpush1.bf16.msra.mxu0 %v4883
  %4989 = vmatprep.subr.bf16.mxu0 0
  %4990 = vmatpush1.bf16.msra.mxu0 %v4884
  %4991 = vmatprep.subr.bf16.mxu0 0
  %4992 = vmatpush1.bf16.msra.mxu0 %v4885
  %4993 = vmatprep.subr.bf16.mxu0 0
  %4994 = vmatpush1.bf16.msra.mxu0 %v4886
  %4995 = vmatprep.subr.bf16.mxu0 0
  %4996 = vmatpush1.bf16.msra.mxu0 0
  %4997 = vmatprep.subr.bf16.mxu0 0
  %4998 = vmatpush1.bf16.msra.mxu0 0
  %4999 = vmatprep.subr.bf16.mxu0 0
  %5000 = vmatpush1.bf16.msra.mxu0 0
  %5001 = vmatprep.subr.bf16.mxu0 0
  %5002 = vmatpush1.bf16.msra.mxu0 0
  %5003 = vmatprep.subr.bf16.mxu0 0
  %5004 = vmatpush1.bf16.msra.mxu0 0
  %5005 = vmatprep.subr.bf16.mxu0 0
  %5006 = vmatpush1.bf16.msra.mxu0 0
  %5007 = vmatprep.subr.bf16.mxu0 0
  %5008 = vmatpush1.bf16.msra.mxu0 0
  %5009 = vmatprep.subr.bf16.mxu0 0
  %5010 = vmatpush1.bf16.msra.mxu0 0
  %5011 = vmatprep.subr.bf16.mxu0 0
  %5012 = vmatpush1.bf16.msra.mxu0 0
  %5013 = vmatprep.subr.bf16.mxu0 0
  %5014 = vmatpush1.bf16.msra.mxu0 0
  %5015 = vmatprep.subr.bf16.mxu0 0
  %5016 = vmatpush1.bf16.msra.mxu0 0
  %5017 = vmatprep.subr.bf16.mxu0 0
  %5018 = vmatpush1.bf16.msra.mxu0 0
  %5019 = vmatprep.mubr.bf16.mxu0 0
  %5020 = vmatmul.mubr.bf16.gmra.mrb[0].mxu0 %v4892
  %v5021 = vpop.f32.mrb[0].mxu0
  %v5022 = vadd.f32 %v4865, %v5021
  %v5023 = vpop.f32.mrb[0].mxu0
  %v5024 = vpop.f32.mrb[0].mxu0
  %v5025 = vadd.f32 %v4865, %v5024
  %v5026 = vpop.f32.mrb[0].mxu0
  %5027 = vmatprep.mubr.bf16.mxu0 0
  %5028 = vmatmul.mubr.bf16.gmra.mrb[0].mxu0 %v4895
  %v5029 = vpop.f32.mrb[0].mxu0
  %v5030 = vadd.f32 %v4865, %v5029
  %v5031 = vpop.f32.mrb[0].mxu0
  %v5032 = vpop.f32.mrb[0].mxu0
  %v5033 = vadd.f32 %v4865, %v5032
  %v5034 = vpop.f32.mrb[0].mxu0
  %5035 = vmatprep.mubr.bf16.mxu0 0
  %5036 = vmatmul.mubr.bf16.gmra.mrb[0].mxu0 %v4898
  %v5037 = vpop.f32.mrb[0].mxu0
  %v5038 = vadd.f32 %v4865, %v5037
  %v5039 = vpop.f32.mrb[0].mxu0
  %v5040 = vpop.f32.mrb[0].mxu0
  %v5041 = vadd.f32 %v4865, %v5040
  %v5042 = vpop.f32.mrb[0].mxu0
  %5043 = vmatprep.mubr.bf16.mxu0 0
  %5044 = vmatmul.mubr.bf16.gmra.mrb[0].mxu0 %v4901
  %v5045 = vpop.f32.mrb[0].mxu0
  %v5046 = vadd.f32 %v4865, %v5045
  %v5047 = vpop.f32.mrb[0].mxu0
  %v5048 = vpop.f32.mrb[0].mxu0
  %v5049 = vadd.f32 %v4865, %v5048
  %v5050 = vpop.f32.mrb[0].mxu0
  %5051 = vmatprep.mubr.bf16.mxu0 0
  %5052 = vmatmul.mubr.bf16.gmra.mrb[0].mxu0 %v4904
  %v5053 = vpop.f32.mrb[0].mxu0
  %v5054 = vadd.f32 %v4865, %v5053
  %v5055 = vpop.f32.mrb[0].mxu0
  %v5056 = vpop.f32.mrb[0].mxu0
  %v5057 = vadd.f32 %v4865, %v5056
  %v5058 = vpop.f32.mrb[0].mxu0
  %5059 = vmatprep.mubr.bf16.mxu0 0
  %5060 = vmatmul.mubr.bf16.gmra.mrb[0].mxu0 %v4907
  %v5061 = vpop.f32.mrb[0].mxu0
  %v5062 = vadd.f32 %v4865, %v5061
  %v5063 = vpop.f32.mrb[0].mxu0
  %v5064 = vpop.f32.mrb[0].mxu0
  %v5065 = vadd.f32 %v4865, %v5064
  %v5066 = vpop.f32.mrb[0].mxu0
  %5067 = vmatprep.mubr.bf16.mxu0 0
  %5068 = vmatmul.mubr.bf16.gmra.mrb[0].mxu0 %v4910
  %v5069 = vpop.f32.mrb[0].mxu0
  %v5070 = vadd.f32 %v4865, %v5069
  %v5071 = vpop.f32.mrb[0].mxu0
  %v5072 = vpop.f32.mrb[0].mxu0
  %v5073 = vadd.f32 %v4865, %v5072
  %v5074 = vpop.f32.mrb[0].mxu0
  %5075 = vmatprep.mubr.bf16.mxu0 0
  %5076 = vmatmul.mubr.bf16.gmra.mrb[0].mxu0 %v4913
  %v5077 = vpop.f32.mrb[0].mxu0
  %v5078 = vadd.f32 %v4865, %v5077
  %v5079 = vpop.f32.mrb[0].mxu0
  %v5080 = vpop.f32.mrb[0].mxu0
  %v5081 = vadd.f32 %v4865, %v5080
  %v5082 = vpop.f32.mrb[0].mxu0
  %5083 = vmatprep.mubr.bf16.mxu0 0
  %5084 = vmatmul.mubr.bf16.gmra.mrb[0].mxu0 %v4916
  %v5085 = vpop.f32.mrb[0].mxu0
  %v5086 = vadd.f32 %v4865, %v5085
  %v5087 = vpop.f32.mrb[0].mxu0
  %v5088 = vpop.f32.mrb[0].mxu0
  %v5089 = vadd.f32 %v4865, %v5088
  %v5090 = vpop.f32.mrb[0].mxu0
  %5091 = vmatprep.mubr.bf16.mxu0 0
  %5092 = vmatmul.mubr.bf16.gmra.mrb[0].mxu0 %v4919
  %v5093 = vpop.f32.mrb[0].mxu0
  %v5094 = vadd.f32 %v4865, %v5093
  %v5095 = vpop.f32.mrb[0].mxu0
  %v5096 = vpop.f32.mrb[0].mxu0
  %v5097 = vadd.f32 %v4865, %v5096
  %v5098 = vpop.f32.mrb[0].mxu0
  %5099 = vmatprep.mubr.bf16.mxu0 0
  %5100 = vmatmul.mubr.bf16.gmra.mrb[0].mxu0 %v4922
  %v5101 = vpop.f32.mrb[0].mxu0
  %v5102 = vadd.f32 %v4865, %v5101
  %v5103 = vpop.f32.mrb[0].mxu0
  %v5104 = vpop.f32.mrb[0].mxu0
  %v5105 = vadd.f32 %v4865, %v5104
  %v5106 = vpop.f32.mrb[0].mxu0
  %5107 = vmatprep.mubr.bf16.mxu0 0
  %5108 = vmatmul.mubr.bf16.gmra.mrb[0].mxu0 %v4925
  %v5109 = vpop.f32.mrb[0].mxu0
  %v5110 = vadd.f32 %v4865, %v5109
  %v5111 = vpop.f32.mrb[0].mxu0
  %v5112 = vpop.f32.mrb[0].mxu0
  %v5113 = vadd.f32 %v4865, %v5112
  %v5114 = vpop.f32.mrb[0].mxu0
  %5115 = vmatprep.mubr.bf16.mxu0 0
  %5116 = vmatmul.mubr.bf16.gmra.mrb[0].mxu0 %v4928
  %v5117 = vpop.f32.mrb[0].mxu0
  %v5118 = vadd.f32 %v4865, %v5117
  %v5119 = vpop.f32.mrb[0].mxu0
  %v5120 = vpop.f32.mrb[0].mxu0
  %v5121 = vadd.f32 %v4865, %v5120
  %v5122 = vpop.f32.mrb[0].mxu0
  %5123 = vmatprep.mubr.bf16.mxu0 0
  %5124 = vmatmul.mubr.bf16.gmra.mrb[0].mxu0 %v4931
  %v5125 = vpop.f32.mrb[0].mxu0
  %v5126 = vadd.f32 %v4865, %v5125
  %v5127 = vpop.f32.mrb[0].mxu0
  %v5128 = vpop.f32.mrb[0].mxu0
  %v5129 = vadd.f32 %v4865, %v5128
  %v5130 = vpop.f32.mrb[0].mxu0
  %5131 = vmatprep.mubr.bf16.mxu0 0
  %5132 = vmatmul.mubr.bf16.gmra.mrb[0].mxu0 %v4934
  %v5133 = vpop.f32.mrb[0].mxu0
  %v5134 = vadd.f32 %v4865, %v5133
  %v5135 = vpop.f32.mrb[0].mxu0
  %v5136 = vpop.f32.mrb[0].mxu0
  %v5137 = vadd.f32 %v4865, %v5136
  %v5138 = vpop.f32.mrb[0].mxu0
  %5139 = vmatprep.mubr.bf16.mxu0 0
  %5140 = vmatmul.mubr.bf16.gmra.mrb[0].mxu0 %v4937
  %v5141 = vpop.f32.mrb[0].mxu0
  %v5142 = vadd.f32 %v4865, %v5141
  %v5143 = vpop.f32.mrb[0].mxu0
  %v5144 = vpop.f32.mrb[0].mxu0
  %v5145 = vadd.f32 %v4865, %v5144
  %v5146 = vpop.f32.mrb[0].mxu0
  %5147 = vmatprep.mubr.bf16.mxu0 0
  %5148 = vmatmul.mubr.bf16.gmra.mrb[0].mxu0 %v4940
  %v5149 = vpop.f32.mrb[0].mxu0
  %v5150 = vadd.f32 %v4865, %v5149
  %v5151 = vpop.f32.mrb[0].mxu0
  %v5152 = vpop.f32.mrb[0].mxu0
  %v5153 = vadd.f32 %v4865, %v5152
  %v5154 = vpop.f32.mrb[0].mxu0
  %5155 = vmatprep.mubr.bf16.mxu0 0
  %5156 = vmatmul.mubr.bf16.gmra.mrb[0].mxu0 %v4943
  %v5157 = vpop.f32.mrb[0].mxu0
  %v5158 = vadd.f32 %v4865, %v5157
  %v5159 = vpop.f32.mrb[0].mxu0
  %v5160 = vpop.f32.mrb[0].mxu0
  %v5161 = vadd.f32 %v4865, %v5160
  %v5162 = vpop.f32.mrb[0].mxu0
  %5163 = vmatprep.mubr.bf16.mxu0 0
  %5164 = vmatmul.mubr.bf16.gmra.mrb[0].mxu0 %v4946
  %v5165 = vpop.f32.mrb[0].mxu0
  %v5166 = vadd.f32 %v4865, %v5165
  %v5167 = vpop.f32.mrb[0].mxu0
  %v5168 = vpop.f32.mrb[0].mxu0
  %v5169 = vadd.f32 %v4865, %v5168
  %v5170 = vpop.f32.mrb[0].mxu0
  %5171 = vmatprep.mubr.bf16.mxu0 0
  %5172 = vmatmul.mubr.bf16.gmra.mrb[0].mxu0 %v4949
  %v5173 = vpop.f32.mrb[0].mxu0
  %v5174 = vadd.f32 %v4865, %v5173
  %v5175 = vpop.f32.mrb[0].mxu0
  %v5176 = vpop.f32.mrb[0].mxu0
  %v5177 = vadd.f32 %v4865, %v5176
  %v5178 = vpop.f32.mrb[0].mxu0
  %5179 = vmatprep.mubr.bf16.mxu0 0
  %5180 = vmatmul.mubr.bf16.gmra.mrb[0].mxu0 %v4952
  %v5181 = vpop.f32.mrb[0].mxu0
  %v5182 = vadd.f32 %v4865, %v5181
  %v5183 = vpop.f32.mrb[0].mxu0
  %v5184 = vpop.f32.mrb[0].mxu0
  %v5185 = vadd.f32 %v4865, %v5184
  %v5186 = vpop.f32.mrb[0].mxu0
  %5187 = vmatprep.mubr.bf16.mxu0 0
  %5188 = vmatmul.mubr.bf16.gmra.mrb[0].mxu0 %v4955
  %v5189 = vpop.f32.mrb[0].mxu0
  %v5190 = vadd.f32 %v4865, %v5189
  %v5191 = vpop.f32.mrb[0].mxu0
  %v5192 = vpop.f32.mrb[0].mxu0
  %v5193 = vadd.f32 %v4865, %v5192
  %v5194 = vpop.f32.mrb[0].mxu0
  %5195 = vmatprep.mubr.bf16.mxu0 0
  %5196 = vmatmul.mubr.bf16.gmra.mrb[0].mxu0 %v4958
  %v5197 = vpop.f32.mrb[0].mxu0
  %v5198 = vadd.f32 %v4865, %v5197
  %v5199 = vpop.f32.mrb[0].mxu0
  %v5200 = vpop.f32.mrb[0].mxu0
  %v5201 = vadd.f32 %v4865, %v5200
  %v5202 = vpop.f32.mrb[0].mxu0
  %5203 = vmatprep.mubr.bf16.mxu0 0
  %5204 = vmatmul.mubr.bf16.gmra.mrb[0].mxu0 %v4961
  %v5205 = vpop.f32.mrb[0].mxu0
  %v5206 = vadd.f32 %v4865, %v5205
  %v5207 = vpop.f32.mrb[0].mxu0
  %v5208 = vpop.f32.mrb[0].mxu0
  %v5209 = vadd.f32 %v4865, %v5208
  %v5210 = vpop.f32.mrb[0].mxu0
  %5211 = vmatprep.mubr.bf16.mxu0 0
  %5212 = vmatmul.mubr.bf16.gmra.mrb[0].mxu0 %v4964
  %v5213 = vpop.f32.mrb[0].mxu0
  %v5214 = vadd.f32 %v4865, %v5213
  %v5215 = vpop.f32.mrb[0].mxu0
  %v5216 = vpop.f32.mrb[0].mxu0
  %v5217 = vadd.f32 %v4865, %v5216
  %v5218 = vpop.f32.mrb[0].mxu0
  %5219 = vmatprep.mubr.bf16.mxu0 0
  %5220 = vmatmul.mubr.bf16.gmra.mrb[0].mxu0 %v4967
  %v5221 = vpop.f32.mrb[0].mxu0
  %v5222 = vadd.f32 %v4865, %v5221
  %v5223 = vpop.f32.mrb[0].mxu0
  %v5224 = vpop.f32.mrb[0].mxu0
  %v5225 = vadd.f32 %v4865, %v5224
  %v5226 = vpop.f32.mrb[0].mxu0
  %5227 = vmatprep.mubr.bf16.mxu0 0
  %5228 = vmatmul.mubr.bf16.gmra.mrb[0].mxu0 %v4970
  %v5229 = vpop.f32.mrb[0].mxu0
  %v5230 = vadd.f32 %v4865, %v5229
  %v5231 = vpop.f32.mrb[0].mxu0
  %v5232 = vpop.f32.mrb[0].mxu0
  %v5233 = vadd.f32 %v4865, %v5232
  %v5234 = vpop.f32.mrb[0].mxu0
  %5235 = vmatprep.mubr.bf16.mxu0 0
  %5236 = vmatmul.mubr.bf16.gmra.mrb[0].mxu0 %v4973
  %v5237 = vpop.f32.mrb[0].mxu0
  %v5238 = vadd.f32 %v4865, %v5237
  %v5239 = vpop.f32.mrb[0].mxu0
  %v5240 = vpop.f32.mrb[0].mxu0
  %v5241 = vadd.f32 %v4865, %v5240
  %v5242 = vpop.f32.mrb[0].mxu0
  %5243 = vmatprep.mubr.bf16.mxu0 0
  %5244 = vmatmul.mubr.bf16.gmra.mrb[0].mxu0 %v4976
  %v5245 = vpop.f32.mrb[0].mxu0
  %v5246 = vadd.f32 %v4865, %v5245
  %v5247 = vpop.f32.mrb[0].mxu0
  %v5248 = vpop.f32.mrb[0].mxu0
  %v5249 = vadd.f32 %v4865, %v5248
  %v5250 = vpop.f32.mrb[0].mxu0
  %5251 = vmatprep.mubr.bf16.mxu0 0
  %5252 = vmatmul.mubr.bf16.gmra.mrb[0].mxu0 %v4979
  %v5253 = vpop.f32.mrb[0].mxu0
  %v5254 = vadd.f32 %v4865, %v5253
  %v5255 = vpop.f32.mrb[0].mxu0
  %v5256 = vpop.f32.mrb[0].mxu0
  %v5257 = vadd.f32 %v4865, %v5256
  %v5258 = vpop.f32.mrb[0].mxu0
  %5259 = vmatprep.mubr.bf16.mxu0 0
  %5260 = vmatmul.mubr.bf16.gmra.mrb[0].mxu0 %v4982
  %v5261 = vpop.f32.mrb[0].mxu0
  %v5262 = vadd.f32 %v4865, %v5261
  %v5263 = vpop.f32.mrb[0].mxu0
  %v5264 = vpop.f32.mrb[0].mxu0
  %v5265 = vadd.f32 %v4865, %v5264
  %v5266 = vpop.f32.mrb[0].mxu0
  %5267 = vmatprep.mubr.bf16.mxu0 0
  %5268 = vmatmul.mubr.bf16.gmra.mrb[0].mxu0 %v4985
  %v5269 = vpop.f32.mrb[0].mxu0
  %v5270 = vadd.f32 %v4865, %v5269
  %v5271 = vpop.f32.mrb[0].mxu0
  %v5272 = vpop.f32.mrb[0].mxu0
  %v5273 = vadd.f32 %v4865, %v5272
  %v5274 = vpop.f32.mrb[0].mxu0
  %5275 = vdwg.mxu0
  %vm5276 = vcmp.ge.f32.partialorder %v5022, 0.0
  %vm5277 = vcmp.ge.f32.partialorder %v5025, 0.0
  %vm5278 = vcmp.ge.f32.partialorder %v5030, 0.0
  %vm5279 = vcmp.ge.f32.partialorder %v5033, 0.0
  %vm5280 = vcmp.ge.f32.partialorder %v5038, 0.0
  %vm5281 = vcmp.ge.f32.partialorder %v5041, 0.0
  %vm5282 = vcmp.ge.f32.partialorder %v5046, 0.0
  %vm5283 = vcmp.ge.f32.partialorder %v5049, 0.0
  %vm5284 = vcmp.ge.f32.partialorder %v5054, 0.0
  %vm5285 = vcmp.ge.f32.partialorder %v5057, 0.0
  %vm5286 = vcmp.ge.f32.partialorder %v5062, 0.0
  %vm5287 = vcmp.ge.f32.partialorder %v5065, 0.0
  %vm5288 = vcmp.ge.f32.partialorder %v5070, 0.0
  %vm5289 = vcmp.ge.f32.partialorder %v5073, 0.0
  %vm5290 = vcmp.ge.f32.partialorder %v5078, 0.0
  %vm5291 = vcmp.ge.f32.partialorder %v5081, 0.0
  %vm5292 = vcmp.ge.f32.partialorder %v5086, 0.0
  %vm5293 = vcmp.ge.f32.partialorder %v5089, 0.0
  %vm5294 = vcmp.ge.f32.partialorder %v5094, 0.0
  %vm5295 = vcmp.ge.f32.partialorder %v5097, 0.0
  %vm5296 = vcmp.ge.f32.partialorder %v5102, 0.0
  %vm5297 = vcmp.ge.f32.partialorder %v5105, 0.0
  %vm5298 = vcmp.ge.f32.partialorder %v5110, 0.0
  %vm5299 = vcmp.ge.f32.partialorder %v5113, 0.0
  %vm5300 = vcmp.ge.f32.partialorder %v5118, 0.0
  %vm5301 = vcmp.ge.f32.partialorder %v5121, 0.0
  %vm5302 = vcmp.ge.f32.partialorder %v5126, 0.0
  %vm5303 = vcmp.ge.f32.partialorder %v5129, 0.0
  %vm5304 = vcmp.ge.f32.partialorder %v5134, 0.0
  %vm5305 = vcmp.ge.f32.partialorder %v5137, 0.0
  %vm5306 = vcmp.ge.f32.partialorder %v5142, 0.0
  %vm5307 = vcmp.ge.f32.partialorder %v5145, 0.0
  %vm5308 = vcmp.ge.f32.partialorder %v5150, 0.0
  %vm5309 = vcmp.ge.f32.partialorder %v5153, 0.0
  %vm5310 = vcmp.ge.f32.partialorder %v5158, 0.0
  %vm5311 = vcmp.ge.f32.partialorder %v5161, 0.0
  %vm5312 = vcmp.ge.f32.partialorder %v5166, 0.0
  %vm5313 = vcmp.ge.f32.partialorder %v5169, 0.0
  %vm5314 = vcmp.ge.f32.partialorder %v5174, 0.0
  %vm5315 = vcmp.ge.f32.partialorder %v5177, 0.0
  %vm5316 = vcmp.ge.f32.partialorder %v5182, 0.0
  %vm5317 = vcmp.ge.f32.partialorder %v5185, 0.0
  %vm5318 = vcmp.ge.f32.partialorder %v5190, 0.0
  %vm5319 = vcmp.ge.f32.partialorder %v5193, 0.0
  %vm5320 = vcmp.ge.f32.partialorder %v5198, 0.0
  %vm5321 = vcmp.ge.f32.partialorder %v5201, 0.0
  %vm5322 = vcmp.ge.f32.partialorder %v5206, 0.0
  %vm5323 = vcmp.ge.f32.partialorder %v5209, 0.0
  %vm5324 = vcmp.ge.f32.partialorder %v5214, 0.0
  %vm5325 = vcmp.ge.f32.partialorder %v5217, 0.0
  %vm5326 = vcmp.ge.f32.partialorder %v5222, 0.0
  %vm5327 = vcmp.ge.f32.partialorder %v5225, 0.0
  %vm5328 = vcmp.ge.f32.partialorder %v5230, 0.0
  %vm5329 = vcmp.ge.f32.partialorder %v5233, 0.0
  %vm5330 = vcmp.ge.f32.partialorder %v5238, 0.0
  %vm5331 = vcmp.ge.f32.partialorder %v5241, 0.0
  %vm5332 = vcmp.ge.f32.partialorder %v5246, 0.0
  %vm5333 = vcmp.ge.f32.partialorder %v5249, 0.0
  %vm5334 = vcmp.ge.f32.partialorder %v5254, 0.0
  %vm5335 = vcmp.ge.f32.partialorder %v5257, 0.0
  %vm5336 = vcmp.ge.f32.partialorder %v5262, 0.0
  %vm5337 = vcmp.ge.f32.partialorder %v5265, 0.0
  %vm5338 = vcmp.ge.f32.partialorder %v5270, 0.0
  %vm5339 = vcmp.ge.f32.partialorder %v5273, 0.0
  %v5340 = vmul.f32 %v5022, 0.2
  %v5341 = vmul.f32 %v5025, 0.2
  %v5342 = vmul.f32 %v5030, 0.2
  %v5343 = vmul.f32 %v5033, 0.2
  %v5344 = vmul.f32 %v5038, 0.2
  %v5345 = vmul.f32 %v5041, 0.2
  %v5346 = vmul.f32 %v5046, 0.2
  %v5347 = vmul.f32 %v5049, 0.2
  %v5348 = vmul.f32 %v5054, 0.2
  %v5349 = vmul.f32 %v5057, 0.2
  %v5350 = vmul.f32 %v5062, 0.2
  %v5351 = vmul.f32 %v5065, 0.2
  %v5352 = vmul.f32 %v5070, 0.2
  %v5353 = vmul.f32 %v5073, 0.2
  %v5354 = vmul.f32 %v5078, 0.2
  %v5355 = vmul.f32 %v5081, 0.2
  %v5356 = vmul.f32 %v5086, 0.2
  %v5357 = vmul.f32 %v5089, 0.2
  %v5358 = vmul.f32 %v5094, 0.2
  %v5359 = vmul.f32 %v5097, 0.2
  %v5360 = vmul.f32 %v5102, 0.2
  %v5361 = vmul.f32 %v5105, 0.2
  %v5362 = vmul.f32 %v5110, 0.2
  %v5363 = vmul.f32 %v5113, 0.2
  %v5364 = vmul.f32 %v5118, 0.2
  %v5365 = vmul.f32 %v5121, 0.2
  %v5366 = vmul.f32 %v5126, 0.2
  %v5367 = vmul.f32 %v5129, 0.2
  %v5368 = vmul.f32 %v5134, 0.2
  %v5369 = vmul.f32 %v5137, 0.2
  %v5370 = vmul.f32 %v5142, 0.2
  %v5371 = vmul.f32 %v5145, 0.2
  %v5372 = vmul.f32 %v5150, 0.2
  %v5373 = vmul.f32 %v5153, 0.2
  %v5374 = vmul.f32 %v5158, 0.2
  %v5375 = vmul.f32 %v5161, 0.2
  %v5376 = vmul.f32 %v5166, 0.2
  %v5377 = vmul.f32 %v5169, 0.2
  %v5378 = vmul.f32 %v5174, 0.2
  %v5379 = vmul.f32 %v5177, 0.2
  %v5380 = vmul.f32 %v5182, 0.2
  %v5381 = vmul.f32 %v5185, 0.2
  %v5382 = vmul.f32 %v5190, 0.2
  %v5383 = vmul.f32 %v5193, 0.2
  %v5384 = vmul.f32 %v5198, 0.2
  %v5385 = vmul.f32 %v5201, 0.2
  %v5386 = vmul.f32 %v5206, 0.2
  %v5387 = vmul.f32 %v5209, 0.2
  %v5388 = vmul.f32 %v5214, 0.2
  %v5389 = vmul.f32 %v5217, 0.2
  %v5390 = vmul.f32 %v5222, 0.2
  %v5391 = vmul.f32 %v5225, 0.2
  %v5392 = vmul.f32 %v5230, 0.2
  %v5393 = vmul.f32 %v5233, 0.2
  %v5394 = vmul.f32 %v5238, 0.2
  %v5395 = vmul.f32 %v5241, 0.2
  %v5396 = vmul.f32 %v5246, 0.2
  %v5397 = vmul.f32 %v5249, 0.2
  %v5398 = vmul.f32 %v5254, 0.2
  %v5399 = vmul.f32 %v5257, 0.2
  %v5400 = vmul.f32 %v5262, 0.2
  %v5401 = vmul.f32 %v5265, 0.2
  %v5402 = vmul.f32 %v5270, 0.2
  %v5403 = vmul.f32 %v5273, 0.2
  %v5404 = vsel %vm5276, %v5022, %v5340
  %v5405 = vsel %vm5277, %v5025, %v5341
  %v5406 = vsel %vm5278, %v5030, %v5342
  %v5407 = vsel %vm5279, %v5033, %v5343
  %v5408 = vsel %vm5280, %v5038, %v5344
  %v5409 = vsel %vm5281, %v5041, %v5345
  %v5410 = vsel %vm5282, %v5046, %v5346
  %v5411 = vsel %vm5283, %v5049, %v5347
  %v5412 = vsel %vm5284, %v5054, %v5348
  %v5413 = vsel %vm5285, %v5057, %v5349
  %v5414 = vsel %vm5286, %v5062, %v5350
  %v5415 = vsel %vm5287, %v5065, %v5351
  %v5416 = vsel %vm5288, %v5070, %v5352
  %v5417 = vsel %vm5289, %v5073, %v5353
  %v5418 = vsel %vm5290, %v5078, %v5354
  %v5419 = vsel %vm5291, %v5081, %v5355
  %v5420 = vsel %vm5292, %v5086, %v5356
  %v5421 = vsel %vm5293, %v5089, %v5357
  %v5422 = vsel %vm5294, %v5094, %v5358
  %v5423 = vsel %vm5295, %v5097, %v5359
  %v5424 = vsel %vm5296, %v5102, %v5360
  %v5425 = vsel %vm5297, %v5105, %v5361
  %v5426 = vsel %vm5298, %v5110, %v5362
  %v5427 = vsel %vm5299, %v5113, %v5363
  %v5428 = vsel %vm5300, %v5118, %v5364
  %v5429 = vsel %vm5301, %v5121, %v5365
  %v5430 = vsel %vm5302, %v5126, %v5366
  %v5431 = vsel %vm5303, %v5129, %v5367
  %v5432 = vsel %vm5304, %v5134, %v5368
  %v5433 = vsel %vm5305, %v5137, %v5369
  %v5434 = vsel %vm5306, %v5142, %v5370
  %v5435 = vsel %vm5307, %v5145, %v5371
  %v5436 = vsel %vm5308, %v5150, %v5372
  %v5437 = vsel %vm5309, %v5153, %v5373
  %v5438 = vsel %vm5310, %v5158, %v5374
  %v5439 = vsel %vm5311, %v5161, %v5375
  %v5440 = vsel %vm5312, %v5166, %v5376
  %v5441 = vsel %vm5313, %v5169, %v5377
  %v5442 = vsel %vm5314, %v5174, %v5378
  %v5443 = vsel %vm5315, %v5177, %v5379
  %v5444 = vsel %vm5316, %v5182, %v5380
  %v5445 = vsel %vm5317, %v5185, %v5381
  %v5446 = vsel %vm5318, %v5190, %v5382
  %v5447 = vsel %vm5319, %v5193, %v5383
  %v5448 = vsel %vm5320, %v5198, %v5384
  %v5449 = vsel %vm5321, %v5201, %v5385
  %v5450 = vsel %vm5322, %v5206, %v5386
  %v5451 = vsel %vm5323, %v5209, %v5387
  %v5452 = vsel %vm5324, %v5214, %v5388
  %v5453 = vsel %vm5325, %v5217, %v5389
  %v5454 = vsel %vm5326, %v5222, %v5390
  %v5455 = vsel %vm5327, %v5225, %v5391
  %v5456 = vsel %vm5328, %v5230, %v5392
  %v5457 = vsel %vm5329, %v5233, %v5393
  %v5458 = vsel %vm5330, %v5238, %v5394
  %v5459 = vsel %vm5331, %v5241, %v5395
  %v5460 = vsel %vm5332, %v5246, %v5396
  %v5461 = vsel %vm5333, %v5249, %v5397
  %v5462 = vsel %vm5334, %v5254, %v5398
  %v5463 = vsel %vm5335, %v5257, %v5399
  %v5464 = vsel %vm5336, %v5262, %v5400
  %v5465 = vsel %vm5337, %v5265, %v5401
  %v5466 = vsel %vm5338, %v5270, %v5402
  %v5467 = vsel %vm5339, %v5273, %v5403
  %v5468 = vld [vmem:[%s55] sm:$0xf]
  %v5469 = vld [vmem:[%s55 + $0x4] sm:$0xf]
  %v5470 = vld [vmem:[%s55 + $0x8] sm:$0xf]
  %v5471 = vld [vmem:[%s55 + $0xc] sm:$0xf]
  %v5472 = vpack.c.bf16 %v5405, %v5404
  %v5473 = vpack.c.bf16 %v5407, %v5406
  %v5474 = vpack.c.bf16 %v5409, %v5408
  %v5475 = vpack.c.bf16 %v5411, %v5410
  %v5476 = vpack.c.bf16 %v5413, %v5412
  %v5477 = vpack.c.bf16 %v5415, %v5414
  %v5478 = vpack.c.bf16 %v5417, %v5416
  %v5479 = vpack.c.bf16 %v5419, %v5418
  %v5480 = vpack.c.bf16 %v5421, %v5420
  %v5481 = vpack.c.bf16 %v5423, %v5422
  %v5482 = vpack.c.bf16 %v5425, %v5424
  %v5483 = vpack.c.bf16 %v5427, %v5426
  %v5484 = vpack.c.bf16 %v5429, %v5428
  %v5485 = vpack.c.bf16 %v5431, %v5430
  %v5486 = vpack.c.bf16 %v5433, %v5432
  %v5487 = vpack.c.bf16 %v5435, %v5434
  %v5488 = vpack.c.bf16 %v5437, %v5436
  %v5489 = vpack.c.bf16 %v5439, %v5438
  %v5490 = vpack.c.bf16 %v5441, %v5440
  %v5491 = vpack.c.bf16 %v5443, %v5442
  %v5492 = vpack.c.bf16 %v5445, %v5444
  %v5493 = vpack.c.bf16 %v5447, %v5446
  %v5494 = vpack.c.bf16 %v5449, %v5448
  %v5495 = vpack.c.bf16 %v5451, %v5450
  %v5496 = vpack.c.bf16 %v5453, %v5452
  %v5497 = vpack.c.bf16 %v5455, %v5454
  %v5498 = vpack.c.bf16 %v5457, %v5456
  %v5499 = vpack.c.bf16 %v5459, %v5458
  %v5500 = vpack.c.bf16 %v5461, %v5460
  %v5501 = vpack.c.bf16 %v5463, %v5462
  %v5502 = vpack.c.bf16 %v5465, %v5464
  %v5503 = vpack.c.bf16 %v5467, %v5466
  %v5504 = vld [vmem:[%s57] sm:$0x1]
  %v5506 = vlaneseq
  %v5507 = vshrl.u32 %v5506, 7
  %v5508 = vsub.s32 0, %v5507
  %v5509 = vrot.slane %v5504, %v5508
  %v5515 = vunpack.c.l.b16 %v5468
  %v5516 = vunpack.c.l.b16 %v5469
  %v5517 = vunpack.c.l.b16 %v5470
  %v5518 = vunpack.c.l.b16 %v5471
  %v5519 = vpack.c.b16 %v5516, %v5515
  %v5520 = vpack.c.b16 %v5518, %v5517
  %v5524 = vsel %vm762, %v5472, 0
  %v5527 = vsel %vm762, %v5473, 0
  %v5530 = vsel %vm762, %v5474, 0
  %v5533 = vsel %vm762, %v5475, 0
  %v5536 = vsel %vm762, %v5476, 0
  %v5539 = vsel %vm762, %v5477, 0
  %v5542 = vsel %vm762, %v5478, 0
  %v5545 = vsel %vm762, %v5479, 0
  %v5548 = vsel %vm762, %v5480, 0
  %v5551 = vsel %vm762, %v5481, 0
  %v5554 = vsel %vm762, %v5482, 0
  %v5557 = vsel %vm762, %v5483, 0
  %v5560 = vsel %vm762, %v5484, 0
  %v5563 = vsel %vm762, %v5485, 0
  %v5566 = vsel %vm762, %v5486, 0
  %v5569 = vsel %vm762, %v5487, 0
  %v5572 = vsel %vm762, %v5488, 0
  %v5575 = vsel %vm762, %v5489, 0
  %v5578 = vsel %vm762, %v5490, 0
  %v5581 = vsel %vm762, %v5491, 0
  %v5584 = vsel %vm762, %v5492, 0
  %v5587 = vsel %vm762, %v5493, 0
  %v5590 = vsel %vm762, %v5494, 0
  %v5593 = vsel %vm762, %v5495, 0
  %v5596 = vsel %vm762, %v5496, 0
  %v5599 = vsel %vm762, %v5497, 0
  %v5602 = vsel %vm762, %v5498, 0
  %v5605 = vsel %vm762, %v5499, 0
  %v5608 = vsel %vm762, %v5500, 0
  %v5611 = vsel %vm762, %v5501, 0
  %v5614 = vsel %vm762, %v5502, 0
  %v5617 = vsel %vm762, %v5503, 0
  %5619 = vmatprep.subr.bf16.mxu0 0
  %5620 = vmatpush1.bf16.msra.mxu0 %v5519
  %5621 = vmatprep.subr.bf16.mxu0 0
  %5622 = vmatpush1.bf16.msra.mxu0 %v5520
  %5623 = vmatprep.subr.bf16.mxu0 0
  %5624 = vmatpush1.bf16.msra.mxu0 0
  %5625 = vmatprep.subr.bf16.mxu0 0
  %5626 = vmatpush1.bf16.msra.mxu0 0
  %5627 = vmatprep.subr.bf16.mxu0 0
  %5628 = vmatpush1.bf16.msra.mxu0 0
  %5629 = vmatprep.subr.bf16.mxu0 0
  %5630 = vmatpush1.bf16.msra.mxu0 0
  %5631 = vmatprep.subr.bf16.mxu0 0
  %5632 = vmatpush1.bf16.msra.mxu0 0
  %5633 = vmatprep.subr.bf16.mxu0 0
  %5634 = vmatpush1.bf16.msra.mxu0 0
  %5635 = vmatprep.subr.bf16.mxu0 0
  %5636 = vmatpush1.bf16.msra.mxu0 0
  %5637 = vmatprep.subr.bf16.mxu0 0
  %5638 = vmatpush1.bf16.msra.mxu0 0
  %5639 = vmatprep.subr.bf16.mxu0 0
  %5640 = vmatpush1.bf16.msra.mxu0 0
  %5641 = vmatprep.subr.bf16.mxu0 0
  %5642 = vmatpush1.bf16.msra.mxu0 0
  %5643 = vmatprep.subr.bf16.mxu0 0
  %5644 = vmatpush1.bf16.msra.mxu0 0
  %5645 = vmatprep.subr.bf16.mxu0 0
  %5646 = vmatpush1.bf16.msra.mxu0 0
  %5647 = vmatprep.subr.bf16.mxu0 0
  %5648 = vmatpush1.bf16.msra.mxu0 0
  %5649 = vmatprep.subr.bf16.mxu0 0
  %5650 = vmatpush1.bf16.msra.mxu0 0
  %5651 = vmatprep.mubr.bf16.mxu0 0
  %5652 = vmatmul.mubr.bf16.gmra.mrb[0].mxu0 %v5524
  %v5653 = vpop.f32.mrb[0].mxu0
  %v5654 = vadd.f32 %v5509, %v5653
  %v5655 = vpop.f32.mrb[0].mxu0
  %v5656 = vpop.f32.mrb[0].mxu0
  %v5657 = vadd.f32 %v5509, %v5656
  %v5658 = vpop.f32.mrb[0].mxu0
  %5659 = vmatprep.mubr.bf16.mxu0 0
  %5660 = vmatmul.mubr.bf16.gmra.mrb[0].mxu0 %v5527
  %v5661 = vpop.f32.mrb[0].mxu0
  %v5662 = vadd.f32 %v5509, %v5661
  %v5663 = vpop.f32.mrb[0].mxu0
  %v5664 = vpop.f32.mrb[0].mxu0
  %v5665 = vadd.f32 %v5509, %v5664
  %v5666 = vpop.f32.mrb[0].mxu0
  %5667 = vmatprep.mubr.bf16.mxu0 0
  %5668 = vmatmul.mubr.bf16.gmra.mrb[0].mxu0 %v5530
  %v5669 = vpop.f32.mrb[0].mxu0
  %v5670 = vadd.f32 %v5509, %v5669
  %v5671 = vpop.f32.mrb[0].mxu0
  %v5672 = vpop.f32.mrb[0].mxu0
  %v5673 = vadd.f32 %v5509, %v5672
  %v5674 = vpop.f32.mrb[0].mxu0
  %5675 = vmatprep.mubr.bf16.mxu0 0
  %5676 = vmatmul.mubr.bf16.gmra.mrb[0].mxu0 %v5533
  %v5677 = vpop.f32.mrb[0].mxu0
  %v5678 = vadd.f32 %v5509, %v5677
  %v5679 = vpop.f32.mrb[0].mxu0
  %v5680 = vpop.f32.mrb[0].mxu0
  %v5681 = vadd.f32 %v5509, %v5680
  %v5682 = vpop.f32.mrb[0].mxu0
  %5683 = vmatprep.mubr.bf16.mxu0 0
  %5684 = vmatmul.mubr.bf16.gmra.mrb[0].mxu0 %v5536
  %v5685 = vpop.f32.mrb[0].mxu0
  %v5686 = vadd.f32 %v5509, %v5685
  %v5687 = vpop.f32.mrb[0].mxu0
  %v5688 = vpop.f32.mrb[0].mxu0
  %v5689 = vadd.f32 %v5509, %v5688
  %v5690 = vpop.f32.mrb[0].mxu0
  %5691 = vmatprep.mubr.bf16.mxu0 0
  %5692 = vmatmul.mubr.bf16.gmra.mrb[0].mxu0 %v5539
  %v5693 = vpop.f32.mrb[0].mxu0
  %v5694 = vadd.f32 %v5509, %v5693
  %v5695 = vpop.f32.mrb[0].mxu0
  %v5696 = vpop.f32.mrb[0].mxu0
  %v5697 = vadd.f32 %v5509, %v5696
  %v5698 = vpop.f32.mrb[0].mxu0
  %5699 = vmatprep.mubr.bf16.mxu0 0
  %5700 = vmatmul.mubr.bf16.gmra.mrb[0].mxu0 %v5542
  %v5701 = vpop.f32.mrb[0].mxu0
  %v5702 = vadd.f32 %v5509, %v5701
  %v5703 = vpop.f32.mrb[0].mxu0
  %v5704 = vpop.f32.mrb[0].mxu0
  %v5705 = vadd.f32 %v5509, %v5704
  %v5706 = vpop.f32.mrb[0].mxu0
  %5707 = vmatprep.mubr.bf16.mxu0 0
  %5708 = vmatmul.mubr.bf16.gmra.mrb[0].mxu0 %v5545
  %v5709 = vpop.f32.mrb[0].mxu0
  %v5710 = vadd.f32 %v5509, %v5709
  %v5711 = vpop.f32.mrb[0].mxu0
  %v5712 = vpop.f32.mrb[0].mxu0
  %v5713 = vadd.f32 %v5509, %v5712
  %v5714 = vpop.f32.mrb[0].mxu0
  %5715 = vmatprep.mubr.bf16.mxu0 0
  %5716 = vmatmul.mubr.bf16.gmra.mrb[0].mxu0 %v5548
  %v5717 = vpop.f32.mrb[0].mxu0
  %v5718 = vadd.f32 %v5509, %v5717
  %v5719 = vpop.f32.mrb[0].mxu0
  %v5720 = vpop.f32.mrb[0].mxu0
  %v5721 = vadd.f32 %v5509, %v5720
  %v5722 = vpop.f32.mrb[0].mxu0
  %5723 = vmatprep.mubr.bf16.mxu0 0
  %5724 = vmatmul.mubr.bf16.gmra.mrb[0].mxu0 %v5551
  %v5725 = vpop.f32.mrb[0].mxu0
  %v5726 = vadd.f32 %v5509, %v5725
  %v5727 = vpop.f32.mrb[0].mxu0
  %v5728 = vpop.f32.mrb[0].mxu0
  %v5729 = vadd.f32 %v5509, %v5728
  %v5730 = vpop.f32.mrb[0].mxu0
  %5731 = vmatprep.mubr.bf16.mxu0 0
  %5732 = vmatmul.mubr.bf16.gmra.mrb[0].mxu0 %v5554
  %v5733 = vpop.f32.mrb[0].mxu0
  %v5734 = vadd.f32 %v5509, %v5733
  %v5735 = vpop.f32.mrb[0].mxu0
  %v5736 = vpop.f32.mrb[0].mxu0
  %v5737 = vadd.f32 %v5509, %v5736
  %v5738 = vpop.f32.mrb[0].mxu0
  %5739 = vmatprep.mubr.bf16.mxu0 0
  %5740 = vmatmul.mubr.bf16.gmra.mrb[0].mxu0 %v5557
  %v5741 = vpop.f32.mrb[0].mxu0
  %v5742 = vadd.f32 %v5509, %v5741
  %v5743 = vpop.f32.mrb[0].mxu0
  %v5744 = vpop.f32.mrb[0].mxu0
  %v5745 = vadd.f32 %v5509, %v5744
  %v5746 = vpop.f32.mrb[0].mxu0
  %5747 = vmatprep.mubr.bf16.mxu0 0
  %5748 = vmatmul.mubr.bf16.gmra.mrb[0].mxu0 %v5560
  %v5749 = vpop.f32.mrb[0].mxu0
  %v5750 = vadd.f32 %v5509, %v5749
  %v5751 = vpop.f32.mrb[0].mxu0
  %v5752 = vpop.f32.mrb[0].mxu0
  %v5753 = vadd.f32 %v5509, %v5752
  %v5754 = vpop.f32.mrb[0].mxu0
  %5755 = vmatprep.mubr.bf16.mxu0 0
  %5756 = vmatmul.mubr.bf16.gmra.mrb[0].mxu0 %v5563
  %v5757 = vpop.f32.mrb[0].mxu0
  %v5758 = vadd.f32 %v5509, %v5757
  %v5759 = vpop.f32.mrb[0].mxu0
  %v5760 = vpop.f32.mrb[0].mxu0
  %v5761 = vadd.f32 %v5509, %v5760
  %v5762 = vpop.f32.mrb[0].mxu0
  %5763 = vmatprep.mubr.bf16.mxu0 0
  %5764 = vmatmul.mubr.bf16.gmra.mrb[0].mxu0 %v5566
  %v5765 = vpop.f32.mrb[0].mxu0
  %v5766 = vadd.f32 %v5509, %v5765
  %v5767 = vpop.f32.mrb[0].mxu0
  %v5768 = vpop.f32.mrb[0].mxu0
  %v5769 = vadd.f32 %v5509, %v5768
  %v5770 = vpop.f32.mrb[0].mxu0
  %5771 = vmatprep.mubr.bf16.mxu0 0
  %5772 = vmatmul.mubr.bf16.gmra.mrb[0].mxu0 %v5569
  %v5773 = vpop.f32.mrb[0].mxu0
  %v5774 = vadd.f32 %v5509, %v5773
  %v5775 = vpop.f32.mrb[0].mxu0
  %v5776 = vpop.f32.mrb[0].mxu0
  %v5777 = vadd.f32 %v5509, %v5776
  %v5778 = vpop.f32.mrb[0].mxu0
  %5779 = vmatprep.mubr.bf16.mxu0 0
  %5780 = vmatmul.mubr.bf16.gmra.mrb[0].mxu0 %v5572
  %v5781 = vpop.f32.mrb[0].mxu0
  %v5782 = vadd.f32 %v5509, %v5781
  %v5783 = vpop.f32.mrb[0].mxu0
  %v5784 = vpop.f32.mrb[0].mxu0
  %v5785 = vadd.f32 %v5509, %v5784
  %v5786 = vpop.f32.mrb[0].mxu0
  %5787 = vmatprep.mubr.bf16.mxu0 0
  %5788 = vmatmul.mubr.bf16.gmra.mrb[0].mxu0 %v5575
  %v5789 = vpop.f32.mrb[0].mxu0
  %v5790 = vadd.f32 %v5509, %v5789
  %v5791 = vpop.f32.mrb[0].mxu0
  %v5792 = vpop.f32.mrb[0].mxu0
  %v5793 = vadd.f32 %v5509, %v5792
  %v5794 = vpop.f32.mrb[0].mxu0
  %5795 = vmatprep.mubr.bf16.mxu0 0
  %5796 = vmatmul.mubr.bf16.gmra.mrb[0].mxu0 %v5578
  %v5797 = vpop.f32.mrb[0].mxu0
  %v5798 = vadd.f32 %v5509, %v5797
  %v5799 = vpop.f32.mrb[0].mxu0
  %v5800 = vpop.f32.mrb[0].mxu0
  %v5801 = vadd.f32 %v5509, %v5800
  %v5802 = vpop.f32.mrb[0].mxu0
  %5803 = vmatprep.mubr.bf16.mxu0 0
  %5804 = vmatmul.mubr.bf16.gmra.mrb[0].mxu0 %v5581
  %v5805 = vpop.f32.mrb[0].mxu0
  %v5806 = vadd.f32 %v5509, %v5805
  %v5807 = vpop.f32.mrb[0].mxu0
  %v5808 = vpop.f32.mrb[0].mxu0
  %v5809 = vadd.f32 %v5509, %v5808
  %v5810 = vpop.f32.mrb[0].mxu0
  %5811 = vmatprep.mubr.bf16.mxu0 0
  %5812 = vmatmul.mubr.bf16.gmra.mrb[0].mxu0 %v5584
  %v5813 = vpop.f32.mrb[0].mxu0
  %v5814 = vadd.f32 %v5509, %v5813
  %v5815 = vpop.f32.mrb[0].mxu0
  %v5816 = vpop.f32.mrb[0].mxu0
  %v5817 = vadd.f32 %v5509, %v5816
  %v5818 = vpop.f32.mrb[0].mxu0
  %5819 = vmatprep.mubr.bf16.mxu0 0
  %5820 = vmatmul.mubr.bf16.gmra.mrb[0].mxu0 %v5587
  %v5821 = vpop.f32.mrb[0].mxu0
  %v5822 = vadd.f32 %v5509, %v5821
  %v5823 = vpop.f32.mrb[0].mxu0
  %v5824 = vpop.f32.mrb[0].mxu0
  %v5825 = vadd.f32 %v5509, %v5824
  %v5826 = vpop.f32.mrb[0].mxu0
  %5827 = vmatprep.mubr.bf16.mxu0 0
  %5828 = vmatmul.mubr.bf16.gmra.mrb[0].mxu0 %v5590
  %v5829 = vpop.f32.mrb[0].mxu0
  %v5830 = vadd.f32 %v5509, %v5829
  %v5831 = vpop.f32.mrb[0].mxu0
  %v5832 = vpop.f32.mrb[0].mxu0
  %v5833 = vadd.f32 %v5509, %v5832
  %v5834 = vpop.f32.mrb[0].mxu0
  %5835 = vmatprep.mubr.bf16.mxu0 0
  %5836 = vmatmul.mubr.bf16.gmra.mrb[0].mxu0 %v5593
  %v5837 = vpop.f32.mrb[0].mxu0
  %v5838 = vadd.f32 %v5509, %v5837
  %v5839 = vpop.f32.mrb[0].mxu0
  %v5840 = vpop.f32.mrb[0].mxu0
  %v5841 = vadd.f32 %v5509, %v5840
  %v5842 = vpop.f32.mrb[0].mxu0
  %5843 = vmatprep.mubr.bf16.mxu0 0
  %5844 = vmatmul.mubr.bf16.gmra.mrb[0].mxu0 %v5596
  %v5845 = vpop.f32.mrb[0].mxu0
  %v5846 = vadd.f32 %v5509, %v5845
  %v5847 = vpop.f32.mrb[0].mxu0
  %v5848 = vpop.f32.mrb[0].mxu0
  %v5849 = vadd.f32 %v5509, %v5848
  %v5850 = vpop.f32.mrb[0].mxu0
  %5851 = vmatprep.mubr.bf16.mxu0 0
  %5852 = vmatmul.mubr.bf16.gmra.mrb[0].mxu0 %v5599
  %v5853 = vpop.f32.mrb[0].mxu0
  %v5854 = vadd.f32 %v5509, %v5853
  %v5855 = vpop.f32.mrb[0].mxu0
  %v5856 = vpop.f32.mrb[0].mxu0
  %v5857 = vadd.f32 %v5509, %v5856
  %v5858 = vpop.f32.mrb[0].mxu0
  %5859 = vmatprep.mubr.bf16.mxu0 0
  %5860 = vmatmul.mubr.bf16.gmra.mrb[0].mxu0 %v5602
  %v5861 = vpop.f32.mrb[0].mxu0
  %v5862 = vadd.f32 %v5509, %v5861
  %v5863 = vpop.f32.mrb[0].mxu0
  %v5864 = vpop.f32.mrb[0].mxu0
  %v5865 = vadd.f32 %v5509, %v5864
  %v5866 = vpop.f32.mrb[0].mxu0
  %5867 = vmatprep.mubr.bf16.mxu0 0
  %5868 = vmatmul.mubr.bf16.gmra.mrb[0].mxu0 %v5605
  %v5869 = vpop.f32.mrb[0].mxu0
  %v5870 = vadd.f32 %v5509, %v5869
  %v5871 = vpop.f32.mrb[0].mxu0
  %v5872 = vpop.f32.mrb[0].mxu0
  %v5873 = vadd.f32 %v5509, %v5872
  %v5874 = vpop.f32.mrb[0].mxu0
  %5875 = vmatprep.mubr.bf16.mxu0 0
  %5876 = vmatmul.mubr.bf16.gmra.mrb[0].mxu0 %v5608
  %v5877 = vpop.f32.mrb[0].mxu0
  %v5878 = vadd.f32 %v5509, %v5877
  %v5879 = vpop.f32.mrb[0].mxu0
  %v5880 = vpop.f32.mrb[0].mxu0
  %v5881 = vadd.f32 %v5509, %v5880
  %v5882 = vpop.f32.mrb[0].mxu0
  %5883 = vmatprep.mubr.bf16.mxu0 0
  %5884 = vmatmul.mubr.bf16.gmra.mrb[0].mxu0 %v5611
  %v5885 = vpop.f32.mrb[0].mxu0
  %v5886 = vadd.f32 %v5509, %v5885
  %v5887 = vpop.f32.mrb[0].mxu0
  %v5888 = vpop.f32.mrb[0].mxu0
  %v5889 = vadd.f32 %v5509, %v5888
  %v5890 = vpop.f32.mrb[0].mxu0
  %5891 = vmatprep.mubr.bf16.mxu0 0
  %5892 = vmatmul.mubr.bf16.gmra.mrb[0].mxu0 %v5614
  %v5893 = vpop.f32.mrb[0].mxu0
  %v5894 = vadd.f32 %v5509, %v5893
  %v5895 = vpop.f32.mrb[0].mxu0
  %v5896 = vpop.f32.mrb[0].mxu0
  %v5897 = vadd.f32 %v5509, %v5896
  %v5898 = vpop.f32.mrb[0].mxu0
  %5899 = vmatprep.mubr.bf16.mxu0 0
  %5900 = vmatmul.mubr.bf16.gmra.mrb[0].mxu0 %v5617
  %v5901 = vpop.f32.mrb[0].mxu0
  %v5902 = vadd.f32 %v5509, %v5901
  %v5903 = vpop.f32.mrb[0].mxu0
  %v5904 = vpop.f32.mrb[0].mxu0
  %v5905 = vadd.f32 %v5509, %v5904
  %v5906 = vpop.f32.mrb[0].mxu0
  %5907 = vdwg.mxu0
  %vm5908 = vcmp.ge.f32.partialorder %v5654, 0.0
  %vm5909 = vcmp.ge.f32.partialorder %v5657, 0.0
  %vm5910 = vcmp.ge.f32.partialorder %v5662, 0.0
  %vm5911 = vcmp.ge.f32.partialorder %v5665, 0.0
  %vm5912 = vcmp.ge.f32.partialorder %v5670, 0.0
  %vm5913 = vcmp.ge.f32.partialorder %v5673, 0.0
  %vm5914 = vcmp.ge.f32.partialorder %v5678, 0.0
  %vm5915 = vcmp.ge.f32.partialorder %v5681, 0.0
  %vm5916 = vcmp.ge.f32.partialorder %v5686, 0.0
  %vm5917 = vcmp.ge.f32.partialorder %v5689, 0.0
  %vm5918 = vcmp.ge.f32.partialorder %v5694, 0.0
  %vm5919 = vcmp.ge.f32.partialorder %v5697, 0.0
  %vm5920 = vcmp.ge.f32.partialorder %v5702, 0.0
  %vm5921 = vcmp.ge.f32.partialorder %v5705, 0.0
  %vm5922 = vcmp.ge.f32.partialorder %v5710, 0.0
  %vm5923 = vcmp.ge.f32.partialorder %v5713, 0.0
  %vm5924 = vcmp.ge.f32.partialorder %v5718, 0.0
  %vm5925 = vcmp.ge.f32.partialorder %v5721, 0.0
  %vm5926 = vcmp.ge.f32.partialorder %v5726, 0.0
  %vm5927 = vcmp.ge.f32.partialorder %v5729, 0.0
  %vm5928 = vcmp.ge.f32.partialorder %v5734, 0.0
  %vm5929 = vcmp.ge.f32.partialorder %v5737, 0.0
  %vm5930 = vcmp.ge.f32.partialorder %v5742, 0.0
  %vm5931 = vcmp.ge.f32.partialorder %v5745, 0.0
  %vm5932 = vcmp.ge.f32.partialorder %v5750, 0.0
  %vm5933 = vcmp.ge.f32.partialorder %v5753, 0.0
  %vm5934 = vcmp.ge.f32.partialorder %v5758, 0.0
  %vm5935 = vcmp.ge.f32.partialorder %v5761, 0.0
  %vm5936 = vcmp.ge.f32.partialorder %v5766, 0.0
  %vm5937 = vcmp.ge.f32.partialorder %v5769, 0.0
  %vm5938 = vcmp.ge.f32.partialorder %v5774, 0.0
  %vm5939 = vcmp.ge.f32.partialorder %v5777, 0.0
  %vm5940 = vcmp.ge.f32.partialorder %v5782, 0.0
  %vm5941 = vcmp.ge.f32.partialorder %v5785, 0.0
  %vm5942 = vcmp.ge.f32.partialorder %v5790, 0.0
  %vm5943 = vcmp.ge.f32.partialorder %v5793, 0.0
  %vm5944 = vcmp.ge.f32.partialorder %v5798, 0.0
  %vm5945 = vcmp.ge.f32.partialorder %v5801, 0.0
  %vm5946 = vcmp.ge.f32.partialorder %v5806, 0.0
  %vm5947 = vcmp.ge.f32.partialorder %v5809, 0.0
  %vm5948 = vcmp.ge.f32.partialorder %v5814, 0.0
  %vm5949 = vcmp.ge.f32.partialorder %v5817, 0.0
  %vm5950 = vcmp.ge.f32.partialorder %v5822, 0.0
  %vm5951 = vcmp.ge.f32.partialorder %v5825, 0.0
  %vm5952 = vcmp.ge.f32.partialorder %v5830, 0.0
  %vm5953 = vcmp.ge.f32.partialorder %v5833, 0.0
  %vm5954 = vcmp.ge.f32.partialorder %v5838, 0.0
  %vm5955 = vcmp.ge.f32.partialorder %v5841, 0.0
  %vm5956 = vcmp.ge.f32.partialorder %v5846, 0.0
  %vm5957 = vcmp.ge.f32.partialorder %v5849, 0.0
  %vm5958 = vcmp.ge.f32.partialorder %v5854, 0.0
  %vm5959 = vcmp.ge.f32.partialorder %v5857, 0.0
  %vm5960 = vcmp.ge.f32.partialorder %v5862, 0.0
  %vm5961 = vcmp.ge.f32.partialorder %v5865, 0.0
  %vm5962 = vcmp.ge.f32.partialorder %v5870, 0.0
  %vm5963 = vcmp.ge.f32.partialorder %v5873, 0.0
  %vm5964 = vcmp.ge.f32.partialorder %v5878, 0.0
  %vm5965 = vcmp.ge.f32.partialorder %v5881, 0.0
  %vm5966 = vcmp.ge.f32.partialorder %v5886, 0.0
  %vm5967 = vcmp.ge.f32.partialorder %v5889, 0.0
  %vm5968 = vcmp.ge.f32.partialorder %v5894, 0.0
  %vm5969 = vcmp.ge.f32.partialorder %v5897, 0.0
  %vm5970 = vcmp.ge.f32.partialorder %v5902, 0.0
  %vm5971 = vcmp.ge.f32.partialorder %v5905, 0.0
  %v5972 = vmul.f32 %v5654, 0.2
  %v5973 = vmul.f32 %v5657, 0.2
  %v5974 = vmul.f32 %v5662, 0.2
  %v5975 = vmul.f32 %v5665, 0.2
  %v5976 = vmul.f32 %v5670, 0.2
  %v5977 = vmul.f32 %v5673, 0.2
  %v5978 = vmul.f32 %v5678, 0.2
  %v5979 = vmul.f32 %v5681, 0.2
  %v5980 = vmul.f32 %v5686, 0.2
  %v5981 = vmul.f32 %v5689, 0.2
  %v5982 = vmul.f32 %v5694, 0.2
  %v5983 = vmul.f32 %v5697, 0.2
  %v5984 = vmul.f32 %v5702, 0.2
  %v5985 = vmul.f32 %v5705, 0.2
  %v5986 = vmul.f32 %v5710, 0.2
  %v5987 = vmul.f32 %v5713, 0.2
  %v5988 = vmul.f32 %v5718, 0.2
  %v5989 = vmul.f32 %v5721, 0.2
  %v5990 = vmul.f32 %v5726, 0.2
  %v5991 = vmul.f32 %v5729, 0.2
  %v5992 = vmul.f32 %v5734, 0.2
  %v5993 = vmul.f32 %v5737, 0.2
  %v5994 = vmul.f32 %v5742, 0.2
  %v5995 = vmul.f32 %v5745, 0.2
  %v5996 = vmul.f32 %v5750, 0.2
  %v5997 = vmul.f32 %v5753, 0.2
  %v5998 = vmul.f32 %v5758, 0.2
  %v5999 = vmul.f32 %v5761, 0.2
  %v6000 = vmul.f32 %v5766, 0.2
  %v6001 = vmul.f32 %v5769, 0.2
  %v6002 = vmul.f32 %v5774, 0.2
  %v6003 = vmul.f32 %v5777, 0.2
  %v6004 = vmul.f32 %v5782, 0.2
  %v6005 = vmul.f32 %v5785, 0.2
  %v6006 = vmul.f32 %v5790, 0.2
  %v6007 = vmul.f32 %v5793, 0.2
  %v6008 = vmul.f32 %v5798, 0.2
  %v6009 = vmul.f32 %v5801, 0.2
  %v6010 = vmul.f32 %v5806, 0.2
  %v6011 = vmul.f32 %v5809, 0.2
  %v6012 = vmul.f32 %v5814, 0.2
  %v6013 = vmul.f32 %v5817, 0.2
  %v6014 = vmul.f32 %v5822, 0.2
  %v6015 = vmul.f32 %v5825, 0.2
  %v6016 = vmul.f32 %v5830, 0.2
  %v6017 = vmul.f32 %v5833, 0.2
  %v6018 = vmul.f32 %v5838, 0.2
  %v6019 = vmul.f32 %v5841, 0.2
  %v6020 = vmul.f32 %v5846, 0.2
  %v6021 = vmul.f32 %v5849, 0.2
  %v6022 = vmul.f32 %v5854, 0.2
  %v6023 = vmul.f32 %v5857, 0.2
  %v6024 = vmul.f32 %v5862, 0.2
  %v6025 = vmul.f32 %v5865, 0.2
  %v6026 = vmul.f32 %v5870, 0.2
  %v6027 = vmul.f32 %v5873, 0.2
  %v6028 = vmul.f32 %v5878, 0.2
  %v6029 = vmul.f32 %v5881, 0.2
  %v6030 = vmul.f32 %v5886, 0.2
  %v6031 = vmul.f32 %v5889, 0.2
  %v6032 = vmul.f32 %v5894, 0.2
  %v6033 = vmul.f32 %v5897, 0.2
  %v6034 = vmul.f32 %v5902, 0.2
  %v6035 = vmul.f32 %v5905, 0.2
  %v6036 = vsel %vm5908, %v5654, %v5972
  %v6037 = vsel %vm5909, %v5657, %v5973
  %v6038 = vsel %vm5910, %v5662, %v5974
  %v6039 = vsel %vm5911, %v5665, %v5975
  %v6040 = vsel %vm5912, %v5670, %v5976
  %v6041 = vsel %vm5913, %v5673, %v5977
  %v6042 = vsel %vm5914, %v5678, %v5978
  %v6043 = vsel %vm5915, %v5681, %v5979
  %v6044 = vsel %vm5916, %v5686, %v5980
  %v6045 = vsel %vm5917, %v5689, %v5981
  %v6046 = vsel %vm5918, %v5694, %v5982
  %v6047 = vsel %vm5919, %v5697, %v5983
  %v6048 = vsel %vm5920, %v5702, %v5984
  %v6049 = vsel %vm5921, %v5705, %v5985
  %v6050 = vsel %vm5922, %v5710, %v5986
  %v6051 = vsel %vm5923, %v5713, %v5987
  %v6052 = vsel %vm5924, %v5718, %v5988
  %v6053 = vsel %vm5925, %v5721, %v5989
  %v6054 = vsel %vm5926, %v5726, %v5990
  %v6055 = vsel %vm5927, %v5729, %v5991
  %v6056 = vsel %vm5928, %v5734, %v5992
  %v6057 = vsel %vm5929, %v5737, %v5993
  %v6058 = vsel %vm5930, %v5742, %v5994
  %v6059 = vsel %vm5931, %v5745, %v5995
  %v6060 = vsel %vm5932, %v5750, %v5996
  %v6061 = vsel %vm5933, %v5753, %v5997
  %v6062 = vsel %vm5934, %v5758, %v5998
  %v6063 = vsel %vm5935, %v5761, %v5999
  %v6064 = vsel %vm5936, %v5766, %v6000
  %v6065 = vsel %vm5937, %v5769, %v6001
  %v6066 = vsel %vm5938, %v5774, %v6002
  %v6067 = vsel %vm5939, %v5777, %v6003
  %v6068 = vsel %vm5940, %v5782, %v6004
  %v6069 = vsel %vm5941, %v5785, %v6005
  %v6070 = vsel %vm5942, %v5790, %v6006
  %v6071 = vsel %vm5943, %v5793, %v6007
  %v6072 = vsel %vm5944, %v5798, %v6008
  %v6073 = vsel %vm5945, %v5801, %v6009
  %v6074 = vsel %vm5946, %v5806, %v6010
  %v6075 = vsel %vm5947, %v5809, %v6011
  %v6076 = vsel %vm5948, %v5814, %v6012
  %v6077 = vsel %vm5949, %v5817, %v6013
  %v6078 = vsel %vm5950, %v5822, %v6014
  %v6079 = vsel %vm5951, %v5825, %v6015
  %v6080 = vsel %vm5952, %v5830, %v6016
  %v6081 = vsel %vm5953, %v5833, %v6017
  %v6082 = vsel %vm5954, %v5838, %v6018
  %v6083 = vsel %vm5955, %v5841, %v6019
  %v6084 = vsel %vm5956, %v5846, %v6020
  %v6085 = vsel %vm5957, %v5849, %v6021
  %v6086 = vsel %vm5958, %v5854, %v6022
  %v6087 = vsel %vm5959, %v5857, %v6023
  %v6088 = vsel %vm5960, %v5862, %v6024
  %v6089 = vsel %vm5961, %v5865, %v6025
  %v6090 = vsel %vm5962, %v5870, %v6026
  %v6091 = vsel %vm5963, %v5873, %v6027
  %v6092 = vsel %vm5964, %v5878, %v6028
  %v6093 = vsel %vm5965, %v5881, %v6029
  %v6094 = vsel %vm5966, %v5886, %v6030
  %v6095 = vsel %vm5967, %v5889, %v6031
  %v6096 = vsel %vm5968, %v5894, %v6032
  %v6097 = vsel %vm5969, %v5897, %v6033
  %v6098 = vsel %vm5970, %v5902, %v6034
  %v6099 = vsel %vm5971, %v5905, %v6035
  %v6100 = vld [vmem:[%s59] sm:$0xf]
  %v6101 = vld [vmem:[%s59 + $0x4] sm:$0xf]
  %v6102 = vld [vmem:[%s59 + $0x8] sm:$0xf]
  %v6103 = vld [vmem:[%s59 + $0xc] sm:$0xf]
  %v6104 = vld [vmem:[%s59 + $0x10] sm:$0xf]
  %v6105 = vld [vmem:[%s59 + $0x14] sm:$0xf]
  %v6106 = vld [vmem:[%s59 + $0x18] sm:$0xf]
  %v6107 = vld [vmem:[%s59 + $0x1c] sm:$0xf]
  %v6108 = vpack.c.bf16 %v6037, %v6036
  %v6109 = vpack.c.bf16 %v6039, %v6038
  %v6110 = vpack.c.bf16 %v6041, %v6040
  %v6111 = vpack.c.bf16 %v6043, %v6042
  %v6112 = vpack.c.bf16 %v6045, %v6044
  %v6113 = vpack.c.bf16 %v6047, %v6046
  %v6114 = vpack.c.bf16 %v6049, %v6048
  %v6115 = vpack.c.bf16 %v6051, %v6050
  %v6116 = vpack.c.bf16 %v6053, %v6052
  %v6117 = vpack.c.bf16 %v6055, %v6054
  %v6118 = vpack.c.bf16 %v6057, %v6056
  %v6119 = vpack.c.bf16 %v6059, %v6058
  %v6120 = vpack.c.bf16 %v6061, %v6060
  %v6121 = vpack.c.bf16 %v6063, %v6062
  %v6122 = vpack.c.bf16 %v6065, %v6064
  %v6123 = vpack.c.bf16 %v6067, %v6066
  %v6124 = vpack.c.bf16 %v6069, %v6068
  %v6125 = vpack.c.bf16 %v6071, %v6070
  %v6126 = vpack.c.bf16 %v6073, %v6072
  %v6127 = vpack.c.bf16 %v6075, %v6074
  %v6128 = vpack.c.bf16 %v6077, %v6076
  %v6129 = vpack.c.bf16 %v6079, %v6078
  %v6130 = vpack.c.bf16 %v6081, %v6080
  %v6131 = vpack.c.bf16 %v6083, %v6082
  %v6132 = vpack.c.bf16 %v6085, %v6084
  %v6133 = vpack.c.bf16 %v6087, %v6086
  %v6134 = vpack.c.bf16 %v6089, %v6088
  %v6135 = vpack.c.bf16 %v6091, %v6090
  %v6136 = vpack.c.bf16 %v6093, %v6092
  %v6137 = vpack.c.bf16 %v6095, %v6094
  %v6138 = vpack.c.bf16 %v6097, %v6096
  %v6139 = vpack.c.bf16 %v6099, %v6098
  %v6140 = vld [vmem:[%s61] sm:$0x1]
  %v6142 = vlaneseq
  %v6143 = vshrl.u32 %v6142, 7
  %v6144 = vsub.s32 0, %v6143
  %v6145 = vrot.slane %v6140, %v6144
  %v6155 = vunpack.c.l.b16 %v6100
  %v6156 = vunpack.c.l.b16 %v6101
  %v6157 = vunpack.c.l.b16 %v6102
  %v6158 = vunpack.c.l.b16 %v6103
  %v6159 = vunpack.c.l.b16 %v6104
  %v6160 = vunpack.c.l.b16 %v6105
  %v6161 = vunpack.c.l.b16 %v6106
  %v6162 = vunpack.c.l.b16 %v6107
  %v6163 = vpack.c.b16 %v6156, %v6155
  %v6164 = vpack.c.b16 %v6158, %v6157
  %v6165 = vpack.c.b16 %v6160, %v6159
  %v6166 = vpack.c.b16 %v6162, %v6161
  %v6172 = vsel %vm280, %v6108, 0
  %v6175 = vsel %vm280, %v6109, 0
  %v6178 = vsel %vm280, %v6110, 0
  %v6181 = vsel %vm280, %v6111, 0
  %v6184 = vsel %vm280, %v6112, 0
  %v6187 = vsel %vm280, %v6113, 0
  %v6190 = vsel %vm280, %v6114, 0
  %v6193 = vsel %vm280, %v6115, 0
  %v6196 = vsel %vm280, %v6116, 0
  %v6199 = vsel %vm280, %v6117, 0
  %v6202 = vsel %vm280, %v6118, 0
  %v6205 = vsel %vm280, %v6119, 0
  %v6208 = vsel %vm280, %v6120, 0
  %v6211 = vsel %vm280, %v6121, 0
  %v6214 = vsel %vm280, %v6122, 0
  %v6217 = vsel %vm280, %v6123, 0
  %v6220 = vsel %vm280, %v6124, 0
  %v6223 = vsel %vm280, %v6125, 0
  %v6226 = vsel %vm280, %v6126, 0
  %v6229 = vsel %vm280, %v6127, 0
  %v6232 = vsel %vm280, %v6128, 0
  %v6235 = vsel %vm280, %v6129, 0
  %v6238 = vsel %vm280, %v6130, 0
  %v6241 = vsel %vm280, %v6131, 0
  %v6244 = vsel %vm280, %v6132, 0
  %v6247 = vsel %vm280, %v6133, 0
  %v6250 = vsel %vm280, %v6134, 0
  %v6253 = vsel %vm280, %v6135, 0
  %v6256 = vsel %vm280, %v6136, 0
  %v6259 = vsel %vm280, %v6137, 0
  %v6262 = vsel %vm280, %v6138, 0
  %v6265 = vsel %vm280, %v6139, 0
  %6267 = vmatprep.subr.bf16.mxu0 0
  %6268 = vmatpush1.bf16.msra.mxu0 %v6163
  %6269 = vmatprep.subr.bf16.mxu0 0
  %6270 = vmatpush1.bf16.msra.mxu0 %v6164
  %6271 = vmatprep.subr.bf16.mxu0 0
  %6272 = vmatpush1.bf16.msra.mxu0 %v6165
  %6273 = vmatprep.subr.bf16.mxu0 0
  %6274 = vmatpush1.bf16.msra.mxu0 %v6166
  %6275 = vmatprep.subr.bf16.mxu0 0
  %6276 = vmatpush1.bf16.msra.mxu0 0
  %6277 = vmatprep.subr.bf16.mxu0 0
  %6278 = vmatpush1.bf16.msra.mxu0 0
  %6279 = vmatprep.subr.bf16.mxu0 0
  %6280 = vmatpush1.bf16.msra.mxu0 0
  %6281 = vmatprep.subr.bf16.mxu0 0
  %6282 = vmatpush1.bf16.msra.mxu0 0
  %6283 = vmatprep.subr.bf16.mxu0 0
  %6284 = vmatpush1.bf16.msra.mxu0 0
  %6285 = vmatprep.subr.bf16.mxu0 0
  %6286 = vmatpush1.bf16.msra.mxu0 0
  %6287 = vmatprep.subr.bf16.mxu0 0
  %6288 = vmatpush1.bf16.msra.mxu0 0
  %6289 = vmatprep.subr.bf16.mxu0 0
  %6290 = vmatpush1.bf16.msra.mxu0 0
  %6291 = vmatprep.subr.bf16.mxu0 0
  %6292 = vmatpush1.bf16.msra.mxu0 0
  %6293 = vmatprep.subr.bf16.mxu0 0
  %6294 = vmatpush1.bf16.msra.mxu0 0
  %6295 = vmatprep.subr.bf16.mxu0 0
  %6296 = vmatpush1.bf16.msra.mxu0 0
  %6297 = vmatprep.subr.bf16.mxu0 0
  %6298 = vmatpush1.bf16.msra.mxu0 0
  %6299 = vmatprep.mubr.bf16.mxu0 0
  %6300 = vmatmul.mubr.bf16.gmra.mrb[0].mxu0 %v6172
  %v6301 = vpop.f32.mrb[0].mxu0
  %v6302 = vadd.f32 %v6145, %v6301
  %v6303 = vpop.f32.mrb[0].mxu0
  %v6304 = vpop.f32.mrb[0].mxu0
  %v6305 = vadd.f32 %v6145, %v6304
  %v6306 = vpop.f32.mrb[0].mxu0
  %6307 = vmatprep.mubr.bf16.mxu0 0
  %6308 = vmatmul.mubr.bf16.gmra.mrb[0].mxu0 %v6175
  %v6309 = vpop.f32.mrb[0].mxu0
  %v6310 = vadd.f32 %v6145, %v6309
  %v6311 = vpop.f32.mrb[0].mxu0
  %v6312 = vpop.f32.mrb[0].mxu0
  %v6313 = vadd.f32 %v6145, %v6312
  %v6314 = vpop.f32.mrb[0].mxu0
  %6315 = vmatprep.mubr.bf16.mxu0 0
  %6316 = vmatmul.mubr.bf16.gmra.mrb[0].mxu0 %v6178
  %v6317 = vpop.f32.mrb[0].mxu0
  %v6318 = vadd.f32 %v6145, %v6317
  %v6319 = vpop.f32.mrb[0].mxu0
  %v6320 = vpop.f32.mrb[0].mxu0
  %v6321 = vadd.f32 %v6145, %v6320
  %v6322 = vpop.f32.mrb[0].mxu0
  %6323 = vmatprep.mubr.bf16.mxu0 0
  %6324 = vmatmul.mubr.bf16.gmra.mrb[0].mxu0 %v6181
  %v6325 = vpop.f32.mrb[0].mxu0
  %v6326 = vadd.f32 %v6145, %v6325
  %v6327 = vpop.f32.mrb[0].mxu0
  %v6328 = vpop.f32.mrb[0].mxu0
  %v6329 = vadd.f32 %v6145, %v6328
  %v6330 = vpop.f32.mrb[0].mxu0
  %6331 = vmatprep.mubr.bf16.mxu0 0
  %6332 = vmatmul.mubr.bf16.gmra.mrb[0].mxu0 %v6184
  %v6333 = vpop.f32.mrb[0].mxu0
  %v6334 = vadd.f32 %v6145, %v6333
  %v6335 = vpop.f32.mrb[0].mxu0
  %v6336 = vpop.f32.mrb[0].mxu0
  %v6337 = vadd.f32 %v6145, %v6336
  %v6338 = vpop.f32.mrb[0].mxu0
  %6339 = vmatprep.mubr.bf16.mxu0 0
  %6340 = vmatmul.mubr.bf16.gmra.mrb[0].mxu0 %v6187
  %v6341 = vpop.f32.mrb[0].mxu0
  %v6342 = vadd.f32 %v6145, %v6341
  %v6343 = vpop.f32.mrb[0].mxu0
  %v6344 = vpop.f32.mrb[0].mxu0
  %v6345 = vadd.f32 %v6145, %v6344
  %v6346 = vpop.f32.mrb[0].mxu0
  %6347 = vmatprep.mubr.bf16.mxu0 0
  %6348 = vmatmul.mubr.bf16.gmra.mrb[0].mxu0 %v6190
  %v6349 = vpop.f32.mrb[0].mxu0
  %v6350 = vadd.f32 %v6145, %v6349
  %v6351 = vpop.f32.mrb[0].mxu0
  %v6352 = vpop.f32.mrb[0].mxu0
  %v6353 = vadd.f32 %v6145, %v6352
  %v6354 = vpop.f32.mrb[0].mxu0
  %6355 = vmatprep.mubr.bf16.mxu0 0
  %6356 = vmatmul.mubr.bf16.gmra.mrb[0].mxu0 %v6193
  %v6357 = vpop.f32.mrb[0].mxu0
  %v6358 = vadd.f32 %v6145, %v6357
  %v6359 = vpop.f32.mrb[0].mxu0
  %v6360 = vpop.f32.mrb[0].mxu0
  %v6361 = vadd.f32 %v6145, %v6360
  %v6362 = vpop.f32.mrb[0].mxu0
  %6363 = vmatprep.mubr.bf16.mxu0 0
  %6364 = vmatmul.mubr.bf16.gmra.mrb[0].mxu0 %v6196
  %v6365 = vpop.f32.mrb[0].mxu0
  %v6366 = vadd.f32 %v6145, %v6365
  %v6367 = vpop.f32.mrb[0].mxu0
  %v6368 = vpop.f32.mrb[0].mxu0
  %v6369 = vadd.f32 %v6145, %v6368
  %v6370 = vpop.f32.mrb[0].mxu0
  %6371 = vmatprep.mubr.bf16.mxu0 0
  %6372 = vmatmul.mubr.bf16.gmra.mrb[0].mxu0 %v6199
  %v6373 = vpop.f32.mrb[0].mxu0
  %v6374 = vadd.f32 %v6145, %v6373
  %v6375 = vpop.f32.mrb[0].mxu0
  %v6376 = vpop.f32.mrb[0].mxu0
  %v6377 = vadd.f32 %v6145, %v6376
  %v6378 = vpop.f32.mrb[0].mxu0
  %6379 = vmatprep.mubr.bf16.mxu0 0
  %6380 = vmatmul.mubr.bf16.gmra.mrb[0].mxu0 %v6202
  %v6381 = vpop.f32.mrb[0].mxu0
  %v6382 = vadd.f32 %v6145, %v6381
  %v6383 = vpop.f32.mrb[0].mxu0
  %v6384 = vpop.f32.mrb[0].mxu0
  %v6385 = vadd.f32 %v6145, %v6384
  %v6386 = vpop.f32.mrb[0].mxu0
  %6387 = vmatprep.mubr.bf16.mxu0 0
  %6388 = vmatmul.mubr.bf16.gmra.mrb[0].mxu0 %v6205
  %v6389 = vpop.f32.mrb[0].mxu0
  %v6390 = vadd.f32 %v6145, %v6389
  %v6391 = vpop.f32.mrb[0].mxu0
  %v6392 = vpop.f32.mrb[0].mxu0
  %v6393 = vadd.f32 %v6145, %v6392
  %v6394 = vpop.f32.mrb[0].mxu0
  %6395 = vmatprep.mubr.bf16.mxu0 0
  %6396 = vmatmul.mubr.bf16.gmra.mrb[0].mxu0 %v6208
  %v6397 = vpop.f32.mrb[0].mxu0
  %v6398 = vadd.f32 %v6145, %v6397
  %v6399 = vpop.f32.mrb[0].mxu0
  %v6400 = vpop.f32.mrb[0].mxu0
  %v6401 = vadd.f32 %v6145, %v6400
  %v6402 = vpop.f32.mrb[0].mxu0
  %6403 = vmatprep.mubr.bf16.mxu0 0
  %6404 = vmatmul.mubr.bf16.gmra.mrb[0].mxu0 %v6211
  %v6405 = vpop.f32.mrb[0].mxu0
  %v6406 = vadd.f32 %v6145, %v6405
  %v6407 = vpop.f32.mrb[0].mxu0
  %v6408 = vpop.f32.mrb[0].mxu0
  %v6409 = vadd.f32 %v6145, %v6408
  %v6410 = vpop.f32.mrb[0].mxu0
  %6411 = vmatprep.mubr.bf16.mxu0 0
  %6412 = vmatmul.mubr.bf16.gmra.mrb[0].mxu0 %v6214
  %v6413 = vpop.f32.mrb[0].mxu0
  %v6414 = vadd.f32 %v6145, %v6413
  %v6415 = vpop.f32.mrb[0].mxu0
  %v6416 = vpop.f32.mrb[0].mxu0
  %v6417 = vadd.f32 %v6145, %v6416
  %v6418 = vpop.f32.mrb[0].mxu0
  %6419 = vmatprep.mubr.bf16.mxu0 0
  %6420 = vmatmul.mubr.bf16.gmra.mrb[0].mxu0 %v6217
  %v6421 = vpop.f32.mrb[0].mxu0
  %v6422 = vadd.f32 %v6145, %v6421
  %v6423 = vpop.f32.mrb[0].mxu0
  %v6424 = vpop.f32.mrb[0].mxu0
  %v6425 = vadd.f32 %v6145, %v6424
  %v6426 = vpop.f32.mrb[0].mxu0
  %6427 = vmatprep.mubr.bf16.mxu0 0
  %6428 = vmatmul.mubr.bf16.gmra.mrb[0].mxu0 %v6220
  %v6429 = vpop.f32.mrb[0].mxu0
  %v6430 = vadd.f32 %v6145, %v6429
  %v6431 = vpop.f32.mrb[0].mxu0
  %v6432 = vpop.f32.mrb[0].mxu0
  %v6433 = vadd.f32 %v6145, %v6432
  %v6434 = vpop.f32.mrb[0].mxu0
  %6435 = vmatprep.mubr.bf16.mxu0 0
  %6436 = vmatmul.mubr.bf16.gmra.mrb[0].mxu0 %v6223
  %v6437 = vpop.f32.mrb[0].mxu0
  %v6438 = vadd.f32 %v6145, %v6437
  %v6439 = vpop.f32.mrb[0].mxu0
  %v6440 = vpop.f32.mrb[0].mxu0
  %v6441 = vadd.f32 %v6145, %v6440
  %v6442 = vpop.f32.mrb[0].mxu0
  %6443 = vmatprep.mubr.bf16.mxu0 0
  %6444 = vmatmul.mubr.bf16.gmra.mrb[0].mxu0 %v6226
  %v6445 = vpop.f32.mrb[0].mxu0
  %v6446 = vadd.f32 %v6145, %v6445
  %v6447 = vpop.f32.mrb[0].mxu0
  %v6448 = vpop.f32.mrb[0].mxu0
  %v6449 = vadd.f32 %v6145, %v6448
  %v6450 = vpop.f32.mrb[0].mxu0
  %6451 = vmatprep.mubr.bf16.mxu0 0
  %6452 = vmatmul.mubr.bf16.gmra.mrb[0].mxu0 %v6229
  %v6453 = vpop.f32.mrb[0].mxu0
  %v6454 = vadd.f32 %v6145, %v6453
  %v6455 = vpop.f32.mrb[0].mxu0
  %v6456 = vpop.f32.mrb[0].mxu0
  %v6457 = vadd.f32 %v6145, %v6456
  %v6458 = vpop.f32.mrb[0].mxu0
  %6459 = vmatprep.mubr.bf16.mxu0 0
  %6460 = vmatmul.mubr.bf16.gmra.mrb[0].mxu0 %v6232
  %v6461 = vpop.f32.mrb[0].mxu0
  %v6462 = vadd.f32 %v6145, %v6461
  %v6463 = vpop.f32.mrb[0].mxu0
  %v6464 = vpop.f32.mrb[0].mxu0
  %v6465 = vadd.f32 %v6145, %v6464
  %v6466 = vpop.f32.mrb[0].mxu0
  %6467 = vmatprep.mubr.bf16.mxu0 0
  %6468 = vmatmul.mubr.bf16.gmra.mrb[0].mxu0 %v6235
  %v6469 = vpop.f32.mrb[0].mxu0
  %v6470 = vadd.f32 %v6145, %v6469
  %v6471 = vpop.f32.mrb[0].mxu0
  %v6472 = vpop.f32.mrb[0].mxu0
  %v6473 = vadd.f32 %v6145, %v6472
  %v6474 = vpop.f32.mrb[0].mxu0
  %6475 = vmatprep.mubr.bf16.mxu0 0
  %6476 = vmatmul.mubr.bf16.gmra.mrb[0].mxu0 %v6238
  %v6477 = vpop.f32.mrb[0].mxu0
  %v6478 = vadd.f32 %v6145, %v6477
  %v6479 = vpop.f32.mrb[0].mxu0
  %v6480 = vpop.f32.mrb[0].mxu0
  %v6481 = vadd.f32 %v6145, %v6480
  %v6482 = vpop.f32.mrb[0].mxu0
  %6483 = vmatprep.mubr.bf16.mxu0 0
  %6484 = vmatmul.mubr.bf16.gmra.mrb[0].mxu0 %v6241
  %v6485 = vpop.f32.mrb[0].mxu0
  %v6486 = vadd.f32 %v6145, %v6485
  %v6487 = vpop.f32.mrb[0].mxu0
  %v6488 = vpop.f32.mrb[0].mxu0
  %v6489 = vadd.f32 %v6145, %v6488
  %v6490 = vpop.f32.mrb[0].mxu0
  %6491 = vmatprep.mubr.bf16.mxu0 0
  %6492 = vmatmul.mubr.bf16.gmra.mrb[0].mxu0 %v6244
  %v6493 = vpop.f32.mrb[0].mxu0
  %v6494 = vadd.f32 %v6145, %v6493
  %v6495 = vpop.f32.mrb[0].mxu0
  %v6496 = vpop.f32.mrb[0].mxu0
  %v6497 = vadd.f32 %v6145, %v6496
  %v6498 = vpop.f32.mrb[0].mxu0
  %6499 = vmatprep.mubr.bf16.mxu0 0
  %6500 = vmatmul.mubr.bf16.gmra.mrb[0].mxu0 %v6247
  %v6501 = vpop.f32.mrb[0].mxu0
  %v6502 = vadd.f32 %v6145, %v6501
  %v6503 = vpop.f32.mrb[0].mxu0
  %v6504 = vpop.f32.mrb[0].mxu0
  %v6505 = vadd.f32 %v6145, %v6504
  %v6506 = vpop.f32.mrb[0].mxu0
  %6507 = vmatprep.mubr.bf16.mxu0 0
  %6508 = vmatmul.mubr.bf16.gmra.mrb[0].mxu0 %v6250
  %v6509 = vpop.f32.mrb[0].mxu0
  %v6510 = vadd.f32 %v6145, %v6509
  %v6511 = vpop.f32.mrb[0].mxu0
  %v6512 = vpop.f32.mrb[0].mxu0
  %v6513 = vadd.f32 %v6145, %v6512
  %v6514 = vpop.f32.mrb[0].mxu0
  %6515 = vmatprep.mubr.bf16.mxu0 0
  %6516 = vmatmul.mubr.bf16.gmra.mrb[0].mxu0 %v6253
  %v6517 = vpop.f32.mrb[0].mxu0
  %v6518 = vadd.f32 %v6145, %v6517
  %v6519 = vpop.f32.mrb[0].mxu0
  %v6520 = vpop.f32.mrb[0].mxu0
  %v6521 = vadd.f32 %v6145, %v6520
  %v6522 = vpop.f32.mrb[0].mxu0
  %6523 = vmatprep.mubr.bf16.mxu0 0
  %6524 = vmatmul.mubr.bf16.gmra.mrb[0].mxu0 %v6256
  %v6525 = vpop.f32.mrb[0].mxu0
  %v6526 = vadd.f32 %v6145, %v6525
  %v6527 = vpop.f32.mrb[0].mxu0
  %v6528 = vpop.f32.mrb[0].mxu0
  %v6529 = vadd.f32 %v6145, %v6528
  %v6530 = vpop.f32.mrb[0].mxu0
  %6531 = vmatprep.mubr.bf16.mxu0 0
  %6532 = vmatmul.mubr.bf16.gmra.mrb[0].mxu0 %v6259
  %v6533 = vpop.f32.mrb[0].mxu0
  %v6534 = vadd.f32 %v6145, %v6533
  %v6535 = vpop.f32.mrb[0].mxu0
  %v6536 = vpop.f32.mrb[0].mxu0
  %v6537 = vadd.f32 %v6145, %v6536
  %v6538 = vpop.f32.mrb[0].mxu0
  %6539 = vmatprep.mubr.bf16.mxu0 0
  %6540 = vmatmul.mubr.bf16.gmra.mrb[0].mxu0 %v6262
  %v6541 = vpop.f32.mrb[0].mxu0
  %v6542 = vadd.f32 %v6145, %v6541
  %v6543 = vpop.f32.mrb[0].mxu0
  %v6544 = vpop.f32.mrb[0].mxu0
  %v6545 = vadd.f32 %v6145, %v6544
  %v6546 = vpop.f32.mrb[0].mxu0
  %6547 = vmatprep.mubr.bf16.mxu0 0
  %6548 = vmatmul.mubr.bf16.gmra.mrb[0].mxu0 %v6265
  %v6549 = vpop.f32.mrb[0].mxu0
  %v6550 = vadd.f32 %v6145, %v6549
  %v6551 = vpop.f32.mrb[0].mxu0
  %v6552 = vpop.f32.mrb[0].mxu0
  %v6553 = vadd.f32 %v6145, %v6552
  %v6554 = vpop.f32.mrb[0].mxu0
  %6555 = vdwg.mxu0
  %v6556 = vadd.f32 %v6302, %v5404
  %v6557 = vadd.f32 %v6305, %v5405
  %v6558 = vadd.f32 %v6310, %v5406
  %v6559 = vadd.f32 %v6313, %v5407
  %v6560 = vadd.f32 %v6318, %v5408
  %v6561 = vadd.f32 %v6321, %v5409
  %v6562 = vadd.f32 %v6326, %v5410
  %v6563 = vadd.f32 %v6329, %v5411
  %v6564 = vadd.f32 %v6334, %v5412
  %v6565 = vadd.f32 %v6337, %v5413
  %v6566 = vadd.f32 %v6342, %v5414
  %v6567 = vadd.f32 %v6345, %v5415
  %v6568 = vadd.f32 %v6350, %v5416
  %v6569 = vadd.f32 %v6353, %v5417
  %v6570 = vadd.f32 %v6358, %v5418
  %v6571 = vadd.f32 %v6361, %v5419
  %v6572 = vadd.f32 %v6366, %v5420
  %v6573 = vadd.f32 %v6369, %v5421
  %v6574 = vadd.f32 %v6374, %v5422
  %v6575 = vadd.f32 %v6377, %v5423
  %v6576 = vadd.f32 %v6382, %v5424
  %v6577 = vadd.f32 %v6385, %v5425
  %v6578 = vadd.f32 %v6390, %v5426
  %v6579 = vadd.f32 %v6393, %v5427
  %v6580 = vadd.f32 %v6398, %v5428
  %v6581 = vadd.f32 %v6401, %v5429
  %v6582 = vadd.f32 %v6406, %v5430
  %v6583 = vadd.f32 %v6409, %v5431
  %v6584 = vadd.f32 %v6414, %v5432
  %v6585 = vadd.f32 %v6417, %v5433
  %v6586 = vadd.f32 %v6422, %v5434
  %v6587 = vadd.f32 %v6425, %v5435
  %v6588 = vadd.f32 %v6430, %v5436
  %v6589 = vadd.f32 %v6433, %v5437
  %v6590 = vadd.f32 %v6438, %v5438
  %v6591 = vadd.f32 %v6441, %v5439
  %v6592 = vadd.f32 %v6446, %v5440
  %v6593 = vadd.f32 %v6449, %v5441
  %v6594 = vadd.f32 %v6454, %v5442
  %v6595 = vadd.f32 %v6457, %v5443
  %v6596 = vadd.f32 %v6462, %v5444
  %v6597 = vadd.f32 %v6465, %v5445
  %v6598 = vadd.f32 %v6470, %v5446
  %v6599 = vadd.f32 %v6473, %v5447
  %v6600 = vadd.f32 %v6478, %v5448
  %v6601 = vadd.f32 %v6481, %v5449
  %v6602 = vadd.f32 %v6486, %v5450
  %v6603 = vadd.f32 %v6489, %v5451
  %v6604 = vadd.f32 %v6494, %v5452
  %v6605 = vadd.f32 %v6497, %v5453
  %v6606 = vadd.f32 %v6502, %v5454
  %v6607 = vadd.f32 %v6505, %v5455
  %v6608 = vadd.f32 %v6510, %v5456
  %v6609 = vadd.f32 %v6513, %v5457
  %v6610 = vadd.f32 %v6518, %v5458
  %v6611 = vadd.f32 %v6521, %v5459
  %v6612 = vadd.f32 %v6526, %v5460
  %v6613 = vadd.f32 %v6529, %v5461
  %v6614 = vadd.f32 %v6534, %v5462
  %v6615 = vadd.f32 %v6537, %v5463
  %v6616 = vadd.f32 %v6542, %v5464
  %v6617 = vadd.f32 %v6545, %v5465
  %v6618 = vadd.f32 %v6550, %v5466
  %v6619 = vadd.f32 %v6553, %v5467
  %vm6620 = vcmp.ge.f32.partialorder %v6556, 0.0
  %vm6621 = vcmp.ge.f32.partialorder %v6557, 0.0
  %vm6622 = vcmp.ge.f32.partialorder %v6558, 0.0
  %vm6623 = vcmp.ge.f32.partialorder %v6559, 0.0
  %vm6624 = vcmp.ge.f32.partialorder %v6560, 0.0
  %vm6625 = vcmp.ge.f32.partialorder %v6561, 0.0
  %vm6626 = vcmp.ge.f32.partialorder %v6562, 0.0
  %vm6627 = vcmp.ge.f32.partialorder %v6563, 0.0
  %vm6628 = vcmp.ge.f32.partialorder %v6564, 0.0
  %vm6629 = vcmp.ge.f32.partialorder %v6565, 0.0
  %vm6630 = vcmp.ge.f32.partialorder %v6566, 0.0
  %vm6631 = vcmp.ge.f32.partialorder %v6567, 0.0
  %vm6632 = vcmp.ge.f32.partialorder %v6568, 0.0
  %vm6633 = vcmp.ge.f32.partialorder %v6569, 0.0
  %vm6634 = vcmp.ge.f32.partialorder %v6570, 0.0
  %vm6635 = vcmp.ge.f32.partialorder %v6571, 0.0
  %vm6636 = vcmp.ge.f32.partialorder %v6572, 0.0
  %vm6637 = vcmp.ge.f32.partialorder %v6573, 0.0
  %vm6638 = vcmp.ge.f32.partialorder %v6574, 0.0
  %vm6639 = vcmp.ge.f32.partialorder %v6575, 0.0
  %vm6640 = vcmp.ge.f32.partialorder %v6576, 0.0
  %vm6641 = vcmp.ge.f32.partialorder %v6577, 0.0
  %vm6642 = vcmp.ge.f32.partialorder %v6578, 0.0
  %vm6643 = vcmp.ge.f32.partialorder %v6579, 0.0
  %vm6644 = vcmp.ge.f32.partialorder %v6580, 0.0
  %vm6645 = vcmp.ge.f32.partialorder %v6581, 0.0
  %vm6646 = vcmp.ge.f32.partialorder %v6582, 0.0
  %vm6647 = vcmp.ge.f32.partialorder %v6583, 0.0
  %vm6648 = vcmp.ge.f32.partialorder %v6584, 0.0
  %vm6649 = vcmp.ge.f32.partialorder %v6585, 0.0
  %vm6650 = vcmp.ge.f32.partialorder %v6586, 0.0
  %vm6651 = vcmp.ge.f32.partialorder %v6587, 0.0
  %vm6652 = vcmp.ge.f32.partialorder %v6588, 0.0
  %vm6653 = vcmp.ge.f32.partialorder %v6589, 0.0
  %vm6654 = vcmp.ge.f32.partialorder %v6590, 0.0
  %vm6655 = vcmp.ge.f32.partialorder %v6591, 0.0
  %vm6656 = vcmp.ge.f32.partialorder %v6592, 0.0
  %vm6657 = vcmp.ge.f32.partialorder %v6593, 0.0
  %vm6658 = vcmp.ge.f32.partialorder %v6594, 0.0
  %vm6659 = vcmp.ge.f32.partialorder %v6595, 0.0
  %vm6660 = vcmp.ge.f32.partialorder %v6596, 0.0
  %vm6661 = vcmp.ge.f32.partialorder %v6597, 0.0
  %vm6662 = vcmp.ge.f32.partialorder %v6598, 0.0
  %vm6663 = vcmp.ge.f32.partialorder %v6599, 0.0
  %vm6664 = vcmp.ge.f32.partialorder %v6600, 0.0
  %vm6665 = vcmp.ge.f32.partialorder %v6601, 0.0
  %vm6666 = vcmp.ge.f32.partialorder %v6602, 0.0
  %vm6667 = vcmp.ge.f32.partialorder %v6603, 0.0
  %vm6668 = vcmp.ge.f32.partialorder %v6604, 0.0
  %vm6669 = vcmp.ge.f32.partialorder %v6605, 0.0
  %vm6670 = vcmp.ge.f32.partialorder %v6606, 0.0
  %vm6671 = vcmp.ge.f32.partialorder %v6607, 0.0
  %vm6672 = vcmp.ge.f32.partialorder %v6608, 0.0
  %vm6673 = vcmp.ge.f32.partialorder %v6609, 0.0
  %vm6674 = vcmp.ge.f32.partialorder %v6610, 0.0
  %vm6675 = vcmp.ge.f32.partialorder %v6611, 0.0
  %vm6676 = vcmp.ge.f32.partialorder %v6612, 0.0
  %vm6677 = vcmp.ge.f32.partialorder %v6613, 0.0
  %vm6678 = vcmp.ge.f32.partialorder %v6614, 0.0
  %vm6679 = vcmp.ge.f32.partialorder %v6615, 0.0
  %vm6680 = vcmp.ge.f32.partialorder %v6616, 0.0
  %vm6681 = vcmp.ge.f32.partialorder %v6617, 0.0
  %vm6682 = vcmp.ge.f32.partialorder %v6618, 0.0
  %vm6683 = vcmp.ge.f32.partialorder %v6619, 0.0
  %v6684 = vmul.f32 %v6556, 0.2
  %v6685 = vmul.f32 %v6557, 0.2
  %v6686 = vmul.f32 %v6558, 0.2
  %v6687 = vmul.f32 %v6559, 0.2
  %v6688 = vmul.f32 %v6560, 0.2
  %v6689 = vmul.f32 %v6561, 0.2
  %v6690 = vmul.f32 %v6562, 0.2
  %v6691 = vmul.f32 %v6563, 0.2
  %v6692 = vmul.f32 %v6564, 0.2
  %v6693 = vmul.f32 %v6565, 0.2
  %v6694 = vmul.f32 %v6566, 0.2
  %v6695 = vmul.f32 %v6567, 0.2
  %v6696 = vmul.f32 %v6568, 0.2
  %v6697 = vmul.f32 %v6569, 0.2
  %v6698 = vmul.f32 %v6570, 0.2
  %v6699 = vmul.f32 %v6571, 0.2
  %v6700 = vmul.f32 %v6572, 0.2
  %v6701 = vmul.f32 %v6573, 0.2
  %v6702 = vmul.f32 %v6574, 0.2
  %v6703 = vmul.f32 %v6575, 0.2
  %v6704 = vmul.f32 %v6576, 0.2
  %v6705 = vmul.f32 %v6577, 0.2
  %v6706 = vmul.f32 %v6578, 0.2
  %v6707 = vmul.f32 %v6579, 0.2
  %v6708 = vmul.f32 %v6580, 0.2
  %v6709 = vmul.f32 %v6581, 0.2
  %v6710 = vmul.f32 %v6582, 0.2
  %v6711 = vmul.f32 %v6583, 0.2
  %v6712 = vmul.f32 %v6584, 0.2
  %v6713 = vmul.f32 %v6585, 0.2
  %v6714 = vmul.f32 %v6586, 0.2
  %v6715 = vmul.f32 %v6587, 0.2
  %v6716 = vmul.f32 %v6588, 0.2
  %v6717 = vmul.f32 %v6589, 0.2
  %v6718 = vmul.f32 %v6590, 0.2
  %v6719 = vmul.f32 %v6591, 0.2
  %v6720 = vmul.f32 %v6592, 0.2
  %v6721 = vmul.f32 %v6593, 0.2
  %v6722 = vmul.f32 %v6594, 0.2
  %v6723 = vmul.f32 %v6595, 0.2
  %v6724 = vmul.f32 %v6596, 0.2
  %v6725 = vmul.f32 %v6597, 0.2
  %v6726 = vmul.f32 %v6598, 0.2
  %v6727 = vmul.f32 %v6599, 0.2
  %v6728 = vmul.f32 %v6600, 0.2
  %v6729 = vmul.f32 %v6601, 0.2
  %v6730 = vmul.f32 %v6602, 0.2
  %v6731 = vmul.f32 %v6603, 0.2
  %v6732 = vmul.f32 %v6604, 0.2
  %v6733 = vmul.f32 %v6605, 0.2
  %v6734 = vmul.f32 %v6606, 0.2
  %v6735 = vmul.f32 %v6607, 0.2
  %v6736 = vmul.f32 %v6608, 0.2
  %v6737 = vmul.f32 %v6609, 0.2
  %v6738 = vmul.f32 %v6610, 0.2
  %v6739 = vmul.f32 %v6611, 0.2
  %v6740 = vmul.f32 %v6612, 0.2
  %v6741 = vmul.f32 %v6613, 0.2
  %v6742 = vmul.f32 %v6614, 0.2
  %v6743 = vmul.f32 %v6615, 0.2
  %v6744 = vmul.f32 %v6616, 0.2
  %v6745 = vmul.f32 %v6617, 0.2
  %v6746 = vmul.f32 %v6618, 0.2
  %v6747 = vmul.f32 %v6619, 0.2
  %v6748 = vsel %vm6620, %v6556, %v6684
  %v6749 = vsel %vm6621, %v6557, %v6685
  %v6750 = vsel %vm6622, %v6558, %v6686
  %v6751 = vsel %vm6623, %v6559, %v6687
  %v6752 = vsel %vm6624, %v6560, %v6688
  %v6753 = vsel %vm6625, %v6561, %v6689
  %v6754 = vsel %vm6626, %v6562, %v6690
  %v6755 = vsel %vm6627, %v6563, %v6691
  %v6756 = vsel %vm6628, %v6564, %v6692
  %v6757 = vsel %vm6629, %v6565, %v6693
  %v6758 = vsel %vm6630, %v6566, %v6694
  %v6759 = vsel %vm6631, %v6567, %v6695
  %v6760 = vsel %vm6632, %v6568, %v6696
  %v6761 = vsel %vm6633, %v6569, %v6697
  %v6762 = vsel %vm6634, %v6570, %v6698
  %v6763 = vsel %vm6635, %v6571, %v6699
  %v6764 = vsel %vm6636, %v6572, %v6700
  %v6765 = vsel %vm6637, %v6573, %v6701
  %v6766 = vsel %vm6638, %v6574, %v6702
  %v6767 = vsel %vm6639, %v6575, %v6703
  %v6768 = vsel %vm6640, %v6576, %v6704
  %v6769 = vsel %vm6641, %v6577, %v6705
  %v6770 = vsel %vm6642, %v6578, %v6706
  %v6771 = vsel %vm6643, %v6579, %v6707
  %v6772 = vsel %vm6644, %v6580, %v6708
  %v6773 = vsel %vm6645, %v6581, %v6709
  %v6774 = vsel %vm6646, %v6582, %v6710
  %v6775 = vsel %vm6647, %v6583, %v6711
  %v6776 = vsel %vm6648, %v6584, %v6712
  %v6777 = vsel %vm6649, %v6585, %v6713
  %v6778 = vsel %vm6650, %v6586, %v6714
  %v6779 = vsel %vm6651, %v6587, %v6715
  %v6780 = vsel %vm6652, %v6588, %v6716
  %v6781 = vsel %vm6653, %v6589, %v6717
  %v6782 = vsel %vm6654, %v6590, %v6718
  %v6783 = vsel %vm6655, %v6591, %v6719
  %v6784 = vsel %vm6656, %v6592, %v6720
  %v6785 = vsel %vm6657, %v6593, %v6721
  %v6786 = vsel %vm6658, %v6594, %v6722
  %v6787 = vsel %vm6659, %v6595, %v6723
  %v6788 = vsel %vm6660, %v6596, %v6724
  %v6789 = vsel %vm6661, %v6597, %v6725
  %v6790 = vsel %vm6662, %v6598, %v6726
  %v6791 = vsel %vm6663, %v6599, %v6727
  %v6792 = vsel %vm6664, %v6600, %v6728
  %v6793 = vsel %vm6665, %v6601, %v6729
  %v6794 = vsel %vm6666, %v6602, %v6730
  %v6795 = vsel %vm6667, %v6603, %v6731
  %v6796 = vsel %vm6668, %v6604, %v6732
  %v6797 = vsel %vm6669, %v6605, %v6733
  %v6798 = vsel %vm6670, %v6606, %v6734
  %v6799 = vsel %vm6671, %v6607, %v6735
  %v6800 = vsel %vm6672, %v6608, %v6736
  %v6801 = vsel %vm6673, %v6609, %v6737
  %v6802 = vsel %vm6674, %v6610, %v6738
  %v6803 = vsel %vm6675, %v6611, %v6739
  %v6804 = vsel %vm6676, %v6612, %v6740
  %v6805 = vsel %vm6677, %v6613, %v6741
  %v6806 = vsel %vm6678, %v6614, %v6742
  %v6807 = vsel %vm6679, %v6615, %v6743
  %v6808 = vsel %vm6680, %v6616, %v6744
  %v6809 = vsel %vm6681, %v6617, %v6745
  %v6810 = vsel %vm6682, %v6618, %v6746
  %v6811 = vsel %vm6683, %v6619, %v6747
  %v6812 = vld [vmem:[%s63] sm:$0xf]
  %v6813 = vld [vmem:[%s63 + $0x4] sm:$0xf]
  %v6814 = vld [vmem:[%s63 + $0x8] sm:$0xf]
  %v6815 = vld [vmem:[%s63 + $0xc] sm:$0xf]
  %v6816 = vpack.c.bf16 %v6749, %v6748
  %v6817 = vpack.c.bf16 %v6751, %v6750
  %v6818 = vpack.c.bf16 %v6753, %v6752
  %v6819 = vpack.c.bf16 %v6755, %v6754
  %v6820 = vpack.c.bf16 %v6757, %v6756
  %v6821 = vpack.c.bf16 %v6759, %v6758
  %v6822 = vpack.c.bf16 %v6761, %v6760
  %v6823 = vpack.c.bf16 %v6763, %v6762
  %v6824 = vpack.c.bf16 %v6765, %v6764
  %v6825 = vpack.c.bf16 %v6767, %v6766
  %v6826 = vpack.c.bf16 %v6769, %v6768
  %v6827 = vpack.c.bf16 %v6771, %v6770
  %v6828 = vpack.c.bf16 %v6773, %v6772
  %v6829 = vpack.c.bf16 %v6775, %v6774
  %v6830 = vpack.c.bf16 %v6777, %v6776
  %v6831 = vpack.c.bf16 %v6779, %v6778
  %v6832 = vpack.c.bf16 %v6781, %v6780
  %v6833 = vpack.c.bf16 %v6783, %v6782
  %v6834 = vpack.c.bf16 %v6785, %v6784
  %v6835 = vpack.c.bf16 %v6787, %v6786
  %v6836 = vpack.c.bf16 %v6789, %v6788
  %v6837 = vpack.c.bf16 %v6791, %v6790
  %v6838 = vpack.c.bf16 %v6793, %v6792
  %v6839 = vpack.c.bf16 %v6795, %v6794
  %v6840 = vpack.c.bf16 %v6797, %v6796
  %v6841 = vpack.c.bf16 %v6799, %v6798
  %v6842 = vpack.c.bf16 %v6801, %v6800
  %v6843 = vpack.c.bf16 %v6803, %v6802
  %v6844 = vpack.c.bf16 %v6805, %v6804
  %v6845 = vpack.c.bf16 %v6807, %v6806
  %v6846 = vpack.c.bf16 %v6809, %v6808
  %v6847 = vpack.c.bf16 %v6811, %v6810
  %v6848 = vld [vmem:[%s65] sm:$0x1]
  %v6850 = vlaneseq
  %v6851 = vshrl.u32 %v6850, 7
  %v6852 = vsub.s32 0, %v6851
  %v6853 = vrot.slane %v6848, %v6852
  %v6859 = vunpack.c.l.b16 %v6812
  %v6860 = vunpack.c.l.b16 %v6813
  %v6861 = vunpack.c.l.b16 %v6814
  %v6862 = vunpack.c.l.b16 %v6815
  %v6863 = vpack.c.b16 %v6860, %v6859
  %v6864 = vpack.c.b16 %v6862, %v6861
  %v6868 = vsel %vm762, %v6816, 0
  %v6871 = vsel %vm762, %v6817, 0
  %v6874 = vsel %vm762, %v6818, 0
  %v6877 = vsel %vm762, %v6819, 0
  %v6880 = vsel %vm762, %v6820, 0
  %v6883 = vsel %vm762, %v6821, 0
  %v6886 = vsel %vm762, %v6822, 0
  %v6889 = vsel %vm762, %v6823, 0
  %v6892 = vsel %vm762, %v6824, 0
  %v6895 = vsel %vm762, %v6825, 0
  %v6898 = vsel %vm762, %v6826, 0
  %v6901 = vsel %vm762, %v6827, 0
  %v6904 = vsel %vm762, %v6828, 0
  %v6907 = vsel %vm762, %v6829, 0
  %v6910 = vsel %vm762, %v6830, 0
  %v6913 = vsel %vm762, %v6831, 0
  %v6916 = vsel %vm762, %v6832, 0
  %v6919 = vsel %vm762, %v6833, 0
  %v6922 = vsel %vm762, %v6834, 0
  %v6925 = vsel %vm762, %v6835, 0
  %v6928 = vsel %vm762, %v6836, 0
  %v6931 = vsel %vm762, %v6837, 0
  %v6934 = vsel %vm762, %v6838, 0
  %v6937 = vsel %vm762, %v6839, 0
  %v6940 = vsel %vm762, %v6840, 0
  %v6943 = vsel %vm762, %v6841, 0
  %v6946 = vsel %vm762, %v6842, 0
  %v6949 = vsel %vm762, %v6843, 0
  %v6952 = vsel %vm762, %v6844, 0
  %v6955 = vsel %vm762, %v6845, 0
  %v6958 = vsel %vm762, %v6846, 0
  %v6961 = vsel %vm762, %v6847, 0
  %6963 = vmatprep.subr.bf16.mxu0 0
  %6964 = vmatpush1.bf16.msra.mxu0 %v6863
  %6965 = vmatprep.subr.bf16.mxu0 0
  %6966 = vmatpush1.bf16.msra.mxu0 %v6864
  %6967 = vmatprep.subr.bf16.mxu0 0
  %6968 = vmatpush1.bf16.msra.mxu0 0
  %6969 = vmatprep.subr.bf16.mxu0 0
  %6970 = vmatpush1.bf16.msra.mxu0 0
  %6971 = vmatprep.subr.bf16.mxu0 0
  %6972 = vmatpush1.bf16.msra.mxu0 0
  %6973 = vmatprep.subr.bf16.mxu0 0
  %6974 = vmatpush1.bf16.msra.mxu0 0
  %6975 = vmatprep.subr.bf16.mxu0 0
  %6976 = vmatpush1.bf16.msra.mxu0 0
  %6977 = vmatprep.subr.bf16.mxu0 0
  %6978 = vmatpush1.bf16.msra.mxu0 0
  %6979 = vmatprep.subr.bf16.mxu0 0
  %6980 = vmatpush1.bf16.msra.mxu0 0
  %6981 = vmatprep.subr.bf16.mxu0 0
  %6982 = vmatpush1.bf16.msra.mxu0 0
  %6983 = vmatprep.subr.bf16.mxu0 0
  %6984 = vmatpush1.bf16.msra.mxu0 0
  %6985 = vmatprep.subr.bf16.mxu0 0
  %6986 = vmatpush1.bf16.msra.mxu0 0
  %6987 = vmatprep.subr.bf16.mxu0 0
  %6988 = vmatpush1.bf16.msra.mxu0 0
  %6989 = vmatprep.subr.bf16.mxu0 0
  %6990 = vmatpush1.bf16.msra.mxu0 0
  %6991 = vmatprep.subr.bf16.mxu0 0
  %6992 = vmatpush1.bf16.msra.mxu0 0
  %6993 = vmatprep.subr.bf16.mxu0 0
  %6994 = vmatpush1.bf16.msra.mxu0 0
  %6995 = vmatprep.mubr.bf16.mxu0 0
  %6996 = vmatmul.mubr.bf16.gmra.mrb[0].mxu0 %v6868
  %v6997 = vpop.f32.mrb[0].mxu0
  %v6998 = vadd.f32 %v6853, %v6997
  %v6999 = vpop.f32.mrb[0].mxu0
  %v7000 = vpop.f32.mrb[0].mxu0
  %v7001 = vadd.f32 %v6853, %v7000
  %v7002 = vpop.f32.mrb[0].mxu0
  %7003 = vmatprep.mubr.bf16.mxu0 0
  %7004 = vmatmul.mubr.bf16.gmra.mrb[0].mxu0 %v6871
  %v7005 = vpop.f32.mrb[0].mxu0
  %v7006 = vadd.f32 %v6853, %v7005
  %v7007 = vpop.f32.mrb[0].mxu0
  %v7008 = vpop.f32.mrb[0].mxu0
  %v7009 = vadd.f32 %v6853, %v7008
  %v7010 = vpop.f32.mrb[0].mxu0
  %7011 = vmatprep.mubr.bf16.mxu0 0
  %7012 = vmatmul.mubr.bf16.gmra.mrb[0].mxu0 %v6874
  %v7013 = vpop.f32.mrb[0].mxu0
  %v7014 = vadd.f32 %v6853, %v7013
  %v7015 = vpop.f32.mrb[0].mxu0
  %v7016 = vpop.f32.mrb[0].mxu0
  %v7017 = vadd.f32 %v6853, %v7016
  %v7018 = vpop.f32.mrb[0].mxu0
  %7019 = vmatprep.mubr.bf16.mxu0 0
  %7020 = vmatmul.mubr.bf16.gmra.mrb[0].mxu0 %v6877
  %v7021 = vpop.f32.mrb[0].mxu0
  %v7022 = vadd.f32 %v6853, %v7021
  %v7023 = vpop.f32.mrb[0].mxu0
  %v7024 = vpop.f32.mrb[0].mxu0
  %v7025 = vadd.f32 %v6853, %v7024
  %v7026 = vpop.f32.mrb[0].mxu0
  %7027 = vmatprep.mubr.bf16.mxu0 0
  %7028 = vmatmul.mubr.bf16.gmra.mrb[0].mxu0 %v6880
  %v7029 = vpop.f32.mrb[0].mxu0
  %v7030 = vadd.f32 %v6853, %v7029
  %v7031 = vpop.f32.mrb[0].mxu0
  %v7032 = vpop.f32.mrb[0].mxu0
  %v7033 = vadd.f32 %v6853, %v7032
  %v7034 = vpop.f32.mrb[0].mxu0
  %7035 = vmatprep.mubr.bf16.mxu0 0
  %7036 = vmatmul.mubr.bf16.gmra.mrb[0].mxu0 %v6883
  %v7037 = vpop.f32.mrb[0].mxu0
  %v7038 = vadd.f32 %v6853, %v7037
  %v7039 = vpop.f32.mrb[0].mxu0
  %v7040 = vpop.f32.mrb[0].mxu0
  %v7041 = vadd.f32 %v6853, %v7040
  %v7042 = vpop.f32.mrb[0].mxu0
  %7043 = vmatprep.mubr.bf16.mxu0 0
  %7044 = vmatmul.mubr.bf16.gmra.mrb[0].mxu0 %v6886
  %v7045 = vpop.f32.mrb[0].mxu0
  %v7046 = vadd.f32 %v6853, %v7045
  %v7047 = vpop.f32.mrb[0].mxu0
  %v7048 = vpop.f32.mrb[0].mxu0
  %v7049 = vadd.f32 %v6853, %v7048
  %v7050 = vpop.f32.mrb[0].mxu0
  %7051 = vmatprep.mubr.bf16.mxu0 0
  %7052 = vmatmul.mubr.bf16.gmra.mrb[0].mxu0 %v6889
  %v7053 = vpop.f32.mrb[0].mxu0
  %v7054 = vadd.f32 %v6853, %v7053
  %v7055 = vpop.f32.mrb[0].mxu0
  %v7056 = vpop.f32.mrb[0].mxu0
  %v7057 = vadd.f32 %v6853, %v7056
  %v7058 = vpop.f32.mrb[0].mxu0
  %7059 = vmatprep.mubr.bf16.mxu0 0
  %7060 = vmatmul.mubr.bf16.gmra.mrb[0].mxu0 %v6892
  %v7061 = vpop.f32.mrb[0].mxu0
  %v7062 = vadd.f32 %v6853, %v7061
  %v7063 = vpop.f32.mrb[0].mxu0
  %v7064 = vpop.f32.mrb[0].mxu0
  %v7065 = vadd.f32 %v6853, %v7064
  %v7066 = vpop.f32.mrb[0].mxu0
  %7067 = vmatprep.mubr.bf16.mxu0 0
  %7068 = vmatmul.mubr.bf16.gmra.mrb[0].mxu0 %v6895
  %v7069 = vpop.f32.mrb[0].mxu0
  %v7070 = vadd.f32 %v6853, %v7069
  %v7071 = vpop.f32.mrb[0].mxu0
  %v7072 = vpop.f32.mrb[0].mxu0
  %v7073 = vadd.f32 %v6853, %v7072
  %v7074 = vpop.f32.mrb[0].mxu0
  %7075 = vmatprep.mubr.bf16.mxu0 0
  %7076 = vmatmul.mubr.bf16.gmra.mrb[0].mxu0 %v6898
  %v7077 = vpop.f32.mrb[0].mxu0
  %v7078 = vadd.f32 %v6853, %v7077
  %v7079 = vpop.f32.mrb[0].mxu0
  %v7080 = vpop.f32.mrb[0].mxu0
  %v7081 = vadd.f32 %v6853, %v7080
  %v7082 = vpop.f32.mrb[0].mxu0
  %7083 = vmatprep.mubr.bf16.mxu0 0
  %7084 = vmatmul.mubr.bf16.gmra.mrb[0].mxu0 %v6901
  %v7085 = vpop.f32.mrb[0].mxu0
  %v7086 = vadd.f32 %v6853, %v7085
  %v7087 = vpop.f32.mrb[0].mxu0
  %v7088 = vpop.f32.mrb[0].mxu0
  %v7089 = vadd.f32 %v6853, %v7088
  %v7090 = vpop.f32.mrb[0].mxu0
  %7091 = vmatprep.mubr.bf16.mxu0 0
  %7092 = vmatmul.mubr.bf16.gmra.mrb[0].mxu0 %v6904
  %v7093 = vpop.f32.mrb[0].mxu0
  %v7094 = vadd.f32 %v6853, %v7093
  %v7095 = vpop.f32.mrb[0].mxu0
  %v7096 = vpop.f32.mrb[0].mxu0
  %v7097 = vadd.f32 %v6853, %v7096
  %v7098 = vpop.f32.mrb[0].mxu0
  %7099 = vmatprep.mubr.bf16.mxu0 0
  %7100 = vmatmul.mubr.bf16.gmra.mrb[0].mxu0 %v6907
  %v7101 = vpop.f32.mrb[0].mxu0
  %v7102 = vadd.f32 %v6853, %v7101
  %v7103 = vpop.f32.mrb[0].mxu0
  %v7104 = vpop.f32.mrb[0].mxu0
  %v7105 = vadd.f32 %v6853, %v7104
  %v7106 = vpop.f32.mrb[0].mxu0
  %7107 = vmatprep.mubr.bf16.mxu0 0
  %7108 = vmatmul.mubr.bf16.gmra.mrb[0].mxu0 %v6910
  %v7109 = vpop.f32.mrb[0].mxu0
  %v7110 = vadd.f32 %v6853, %v7109
  %v7111 = vpop.f32.mrb[0].mxu0
  %v7112 = vpop.f32.mrb[0].mxu0
  %v7113 = vadd.f32 %v6853, %v7112
  %v7114 = vpop.f32.mrb[0].mxu0
  %7115 = vmatprep.mubr.bf16.mxu0 0
  %7116 = vmatmul.mubr.bf16.gmra.mrb[0].mxu0 %v6913
  %v7117 = vpop.f32.mrb[0].mxu0
  %v7118 = vadd.f32 %v6853, %v7117
  %v7119 = vpop.f32.mrb[0].mxu0
  %v7120 = vpop.f32.mrb[0].mxu0
  %v7121 = vadd.f32 %v6853, %v7120
  %v7122 = vpop.f32.mrb[0].mxu0
  %7123 = vmatprep.mubr.bf16.mxu0 0
  %7124 = vmatmul.mubr.bf16.gmra.mrb[0].mxu0 %v6916
  %v7125 = vpop.f32.mrb[0].mxu0
  %v7126 = vadd.f32 %v6853, %v7125
  %v7127 = vpop.f32.mrb[0].mxu0
  %v7128 = vpop.f32.mrb[0].mxu0
  %v7129 = vadd.f32 %v6853, %v7128
  %v7130 = vpop.f32.mrb[0].mxu0
  %7131 = vmatprep.mubr.bf16.mxu0 0
  %7132 = vmatmul.mubr.bf16.gmra.mrb[0].mxu0 %v6919
  %v7133 = vpop.f32.mrb[0].mxu0
  %v7134 = vadd.f32 %v6853, %v7133
  %v7135 = vpop.f32.mrb[0].mxu0
  %v7136 = vpop.f32.mrb[0].mxu0
  %v7137 = vadd.f32 %v6853, %v7136
  %v7138 = vpop.f32.mrb[0].mxu0
  %7139 = vmatprep.mubr.bf16.mxu0 0
  %7140 = vmatmul.mubr.bf16.gmra.mrb[0].mxu0 %v6922
  %v7141 = vpop.f32.mrb[0].mxu0
  %v7142 = vadd.f32 %v6853, %v7141
  %v7143 = vpop.f32.mrb[0].mxu0
  %v7144 = vpop.f32.mrb[0].mxu0
  %v7145 = vadd.f32 %v6853, %v7144
  %v7146 = vpop.f32.mrb[0].mxu0
  %7147 = vmatprep.mubr.bf16.mxu0 0
  %7148 = vmatmul.mubr.bf16.gmra.mrb[0].mxu0 %v6925
  %v7149 = vpop.f32.mrb[0].mxu0
  %v7150 = vadd.f32 %v6853, %v7149
  %v7151 = vpop.f32.mrb[0].mxu0
  %v7152 = vpop.f32.mrb[0].mxu0
  %v7153 = vadd.f32 %v6853, %v7152
  %v7154 = vpop.f32.mrb[0].mxu0
  %7155 = vmatprep.mubr.bf16.mxu0 0
  %7156 = vmatmul.mubr.bf16.gmra.mrb[0].mxu0 %v6928
  %v7157 = vpop.f32.mrb[0].mxu0
  %v7158 = vadd.f32 %v6853, %v7157
  %v7159 = vpop.f32.mrb[0].mxu0
  %v7160 = vpop.f32.mrb[0].mxu0
  %v7161 = vadd.f32 %v6853, %v7160
  %v7162 = vpop.f32.mrb[0].mxu0
  %7163 = vmatprep.mubr.bf16.mxu0 0
  %7164 = vmatmul.mubr.bf16.gmra.mrb[0].mxu0 %v6931
  %v7165 = vpop.f32.mrb[0].mxu0
  %v7166 = vadd.f32 %v6853, %v7165
  %v7167 = vpop.f32.mrb[0].mxu0
  %v7168 = vpop.f32.mrb[0].mxu0
  %v7169 = vadd.f32 %v6853, %v7168
  %v7170 = vpop.f32.mrb[0].mxu0
  %7171 = vmatprep.mubr.bf16.mxu0 0
  %7172 = vmatmul.mubr.bf16.gmra.mrb[0].mxu0 %v6934
  %v7173 = vpop.f32.mrb[0].mxu0
  %v7174 = vadd.f32 %v6853, %v7173
  %v7175 = vpop.f32.mrb[0].mxu0
  %v7176 = vpop.f32.mrb[0].mxu0
  %v7177 = vadd.f32 %v6853, %v7176
  %v7178 = vpop.f32.mrb[0].mxu0
  %7179 = vmatprep.mubr.bf16.mxu0 0
  %7180 = vmatmul.mubr.bf16.gmra.mrb[0].mxu0 %v6937
  %v7181 = vpop.f32.mrb[0].mxu0
  %v7182 = vadd.f32 %v6853, %v7181
  %v7183 = vpop.f32.mrb[0].mxu0
  %v7184 = vpop.f32.mrb[0].mxu0
  %v7185 = vadd.f32 %v6853, %v7184
  %v7186 = vpop.f32.mrb[0].mxu0
  %7187 = vmatprep.mubr.bf16.mxu0 0
  %7188 = vmatmul.mubr.bf16.gmra.mrb[0].mxu0 %v6940
  %v7189 = vpop.f32.mrb[0].mxu0
  %v7190 = vadd.f32 %v6853, %v7189
  %v7191 = vpop.f32.mrb[0].mxu0
  %v7192 = vpop.f32.mrb[0].mxu0
  %v7193 = vadd.f32 %v6853, %v7192
  %v7194 = vpop.f32.mrb[0].mxu0
  %7195 = vmatprep.mubr.bf16.mxu0 0
  %7196 = vmatmul.mubr.bf16.gmra.mrb[0].mxu0 %v6943
  %v7197 = vpop.f32.mrb[0].mxu0
  %v7198 = vadd.f32 %v6853, %v7197
  %v7199 = vpop.f32.mrb[0].mxu0
  %v7200 = vpop.f32.mrb[0].mxu0
  %v7201 = vadd.f32 %v6853, %v7200
  %v7202 = vpop.f32.mrb[0].mxu0
  %7203 = vmatprep.mubr.bf16.mxu0 0
  %7204 = vmatmul.mubr.bf16.gmra.mrb[0].mxu0 %v6946
  %v7205 = vpop.f32.mrb[0].mxu0
  %v7206 = vadd.f32 %v6853, %v7205
  %v7207 = vpop.f32.mrb[0].mxu0
  %v7208 = vpop.f32.mrb[0].mxu0
  %v7209 = vadd.f32 %v6853, %v7208
  %v7210 = vpop.f32.mrb[0].mxu0
  %7211 = vmatprep.mubr.bf16.mxu0 0
  %7212 = vmatmul.mubr.bf16.gmra.mrb[0].mxu0 %v6949
  %v7213 = vpop.f32.mrb[0].mxu0
  %v7214 = vadd.f32 %v6853, %v7213
  %v7215 = vpop.f32.mrb[0].mxu0
  %v7216 = vpop.f32.mrb[0].mxu0
  %v7217 = vadd.f32 %v6853, %v7216
  %v7218 = vpop.f32.mrb[0].mxu0
  %7219 = vmatprep.mubr.bf16.mxu0 0
  %7220 = vmatmul.mubr.bf16.gmra.mrb[0].mxu0 %v6952
  %v7221 = vpop.f32.mrb[0].mxu0
  %v7222 = vadd.f32 %v6853, %v7221
  %v7223 = vpop.f32.mrb[0].mxu0
  %v7224 = vpop.f32.mrb[0].mxu0
  %v7225 = vadd.f32 %v6853, %v7224
  %v7226 = vpop.f32.mrb[0].mxu0
  %7227 = vmatprep.mubr.bf16.mxu0 0
  %7228 = vmatmul.mubr.bf16.gmra.mrb[0].mxu0 %v6955
  %v7229 = vpop.f32.mrb[0].mxu0
  %v7230 = vadd.f32 %v6853, %v7229
  %v7231 = vpop.f32.mrb[0].mxu0
  %v7232 = vpop.f32.mrb[0].mxu0
  %v7233 = vadd.f32 %v6853, %v7232
  %v7234 = vpop.f32.mrb[0].mxu0
  %7235 = vmatprep.mubr.bf16.mxu0 0
  %7236 = vmatmul.mubr.bf16.gmra.mrb[0].mxu0 %v6958
  %v7237 = vpop.f32.mrb[0].mxu0
  %v7238 = vadd.f32 %v6853, %v7237
  %v7239 = vpop.f32.mrb[0].mxu0
  %v7240 = vpop.f32.mrb[0].mxu0
  %v7241 = vadd.f32 %v6853, %v7240
  %v7242 = vpop.f32.mrb[0].mxu0
  %7243 = vmatprep.mubr.bf16.mxu0 0
  %7244 = vmatmul.mubr.bf16.gmra.mrb[0].mxu0 %v6961
  %v7245 = vpop.f32.mrb[0].mxu0
  %v7246 = vadd.f32 %v6853, %v7245
  %v7247 = vpop.f32.mrb[0].mxu0
  %v7248 = vpop.f32.mrb[0].mxu0
  %v7249 = vadd.f32 %v6853, %v7248
  %v7250 = vpop.f32.mrb[0].mxu0
  %7251 = vdwg.mxu0
  %v7252 = vsub.f32 0.0, %v6998
  %v7253 = vsub.f32 0.0, %v7001
  %v7254 = vsub.f32 0.0, %v7006
  %v7255 = vsub.f32 0.0, %v7009
  %v7256 = vsub.f32 0.0, %v7014
  %v7257 = vsub.f32 0.0, %v7017
  %v7258 = vsub.f32 0.0, %v7022
  %v7259 = vsub.f32 0.0, %v7025
  %v7260 = vsub.f32 0.0, %v7030
  %v7261 = vsub.f32 0.0, %v7033
  %v7262 = vsub.f32 0.0, %v7038
  %v7263 = vsub.f32 0.0, %v7041
  %v7264 = vsub.f32 0.0, %v7046
  %v7265 = vsub.f32 0.0, %v7049
  %v7266 = vsub.f32 0.0, %v7054
  %v7267 = vsub.f32 0.0, %v7057
  %v7268 = vsub.f32 0.0, %v7062
  %v7269 = vsub.f32 0.0, %v7065
  %v7270 = vsub.f32 0.0, %v7070
  %v7271 = vsub.f32 0.0, %v7073
  %v7272 = vsub.f32 0.0, %v7078
  %v7273 = vsub.f32 0.0, %v7081
  %v7274 = vsub.f32 0.0, %v7086
  %v7275 = vsub.f32 0.0, %v7089
  %v7276 = vsub.f32 0.0, %v7094
  %v7277 = vsub.f32 0.0, %v7097
  %v7278 = vsub.f32 0.0, %v7102
  %v7279 = vsub.f32 0.0, %v7105
  %v7280 = vsub.f32 0.0, %v7110
  %v7281 = vsub.f32 0.0, %v7113
  %v7282 = vsub.f32 0.0, %v7118
  %v7283 = vsub.f32 0.0, %v7121
  %v7284 = vsub.f32 0.0, %v7126
  %v7285 = vsub.f32 0.0, %v7129
  %v7286 = vsub.f32 0.0, %v7134
  %v7287 = vsub.f32 0.0, %v7137
  %v7288 = vsub.f32 0.0, %v7142
  %v7289 = vsub.f32 0.0, %v7145
  %v7290 = vsub.f32 0.0, %v7150
  %v7291 = vsub.f32 0.0, %v7153
  %v7292 = vsub.f32 0.0, %v7158
  %v7293 = vsub.f32 0.0, %v7161
  %v7294 = vsub.f32 0.0, %v7166
  %v7295 = vsub.f32 0.0, %v7169
  %v7296 = vsub.f32 0.0, %v7174
  %v7297 = vsub.f32 0.0, %v7177
  %v7298 = vsub.f32 0.0, %v7182
  %v7299 = vsub.f32 0.0, %v7185
  %v7300 = vsub.f32 0.0, %v7190
  %v7301 = vsub.f32 0.0, %v7193
  %v7302 = vsub.f32 0.0, %v7198
  %v7303 = vsub.f32 0.0, %v7201
  %v7304 = vsub.f32 0.0, %v7206
  %v7305 = vsub.f32 0.0, %v7209
  %v7306 = vsub.f32 0.0, %v7214
  %v7307 = vsub.f32 0.0, %v7217
  %v7308 = vsub.f32 0.0, %v7222
  %v7309 = vsub.f32 0.0, %v7225
  %v7310 = vsub.f32 0.0, %v7230
  %v7311 = vsub.f32 0.0, %v7233
  %v7312 = vsub.f32 0.0, %v7238
  %v7313 = vsub.f32 0.0, %v7241
  %v7314 = vsub.f32 0.0, %v7246
  %v7315 = vsub.f32 0.0, %v7249
  %v7316 = vmul.f32 %v7252, 1.442695
  %v7317 = vpow.pop %v7316
  %v7318 = vmul.f32 %v7253, 1.442695
  %v7319 = vpow.pop %v7318
  %v7320 = vmul.f32 %v7254, 1.442695
  %v7321 = vpow.pop %v7320
  %v7322 = vmul.f32 %v7255, 1.442695
  %v7323 = vpow.pop %v7322
  %v7324 = vmul.f32 %v7256, 1.442695
  %v7325 = vpow.pop %v7324
  %v7326 = vmul.f32 %v7257, 1.442695
  %v7327 = vpow.pop %v7326
  %v7328 = vmul.f32 %v7258, 1.442695
  %v7329 = vpow.pop %v7328
  %v7330 = vmul.f32 %v7259, 1.442695
  %v7331 = vpow.pop %v7330
  %v7332 = vmul.f32 %v7260, 1.442695
  %v7333 = vpow.pop %v7332
  %v7334 = vmul.f32 %v7261, 1.442695
  %v7335 = vpow.pop %v7334
  %v7336 = vmul.f32 %v7262, 1.442695
  %v7337 = vpow.pop %v7336
  %v7338 = vmul.f32 %v7263, 1.442695
  %v7339 = vpow.pop %v7338
  %v7340 = vmul.f32 %v7264, 1.442695
  %v7341 = vpow.pop %v7340
  %v7342 = vmul.f32 %v7265, 1.442695
  %v7343 = vpow.pop %v7342
  %v7344 = vmul.f32 %v7266, 1.442695
  %v7345 = vpow.pop %v7344
  %v7346 = vmul.f32 %v7267, 1.442695
  %v7347 = vpow.pop %v7346
  %v7348 = vmul.f32 %v7268, 1.442695
  %v7349 = vpow.pop %v7348
  %v7350 = vmul.f32 %v7269, 1.442695
  %v7351 = vpow.pop %v7350
  %v7352 = vmul.f32 %v7270, 1.442695
  %v7353 = vpow.pop %v7352
  %v7354 = vmul.f32 %v7271, 1.442695
  %v7355 = vpow.pop %v7354
  %v7356 = vmul.f32 %v7272, 1.442695
  %v7357 = vpow.pop %v7356
  %v7358 = vmul.f32 %v7273, 1.442695
  %v7359 = vpow.pop %v7358
  %v7360 = vmul.f32 %v7274, 1.442695
  %v7361 = vpow.pop %v7360
  %v7362 = vmul.f32 %v7275, 1.442695
  %v7363 = vpow.pop %v7362
  %v7364 = vmul.f32 %v7276, 1.442695
  %v7365 = vpow.pop %v7364
  %v7366 = vmul.f32 %v7277, 1.442695
  %v7367 = vpow.pop %v7366
  %v7368 = vmul.f32 %v7278, 1.442695
  %v7369 = vpow.pop %v7368
  %v7370 = vmul.f32 %v7279, 1.442695
  %v7371 = vpow.pop %v7370
  %v7372 = vmul.f32 %v7280, 1.442695
  %v7373 = vpow.pop %v7372
  %v7374 = vmul.f32 %v7281, 1.442695
  %v7375 = vpow.pop %v7374
  %v7376 = vmul.f32 %v7282, 1.442695
  %v7377 = vpow.pop %v7376
  %v7378 = vmul.f32 %v7283, 1.442695
  %v7379 = vpow.pop %v7378
  %v7380 = vmul.f32 %v7284, 1.442695
  %v7381 = vpow.pop %v7380
  %v7382 = vmul.f32 %v7285, 1.442695
  %v7383 = vpow.pop %v7382
  %v7384 = vmul.f32 %v7286, 1.442695
  %v7385 = vpow.pop %v7384
  %v7386 = vmul.f32 %v7287, 1.442695
  %v7387 = vpow.pop %v7386
  %v7388 = vmul.f32 %v7288, 1.442695
  %v7389 = vpow.pop %v7388
  %v7390 = vmul.f32 %v7289, 1.442695
  %v7391 = vpow.pop %v7390
  %v7392 = vmul.f32 %v7290, 1.442695
  %v7393 = vpow.pop %v7392
  %v7394 = vmul.f32 %v7291, 1.442695
  %v7395 = vpow.pop %v7394
  %v7396 = vmul.f32 %v7292, 1.442695
  %v7397 = vpow.pop %v7396
  %v7398 = vmul.f32 %v7293, 1.442695
  %v7399 = vpow.pop %v7398
  %v7400 = vmul.f32 %v7294, 1.442695
  %v7401 = vpow.pop %v7400
  %v7402 = vmul.f32 %v7295, 1.442695
  %v7403 = vpow.pop %v7402
  %v7404 = vmul.f32 %v7296, 1.442695
  %v7405 = vpow.pop %v7404
  %v7406 = vmul.f32 %v7297, 1.442695
  %v7407 = vpow.pop %v7406
  %v7408 = vmul.f32 %v7298, 1.442695
  %v7409 = vpow.pop %v7408
  %v7410 = vmul.f32 %v7299, 1.442695
  %v7411 = vpow.pop %v7410
  %v7412 = vmul.f32 %v7300, 1.442695
  %v7413 = vpow.pop %v7412
  %v7414 = vmul.f32 %v7301, 1.442695
  %v7415 = vpow.pop %v7414
  %v7416 = vmul.f32 %v7302, 1.442695
  %v7417 = vpow.pop %v7416
  %v7418 = vmul.f32 %v7303, 1.442695
  %v7419 = vpow.pop %v7418
  %v7420 = vmul.f32 %v7304, 1.442695
  %v7421 = vpow.pop %v7420
  %v7422 = vmul.f32 %v7305, 1.442695
  %v7423 = vpow.pop %v7422
  %v7424 = vmul.f32 %v7306, 1.442695
  %v7425 = vpow.pop %v7424
  %v7426 = vmul.f32 %v7307, 1.442695
  %v7427 = vpow.pop %v7426
  %v7428 = vmul.f32 %v7308, 1.442695
  %v7429 = vpow.pop %v7428
  %v7430 = vmul.f32 %v7309, 1.442695
  %v7431 = vpow.pop %v7430
  %v7432 = vmul.f32 %v7310, 1.442695
  %v7433 = vpow.pop %v7432
  %v7434 = vmul.f32 %v7311, 1.442695
  %v7435 = vpow.pop %v7434
  %v7436 = vmul.f32 %v7312, 1.442695
  %v7437 = vpow.pop %v7436
  %v7438 = vmul.f32 %v7313, 1.442695
  %v7439 = vpow.pop %v7438
  %v7440 = vmul.f32 %v7314, 1.442695
  %v7441 = vpow.pop %v7440
  %v7442 = vmul.f32 %v7315, 1.442695
  %v7443 = vpow.pop %v7442
  %v7444 = vadd.f32 %v7317, 1.0
  %v7445 = vadd.f32 %v7319, 1.0
  %v7446 = vadd.f32 %v7321, 1.0
  %v7447 = vadd.f32 %v7323, 1.0
  %v7448 = vadd.f32 %v7325, 1.0
  %v7449 = vadd.f32 %v7327, 1.0
  %v7450 = vadd.f32 %v7329, 1.0
  %v7451 = vadd.f32 %v7331, 1.0
  %v7452 = vadd.f32 %v7333, 1.0
  %v7453 = vadd.f32 %v7335, 1.0
  %v7454 = vadd.f32 %v7337, 1.0
  %v7455 = vadd.f32 %v7339, 1.0
  %v7456 = vadd.f32 %v7341, 1.0
  %v7457 = vadd.f32 %v7343, 1.0
  %v7458 = vadd.f32 %v7345, 1.0
  %v7459 = vadd.f32 %v7347, 1.0
  %v7460 = vadd.f32 %v7349, 1.0
  %v7461 = vadd.f32 %v7351, 1.0
  %v7462 = vadd.f32 %v7353, 1.0
  %v7463 = vadd.f32 %v7355, 1.0
  %v7464 = vadd.f32 %v7357, 1.0
  %v7465 = vadd.f32 %v7359, 1.0
  %v7466 = vadd.f32 %v7361, 1.0
  %v7467 = vadd.f32 %v7363, 1.0
  %v7468 = vadd.f32 %v7365, 1.0
  %v7469 = vadd.f32 %v7367, 1.0
  %v7470 = vadd.f32 %v7369, 1.0
  %v7471 = vadd.f32 %v7371, 1.0
  %v7472 = vadd.f32 %v7373, 1.0
  %v7473 = vadd.f32 %v7375, 1.0
  %v7474 = vadd.f32 %v7377, 1.0
  %v7475 = vadd.f32 %v7379, 1.0
  %v7476 = vadd.f32 %v7381, 1.0
  %v7477 = vadd.f32 %v7383, 1.0
  %v7478 = vadd.f32 %v7385, 1.0
  %v7479 = vadd.f32 %v7387, 1.0
  %v7480 = vadd.f32 %v7389, 1.0
  %v7481 = vadd.f32 %v7391, 1.0
  %v7482 = vadd.f32 %v7393, 1.0
  %v7483 = vadd.f32 %v7395, 1.0
  %v7484 = vadd.f32 %v7397, 1.0
  %v7485 = vadd.f32 %v7399, 1.0
  %v7486 = vadd.f32 %v7401, 1.0
  %v7487 = vadd.f32 %v7403, 1.0
  %v7488 = vadd.f32 %v7405, 1.0
  %v7489 = vadd.f32 %v7407, 1.0
  %v7490 = vadd.f32 %v7409, 1.0
  %v7491 = vadd.f32 %v7411, 1.0
  %v7492 = vadd.f32 %v7413, 1.0
  %v7493 = vadd.f32 %v7415, 1.0
  %v7494 = vadd.f32 %v7417, 1.0
  %v7495 = vadd.f32 %v7419, 1.0
  %v7496 = vadd.f32 %v7421, 1.0
  %v7497 = vadd.f32 %v7423, 1.0
  %v7498 = vadd.f32 %v7425, 1.0
  %v7499 = vadd.f32 %v7427, 1.0
  %v7500 = vadd.f32 %v7429, 1.0
  %v7501 = vadd.f32 %v7431, 1.0
  %v7502 = vadd.f32 %v7433, 1.0
  %v7503 = vadd.f32 %v7435, 1.0
  %v7504 = vadd.f32 %v7437, 1.0
  %v7505 = vadd.f32 %v7439, 1.0
  %v7506 = vadd.f32 %v7441, 1.0
  %v7507 = vadd.f32 %v7443, 1.0
  %v7508 = vrcp.pop %v7444
  %v7509 = vmul.f32 1.0, %v7508
  %v7510 = vrcp.pop %v7445
  %v7511 = vmul.f32 1.0, %v7510
  %v7512 = vrcp.pop %v7446
  %v7513 = vmul.f32 1.0, %v7512
  %v7514 = vrcp.pop %v7447
  %v7515 = vmul.f32 1.0, %v7514
  %v7516 = vrcp.pop %v7448
  %v7517 = vmul.f32 1.0, %v7516
  %v7518 = vrcp.pop %v7449
  %v7519 = vmul.f32 1.0, %v7518
  %v7520 = vrcp.pop %v7450
  %v7521 = vmul.f32 1.0, %v7520
  %v7522 = vrcp.pop %v7451
  %v7523 = vmul.f32 1.0, %v7522
  %v7524 = vrcp.pop %v7452
  %v7525 = vmul.f32 1.0, %v7524
  %v7526 = vrcp.pop %v7453
  %v7527 = vmul.f32 1.0, %v7526
  %v7528 = vrcp.pop %v7454
  %v7529 = vmul.f32 1.0, %v7528
  %v7530 = vrcp.pop %v7455
  %v7531 = vmul.f32 1.0, %v7530
  %v7532 = vrcp.pop %v7456
  %v7533 = vmul.f32 1.0, %v7532
  %v7534 = vrcp.pop %v7457
  %v7535 = vmul.f32 1.0, %v7534
  %v7536 = vrcp.pop %v7458
  %v7537 = vmul.f32 1.0, %v7536
  %v7538 = vrcp.pop %v7459
  %v7539 = vmul.f32 1.0, %v7538
  %v7540 = vrcp.pop %v7460
  %v7541 = vmul.f32 1.0, %v7540
  %v7542 = vrcp.pop %v7461
  %v7543 = vmul.f32 1.0, %v7542
  %v7544 = vrcp.pop %v7462
  %v7545 = vmul.f32 1.0, %v7544
  %v7546 = vrcp.pop %v7463
  %v7547 = vmul.f32 1.0, %v7546
  %v7548 = vrcp.pop %v7464
  %v7549 = vmul.f32 1.0, %v7548
  %v7550 = vrcp.pop %v7465
  %v7551 = vmul.f32 1.0, %v7550
  %v7552 = vrcp.pop %v7466
  %v7553 = vmul.f32 1.0, %v7552
  %v7554 = vrcp.pop %v7467
  %v7555 = vmul.f32 1.0, %v7554
  %v7556 = vrcp.pop %v7468
  %v7557 = vmul.f32 1.0, %v7556
  %v7558 = vrcp.pop %v7469
  %v7559 = vmul.f32 1.0, %v7558
  %v7560 = vrcp.pop %v7470
  %v7561 = vmul.f32 1.0, %v7560
  %v7562 = vrcp.pop %v7471
  %v7563 = vmul.f32 1.0, %v7562
  %v7564 = vrcp.pop %v7472
  %v7565 = vmul.f32 1.0, %v7564
  %v7566 = vrcp.pop %v7473
  %v7567 = vmul.f32 1.0, %v7566
  %v7568 = vrcp.pop %v7474
  %v7569 = vmul.f32 1.0, %v7568
  %v7570 = vrcp.pop %v7475
  %v7571 = vmul.f32 1.0, %v7570
  %v7572 = vrcp.pop %v7476
  %v7573 = vmul.f32 1.0, %v7572
  %v7574 = vrcp.pop %v7477
  %v7575 = vmul.f32 1.0, %v7574
  %v7576 = vrcp.pop %v7478
  %v7577 = vmul.f32 1.0, %v7576
  %v7578 = vrcp.pop %v7479
  %v7579 = vmul.f32 1.0, %v7578
  %v7580 = vrcp.pop %v7480
  %v7581 = vmul.f32 1.0, %v7580
  %v7582 = vrcp.pop %v7481
  %v7583 = vmul.f32 1.0, %v7582
  %v7584 = vrcp.pop %v7482
  %v7585 = vmul.f32 1.0, %v7584
  %v7586 = vrcp.pop %v7483
  %v7587 = vmul.f32 1.0, %v7586
  %v7588 = vrcp.pop %v7484
  %v7589 = vmul.f32 1.0, %v7588
  %v7590 = vrcp.pop %v7485
  %v7591 = vmul.f32 1.0, %v7590
  %v7592 = vrcp.pop %v7486
  %v7593 = vmul.f32 1.0, %v7592
  %v7594 = vrcp.pop %v7487
  %v7595 = vmul.f32 1.0, %v7594
  %v7596 = vrcp.pop %v7488
  %v7597 = vmul.f32 1.0, %v7596
  %v7598 = vrcp.pop %v7489
  %v7599 = vmul.f32 1.0, %v7598
  %v7600 = vrcp.pop %v7490
  %v7601 = vmul.f32 1.0, %v7600
  %v7602 = vrcp.pop %v7491
  %v7603 = vmul.f32 1.0, %v7602
  %v7604 = vrcp.pop %v7492
  %v7605 = vmul.f32 1.0, %v7604
  %v7606 = vrcp.pop %v7493
  %v7607 = vmul.f32 1.0, %v7606
  %v7608 = vrcp.pop %v7494
  %v7609 = vmul.f32 1.0, %v7608
  %v7610 = vrcp.pop %v7495
  %v7611 = vmul.f32 1.0, %v7610
  %v7612 = vrcp.pop %v7496
  %v7613 = vmul.f32 1.0, %v7612
  %v7614 = vrcp.pop %v7497
  %v7615 = vmul.f32 1.0, %v7614
  %v7616 = vrcp.pop %v7498
  %v7617 = vmul.f32 1.0, %v7616
  %v7618 = vrcp.pop %v7499
  %v7619 = vmul.f32 1.0, %v7618
  %v7620 = vrcp.pop %v7500
  %v7621 = vmul.f32 1.0, %v7620
  %v7622 = vrcp.pop %v7501
  %v7623 = vmul.f32 1.0, %v7622
  %v7624 = vrcp.pop %v7502
  %v7625 = vmul.f32 1.0, %v7624
  %v7626 = vrcp.pop %v7503
  %v7627 = vmul.f32 1.0, %v7626
  %v7628 = vrcp.pop %v7504
  %v7629 = vmul.f32 1.0, %v7628
  %v7630 = vrcp.pop %v7505
  %v7631 = vmul.f32 1.0, %v7630
  %v7632 = vrcp.pop %v7506
  %v7633 = vmul.f32 1.0, %v7632
  %v7634 = vrcp.pop %v7507
  %v7635 = vmul.f32 1.0, %v7634
  %7636 = vst [vmem:[%s71] sm:$0xff] %v7509
  %7637 = vst [vmem:[%s71 + $0x8] sm:$0xff] %v7511
  %7638 = vst [vmem:[%s71 + $0x10] sm:$0xff] %v7513
  %7639 = vst [vmem:[%s71 + $0x18] sm:$0xff] %v7515
  %7640 = vst [vmem:[%s71 + $0x20] sm:$0xff] %v7517
  %7641 = vst [vmem:[%s71 + $0x28] sm:$0xff] %v7519
  %7642 = vst [vmem:[%s71 + $0x30] sm:$0xff] %v7521
  %7643 = vst [vmem:[%s71 + $0x38] sm:$0xff] %v7523
  %7644 = vst [vmem:[%s71 + $0x40] sm:$0xff] %v7525
  %7645 = vst [vmem:[%s71 + $0x48] sm:$0xff] %v7527
  %7646 = vst [vmem:[%s71 + $0x50] sm:$0xff] %v7529
  %7647 = vst [vmem:[%s71 + $0x58] sm:$0xff] %v7531
  %7648 = vst [vmem:[%s71 + $0x60] sm:$0xff] %v7533
  %7649 = vst [vmem:[%s71 + $0x68] sm:$0xff] %v7535
  %7650 = vst [vmem:[%s71 + $0x70] sm:$0xff] %v7537
  %7651 = vst [vmem:[%s71 + $0x78] sm:$0xff] %v7539
  %7652 = vst [vmem:[%s71 + $0x80] sm:$0xff] %v7541
  %7653 = vst [vmem:[%s71 + $0x88] sm:$0xff] %v7543
  %7654 = vst [vmem:[%s71 + $0x90] sm:$0xff] %v7545
  %7655 = vst [vmem:[%s71 + $0x98] sm:$0xff] %v7547
  %7656 = vst [vmem:[%s71 + $0xa0] sm:$0xff] %v7549
  %7657 = vst [vmem:[%s71 + $0xa8] sm:$0xff] %v7551
  %7658 = vst [vmem:[%s71 + $0xb0] sm:$0xff] %v7553
  %7659 = vst [vmem:[%s71 + $0xb8] sm:$0xff] %v7555
  %7660 = vst [vmem:[%s71 + $0xc0] sm:$0xff] %v7557
  %7661 = vst [vmem:[%s71 + $0xc8] sm:$0xff] %v7559
  %7662 = vst [vmem:[%s71 + $0xd0] sm:$0xff] %v7561
  %7663 = vst [vmem:[%s71 + $0xd8] sm:$0xff] %v7563
  %7664 = vst [vmem:[%s71 + $0xe0] sm:$0xff] %v7565
  %7665 = vst [vmem:[%s71 + $0xe8] sm:$0xff] %v7567
  %7666 = vst [vmem:[%s71 + $0xf0] sm:$0xff] %v7569
  %7667 = vst [vmem:[%s71 + $0xf8] sm:$0xff] %v7571
  %7668 = vst [vmem:[%s71 + $0x100] sm:$0xff] %v7573
  %7669 = vst [vmem:[%s71 + $0x108] sm:$0xff] %v7575
  %7670 = vst [vmem:[%s71 + $0x110] sm:$0xff] %v7577
  %7671 = vst [vmem:[%s71 + $0x118] sm:$0xff] %v7579
  %7672 = vst [vmem:[%s71 + $0x120] sm:$0xff] %v7581
  %7673 = vst [vmem:[%s71 + $0x128] sm:$0xff] %v7583
  %7674 = vst [vmem:[%s71 + $0x130] sm:$0xff] %v7585
  %7675 = vst [vmem:[%s71 + $0x138] sm:$0xff] %v7587
  %7676 = vst [vmem:[%s71 + $0x140] sm:$0xff] %v7589
  %7677 = vst [vmem:[%s71 + $0x148] sm:$0xff] %v7591
  %7678 = vst [vmem:[%s71 + $0x150] sm:$0xff] %v7593
  %7679 = vst [vmem:[%s71 + $0x158] sm:$0xff] %v7595
  %7680 = vst [vmem:[%s71 + $0x160] sm:$0xff] %v7597
  %7681 = vst [vmem:[%s71 + $0x168] sm:$0xff] %v7599
  %7682 = vst [vmem:[%s71 + $0x170] sm:$0xff] %v7601
  %7683 = vst [vmem:[%s71 + $0x178] sm:$0xff] %v7603
  %7684 = vst [vmem:[%s71 + $0x180] sm:$0xff] %v7605
  %7685 = vst [vmem:[%s71 + $0x188] sm:$0xff] %v7607
  %7686 = vst [vmem:[%s71 + $0x190] sm:$0xff] %v7609
  %7687 = vst [vmem:[%s71 + $0x198] sm:$0xff] %v7611
  %7688 = vst [vmem:[%s71 + $0x1a0] sm:$0xff] %v7613
  %7689 = vst [vmem:[%s71 + $0x1a8] sm:$0xff] %v7615
  %7690 = vst [vmem:[%s71 + $0x1b0] sm:$0xff] %v7617
  %7691 = vst [vmem:[%s71 + $0x1b8] sm:$0xff] %v7619
  %7692 = vst [vmem:[%s71 + $0x1c0] sm:$0xff] %v7621
  %7693 = vst [vmem:[%s71 + $0x1c8] sm:$0xff] %v7623
  %7694 = vst [vmem:[%s71 + $0x1d0] sm:$0xff] %v7625
  %7695 = vst [vmem:[%s71 + $0x1d8] sm:$0xff] %v7627
  %7696 = vst [vmem:[%s71 + $0x1e0] sm:$0xff] %v7629
  %7697 = vst [vmem:[%s71 + $0x1e8] sm:$0xff] %v7631
  %7698 = vst [vmem:[%s71 + $0x1f0] sm:$0xff] %v7633
  %7699 = vst [vmem:[%s71 + $0x1f8] sm:$0xff] %v7635
  // Predicated region
  $region134: #{neural_renderer_forward.1} parent=0 // pred_check
    _
  $region135: #{neural_renderer_forward.1} parent=0 // pred_check_branch
    %7701 = sbr.rel (0) target = $region137
  $region136: #{neural_renderer_forward.1} parent=0 // pred_region
    _
  $region137: #{neural_renderer_forward.1} parent=0 // pred_fallthru
    _
  // Predicated region
  $region138: #{neural_renderer_forward.1} parent=0 // pred_check
    _
  $region139: #{neural_renderer_forward.1} parent=0 // pred_check_branch
    %7703 = sbr.rel (0) target = $region141
  $region140: #{neural_renderer_forward.1} parent=0 // pred_region
    _
  $region141: #{neural_renderer_forward.1} parent=0 // pred_fallthru
    _
  // Predicated region
  $region142: #{neural_renderer_forward.1} parent=0 // pred_check
    _
  $region143: #{neural_renderer_forward.1} parent=0 // pred_check_branch
    %7705 = sbr.rel (0) target = $region145
  $region144: #{neural_renderer_forward.1} parent=0 // pred_region
    _
  $region145: #{neural_renderer_forward.1} parent=0 // pred_fallthru
    _
  // Predicated region
  $region146: #{neural_renderer_forward.1} parent=0 // pred_check
    _
  $region147: #{neural_renderer_forward.1} parent=0 // pred_check_branch
    %7707 = sbr.rel (0) target = $region149
  $region148: #{neural_renderer_forward.1} parent=0 // pred_region
    _
  $region149: #{neural_renderer_forward.1} parent=0 // pred_fallthru
    _
  // Predicated region
  $region150: #{neural_renderer_forward.1} parent=0 // pred_check
    _
  $region151: #{neural_renderer_forward.1} parent=0 // pred_check_branch
    %7709 = sbr.rel (0) target = $region153
  $region152: #{neural_renderer_forward.1} parent=0 // pred_region
    _
  $region153: #{neural_renderer_forward.1} parent=0 // pred_fallthru
    _
  // Predicated region
  $region154: #{neural_renderer_forward.1} parent=0 // pred_check
    _
  $region155: #{neural_renderer_forward.1} parent=0 // pred_check_branch
    %7711 = sbr.rel (0) target = $region157
  $region156: #{neural_renderer_forward.1} parent=0 // pred_region
    _
  $region157: #{neural_renderer_forward.1} parent=0 // pred_fallthru
    _

</llo_original>
